<compile_context>
chip_gen: v5e
topology: v5e:2x2
jax: 0.10.0
libtpu: 0.0.40
codegen_flags: <defaults>
</compile_context>

<pallas_src>
import functools

import jax
import jax.numpy as jnp
from jax import lax
from jax.experimental import pallas as pl
from jax.experimental.pallas import tpu as pltpu


C3_IN, C4_IN, C5_IN = 32, 64, 128
OUT_CHANNELS = 64


# ---------------------------------------------------------------------------
# Fused per-level FPN kernel (W-packed blocks):
#   inter = conv1x1(x) + bias (+ in-kernel x2-upsampled coarser p_inter)
#   out   = conv3x3(inter) + bias          (stride 1, padding 1)
# ---------------------------------------------------------------------------
def _fpn_level_kernel(*refs, has_residual, emit_inter):
    k = 0
    x_ref = refs[k]; k += 1                 # (BB, H, Wp, 2*Cin)   bf16
    res_ref = None
    if has_residual:
        res_ref = refs[k]; k += 1           # (BB, H//2, Wp, C)    bf16 (coarse)
    wl_ref = refs[k]; k += 1                # (Cin, C)             bf16
    bl_ref = refs[k]; k += 1                # (1, 2C)              f32
    wc_ref = refs[k]; k += 1                # (3, 2C, 2C)          bf16 centre taps
    we_ref = refs[k]; k += 1                # (3, 2, C, C)         bf16 edge taps
    bo_ref = refs[k]; k += 1                # (1, 2C)              f32
    inter_ref = None
    if emit_inter:
        inter_ref = refs[k]; k += 1         # (BB, H, Wp, 2C)      bf16
    out_ref = refs[k]; k += 1               # (BB, H, Wp, 2C)      f32
    pad_ref = refs[k]; k += 1               # (H+2, Wp+2, 2C)      bf16 scratch

    BB, H, Wp, C2 = out_ref.shape
    C = C2 // 2
    Cin = wl_ref.shape[0]

    # Zero only the 1-px halo (perimeter).  Done every step: see header note.
    zrow = jnp.zeros((1, Wp + 2, C2), pad_ref.dtype)
    zcol = jnp.zeros((H + 2, 1, C2), pad_ref.dtype)
    pad_ref[0:1, :, :] = zrow
    pad_ref[H + 1:H + 2, :, :] = zrow
    pad_ref[:, 0:1, :] = zcol
    pad_ref[:, Wp + 1:Wp + 2, :] = zcol

    wl = wl_ref[...]
    bl = bl_ref[...]
    bo = bo_ref[...]
    dn = (((2,), (0,)), ((), ()))

    for b in range(BB):                     # static unroll over the batch block
        # ---- lateral 1x1 conv on the two packed pixel halves (flop-exact) --
        xb = x_ref[b]                                          # (H, Wp, 2Cin)
        lo = lax.dot_general(xb[:, :, 0:Cin], wl, dn,
                             preferred_element_type=jnp.float32)
        hi = lax.dot_general(xb[:, :, Cin:2 * Cin], wl, dn,
                             preferred_element_type=jnp.float32)
        inter = jnp.concatenate([lo, hi], axis=-1) + bl        # (H, Wp, 2C) f32

        if has_residual:
            # fused nearest x2 upsample of the coarse p_inter:
            #   W direction == lane duplication (packed layout),
            #   H direction == repeat along the leading axis.
            c = res_ref[b]                                     # (H//2, Wp, C)
            c2 = jnp.concatenate([c, c], axis=-1)              # (H//2, Wp, 2C)
            rp = jnp.repeat(c2, 2, axis=0)                     # (H, Wp, 2C)
            inter = inter + rp.astype(jnp.float32)

        inter_bf = inter.astype(jnp.bfloat16)
        if emit_inter:
            inter_ref[b] = inter_bf
        pad_ref[1:H + 1, 1:Wp + 1, :] = inter_bf

        # ---- 3x3 "same" conv ------------------------------------------------
        # centre packed column: 3 dense (2C x 2C) matmuls (K = N = 128)
        acc = None
        for dh in range(3):
            ctr = pad_ref[dh:dh + H, 1:Wp + 1, :]              # (H, Wp, 2C)
            term = lax.dot_general(ctr, wc_ref[dh], dn,
                                   preferred_element_type=jnp.float32)
            acc = term if acc is None else acc + term
        # half-column edge taps: 6 small (C x C) matmuls
        acc_lo = None    # -> output lanes [0:C]   (left neighbour, K[dh,0])
        acc_hi = None    # -> output lanes [C:2C]  (right neighbour, K[dh,2])
        for dh in range(3):
            t_lo = lax.dot_general(pad_ref[dh:dh + H, 0:Wp, C:C2],
                                   we_ref[dh, 0], dn,
                                   preferred_element_type=jnp.float32)
            t_hi = lax.dot_general(pad_ref[dh:dh + H, 2:Wp + 2, 0:C],
                                   we_ref[dh, 1], dn,
                                   preferred_element_type=jnp.float32)
            acc_lo = t_lo if acc_lo is None else acc_lo + t_lo
            acc_hi = t_hi if acc_hi is None else acc_hi + t_hi
        acc = acc + jnp.concatenate([acc_lo, acc_hi], axis=-1) + bo
        out_ref[b] = acc.astype(out_ref.dtype)


def fpn_level(x_packed, res_coarse, wl, bl2, wc, we, bo2, *, emit_inter):
    """One fused FPN level on W-packed NHWC blocks.

    x_packed   : (B, H, W/2, 2*Cin)  bf16
    res_coarse : (B, H/2, W/2, C)    bf16 coarse p_inter (or None)
    returns    : (p_inter_packed bf16 | None, p_out_packed f32), (B, H, W/2, 2C)
    """
    B, H, Wp, Cin2 = x_packed.shape
    Cin = Cin2 // 2
    C2 = wc.shape[-1]
    C = C2 // 2

    # Collapse the grid for small levels (per-step overhead dominates there).
    per_img = H * Wp * (Cin2 * 2 + C2 * 2 + C2 * 4)
    if res_coarse is not None:
        per_img += (H // 2) * Wp * C * 2
    BB = B if B * per_img <= (1 << 21) else 1
    grid = (B // BB,)

    weight_bytes = (Cin * C + 3 * C2 * C2 + 6 * C * C) * 2 + 2 * C2 * 4
    scratch_bytes = (H + 2) * (Wp + 2) * C2 * 2
    vmem_limit = int(min(max(2 * BB * per_img + 2 * weight_bytes + scratch_bytes,
                             32 * 1024 * 1024), 96 * 1024 * 1024))

    in_specs = [pl.BlockSpec((BB, H, Wp, Cin2), lambda b: (b, 0, 0, 0))]
    args = [x_packed]
    if res_coarse is not None:
        in_specs.append(pl.BlockSpec((BB, H // 2, Wp, C), lambda b: (b, 0, 0, 0)))
        args.append(res_coarse)
    in_specs += [
        pl.BlockSpec((Cin, C), lambda b: (0, 0)),
        pl.BlockSpec((1, C2), lambda b: (0, 0)),
        pl.BlockSpec((3, C2, C2), lambda b: (0, 0, 0)),
        pl.BlockSpec((3, 2, C, C), lambda b: (0, 0, 0, 0)),
        pl.BlockSpec((1, C2), lambda b: (0, 0)),
    ]
    args += [wl, bl2, wc, we, bo2]

    out_shapes, out_specs = [], []
    if emit_inter:
        out_shapes.append(jax.ShapeDtypeStruct((B, H, Wp, C2), jnp.bfloat16))
        out_specs.append(pl.BlockSpec((BB, H, Wp, C2), lambda b: (b, 0, 0, 0)))
    out_shapes.append(jax.ShapeDtypeStruct((B, H, Wp, C2), jnp.float32))
    out_specs.append(pl.BlockSpec((BB, H, Wp, C2), lambda b: (b, 0, 0, 0)))

    W = 2 * Wp
    flops = 2 * B * H * W * C * (Cin + 9 * C)
    bytes_accessed = (x_packed.size * 2
                      + B * H * Wp * C2 * ((2 if emit_inter else 0) + 4)
                      + (res_coarse.size * 2 if res_coarse is not None else 0)
                      + weight_bytes)

    results = pl.pallas_call(
        functools.partial(_fpn_level_kernel,
                          has_residual=res_coarse is not None,
                          emit_inter=emit_inter),
        out_shape=tuple(out_shapes) if emit_inter else out_shapes[0],
        grid=grid,
        in_specs=in_specs,
        out_specs=tuple(out_specs) if emit_inter else out_specs[0],
        scratch_shapes=[pltpu.VMEM((H + 2, Wp + 2, C2), jnp.bfloat16)],
        compiler_params=pltpu.CompilerParams(
            dimension_semantics=("parallel",),
            vmem_limit_bytes=vmem_limit),
        cost_estimate=pl.CostEstimate(flops=flops, transcendentals=0,
                                      bytes_accessed=bytes_accessed),
    )(*args)

    if emit_inter:
        inter, out = results
        return inter, out
    return None, results


# ---------------------------------------------------------------------------
# Backbone stub (plain JAX glue; see TODO above)
# ---------------------------------------------------------------------------
def _conv_s2(x, w, b):
    y = lax.conv_general_dilated(
        x, w, window_strides=(2, 2), padding="SAME",
        dimension_numbers=("NHWC", "HWIO", "NHWC"))
    return jax.nn.relu(y + b)


def backbone_stub(x_nhwc, params):
    h = _conv_s2(x_nhwc, params["stem_w"], params["stem_b"])    # stride 2
    h = _conv_s2(h, params["b1_w"], params["b1_b"])             # stride 4
    c3 = _conv_s2(h, params["b2_w"], params["b2_b"])            # stride 8
    c4 = _conv_s2(c3, params["b3_w"], params["b3_b"])           # stride 16
    c5 = _conv_s2(c4, params["b4_w"], params["b4_b"])           # stride 32
    return c3, c4, c5


# ---------------------------------------------------------------------------
# Parameter construction (deterministic)
# ---------------------------------------------------------------------------
def make_params(key):
    ks = list(jax.random.split(key, 32))

    def nrm(shape, i, scale=0.1):
        return (scale * jax.random.normal(ks[i], shape)).astype(jnp.float32)

    p = {}
    p["stem_w"], p["stem_b"] = nrm((3, 3, 3, 16), 0), nrm((16,), 1)
    p["b1_w"], p["b1_b"] = nrm((3, 3, 16, 24), 2), nrm((24,), 3)
    p["b2_w"], p["b2_b"] = nrm((3, 3, 24, C3_IN), 4), nrm((C3_IN,), 5)
    p["b3_w"], p["b3_b"] = nrm((3, 3, C3_IN, C4_IN), 6), nrm((C4_IN,), 7)
    p["b4_w"], p["b4_b"] = nrm((3, 3, C4_IN, C5_IN), 8), nrm((C5_IN,), 9)
    # FPN lateral 1x1: weight (Cin, Cout), bias (1, Cout)
    p["convl3_w"], p["convl3_b"] = nrm((C3_IN, OUT_CHANNELS), 10), nrm((1, OUT_CHANNELS), 11)
    p["convl4_w"], p["convl4_b"] = nrm((C4_IN, OUT_CHANNELS), 12), nrm((1, OUT_CHANNELS), 13)
    p["convl5_w"], p["convl5_b"] = nrm((C5_IN, OUT_CHANNELS), 14), nrm((1, OUT_CHANNELS), 15)
    # FPN output 3x3: weight (3, 3, Cin, Cout), bias (1, Cout)
    p["conv3_w"], p["conv3_b"] = nrm((3, 3, OUT_CHANNELS, OUT_CHANNELS), 16), nrm((1, OUT_CHANNELS), 17)
    p["conv4_w"], p["conv4_b"] = nrm((3, 3, OUT_CHANNELS, OUT_CHANNELS), 18), nrm((1, OUT_CHANNELS), 19)
    p["conv5_w"], p["conv5_b"] = nrm((3, 3, OUT_CHANNELS, OUT_CHANNELS), 20), nrm((1, OUT_CHANNELS), 21)
    return p


def _prep_3x3(w, b, bf):
    """(3,3,C,C) conv weight -> packed-tap weights for the W-packed kernel."""
    wc = jnp.stack([jnp.block([[w[dh, 1], w[dh, 0]],
                               [w[dh, 2], w[dh, 1]]]) for dh in range(3)]).astype(bf)
    we = jnp.stack([jnp.stack([w[dh, 0], w[dh, 2]]) for dh in range(3)]).astype(bf)
    bo2 = jnp.concatenate([b, b], axis=-1)
    return wc, we, bo2


# ---------------------------------------------------------------------------
# Full forward (mirrors DetectorBackboneWithFPN.forward)
# ---------------------------------------------------------------------------
@jax.jit
def detector_backbone_with_fpn(images_nchw, params):
    x = jnp.transpose(images_nchw, (0, 2, 3, 1)).astype(jnp.float32)  # -> NHWC
    c3, c4, c5 = backbone_stub(x, params)

    bf = jnp.bfloat16

    def pack_w(t):      # (B,H,W,c) -> (B,H,W/2,2c): free metadata reshape
        B, H, W, c = t.shape
        return t.reshape(B, H, W // 2, 2 * c)

    def unpack_w(t):    # (B,H,Wp,2c) -> (B,H,2Wp,c): free metadata reshape
        B, H, Wp, c2 = t.shape
        return t.reshape(B, H, 2 * Wp, c2 // 2)

    wl3 = params["convl3_w"].astype(bf)
    wl4 = params["convl4_w"].astype(bf)
    wl5 = params["convl5_w"].astype(bf)
    bl3 = jnp.concatenate([params["convl3_b"], params["convl3_b"]], axis=-1)
    bl4 = jnp.concatenate([params["convl4_b"], params["convl4_b"]], axis=-1)
    bl5 = jnp.concatenate([params["convl5_b"], params["convl5_b"]], axis=-1)
    wc3, we3, bo3 = _prep_3x3(params["conv3_w"], params["conv3_b"], bf)
    wc4, we4, bo4 = _prep_3x3(params["conv4_w"], params["conv4_b"], bf)
    wc5, we5, bo5 = _prep_3x3(params["conv5_w"], params["conv5_b"], bf)

    # p5: no residual -> no zeros stream
    p5i, p5 = fpn_level(pack_w(c5.astype(bf)), None, wl5, bl5, wc5, we5, bo5,
                        emit_inter=True)
    # p4: coarse p5_inter consumed directly; x2 upsample fused in-kernel
    p4i, p4 = fpn_level(pack_w(c4.astype(bf)), unpack_w(p5i), wl4, bl4, wc4,
                        we4, bo4, emit_inter=True)
    # p3: p3_inter has no consumer -> don't emit it
    _, p3 = fpn_level(pack_w(c3.astype(bf)), unpack_w(p4i), wl3, bl3, wc3,
                      we3, bo3, emit_inter=False)

    to_nchw = lambda t: jnp.transpose(unpack_w(t), (0, 3, 1, 2))
    return {"p3": to_nchw(p3), "p4": to_nchw(p4), "p5": to_nchw(p5)}


# ---------------------------------------------------------------------------
# Plain-XLA float32 reference (for correctness checking only)
# ---------------------------------------------------------------------------
def _reference_fpn(images_nchw, params):
    x = jnp.transpose(images_nchw, (0, 2, 3, 1)).astype(jnp.float32)
    c3, c4, c5 = backbone_stub(x, params)

    def conv1x1(t, w, b):
        return jnp.einsum("bhwc,cd->bhwd", t, w) + b

    def conv3x3(t, w, b):
        y = lax.conv_general_dilated(t, w, (1, 1), ((1, 1), (1, 1)),
                                     dimension_numbers=("NHWC", "HWIO", "NHWC"))
        return y + b

    def up2(t):
        return jnp.repeat(jnp.repeat(t, 2, axis=1), 2, axis=2)

    p5i = conv1x1(c5, params["convl5_w"], params["convl5_b"])
    p5 = conv3x3(p5i, params["conv5_w"], params["conv5_b"])
    p4i = conv1x1(c4, params["convl4_w"], params["convl4_b"]) + up2(p5i)
    p4 = conv3x3(p4i, params["conv4_w"], params["conv4_b"])
    p3i = conv1x1(c3, params["convl3_w"], params["convl3_b"]) + up2(p4i)
    p3 = conv3x3(p3i, params["conv3_w"], params["conv3_b"])
    to_nchw = lambda t: jnp.transpose(t, (0, 3, 1, 2))
    return {"p3": to_nchw(p3), "p4": to_nchw(p4), "p5": to_nchw(p5)}


if __name__ == "__main__":
    key = jax.random.PRNGKey(0)
    k_img, k_par = jax.random.split(key)

    B, H, W = 2, 64, 64  # strides 8/16/32 -> p3: 8x8, p4: 4x4, p5: 2x2
    images = jax.random.normal(k_img, (B, 3, H, W), dtype=jnp.float32)
    params = make_params(k_par)

    feats = detector_backbone_with_fpn(images, params)
    feats = jax.block_until_ready(feats)

    assert feats["p3"].shape == (B, OUT_CHANNELS, H // 8, W // 8)
    assert feats["p4"].shape == (B, OUT_CHANNELS, H // 16, W // 16)
    assert feats["p5"].shape == (B, OUT_CHANNELS, H // 32, W // 32)
    assert all(bool(jnp.isfinite(v).all()) for v in feats.values())

    # Correctness vs a float32 XLA reference (bf16 matmuls -> loose tolerance).
    ref = _reference_fpn(images, params)
    for name in ("p3", "p4", "p5"):
        assert bool(jnp.allclose(feats[name], ref[name], atol=5e-2, rtol=5e-2)), name

    print("KERNEL_OK")
</pallas_src>

<mosaic_0001>
module attributes {stable_mosaic.version = 11 : i64} {
  func.func @_fpn_level_kernel(%arg0: i32, %arg1: memref<2x2x1x256xbf16, #tpu.memory_space<vmem>>, %arg2: memref<128x64xbf16, #tpu.memory_space<vmem>>, %arg3: memref<1x128xf32, #tpu.memory_space<vmem>>, %arg4: memref<3x128x128xbf16, #tpu.memory_space<vmem>>, %arg5: memref<3x2x64x64xbf16, #tpu.memory_space<vmem>>, %arg6: memref<1x128xf32, #tpu.memory_space<vmem>>, %arg7: memref<2x2x1x128xbf16, #tpu.memory_space<vmem>>, %arg8: memref<2x2x1x128xf32, #tpu.memory_space<vmem>>, %arg9: memref<4x3x128xbf16, #tpu.memory_space<vmem>>) attributes {dimension_semantics = [#tpu.dimension_semantics<parallel>], iteration_bounds = array<i64: 1>, scalar_prefetch = 0 : i64, scratch_operands = 1 : i64, tpu.core_type = #tpu.core_type<tc>, window_params = [{transform_indices = @transform_0, window_bounds = array<i64: 2, 2, 1, 256>}, {pipeline_mode = #tpu.pipeline_mode<synchronous>, transform_indices = @transform_1, window_bounds = array<i64: 128, 64>}, {pipeline_mode = #tpu.pipeline_mode<synchronous>, transform_indices = @transform_2, window_bounds = array<i64: 1, 128>}, {pipeline_mode = #tpu.pipeline_mode<synchronous>, transform_indices = @transform_3, window_bounds = array<i64: 3, 128, 128>}, {pipeline_mode = #tpu.pipeline_mode<synchronous>, transform_indices = @transform_4, window_bounds = array<i64: 3, 2, 64, 64>}, {pipeline_mode = #tpu.pipeline_mode<synchronous>, transform_indices = @transform_5, window_bounds = array<i64: 1, 128>}, {transform_indices = @transform_6, window_bounds = array<i64: 2, 2, 1, 128>}, {transform_indices = @transform_7, window_bounds = array<i64: 2, 2, 1, 128>}]} {
    %cst = arith.constant 0.000000e+00 : bf16
    %0 = vector.broadcast %cst : bf16 to vector<1x3x128xbf16>
    %cst_0 = arith.constant 0.000000e+00 : bf16
    %1 = vector.broadcast %cst_0 : bf16 to vector<4x1x128xbf16>
    %c0 = arith.constant 0 : index
    %c0_1 = arith.constant 0 : index
    %c0_2 = arith.constant 0 : index
    %2 = vector.load %arg9[%c0, %c0_1, %c0_2] : memref<4x3x128xbf16, #tpu.memory_space<vmem>>, vector<1x3x128xbf16>
    tpu.vector_store %arg9[%c0, %c0_1, %c0_2], %0 {strides = array<i32>} : memref<4x3x128xbf16, #tpu.memory_space<vmem>>, vector<1x3x128xbf16>,
    %c3 = arith.constant 3 : index
    %c0_3 = arith.constant 0 : index
    %c0_4 = arith.constant 0 : index
    %3 = vector.load %arg9[%c3, %c0_3, %c0_4] : memref<4x3x128xbf16, #tpu.memory_space<vmem>>, vector<1x3x128xbf16>
    tpu.vector_store %arg9[%c3, %c0_3, %c0_4], %0 {strides = array<i32>} : memref<4x3x128xbf16, #tpu.memory_space<vmem>>, vector<1x3x128xbf16>,
    %c0_5 = arith.constant 0 : index
    %c0_6 = arith.constant 0 : index
    %c0_7 = arith.constant 0 : index
    %4 = vector.load %arg9[%c0_5, %c0_6, %c0_7] : memref<4x3x128xbf16, #tpu.memory_space<vmem>>, vector<4x1x128xbf16>
    tpu.vector_store %arg9[%c0_5, %c0_6, %c0_7], %1 {strides = array<i32>} : memref<4x3x128xbf16, #tpu.memory_space<vmem>>, vector<4x1x128xbf16>,
    %c0_8 = arith.constant 0 : index
    %c2 = arith.constant 2 : index
    %c0_9 = arith.constant 0 : index
    %5 = vector.load %arg9[%c0_8, %c2, %c0_9] : memref<4x3x128xbf16, #tpu.memory_space<vmem>>, vector<4x1x128xbf16>
    tpu.vector_store %arg9[%c0_8, %c2, %c0_9], %1 {strides = array<i32>} : memref<4x3x128xbf16, #tpu.memory_space<vmem>>, vector<4x1x128xbf16>,
    %c0_10 = arith.constant 0 : index
    %c0_11 = arith.constant 0 : index
    %6 = vector.load %arg2[%c0_10, %c0_11] : memref<128x64xbf16, #tpu.memory_space<vmem>>, vector<128x64xbf16>
    %c0_12 = arith.constant 0 : index
    %c0_13 = arith.constant 0 : index
    %7 = vector.load %arg3[%c0_12, %c0_13] : memref<1x128xf32, #tpu.memory_space<vmem>>, vector<1x128xf32>
    %c0_14 = arith.constant 0 : index
    %c0_15 = arith.constant 0 : index
    %8 = vector.load %arg6[%c0_14, %c0_15] : memref<1x128xf32, #tpu.memory_space<vmem>>, vector<1x128xf32>
    %c0_16 = arith.constant 0 : index
    %c0_17 = arith.constant 0 : index
    %c0_18 = arith.constant 0 : index
    %c0_19 = arith.constant 0 : index
    %9 = vector.load %arg1[%c0_16, %c0_17, %c0_18, %c0_19] : memref<2x2x1x256xbf16, #tpu.memory_space<vmem>>, vector<1x2x1x256xbf16>
    %10 = vector.shape_cast %9 : vector<1x2x1x256xbf16> to vector<2x1x256xbf16>
    %11 = vector.extract_strided_slice %10 {offsets = [0, 0, 0], sizes = [2, 1, 128], strides = [1, 1, 1]} : vector<2x1x256xbf16> to vector<2x1x128xbf16>
    %cst_20 = arith.constant dense<0.000000e+00> : vector<2x1x64xf32>
    %12 = tpu.matmul %11, %6, %cst_20 {dimension_numbers = #tpu.dot_dimension_numbers<[2], [0], [0, 1], [1], [0, 0, 0, 1, 1, 1], [], []>} : vector<2x1x128xbf16>, vector<128x64xbf16>, vector<2x1x64xf32> -> vector<2x1x64xf32>
    %13 = vector.extract_strided_slice %10 {offsets = [0, 0, 128], sizes = [2, 1, 128], strides = [1, 1, 1]} : vector<2x1x256xbf16> to vector<2x1x128xbf16>
    %cst_21 = arith.constant dense<0.000000e+00> : vector<2x1x64xf32>
    %14 = tpu.matmul %13, %6, %cst_21 {dimension_numbers = #tpu.dot_dimension_numbers<[2], [0], [0, 1], [1], [0, 0, 0, 1, 1, 1], [], []>} : vector<2x1x128xbf16>, vector<128x64xbf16>, vector<2x1x64xf32> -> vector<2x1x64xf32>
    %15 = tpu.concatenate %12, %14 in 2 : vector<2x1x64xf32>, vector<2x1x64xf32> -> vector<2x1x128xf32>
    %16 = vector.shape_cast %7 : vector<1x128xf32> to vector<1x1x128xf32>
    %17 = vector.broadcast %16 : vector<1x1x128xf32> to vector<2x1x128xf32>
    %18 = arith.addf %15, %17 : vector<2x1x128xf32>
    %19 = arith.truncf %18 : vector<2x1x128xf32> to vector<2x1x128xbf16>
    %c0_22 = arith.constant 0 : index
    %c0_23 = arith.constant 0 : index
    %c0_24 = arith.constant 0 : index
    %c0_25 = arith.constant 0 : index
    %20 = vector.load %arg7[%c0_22, %c0_23, %c0_24, %c0_25] : memref<2x2x1x128xbf16, #tpu.memory_space<vmem>>, vector<1x2x1x128xbf16>
    %21 = vector.shape_cast %20 : vector<1x2x1x128xbf16> to vector<2x1x128xbf16>
    %22 = vector.shape_cast %19 : vector<2x1x128xbf16> to vector<1x2x1x128xbf16>
    tpu.vector_store %arg7[%c0_22, %c0_23, %c0_24, %c0_25], %22 {strides = array<i32>} : memref<2x2x1x128xbf16, #tpu.memory_space<vmem>>, vector<1x2x1x128xbf16>,
    %c1 = arith.constant 1 : index
    %c1_26 = arith.constant 1 : index
    %c0_27 = arith.constant 0 : index
    %23 = vector.load %arg9[%c1, %c1_26, %c0_27] : memref<4x3x128xbf16, #tpu.memory_space<vmem>>, vector<2x1x128xbf16>
    tpu.vector_store %arg9[%c1, %c1_26, %c0_27], %19 {strides = array<i32>} : memref<4x3x128xbf16, #tpu.memory_space<vmem>>, vector<2x1x128xbf16>,
    %c0_28 = arith.constant 0 : index
    %c1_29 = arith.constant 1 : index
    %c0_30 = arith.constant 0 : index
    %24 = vector.load %arg9[%c0_28, %c1_29, %c0_30] : memref<4x3x128xbf16, #tpu.memory_space<vmem>>, vector<2x1x128xbf16>
    %c0_31 = arith.constant 0 : index
    %c0_32 = arith.constant 0 : index
    %c0_33 = arith.constant 0 : index
    %25 = vector.load %arg4[%c0_31, %c0_32, %c0_33] : memref<3x128x128xbf16, #tpu.memory_space<vmem>>, vector<1x128x128xbf16>
    %26 = vector.shape_cast %25 : vector<1x128x128xbf16> to vector<128x128xbf16>
    %cst_34 = arith.constant dense<0.000000e+00> : vector<2x1x128xf32>
    %27 = tpu.matmul %24, %26, %cst_34 {dimension_numbers = #tpu.dot_dimension_numbers<[2], [0], [0, 1], [1], [0, 0, 0, 1, 1, 1], [], []>} : vector<2x1x128xbf16>, vector<128x128xbf16>, vector<2x1x128xf32> -> vector<2x1x128xf32>
    %c1_35 = arith.constant 1 : index
    %c1_36 = arith.constant 1 : index
    %c0_37 = arith.constant 0 : index
    %28 = vector.load %arg9[%c1_35, %c1_36, %c0_37] : memref<4x3x128xbf16, #tpu.memory_space<vmem>>, vector<2x1x128xbf16>
    %c1_38 = arith.constant 1 : index
    %c0_39 = arith.constant 0 : index
    %c0_40 = arith.constant 0 : index
    %29 = vector.load %arg4[%c1_38, %c0_39, %c0_40] : memref<3x128x128xbf16, #tpu.memory_space<vmem>>, vector<1x128x128xbf16>
    %30 = vector.shape_cast %29 : vector<1x128x128xbf16> to vector<128x128xbf16>
    %cst_41 = arith.constant dense<0.000000e+00> : vector<2x1x128xf32>
    %31 = tpu.matmul %28, %30, %cst_41 {dimension_numbers = #tpu.dot_dimension_numbers<[2], [0], [0, 1], [1], [0, 0, 0, 1, 1, 1], [], []>} : vector<2x1x128xbf16>, vector<128x128xbf16>, vector<2x1x128xf32> -> vector<2x1x128xf32>
    %32 = arith.addf %27, %31 : vector<2x1x128xf32>
    %c2_42 = arith.constant 2 : index
    %c1_43 = arith.constant 1 : index
    %c0_44 = arith.constant 0 : index
    %33 = vector.load %arg9[%c2_42, %c1_43, %c0_44] : memref<4x3x128xbf16, #tpu.memory_space<vmem>>, vector<2x1x128xbf16>
    %c2_45 = arith.constant 2 : index
    %c0_46 = arith.constant 0 : index
    %c0_47 = arith.constant 0 : index
    %34 = vector.load %arg4[%c2_45, %c0_46, %c0_47] : memref<3x128x128xbf16, #tpu.memory_space<vmem>>, vector<1x128x128xbf16>
    %35 = vector.shape_cast %34 : vector<1x128x128xbf16> to vector<128x128xbf16>
    %cst_48 = arith.constant dense<0.000000e+00> : vector<2x1x128xf32>
    %36 = tpu.matmul %33, %35, %cst_48 {dimension_numbers = #tpu.dot_dimension_numbers<[2], [0], [0, 1], [1], [0, 0, 0, 1, 1, 1], [], []>} : vector<2x1x128xbf16>, vector<128x128xbf16>, vector<2x1x128xf32> -> vector<2x1x128xf32>
    %37 = arith.addf %32, %36 : vector<2x1x128xf32>
    %c0_49 = arith.constant 0 : index
    %c0_50 = arith.constant 0 : index
    %c64 = arith.constant 64 : index
    %38 = vector.load %arg9[%c0_49, %c0_50, %c64] : memref<4x3x128xbf16, #tpu.memory_space<vmem>>, vector<2x1x64xbf16>
    %c0_51 = arith.constant 0 : index
    %c0_52 = arith.constant 0 : index
    %c0_53 = arith.constant 0 : index
    %c0_54 = arith.constant 0 : index
    %39 = vector.load %arg5[%c0_51, %c0_52, %c0_53, %c0_54] : memref<3x2x64x64xbf16, #tpu.memory_space<vmem>>, vector<1x1x64x64xbf16>
    %40 = vector.shape_cast %39 : vector<1x1x64x64xbf16> to vector<64x64xbf16>
    %cst_55 = arith.constant dense<0.000000e+00> : vector<2x1x64xf32>
    %41 = tpu.matmul %38, %40, %cst_55 {dimension_numbers = #tpu.dot_dimension_numbers<[2], [0], [0, 1], [1], [0, 0, 0, 1, 1, 1], [], []>} : vector<2x1x64xbf16>, vector<64x64xbf16>, vector<2x1x64xf32> -> vector<2x1x64xf32>
    %c0_56 = arith.constant 0 : index
    %c2_57 = arith.constant 2 : index
    %c0_58 = arith.constant 0 : index
    %42 = vector.load %arg9[%c0_56, %c2_57, %c0_58] : memref<4x3x128xbf16, #tpu.memory_space<vmem>>, vector<2x1x64xbf16>
    %c0_59 = arith.constant 0 : index
    %c1_60 = arith.constant 1 : index
    %c0_61 = arith.constant 0 : index
    %c0_62 = arith.constant 0 : index
    %43 = vector.load %arg5[%c0_59, %c1_60, %c0_61, %c0_62] : memref<3x2x64x64xbf16, #tpu.memory_space<vmem>>, vector<1x1x64x64xbf16>
    %44 = vector.shape_cast %43 : vector<1x1x64x64xbf16> to vector<64x64xbf16>
    %cst_63 = arith.constant dense<0.000000e+00> : vector<2x1x64xf32>
    %45 = tpu.matmul %42, %44, %cst_63 {dimension_numbers = #tpu.dot_dimension_numbers<[2], [0], [0, 1], [1], [0, 0, 0, 1, 1, 1], [], []>} : vector<2x1x64xbf16>, vector<64x64xbf16>, vector<2x1x64xf32> -> vector<2x1x64xf32>
    %c1_64 = arith.constant 1 : index
    %c0_65 = arith.constant 0 : index
    %c64_66 = arith.constant 64 : index
    %46 = vector.load %arg9[%c1_64, %c0_65, %c64_66] : memref<4x3x128xbf16, #tpu.memory_space<vmem>>, vector<2x1x64xbf16>
    %c1_67 = arith.constant 1 : index
    %c0_68 = arith.constant 0 : index
    %c0_69 = arith.constant 0 : index
    %c0_70 = arith.constant 0 : index
    %47 = vector.load %arg5[%c1_67, %c0_68, %c0_69, %c0_70] : memref<3x2x64x64xbf16, #tpu.memory_space<vmem>>, vector<1x1x64x64xbf16>
    %48 = vector.shape_cast %47 : vector<1x1x64x64xbf16> to vector<64x64xbf16>
    %cst_71 = arith.constant dense<0.000000e+00> : vector<2x1x64xf32>
    %49 = tpu.matmul %46, %48, %cst_71 {dimension_numbers = #tpu.dot_dimension_numbers<[2], [0], [0, 1], [1], [0, 0, 0, 1, 1, 1], [], []>} : vector<2x1x64xbf16>, vector<64x64xbf16>, vector<2x1x64xf32> -> vector<2x1x64xf32>
    %c1_72 = arith.constant 1 : index
    %c2_73 = arith.constant 2 : index
    %c0_74 = arith.constant 0 : index
    %50 = vector.load %arg9[%c1_72, %c2_73, %c0_74] : memref<4x3x128xbf16, #tpu.memory_space<vmem>>, vector<2x1x64xbf16>
    %c1_75 = arith.constant 1 : index
    %c1_76 = arith.constant 1 : index
    %c0_77 = arith.constant 0 : index
    %c0_78 = arith.constant 0 : index
    %51 = vector.load %arg5[%c1_75, %c1_76, %c0_77, %c0_78] : memref<3x2x64x64xbf16, #tpu.memory_space<vmem>>, vector<1x1x64x64xbf16>
    %52 = vector.shape_cast %51 : vector<1x1x64x64xbf16> to vector<64x64xbf16>
    %cst_79 = arith.constant dense<0.000000e+00> : vector<2x1x64xf32>
    %53 = tpu.matmul %50, %52, %cst_79 {dimension_numbers = #tpu.dot_dimension_numbers<[2], [0], [0, 1], [1], [0, 0, 0, 1, 1, 1], [], []>} : vector<2x1x64xbf16>, vector<64x64xbf16>, vector<2x1x64xf32> -> vector<2x1x64xf32>
    %54 = arith.addf %41, %49 : vector<2x1x64xf32>
    %55 = arith.addf %45, %53 : vector<2x1x64xf32>
    %c2_80 = arith.constant 2 : index
    %c0_81 = arith.constant 0 : index
    %c64_82 = arith.constant 64 : index
    %56 = vector.load %arg9[%c2_80, %c0_81, %c64_82] : memref<4x3x128xbf16, #tpu.memory_space<vmem>>, vector<2x1x64xbf16>
    %c2_83 = arith.constant 2 : index
    %c0_84 = arith.constant 0 : index
    %c0_85 = arith.constant 0 : index
    %c0_86 = arith.constant 0 : index
    %57 = vector.load %arg5[%c2_83, %c0_84, %c0_85, %c0_86] : memref<3x2x64x64xbf16, #tpu.memory_space<vmem>>, vector<1x1x64x64xbf16>
    %58 = vector.shape_cast %57 : vector<1x1x64x64xbf16> to vector<64x64xbf16>
    %cst_87 = arith.constant dense<0.000000e+00> : vector<2x1x64xf32>
    %59 = tpu.matmul %56, %58, %cst_87 {dimension_numbers = #tpu.dot_dimension_numbers<[2], [0], [0, 1], [1], [0, 0, 0, 1, 1, 1], [], []>} : vector<2x1x64xbf16>, vector<64x64xbf16>, vector<2x1x64xf32> -> vector<2x1x64xf32>
    %c2_88 = arith.constant 2 : index
    %c2_89 = arith.constant 2 : index
    %c0_90 = arith.constant 0 : index
    %60 = vector.load %arg9[%c2_88, %c2_89, %c0_90] : memref<4x3x128xbf16, #tpu.memory_space<vmem>>, vector<2x1x64xbf16>
    %c2_91 = arith.constant 2 : index
    %c1_92 = arith.constant 1 : index
    %c0_93 = arith.constant 0 : index
    %c0_94 = arith.constant 0 : index
    %61 = vector.load %arg5[%c2_91, %c1_92, %c0_93, %c0_94] : memref<3x2x64x64xbf16, #tpu.memory_space<vmem>>, vector<1x1x64x64xbf16>
    %62 = vector.shape_cast %61 : vector<1x1x64x64xbf16> to vector<64x64xbf16>
    %cst_95 = arith.constant dense<0.000000e+00> : vector<2x1x64xf32>
    %63 = tpu.matmul %60, %62, %cst_95 {dimension_numbers = #tpu.dot_dimension_numbers<[2], [0], [0, 1], [1], [0, 0, 0, 1, 1, 1], [], []>} : vector<2x1x64xbf16>, vector<64x64xbf16>, vector<2x1x64xf32> -> vector<2x1x64xf32>
    %64 = arith.addf %54, %59 : vector<2x1x64xf32>
    %65 = arith.addf %55, %63 : vector<2x1x64xf32>
    %66 = tpu.concatenate %64, %65 in 2 : vector<2x1x64xf32>, vector<2x1x64xf32> -> vector<2x1x128xf32>
    %67 = arith.addf %37, %66 : vector<2x1x128xf32>
    %68 = vector.shape_cast %8 : vector<1x128xf32> to vector<1x1x128xf32>
    %69 = vector.broadcast %68 : vector<1x1x128xf32> to vector<2x1x128xf32>
    %70 = arith.addf %67, %69 : vector<2x1x128xf32>
    %c0_96 = arith.constant 0 : index
    %c0_97 = arith.constant 0 : index
    %c0_98 = arith.constant 0 : index
    %c0_99 = arith.constant 0 : index
    %71 = vector.load %arg8[%c0_96, %c0_97, %c0_98, %c0_99] : memref<2x2x1x128xf32, #tpu.memory_space<vmem>>, vector<1x2x1x128xf32>
    %72 = vector.shape_cast %71 : vector<1x2x1x128xf32> to vector<2x1x128xf32>
    %73 = vector.shape_cast %70 : vector<2x1x128xf32> to vector<1x2x1x128xf32>
    tpu.vector_store %arg8[%c0_96, %c0_97, %c0_98, %c0_99], %73 {strides = array<i32>} : memref<2x2x1x128xf32, #tpu.memory_space<vmem>>, vector<1x2x1x128xf32>,
    %c1_100 = arith.constant 1 : index
    %c0_101 = arith.constant 0 : index
    %c0_102 = arith.constant 0 : index
    %c0_103 = arith.constant 0 : index
    %74 = vector.load %arg1[%c1_100, %c0_101, %c0_102, %c0_103] : memref<2x2x1x256xbf16, #tpu.memory_space<vmem>>, vector<1x2x1x256xbf16>
    %75 = vector.shape_cast %74 : vector<1x2x1x256xbf16> to vector<2x1x256xbf16>
    %76 = vector.extract_strided_slice %75 {offsets = [0, 0, 0], sizes = [2, 1, 128], strides = [1, 1, 1]} : vector<2x1x256xbf16> to vector<2x1x128xbf16>
    %cst_104 = arith.constant dense<0.000000e+00> : vector<2x1x64xf32>
    %77 = tpu.matmul %76, %6, %cst_104 {dimension_numbers = #tpu.dot_dimension_numbers<[2], [0], [0, 1], [1], [0, 0, 0, 1, 1, 1], [], []>} : vector<2x1x128xbf16>, vector<128x64xbf16>, vector<2x1x64xf32> -> vector<2x1x64xf32>
    %78 = vector.extract_strided_slice %75 {offsets = [0, 0, 128], sizes = [2, 1, 128], strides = [1, 1, 1]} : vector<2x1x256xbf16> to vector<2x1x128xbf16>
    %cst_105 = arith.constant dense<0.000000e+00> : vector<2x1x64xf32>
    %79 = tpu.matmul %78, %6, %cst_105 {dimension_numbers = #tpu.dot_dimension_numbers<[2], [0], [0, 1], [1], [0, 0, 0, 1, 1, 1], [], []>} : vector<2x1x128xbf16>, vector<128x64xbf16>, vector<2x1x64xf32> -> vector<2x1x64xf32>
    %80 = tpu.concatenate %77, %79 in 2 : vector<2x1x64xf32>, vector<2x1x64xf32> -> vector<2x1x128xf32>
    %81 = vector.shape_cast %7 : vector<1x128xf32> to vector<1x1x128xf32>
    %82 = vector.broadcast %81 : vector<1x1x128xf32> to vector<2x1x128xf32>
    %83 = arith.addf %80, %82 : vector<2x1x128xf32>
    %84 = arith.truncf %83 : vector<2x1x128xf32> to vector<2x1x128xbf16>
    %c1_106 = arith.constant 1 : index
    %c0_107 = arith.constant 0 : index
    %c0_108 = arith.constant 0 : index
    %c0_109 = arith.constant 0 : index
    %85 = vector.load %arg7[%c1_106, %c0_107, %c0_108, %c0_109] : memref<2x2x1x128xbf16, #tpu.memory_space<vmem>>, vector<1x2x1x128xbf16>
    %86 = vector.shape_cast %85 : vector<1x2x1x128xbf16> to vector<2x1x128xbf16>
    %87 = vector.shape_cast %84 : vector<2x1x128xbf16> to vector<1x2x1x128xbf16>
    tpu.vector_store %arg7[%c1_106, %c0_107, %c0_108, %c0_109], %87 {strides = array<i32>} : memref<2x2x1x128xbf16, #tpu.memory_space<vmem>>, vector<1x2x1x128xbf16>,
    %c1_110 = arith.constant 1 : index
    %c1_111 = arith.constant 1 : index
    %c0_112 = arith.constant 0 : index
    %88 = vector.load %arg9[%c1_110, %c1_111, %c0_112] : memref<4x3x128xbf16, #tpu.memory_space<vmem>>, vector<2x1x128xbf16>
    tpu.vector_store %arg9[%c1_110, %c1_111, %c0_112], %84 {strides = array<i32>} : memref<4x3x128xbf16, #tpu.memory_space<vmem>>, vector<2x1x128xbf16>,
    %c0_113 = arith.constant 0 : index
    %c1_114 = arith.constant 1 : index
    %c0_115 = arith.constant 0 : index
    %89 = vector.load %arg9[%c0_113, %c1_114, %c0_115] : memref<4x3x128xbf16, #tpu.memory_space<vmem>>, vector<2x1x128xbf16>
    %c0_116 = arith.constant 0 : index
    %c0_117 = arith.constant 0 : index
    %c0_118 = arith.constant 0 : index
    %90 = vector.load %arg4[%c0_116, %c0_117, %c0_118] : memref<3x128x128xbf16, #tpu.memory_space<vmem>>, vector<1x128x128xbf16>
    %91 = vector.shape_cast %90 : vector<1x128x128xbf16> to vector<128x128xbf16>
    %cst_119 = arith.constant dense<0.000000e+00> : vector<2x1x128xf32>
    %92 = tpu.matmul %89, %91, %cst_119 {dimension_numbers = #tpu.dot_dimension_numbers<[2], [0], [0, 1], [1], [0, 0, 0, 1, 1, 1], [], []>} : vector<2x1x128xbf16>, vector<128x128xbf16>, vector<2x1x128xf32> -> vector<2x1x128xf32>
    %c1_120 = arith.constant 1 : index
    %c1_121 = arith.constant 1 : index
    %c0_122 = arith.constant 0 : index
    %93 = vector.load %arg9[%c1_120, %c1_121, %c0_122] : memref<4x3x128xbf16, #tpu.memory_space<vmem>>, vector<2x1x128xbf16>
    %c1_123 = arith.constant 1 : index
    %c0_124 = arith.constant 0 : index
    %c0_125 = arith.constant 0 : index
    %94 = vector.load %arg4[%c1_123, %c0_124, %c0_125] : memref<3x128x128xbf16, #tpu.memory_space<vmem>>, vector<1x128x128xbf16>
    %95 = vector.shape_cast %94 : vector<1x128x128xbf16> to vector<128x128xbf16>
    %cst_126 = arith.constant dense<0.000000e+00> : vector<2x1x128xf32>
    %96 = tpu.matmul %93, %95, %cst_126 {dimension_numbers = #tpu.dot_dimension_numbers<[2], [0], [0, 1], [1], [0, 0, 0, 1, 1, 1], [], []>} : vector<2x1x128xbf16>, vector<128x128xbf16>, vector<2x1x128xf32> -> vector<2x1x128xf32>
    %97 = arith.addf %92, %96 : vector<2x1x128xf32>
    %c2_127 = arith.constant 2 : index
    %c1_128 = arith.constant 1 : index
    %c0_129 = arith.constant 0 : index
    %98 = vector.load %arg9[%c2_127, %c1_128, %c0_129] : memref<4x3x128xbf16, #tpu.memory_space<vmem>>, vector<2x1x128xbf16>
    %c2_130 = arith.constant 2 : index
    %c0_131 = arith.constant 0 : index
    %c0_132 = arith.constant 0 : index
    %99 = vector.load %arg4[%c2_130, %c0_131, %c0_132] : memref<3x128x128xbf16, #tpu.memory_space<vmem>>, vector<1x128x128xbf16>
    %100 = vector.shape_cast %99 : vector<1x128x128xbf16> to vector<128x128xbf16>
    %cst_133 = arith.constant dense<0.000000e+00> : vector<2x1x128xf32>
    %101 = tpu.matmul %98, %100, %cst_133 {dimension_numbers = #tpu.dot_dimension_numbers<[2], [0], [0, 1], [1], [0, 0, 0, 1, 1, 1], [], []>} : vector<2x1x128xbf16>, vector<128x128xbf16>, vector<2x1x128xf32> -> vector<2x1x128xf32>
    %102 = arith.addf %97, %101 : vector<2x1x128xf32>
    %c0_134 = arith.constant 0 : index
    %c0_135 = arith.constant 0 : index
    %c64_136 = arith.constant 64 : index
    %103 = vector.load %arg9[%c0_134, %c0_135, %c64_136] : memref<4x3x128xbf16, #tpu.memory_space<vmem>>, vector<2x1x64xbf16>
    %c0_137 = arith.constant 0 : index
    %c0_138 = arith.constant 0 : index
    %c0_139 = arith.constant 0 : index
    %c0_140 = arith.constant 0 : index
    %104 = vector.load %arg5[%c0_137, %c0_138, %c0_139, %c0_140] : memref<3x2x64x64xbf16, #tpu.memory_space<vmem>>, vector<1x1x64x64xbf16>
    %105 = vector.shape_cast %104 : vector<1x1x64x64xbf16> to vector<64x64xbf16>
    %cst_141 = arith.constant dense<0.000000e+00> : vector<2x1x64xf32>
    %106 = tpu.matmul %103, %105, %cst_141 {dimension_numbers = #tpu.dot_dimension_numbers<[2], [0], [0, 1], [1], [0, 0, 0, 1, 1, 1], [], []>} : vector<2x1x64xbf16>, vector<64x64xbf16>, vector<2x1x64xf32> -> vector<2x1x64xf32>
    %c0_142 = arith.constant 0 : index
    %c2_143 = arith.constant 2 : index
    %c0_144 = arith.constant 0 : index
    %107 = vector.load %arg9[%c0_142, %c2_143, %c0_144] : memref<4x3x128xbf16, #tpu.memory_space<vmem>>, vector<2x1x64xbf16>
    %c0_145 = arith.constant 0 : index
    %c1_146 = arith.constant 1 : index
    %c0_147 = arith.constant 0 : index
    %c0_148 = arith.constant 0 : index
    %108 = vector.load %arg5[%c0_145, %c1_146, %c0_147, %c0_148] : memref<3x2x64x64xbf16, #tpu.memory_space<vmem>>, vector<1x1x64x64xbf16>
    %109 = vector.shape_cast %108 : vector<1x1x64x64xbf16> to vector<64x64xbf16>
    %cst_149 = arith.constant dense<0.000000e+00> : vector<2x1x64xf32>
    %110 = tpu.matmul %107, %109, %cst_149 {dimension_numbers = #tpu.dot_dimension_numbers<[2], [0], [0, 1], [1], [0, 0, 0, 1, 1, 1], [], []>} : vector<2x1x64xbf16>, vector<64x64xbf16>, vector<2x1x64xf32> -> vector<2x1x64xf32>
    %c1_150 = arith.constant 1 : index
    %c0_151 = arith.constant 0 : index
    %c64_152 = arith.constant 64 : index
    %111 = vector.load %arg9[%c1_150, %c0_151, %c64_152] : memref<4x3x128xbf16, #tpu.memory_space<vmem>>, vector<2x1x64xbf16>
    %c1_153 = arith.constant 1 : index
    %c0_154 = arith.constant 0 : index
    %c0_155 = arith.constant 0 : index
    %c0_156 = arith.constant 0 : index
    %112 = vector.load %arg5[%c1_153, %c0_154, %c0_155, %c0_156] : memref<3x2x64x64xbf16, #tpu.memory_space<vmem>>, vector<1x1x64x64xbf16>
    %113 = vector.shape_cast %112 : vector<1x1x64x64xbf16> to vector<64x64xbf16>
    %cst_157 = arith.constant dense<0.000000e+00> : vector<2x1x64xf32>
    %114 = tpu.matmul %111, %113, %cst_157 {dimension_numbers = #tpu.dot_dimension_numbers<[2], [0], [0, 1], [1], [0, 0, 0, 1, 1, 1], [], []>} : vector<2x1x64xbf16>, vector<64x64xbf16>, vector<2x1x64xf32> -> vector<2x1x64xf32>
    %c1_158 = arith.constant 1 : index
    %c2_159 = arith.constant 2 : index
    %c0_160 = arith.constant 0 : index
    %115 = vector.load %arg9[%c1_158, %c2_159, %c0_160] : memref<4x3x128xbf16, #tpu.memory_space<vmem>>, vector<2x1x64xbf16>
    %c1_161 = arith.constant 1 : index
    %c1_162 = arith.constant 1 : index
    %c0_163 = arith.constant 0 : index
    %c0_164 = arith.constant 0 : index
    %116 = vector.load %arg5[%c1_161, %c1_162, %c0_163, %c0_164] : memref<3x2x64x64xbf16, #tpu.memory_space<vmem>>, vector<1x1x64x64xbf16>
    %117 = vector.shape_cast %116 : vector<1x1x64x64xbf16> to vector<64x64xbf16>
    %cst_165 = arith.constant dense<0.000000e+00> : vector<2x1x64xf32>
    %118 = tpu.matmul %115, %117, %cst_165 {dimension_numbers = #tpu.dot_dimension_numbers<[2], [0], [0, 1], [1], [0, 0, 0, 1, 1, 1], [], []>} : vector<2x1x64xbf16>, vector<64x64xbf16>, vector<2x1x64xf32> -> vector<2x1x64xf32>
    %119 = arith.addf %106, %114 : vector<2x1x64xf32>
    %120 = arith.addf %110, %118 : vector<2x1x64xf32>
    %c2_166 = arith.constant 2 : index
    %c0_167 = arith.constant 0 : index
    %c64_168 = arith.constant 64 : index
    %121 = vector.load %arg9[%c2_166, %c0_167, %c64_168] : memref<4x3x128xbf16, #tpu.memory_space<vmem>>, vector<2x1x64xbf16>
    %c2_169 = arith.constant 2 : index
    %c0_170 = arith.constant 0 : index
    %c0_171 = arith.constant 0 : index
    %c0_172 = arith.constant 0 : index
    %122 = vector.load %arg5[%c2_169, %c0_170, %c0_171, %c0_172] : memref<3x2x64x64xbf16, #tpu.memory_space<vmem>>, vector<1x1x64x64xbf16>
    %123 = vector.shape_cast %122 : vector<1x1x64x64xbf16> to vector<64x64xbf16>
    %cst_173 = arith.constant dense<0.000000e+00> : vector<2x1x64xf32>
    %124 = tpu.matmul %121, %123, %cst_173 {dimension_numbers = #tpu.dot_dimension_numbers<[2], [0], [0, 1], [1], [0, 0, 0, 1, 1, 1], [], []>} : vector<2x1x64xbf16>, vector<64x64xbf16>, vector<2x1x64xf32> -> vector<2x1x64xf32>
    %c2_174 = arith.constant 2 : index
    %c2_175 = arith.constant 2 : index
    %c0_176 = arith.constant 0 : index
    %125 = vector.load %arg9[%c2_174, %c2_175, %c0_176] : memref<4x3x128xbf16, #tpu.memory_space<vmem>>, vector<2x1x64xbf16>
    %c2_177 = arith.constant 2 : index
    %c1_178 = arith.constant 1 : index
    %c0_179 = arith.constant 0 : index
    %c0_180 = arith.constant 0 : index
    %126 = vector.load %arg5[%c2_177, %c1_178, %c0_179, %c0_180] : memref<3x2x64x64xbf16, #tpu.memory_space<vmem>>, vector<1x1x64x64xbf16>
    %127 = vector.shape_cast %126 : vector<1x1x64x64xbf16> to vector<64x64xbf16>
    %cst_181 = arith.constant dense<0.000000e+00> : vector<2x1x64xf32>
    %128 = tpu.matmul %125, %127, %cst_181 {dimension_numbers = #tpu.dot_dimension_numbers<[2], [0], [0, 1], [1], [0, 0, 0, 1, 1, 1], [], []>} : vector<2x1x64xbf16>, vector<64x64xbf16>, vector<2x1x64xf32> -> vector<2x1x64xf32>
    %129 = arith.addf %119, %124 : vector<2x1x64xf32>
    %130 = arith.addf %120, %128 : vector<2x1x64xf32>
    %131 = tpu.concatenate %129, %130 in 2 : vector<2x1x64xf32>, vector<2x1x64xf32> -> vector<2x1x128xf32>
    %132 = arith.addf %102, %131 : vector<2x1x128xf32>
    %133 = vector.shape_cast %8 : vector<1x128xf32> to vector<1x1x128xf32>
    %134 = vector.broadcast %133 : vector<1x1x128xf32> to vector<2x1x128xf32>
    %135 = arith.addf %132, %134 : vector<2x1x128xf32>
    %c1_182 = arith.constant 1 : index
    %c0_183 = arith.constant 0 : index
    %c0_184 = arith.constant 0 : index
    %c0_185 = arith.constant 0 : index
    %136 = vector.load %arg8[%c1_182, %c0_183, %c0_184, %c0_185] : memref<2x2x1x128xf32, #tpu.memory_space<vmem>>, vector<1x2x1x128xf32>
    %137 = vector.shape_cast %136 : vector<1x2x1x128xf32> to vector<2x1x128xf32>
    %138 = vector.shape_cast %135 : vector<2x1x128xf32> to vector<1x2x1x128xf32>
    tpu.vector_store %arg8[%c1_182, %c0_183, %c0_184, %c0_185], %138 {strides = array<i32>} : memref<2x2x1x128xf32, #tpu.memory_space<vmem>>, vector<1x2x1x128xf32>,
    return
  }
  func.func @transform_0(%arg0: i32) -> (i32, i32, i32, i32) {
    %c0_i32 = arith.constant 0 : i32
    %c0_i32_0 = arith.constant 0 : i32
    %c0_i32_1 = arith.constant 0 : i32
    %c0_i32_2 = arith.constant 0 : i32
    return %arg0, %c0_i32, %c0_i32_0, %c0_i32_1 : i32, i32, i32, i32
  }
  func.func @transform_1(%arg0: i32) -> (i32, i32) {
    %c0_i32 = arith.constant 0 : i32
    %c0_i32_0 = arith.constant 0 : i32
    %c0_i32_1 = arith.constant 0 : i32
    return %c0_i32, %c0_i32_0 : i32, i32
  }
  func.func @transform_2(%arg0: i32) -> (i32, i32) {
    %c0_i32 = arith.constant 0 : i32
    %c0_i32_0 = arith.constant 0 : i32
    %c0_i32_1 = arith.constant 0 : i32
    return %c0_i32, %c0_i32_0 : i32, i32
  }
  func.func @transform_3(%arg0: i32) -> (i32, i32, i32) {
    %c0_i32 = arith.constant 0 : i32
    %c0_i32_0 = arith.constant 0 : i32
    %c0_i32_1 = arith.constant 0 : i32
    %c0_i32_2 = arith.constant 0 : i32
    return %c0_i32, %c0_i32_0, %c0_i32_1 : i32, i32, i32
  }
  func.func @transform_4(%arg0: i32) -> (i32, i32, i32, i32) {
    %c0_i32 = arith.constant 0 : i32
    %c0_i32_0 = arith.constant 0 : i32
    %c0_i32_1 = arith.constant 0 : i32
    %c0_i32_2 = arith.constant 0 : i32
    %c0_i32_3 = arith.constant 0 : i32
    return %c0_i32, %c0_i32_0, %c0_i32_1, %c0_i32_2 : i32, i32, i32, i32
  }
  func.func @transform_5(%arg0: i32) -> (i32, i32) {
    %c0_i32 = arith.constant 0 : i32
    %c0_i32_0 = arith.constant 0 : i32
    %c0_i32_1 = arith.constant 0 : i32
    return %c0_i32, %c0_i32_0 : i32, i32
  }
  func.func @transform_6(%arg0: i32) -> (i32, i32, i32, i32) {
    %c0_i32 = arith.constant 0 : i32
    %c0_i32_0 = arith.constant 0 : i32
    %c0_i32_1 = arith.constant 0 : i32
    %c0_i32_2 = arith.constant 0 : i32
    return %arg0, %c0_i32, %c0_i32_0, %c0_i32_1 : i32, i32, i32, i32
  }
  func.func @transform_7(%arg0: i32) -> (i32, i32, i32, i32) {
    %c0_i32 = arith.constant 0 : i32
    %c0_i32_0 = arith.constant 0 : i32
    %c0_i32_1 = arith.constant 0 : i32
    %c0_i32_2 = arith.constant 0 : i32
    return %arg0, %c0_i32, %c0_i32_0, %c0_i32_1 : i32, i32, i32, i32
  }
}

module attributes {stable_mosaic.version = 11 : i64} {
  func.func @_fpn_level_kernel(%arg0: i32, %arg1: memref<2x4x2x128xbf16, #tpu.memory_space<vmem>>, %arg2: memref<2x2x2x64xbf16, #tpu.memory_space<vmem>>, %arg3: memref<64x64xbf16, #tpu.memory_space<vmem>>, %arg4: memref<1x128xf32, #tpu.memory_space<vmem>>, %arg5: memref<3x128x128xbf16, #tpu.memory_space<vmem>>, %arg6: memref<3x2x64x64xbf16, #tpu.memory_space<vmem>>, %arg7: memref<1x128xf32, #tpu.memory_space<vmem>>, %arg8: memref<2x4x2x128xbf16, #tpu.memory_space<vmem>>, %arg9: memref<2x4x2x128xf32, #tpu.memory_space<vmem>>, %arg10: memref<6x4x128xbf16, #tpu.memory_space<vmem>>) attributes {dimension_semantics = [#tpu.dimension_semantics<parallel>], iteration_bounds = array<i64: 1>, scalar_prefetch = 0 : i64, scratch_operands = 1 : i64, tpu.core_type = #tpu.core_type<tc>, window_params = [{transform_indices = @transform_0, window_bounds = array<i64: 2, 4, 2, 128>}, {transform_indices = @transform_1, window_bounds = array<i64: 2, 2, 2, 64>}, {pipeline_mode = #tpu.pipeline_mode<synchronous>, transform_indices = @transform_2, window_bounds = array<i64: 64, 64>}, {pipeline_mode = #tpu.pipeline_mode<synchronous>, transform_indices = @transform_3, window_bounds = array<i64: 1, 128>}, {pipeline_mode = #tpu.pipeline_mode<synchronous>, transform_indices = @transform_4, window_bounds = array<i64: 3, 128, 128>}, {pipeline_mode = #tpu.pipeline_mode<synchronous>, transform_indices = @transform_5, window_bounds = array<i64: 3, 2, 64, 64>}, {pipeline_mode = #tpu.pipeline_mode<synchronous>, transform_indices = @transform_6, window_bounds = array<i64: 1, 128>}, {transform_indices = @transform_7, window_bounds = array<i64: 2, 4, 2, 128>}, {transform_indices = @transform_8, window_bounds = array<i64: 2, 4, 2, 128>}]} {
    %cst = arith.constant 0.000000e+00 : bf16
    %0 = vector.broadcast %cst : bf16 to vector<1x4x128xbf16>
    %cst_0 = arith.constant 0.000000e+00 : bf16
    %1 = vector.broadcast %cst_0 : bf16 to vector<6x1x128xbf16>
    %c0 = arith.constant 0 : index
    %c0_1 = arith.constant 0 : index
    %c0_2 = arith.constant 0 : index
    %2 = vector.load %arg10[%c0, %c0_1, %c0_2] : memref<6x4x128xbf16, #tpu.memory_space<vmem>>, vector<1x4x128xbf16>
    tpu.vector_store %arg10[%c0, %c0_1, %c0_2], %0 {strides = array<i32>} : memref<6x4x128xbf16, #tpu.memory_space<vmem>>, vector<1x4x128xbf16>,
    %c5 = arith.constant 5 : index
    %c0_3 = arith.constant 0 : index
    %c0_4 = arith.constant 0 : index
    %3 = vector.load %arg10[%c5, %c0_3, %c0_4] : memref<6x4x128xbf16, #tpu.memory_space<vmem>>, vector<1x4x128xbf16>
    tpu.vector_store %arg10[%c5, %c0_3, %c0_4], %0 {strides = array<i32>} : memref<6x4x128xbf16, #tpu.memory_space<vmem>>, vector<1x4x128xbf16>,
    %c0_5 = arith.constant 0 : index
    %c0_6 = arith.constant 0 : index
    %c0_7 = arith.constant 0 : index
    %4 = vector.load %arg10[%c0_5, %c0_6, %c0_7] : memref<6x4x128xbf16, #tpu.memory_space<vmem>>, vector<6x1x128xbf16>
    tpu.vector_store %arg10[%c0_5, %c0_6, %c0_7], %1 {strides = array<i32>} : memref<6x4x128xbf16, #tpu.memory_space<vmem>>, vector<6x1x128xbf16>,
    %c0_8 = arith.constant 0 : index
    %c3 = arith.constant 3 : index
    %c0_9 = arith.constant 0 : index
    %5 = vector.load %arg10[%c0_8, %c3, %c0_9] : memref<6x4x128xbf16, #tpu.memory_space<vmem>>, vector<6x1x128xbf16>
    tpu.vector_store %arg10[%c0_8, %c3, %c0_9], %1 {strides = array<i32>} : memref<6x4x128xbf16, #tpu.memory_space<vmem>>, vector<6x1x128xbf16>,
    %c0_10 = arith.constant 0 : index
    %c0_11 = arith.constant 0 : index
    %6 = vector.load %arg3[%c0_10, %c0_11] : memref<64x64xbf16, #tpu.memory_space<vmem>>, vector<64x64xbf16>
    %c0_12 = arith.constant 0 : index
    %c0_13 = arith.constant 0 : index
    %7 = vector.load %arg4[%c0_12, %c0_13] : memref<1x128xf32, #tpu.memory_space<vmem>>, vector<1x128xf32>
    %c0_14 = arith.constant 0 : index
    %c0_15 = arith.constant 0 : index
    %8 = vector.load %arg7[%c0_14, %c0_15] : memref<1x128xf32, #tpu.memory_space<vmem>>, vector<1x128xf32>
    %c0_16 = arith.constant 0 : index
    %c0_17 = arith.constant 0 : index
    %c0_18 = arith.constant 0 : index
    %c0_19 = arith.constant 0 : index
    %9 = vector.load %arg1[%c0_16, %c0_17, %c0_18, %c0_19] : memref<2x4x2x128xbf16, #tpu.memory_space<vmem>>, vector<1x4x2x128xbf16>
    %10 = vector.shape_cast %9 : vector<1x4x2x128xbf16> to vector<4x2x128xbf16>
    %11 = vector.extract_strided_slice %10 {offsets = [0, 0, 0], sizes = [4, 2, 64], strides = [1, 1, 1]} : vector<4x2x128xbf16> to vector<4x2x64xbf16>
    %cst_20 = arith.constant dense<0.000000e+00> : vector<4x2x64xf32>
    %12 = tpu.matmul %11, %6, %cst_20 {dimension_numbers = #tpu.dot_dimension_numbers<[2], [0], [0, 1], [1], [0, 0, 0, 1, 1, 1], [], []>} : vector<4x2x64xbf16>, vector<64x64xbf16>, vector<4x2x64xf32> -> vector<4x2x64xf32>
    %13 = vector.extract_strided_slice %10 {offsets = [0, 0, 64], sizes = [4, 2, 64], strides = [1, 1, 1]} : vector<4x2x128xbf16> to vector<4x2x64xbf16>
    %cst_21 = arith.constant dense<0.000000e+00> : vector<4x2x64xf32>
    %14 = tpu.matmul %13, %6, %cst_21 {dimension_numbers = #tpu.dot_dimension_numbers<[2], [0], [0, 1], [1], [0, 0, 0, 1, 1, 1], [], []>} : vector<4x2x64xbf16>, vector<64x64xbf16>, vector<4x2x64xf32> -> vector<4x2x64xf32>
    %15 = tpu.concatenate %12, %14 in 2 : vector<4x2x64xf32>, vector<4x2x64xf32> -> vector<4x2x128xf32>
    %16 = vector.shape_cast %7 : vector<1x128xf32> to vector<1x1x128xf32>
    %17 = vector.broadcast %16 : vector<1x1x128xf32> to vector<4x2x128xf32>
    %18 = arith.addf %15, %17 : vector<4x2x128xf32>
    %c0_22 = arith.constant 0 : index
    %c0_23 = arith.constant 0 : index
    %c0_24 = arith.constant 0 : index
    %c0_25 = arith.constant 0 : index
    %19 = vector.load %arg2[%c0_22, %c0_23, %c0_24, %c0_25] : memref<2x2x2x64xbf16, #tpu.memory_space<vmem>>, vector<1x2x2x64xbf16>
    %20 = vector.shape_cast %19 : vector<1x2x2x64xbf16> to vector<2x2x64xbf16>
    %21 = tpu.concatenate %20, %20 in 2 : vector<2x2x64xbf16>, vector<2x2x64xbf16> -> vector<2x2x128xbf16>
    %22 = vector.shape_cast %21 : vector<2x2x128xbf16> to vector<2x1x2x128xbf16>
    %23 = vector.broadcast %22 : vector<2x1x2x128xbf16> to vector<2x2x2x128xbf16>
    %24 = vector.shape_cast %23 : vector<2x2x2x128xbf16> to vector<4x2x128xbf16>
    %25 = arith.extf %24 : vector<4x2x128xbf16> to vector<4x2x128xf32>
    %26 = arith.addf %18, %25 : vector<4x2x128xf32>
    %27 = arith.truncf %26 : vector<4x2x128xf32> to vector<4x2x128xbf16>
    %c0_26 = arith.constant 0 : index
    %c0_27 = arith.constant 0 : index
    %c0_28 = arith.constant 0 : index
    %c0_29 = arith.constant 0 : index
    %28 = vector.load %arg8[%c0_26, %c0_27, %c0_28, %c0_29] : memref<2x4x2x128xbf16, #tpu.memory_space<vmem>>, vector<1x4x2x128xbf16>
    %29 = vector.shape_cast %28 : vector<1x4x2x128xbf16> to vector<4x2x128xbf16>
    %30 = vector.shape_cast %27 : vector<4x2x128xbf16> to vector<1x4x2x128xbf16>
    tpu.vector_store %arg8[%c0_26, %c0_27, %c0_28, %c0_29], %30 {strides = array<i32>} : memref<2x4x2x128xbf16, #tpu.memory_space<vmem>>, vector<1x4x2x128xbf16>,
    %c1 = arith.constant 1 : index
    %c1_30 = arith.constant 1 : index
    %c0_31 = arith.constant 0 : index
    %31 = vector.load %arg10[%c1, %c1_30, %c0_31] : memref<6x4x128xbf16, #tpu.memory_space<vmem>>, vector<4x2x128xbf16>
    tpu.vector_store %arg10[%c1, %c1_30, %c0_31], %27 {strides = array<i32>} : memref<6x4x128xbf16, #tpu.memory_space<vmem>>, vector<4x2x128xbf16>,
    %c0_32 = arith.constant 0 : index
    %c1_33 = arith.constant 1 : index
    %c0_34 = arith.constant 0 : index
    %32 = vector.load %arg10[%c0_32, %c1_33, %c0_34] : memref<6x4x128xbf16, #tpu.memory_space<vmem>>, vector<4x2x128xbf16>
    %c0_35 = arith.constant 0 : index
    %c0_36 = arith.constant 0 : index
    %c0_37 = arith.constant 0 : index
    %33 = vector.load %arg5[%c0_35, %c0_36, %c0_37] : memref<3x128x128xbf16, #tpu.memory_space<vmem>>, vector<1x128x128xbf16>
    %34 = vector.shape_cast %33 : vector<1x128x128xbf16> to vector<128x128xbf16>
    %cst_38 = arith.constant dense<0.000000e+00> : vector<4x2x128xf32>
    %35 = tpu.matmul %32, %34, %cst_38 {dimension_numbers = #tpu.dot_dimension_numbers<[2], [0], [0, 1], [1], [0, 0, 0, 1, 1, 1], [], []>} : vector<4x2x128xbf16>, vector<128x128xbf16>, vector<4x2x128xf32> -> vector<4x2x128xf32>
    %c1_39 = arith.constant 1 : index
    %c1_40 = arith.constant 1 : index
    %c0_41 = arith.constant 0 : index
    %36 = vector.load %arg10[%c1_39, %c1_40, %c0_41] : memref<6x4x128xbf16, #tpu.memory_space<vmem>>, vector<4x2x128xbf16>
    %c1_42 = arith.constant 1 : index
    %c0_43 = arith.constant 0 : index
    %c0_44 = arith.constant 0 : index
    %37 = vector.load %arg5[%c1_42, %c0_43, %c0_44] : memref<3x128x128xbf16, #tpu.memory_space<vmem>>, vector<1x128x128xbf16>
    %38 = vector.shape_cast %37 : vector<1x128x128xbf16> to vector<128x128xbf16>
    %cst_45 = arith.constant dense<0.000000e+00> : vector<4x2x128xf32>
    %39 = tpu.matmul %36, %38, %cst_45 {dimension_numbers = #tpu.dot_dimension_numbers<[2], [0], [0, 1], [1], [0, 0, 0, 1, 1, 1], [], []>} : vector<4x2x128xbf16>, vector<128x128xbf16>, vector<4x2x128xf32> -> vector<4x2x128xf32>
    %40 = arith.addf %35, %39 : vector<4x2x128xf32>
    %c2 = arith.constant 2 : index
    %c1_46 = arith.constant 1 : index
    %c0_47 = arith.constant 0 : index
    %41 = vector.load %arg10[%c2, %c1_46, %c0_47] : memref<6x4x128xbf16, #tpu.memory_space<vmem>>, vector<4x2x128xbf16>
    %c2_48 = arith.constant 2 : index
    %c0_49 = arith.constant 0 : index
    %c0_50 = arith.constant 0 : index
    %42 = vector.load %arg5[%c2_48, %c0_49, %c0_50] : memref<3x128x128xbf16, #tpu.memory_space<vmem>>, vector<1x128x128xbf16>
    %43 = vector.shape_cast %42 : vector<1x128x128xbf16> to vector<128x128xbf16>
    %cst_51 = arith.constant dense<0.000000e+00> : vector<4x2x128xf32>
    %44 = tpu.matmul %41, %43, %cst_51 {dimension_numbers = #tpu.dot_dimension_numbers<[2], [0], [0, 1], [1], [0, 0, 0, 1, 1, 1], [], []>} : vector<4x2x128xbf16>, vector<128x128xbf16>, vector<4x2x128xf32> -> vector<4x2x128xf32>
    %45 = arith.addf %40, %44 : vector<4x2x128xf32>
    %c0_52 = arith.constant 0 : index
    %c0_53 = arith.constant 0 : index
    %c64 = arith.constant 64 : index
    %46 = vector.load %arg10[%c0_52, %c0_53, %c64] : memref<6x4x128xbf16, #tpu.memory_space<vmem>>, vector<4x2x64xbf16>
    %c0_54 = arith.constant 0 : index
    %c0_55 = arith.constant 0 : index
    %c0_56 = arith.constant 0 : index
    %c0_57 = arith.constant 0 : index
    %47 = vector.load %arg6[%c0_54, %c0_55, %c0_56, %c0_57] : memref<3x2x64x64xbf16, #tpu.memory_space<vmem>>, vector<1x1x64x64xbf16>
    %48 = vector.shape_cast %47 : vector<1x1x64x64xbf16> to vector<64x64xbf16>
    %cst_58 = arith.constant dense<0.000000e+00> : vector<4x2x64xf32>
    %49 = tpu.matmul %46, %48, %cst_58 {dimension_numbers = #tpu.dot_dimension_numbers<[2], [0], [0, 1], [1], [0, 0, 0, 1, 1, 1], [], []>} : vector<4x2x64xbf16>, vector<64x64xbf16>, vector<4x2x64xf32> -> vector<4x2x64xf32>
    %c0_59 = arith.constant 0 : index
    %c2_60 = arith.constant 2 : index
    %c0_61 = arith.constant 0 : index
    %50 = vector.load %arg10[%c0_59, %c2_60, %c0_61] : memref<6x4x128xbf16, #tpu.memory_space<vmem>>, vector<4x2x64xbf16>
    %c0_62 = arith.constant 0 : index
    %c1_63 = arith.constant 1 : index
    %c0_64 = arith.constant 0 : index
    %c0_65 = arith.constant 0 : index
    %51 = vector.load %arg6[%c0_62, %c1_63, %c0_64, %c0_65] : memref<3x2x64x64xbf16, #tpu.memory_space<vmem>>, vector<1x1x64x64xbf16>
    %52 = vector.shape_cast %51 : vector<1x1x64x64xbf16> to vector<64x64xbf16>
    %cst_66 = arith.constant dense<0.000000e+00> : vector<4x2x64xf32>
    %53 = tpu.matmul %50, %52, %cst_66 {dimension_numbers = #tpu.dot_dimension_numbers<[2], [0], [0, 1], [1], [0, 0, 0, 1, 1, 1], [], []>} : vector<4x2x64xbf16>, vector<64x64xbf16>, vector<4x2x64xf32> -> vector<4x2x64xf32>
    %c1_67 = arith.constant 1 : index
    %c0_68 = arith.constant 0 : index
    %c64_69 = arith.constant 64 : index
    %54 = vector.load %arg10[%c1_67, %c0_68, %c64_69] : memref<6x4x128xbf16, #tpu.memory_space<vmem>>, vector<4x2x64xbf16>
    %c1_70 = arith.constant 1 : index
    %c0_71 = arith.constant 0 : index
    %c0_72 = arith.constant 0 : index
    %c0_73 = arith.constant 0 : index
    %55 = vector.load %arg6[%c1_70, %c0_71, %c0_72, %c0_73] : memref<3x2x64x64xbf16, #tpu.memory_space<vmem>>, vector<1x1x64x64xbf16>
    %56 = vector.shape_cast %55 : vector<1x1x64x64xbf16> to vector<64x64xbf16>
    %cst_74 = arith.constant dense<0.000000e+00> : vector<4x2x64xf32>
    %57 = tpu.matmul %54, %56, %cst_74 {dimension_numbers = #tpu.dot_dimension_numbers<[2], [0], [0, 1], [1], [0, 0, 0, 1, 1, 1], [], []>} : vector<4x2x64xbf16>, vector<64x64xbf16>, vector<4x2x64xf32> -> vector<4x2x64xf32>
    %c1_75 = arith.constant 1 : index
    %c2_76 = arith.constant 2 : index
    %c0_77 = arith.constant 0 : index
    %58 = vector.load %arg10[%c1_75, %c2_76, %c0_77] : memref<6x4x128xbf16, #tpu.memory_space<vmem>>, vector<4x2x64xbf16>
    %c1_78 = arith.constant 1 : index
    %c1_79 = arith.constant 1 : index
    %c0_80 = arith.constant 0 : index
    %c0_81 = arith.constant 0 : index
    %59 = vector.load %arg6[%c1_78, %c1_79, %c0_80, %c0_81] : memref<3x2x64x64xbf16, #tpu.memory_space<vmem>>, vector<1x1x64x64xbf16>
    %60 = vector.shape_cast %59 : vector<1x1x64x64xbf16> to vector<64x64xbf16>
    %cst_82 = arith.constant dense<0.000000e+00> : vector<4x2x64xf32>
    %61 = tpu.matmul %58, %60, %cst_82 {dimension_numbers = #tpu.dot_dimension_numbers<[2], [0], [0, 1], [1], [0, 0, 0, 1, 1, 1], [], []>} : vector<4x2x64xbf16>, vector<64x64xbf16>, vector<4x2x64xf32> -> vector<4x2x64xf32>
    %62 = arith.addf %49, %57 : vector<4x2x64xf32>
    %63 = arith.addf %53, %61 : vector<4x2x64xf32>
    %c2_83 = arith.constant 2 : index
    %c0_84 = arith.constant 0 : index
    %c64_85 = arith.constant 64 : index
    %64 = vector.load %arg10[%c2_83, %c0_84, %c64_85] : memref<6x4x128xbf16, #tpu.memory_space<vmem>>, vector<4x2x64xbf16>
    %c2_86 = arith.constant 2 : index
    %c0_87 = arith.constant 0 : index
    %c0_88 = arith.constant 0 : index
    %c0_89 = arith.constant 0 : index
    %65 = vector.load %arg6[%c2_86, %c0_87, %c0_88, %c0_89] : memref<3x2x64x64xbf16, #tpu.memory_space<vmem>>, vector<1x1x64x64xbf16>
    %66 = vector.shape_cast %65 : vector<1x1x64x64xbf16> to vector<64x64xbf16>
    %cst_90 = arith.constant dense<0.000000e+00> : vector<4x2x64xf32>
    %67 = tpu.matmul %64, %66, %cst_90 {dimension_numbers = #tpu.dot_dimension_numbers<[2], [0], [0, 1], [1], [0, 0, 0, 1, 1, 1], [], []>} : vector<4x2x64xbf16>, vector<64x64xbf16>, vector<4x2x64xf32> -> vector<4x2x64xf32>
    %c2_91 = arith.constant 2 : index
    %c2_92 = arith.constant 2 : index
    %c0_93 = arith.constant 0 : index
    %68 = vector.load %arg10[%c2_91, %c2_92, %c0_93] : memref<6x4x128xbf16, #tpu.memory_space<vmem>>, vector<4x2x64xbf16>
    %c2_94 = arith.constant 2 : index
    %c1_95 = arith.constant 1 : index
    %c0_96 = arith.constant 0 : index
    %c0_97 = arith.constant 0 : index
    %69 = vector.load %arg6[%c2_94, %c1_95, %c0_96, %c0_97] : memref<3x2x64x64xbf16, #tpu.memory_space<vmem>>, vector<1x1x64x64xbf16>
    %70 = vector.shape_cast %69 : vector<1x1x64x64xbf16> to vector<64x64xbf16>
    %cst_98 = arith.constant dense<0.000000e+00> : vector<4x2x64xf32>
    %71 = tpu.matmul %68, %70, %cst_98 {dimension_numbers = #tpu.dot_dimension_numbers<[2], [0], [0, 1], [1], [0, 0, 0, 1, 1, 1], [], []>} : vector<4x2x64xbf16>, vector<64x64xbf16>, vector<4x2x64xf32> -> vector<4x2x64xf32>
    %72 = arith.addf %62, %67 : vector<4x2x64xf32>
    %73 = arith.addf %63, %71 : vector<4x2x64xf32>
    %74 = tpu.concatenate %72, %73 in 2 : vector<4x2x64xf32>, vector<4x2x64xf32> -> vector<4x2x128xf32>
    %75 = arith.addf %45, %74 : vector<4x2x128xf32>
    %76 = vector.shape_cast %8 : vector<1x128xf32> to vector<1x1x128xf32>
    %77 = vector.broadcast %76 : vector<1x1x128xf32> to vector<4x2x128xf32>
    %78 = arith.addf %75, %77 : vector<4x2x128xf32>
    %c0_99 = arith.constant 0 : index
    %c0_100 = arith.constant 0 : index
    %c0_101 = arith.constant 0 : index
    %c0_102 = arith.constant 0 : index
    %79 = vector.load %arg9[%c0_99, %c0_100, %c0_101, %c0_102] : memref<2x4x2x128xf32, #tpu.memory_space<vmem>>, vector<1x4x2x128xf32>
    %80 = vector.shape_cast %79 : vector<1x4x2x128xf32> to vector<4x2x128xf32>
    %81 = vector.shape_cast %78 : vector<4x2x128xf32> to vector<1x4x2x128xf32>
    tpu.vector_store %arg9[%c0_99, %c0_100, %c0_101, %c0_102], %81 {strides = array<i32>} : memref<2x4x2x128xf32, #tpu.memory_space<vmem>>, vector<1x4x2x128xf32>,
    %c1_103 = arith.constant 1 : index
    %c0_104 = arith.constant 0 : index
    %c0_105 = arith.constant 0 : index
    %c0_106 = arith.constant 0 : index
    %82 = vector.load %arg1[%c1_103, %c0_104, %c0_105, %c0_106] : memref<2x4x2x128xbf16, #tpu.memory_space<vmem>>, vector<1x4x2x128xbf16>
    %83 = vector.shape_cast %82 : vector<1x4x2x128xbf16> to vector<4x2x128xbf16>
    %84 = vector.extract_strided_slice %83 {offsets = [0, 0, 0], sizes = [4, 2, 64], strides = [1, 1, 1]} : vector<4x2x128xbf16> to vector<4x2x64xbf16>
    %cst_107 = arith.constant dense<0.000000e+00> : vector<4x2x64xf32>
    %85 = tpu.matmul %84, %6, %cst_107 {dimension_numbers = #tpu.dot_dimension_numbers<[2], [0], [0, 1], [1], [0, 0, 0, 1, 1, 1], [], []>} : vector<4x2x64xbf16>, vector<64x64xbf16>, vector<4x2x64xf32> -> vector<4x2x64xf32>
    %86 = vector.extract_strided_slice %83 {offsets = [0, 0, 64], sizes = [4, 2, 64], strides = [1, 1, 1]} : vector<4x2x128xbf16> to vector<4x2x64xbf16>
    %cst_108 = arith.constant dense<0.000000e+00> : vector<4x2x64xf32>
    %87 = tpu.matmul %86, %6, %cst_108 {dimension_numbers = #tpu.dot_dimension_numbers<[2], [0], [0, 1], [1], [0, 0, 0, 1, 1, 1], [], []>} : vector<4x2x64xbf16>, vector<64x64xbf16>, vector<4x2x64xf32> -> vector<4x2x64xf32>
    %88 = tpu.concatenate %85, %87 in 2 : vector<4x2x64xf32>, vector<4x2x64xf32> -> vector<4x2x128xf32>
    %89 = vector.shape_cast %7 : vector<1x128xf32> to vector<1x1x128xf32>
    %90 = vector.broadcast %89 : vector<1x1x128xf32> to vector<4x2x128xf32>
    %91 = arith.addf %88, %90 : vector<4x2x128xf32>
    %c1_109 = arith.constant 1 : index
    %c0_110 = arith.constant 0 : index
    %c0_111 = arith.constant 0 : index
    %c0_112 = arith.constant 0 : index
    %92 = vector.load %arg2[%c1_109, %c0_110, %c0_111, %c0_112] : memref<2x2x2x64xbf16, #tpu.memory_space<vmem>>, vector<1x2x2x64xbf16>
    %93 = vector.shape_cast %92 : vector<1x2x2x64xbf16> to vector<2x2x64xbf16>
    %94 = tpu.concatenate %93, %93 in 2 : vector<2x2x64xbf16>, vector<2x2x64xbf16> -> vector<2x2x128xbf16>
    %95 = vector.shape_cast %94 : vector<2x2x128xbf16> to vector<2x1x2x128xbf16>
    %96 = vector.broadcast %95 : vector<2x1x2x128xbf16> to vector<2x2x2x128xbf16>
    %97 = vector.shape_cast %96 : vector<2x2x2x128xbf16> to vector<4x2x128xbf16>
    %98 = arith.extf %97 : vector<4x2x128xbf16> to vector<4x2x128xf32>
    %99 = arith.addf %91, %98 : vector<4x2x128xf32>
    %100 = arith.truncf %99 : vector<4x2x128xf32> to vector<4x2x128xbf16>
    %c1_113 = arith.constant 1 : index
    %c0_114 = arith.constant 0 : index
    %c0_115 = arith.constant 0 : index
    %c0_116 = arith.constant 0 : index
    %101 = vector.load %arg8[%c1_113, %c0_114, %c0_115, %c0_116] : memref<2x4x2x128xbf16, #tpu.memory_space<vmem>>, vector<1x4x2x128xbf16>
    %102 = vector.shape_cast %101 : vector<1x4x2x128xbf16> to vector<4x2x128xbf16>
    %103 = vector.shape_cast %100 : vector<4x2x128xbf16> to vector<1x4x2x128xbf16>
    tpu.vector_store %arg8[%c1_113, %c0_114, %c0_115, %c0_116], %103 {strides = array<i32>} : memref<2x4x2x128xbf16, #tpu.memory_space<vmem>>, vector<1x4x2x128xbf16>,
    %c1_117 = arith.constant 1 : index
    %c1_118 = arith.constant 1 : index
    %c0_119 = arith.constant 0 : index
    %104 = vector.load %arg10[%c1_117, %c1_118, %c0_119] : memref<6x4x128xbf16, #tpu.memory_space<vmem>>, vector<4x2x128xbf16>
    tpu.vector_store %arg10[%c1_117, %c1_118, %c0_119], %100 {strides = array<i32>} : memref<6x4x128xbf16, #tpu.memory_space<vmem>>, vector<4x2x128xbf16>,
    %c0_120 = arith.constant 0 : index
    %c1_121 = arith.constant 1 : index
    %c0_122 = arith.constant 0 : index
    %105 = vector.load %arg10[%c0_120, %c1_121, %c0_122] : memref<6x4x128xbf16, #tpu.memory_space<vmem>>, vector<4x2x128xbf16>
    %c0_123 = arith.constant 0 : index
    %c0_124 = arith.constant 0 : index
    %c0_125 = arith.constant 0 : index
    %106 = vector.load %arg5[%c0_123, %c0_124, %c0_125] : memref<3x128x128xbf16, #tpu.memory_space<vmem>>, vector<1x128x128xbf16>
    %107 = vector.shape_cast %106 : vector<1x128x128xbf16> to vector<128x128xbf16>
    %cst_126 = arith.constant dense<0.000000e+00> : vector<4x2x128xf32>
    %108 = tpu.matmul %105, %107, %cst_126 {dimension_numbers = #tpu.dot_dimension_numbers<[2], [0], [0, 1], [1], [0, 0, 0, 1, 1, 1], [], []>} : vector<4x2x128xbf16>, vector<128x128xbf16>, vector<4x2x128xf32> -> vector<4x2x128xf32>
    %c1_127 = arith.constant 1 : index
    %c1_128 = arith.constant 1 : index
    %c0_129 = arith.constant 0 : index
    %109 = vector.load %arg10[%c1_127, %c1_128, %c0_129] : memref<6x4x128xbf16, #tpu.memory_space<vmem>>, vector<4x2x128xbf16>
    %c1_130 = arith.constant 1 : index
    %c0_131 = arith.constant 0 : index
    %c0_132 = arith.constant 0 : index
    %110 = vector.load %arg5[%c1_130, %c0_131, %c0_132] : memref<3x128x128xbf16, #tpu.memory_space<vmem>>, vector<1x128x128xbf16>
    %111 = vector.shape_cast %110 : vector<1x128x128xbf16> to vector<128x128xbf16>
    %cst_133 = arith.constant dense<0.000000e+00> : vector<4x2x128xf32>
    %112 = tpu.matmul %109, %111, %cst_133 {dimension_numbers = #tpu.dot_dimension_numbers<[2], [0], [0, 1], [1], [0, 0, 0, 1, 1, 1], [], []>} : vector<4x2x128xbf16>, vector<128x128xbf16>, vector<4x2x128xf32> -> vector<4x2x128xf32>
    %113 = arith.addf %108, %112 : vector<4x2x128xf32>
    %c2_134 = arith.constant 2 : index
    %c1_135 = arith.constant 1 : index
    %c0_136 = arith.constant 0 : index
    %114 = vector.load %arg10[%c2_134, %c1_135, %c0_136] : memref<6x4x128xbf16, #tpu.memory_space<vmem>>, vector<4x2x128xbf16>
    %c2_137 = arith.constant 2 : index
    %c0_138 = arith.constant 0 : index
    %c0_139 = arith.constant 0 : index
    %115 = vector.load %arg5[%c2_137, %c0_138, %c0_139] : memref<3x128x128xbf16, #tpu.memory_space<vmem>>, vector<1x128x128xbf16>
    %116 = vector.shape_cast %115 : vector<1x128x128xbf16> to vector<128x128xbf16>
    %cst_140 = arith.constant dense<0.000000e+00> : vector<4x2x128xf32>
    %117 = tpu.matmul %114, %116, %cst_140 {dimension_numbers = #tpu.dot_dimension_numbers<[2], [0], [0, 1], [1], [0, 0, 0, 1, 1, 1], [], []>} : vector<4x2x128xbf16>, vector<128x128xbf16>, vector<4x2x128xf32> -> vector<4x2x128xf32>
    %118 = arith.addf %113, %117 : vector<4x2x128xf32>
    %c0_141 = arith.constant 0 : index
    %c0_142 = arith.constant 0 : index
    %c64_143 = arith.constant 64 : index
    %119 = vector.load %arg10[%c0_141, %c0_142, %c64_143] : memref<6x4x128xbf16, #tpu.memory_space<vmem>>, vector<4x2x64xbf16>
    %c0_144 = arith.constant 0 : index
    %c0_145 = arith.constant 0 : index
    %c0_146 = arith.constant 0 : index
    %c0_147 = arith.constant 0 : index
    %120 = vector.load %arg6[%c0_144, %c0_145, %c0_146, %c0_147] : memref<3x2x64x64xbf16, #tpu.memory_space<vmem>>, vector<1x1x64x64xbf16>
    %121 = vector.shape_cast %120 : vector<1x1x64x64xbf16> to vector<64x64xbf16>
    %cst_148 = arith.constant dense<0.000000e+00> : vector<4x2x64xf32>
    %122 = tpu.matmul %119, %121, %cst_148 {dimension_numbers = #tpu.dot_dimension_numbers<[2], [0], [0, 1], [1], [0, 0, 0, 1, 1, 1], [], []>} : vector<4x2x64xbf16>, vector<64x64xbf16>, vector<4x2x64xf32> -> vector<4x2x64xf32>
    %c0_149 = arith.constant 0 : index
    %c2_150 = arith.constant 2 : index
    %c0_151 = arith.constant 0 : index
    %123 = vector.load %arg10[%c0_149, %c2_150, %c0_151] : memref<6x4x128xbf16, #tpu.memory_space<vmem>>, vector<4x2x64xbf16>
    %c0_152 = arith.constant 0 : index
    %c1_153 = arith.constant 1 : index
    %c0_154 = arith.constant 0 : index
    %c0_155 = arith.constant 0 : index
    %124 = vector.load %arg6[%c0_152, %c1_153, %c0_154, %c0_155] : memref<3x2x64x64xbf16, #tpu.memory_space<vmem>>, vector<1x1x64x64xbf16>
    %125 = vector.shape_cast %124 : vector<1x1x64x64xbf16> to vector<64x64xbf16>
    %cst_156 = arith.constant dense<0.000000e+00> : vector<4x2x64xf32>
    %126 = tpu.matmul %123, %125, %cst_156 {dimension_numbers = #tpu.dot_dimension_numbers<[2], [0], [0, 1], [1], [0, 0, 0, 1, 1, 1], [], []>} : vector<4x2x64xbf16>, vector<64x64xbf16>, vector<4x2x64xf32> -> vector<4x2x64xf32>
    %c1_157 = arith.constant 1 : index
    %c0_158 = arith.constant 0 : index
    %c64_159 = arith.constant 64 : index
    %127 = vector.load %arg10[%c1_157, %c0_158, %c64_159] : memref<6x4x128xbf16, #tpu.memory_space<vmem>>, vector<4x2x64xbf16>
    %c1_160 = arith.constant 1 : index
    %c0_161 = arith.constant 0 : index
    %c0_162 = arith.constant 0 : index
    %c0_163 = arith.constant 0 : index
    %128 = vector.load %arg6[%c1_160, %c0_161, %c0_162, %c0_163] : memref<3x2x64x64xbf16, #tpu.memory_space<vmem>>, vector<1x1x64x64xbf16>
    %129 = vector.shape_cast %128 : vector<1x1x64x64xbf16> to vector<64x64xbf16>
    %cst_164 = arith.constant dense<0.000000e+00> : vector<4x2x64xf32>
    %130 = tpu.matmul %127, %129, %cst_164 {dimension_numbers = #tpu.dot_dimension_numbers<[2], [0], [0, 1], [1], [0, 0, 0, 1, 1, 1], [], []>} : vector<4x2x64xbf16>, vector<64x64xbf16>, vector<4x2x64xf32> -> vector<4x2x64xf32>
    %c1_165 = arith.constant 1 : index
    %c2_166 = arith.constant 2 : index
    %c0_167 = arith.constant 0 : index
    %131 = vector.load %arg10[%c1_165, %c2_166, %c0_167] : memref<6x4x128xbf16, #tpu.memory_space<vmem>>, vector<4x2x64xbf16>
    %c1_168 = arith.constant 1 : index
    %c1_169 = arith.constant 1 : index
    %c0_170 = arith.constant 0 : index
    %c0_171 = arith.constant 0 : index
    %132 = vector.load %arg6[%c1_168, %c1_169, %c0_170, %c0_171] : memref<3x2x64x64xbf16, #tpu.memory_space<vmem>>, vector<1x1x64x64xbf16>
    %133 = vector.shape_cast %132 : vector<1x1x64x64xbf16> to vector<64x64xbf16>
    %cst_172 = arith.constant dense<0.000000e+00> : vector<4x2x64xf32>
    %134 = tpu.matmul %131, %133, %cst_172 {dimension_numbers = #tpu.dot_dimension_numbers<[2], [0], [0, 1], [1], [0, 0, 0, 1, 1, 1], [], []>} : vector<4x2x64xbf16>, vector<64x64xbf16>, vector<4x2x64xf32> -> vector<4x2x64xf32>
    %135 = arith.addf %122, %130 : vector<4x2x64xf32>
    %136 = arith.addf %126, %134 : vector<4x2x64xf32>
    %c2_173 = arith.constant 2 : index
    %c0_174 = arith.constant 0 : index
    %c64_175 = arith.constant 64 : index
    %137 = vector.load %arg10[%c2_173, %c0_174, %c64_175] : memref<6x4x128xbf16, #tpu.memory_space<vmem>>, vector<4x2x64xbf16>
    %c2_176 = arith.constant 2 : index
    %c0_177 = arith.constant 0 : index
    %c0_178 = arith.constant 0 : index
    %c0_179 = arith.constant 0 : index
    %138 = vector.load %arg6[%c2_176, %c0_177, %c0_178, %c0_179] : memref<3x2x64x64xbf16, #tpu.memory_space<vmem>>, vector<1x1x64x64xbf16>
    %139 = vector.shape_cast %138 : vector<1x1x64x64xbf16> to vector<64x64xbf16>
    %cst_180 = arith.constant dense<0.000000e+00> : vector<4x2x64xf32>
    %140 = tpu.matmul %137, %139, %cst_180 {dimension_numbers = #tpu.dot_dimension_numbers<[2], [0], [0, 1], [1], [0, 0, 0, 1, 1, 1], [], []>} : vector<4x2x64xbf16>, vector<64x64xbf16>, vector<4x2x64xf32> -> vector<4x2x64xf32>
    %c2_181 = arith.constant 2 : index
    %c2_182 = arith.constant 2 : index
    %c0_183 = arith.constant 0 : index
    %141 = vector.load %arg10[%c2_181, %c2_182, %c0_183] : memref<6x4x128xbf16, #tpu.memory_space<vmem>>, vector<4x2x64xbf16>
    %c2_184 = arith.constant 2 : index
    %c1_185 = arith.constant 1 : index
    %c0_186 = arith.constant 0 : index
    %c0_187 = arith.constant 0 : index
    %142 = vector.load %arg6[%c2_184, %c1_185, %c0_186, %c0_187] : memref<3x2x64x64xbf16, #tpu.memory_space<vmem>>, vector<1x1x64x64xbf16>
    %143 = vector.shape_cast %142 : vector<1x1x64x64xbf16> to vector<64x64xbf16>
    %cst_188 = arith.constant dense<0.000000e+00> : vector<4x2x64xf32>
    %144 = tpu.matmul %141, %143, %cst_188 {dimension_numbers = #tpu.dot_dimension_numbers<[2], [0], [0, 1], [1], [0, 0, 0, 1, 1, 1], [], []>} : vector<4x2x64xbf16>, vector<64x64xbf16>, vector<4x2x64xf32> -> vector<4x2x64xf32>
    %145 = arith.addf %135, %140 : vector<4x2x64xf32>
    %146 = arith.addf %136, %144 : vector<4x2x64xf32>
    %147 = tpu.concatenate %145, %146 in 2 : vector<4x2x64xf32>, vector<4x2x64xf32> -> vector<4x2x128xf32>
    %148 = arith.addf %118, %147 : vector<4x2x128xf32>
    %149 = vector.shape_cast %8 : vector<1x128xf32> to vector<1x1x128xf32>
    %150 = vector.broadcast %149 : vector<1x1x128xf32> to vector<4x2x128xf32>
    %151 = arith.addf %148, %150 : vector<4x2x128xf32>
    %c1_189 = arith.constant 1 : index
    %c0_190 = arith.constant 0 : index
    %c0_191 = arith.constant 0 : index
    %c0_192 = arith.constant 0 : index
    %152 = vector.load %arg9[%c1_189, %c0_190, %c0_191, %c0_192] : memref<2x4x2x128xf32, #tpu.memory_space<vmem>>, vector<1x4x2x128xf32>
    %153 = vector.shape_cast %152 : vector<1x4x2x128xf32> to vector<4x2x128xf32>
    %154 = vector.shape_cast %151 : vector<4x2x128xf32> to vector<1x4x2x128xf32>
    tpu.vector_store %arg9[%c1_189, %c0_190, %c0_191, %c0_192], %154 {strides = array<i32>} : memref<2x4x2x128xf32, #tpu.memory_space<vmem>>, vector<1x4x2x128xf32>,
    return
  }
  func.func @transform_0(%arg0: i32) -> (i32, i32, i32, i32) {
    %c0_i32 = arith.constant 0 : i32
    %c0_i32_0 = arith.constant 0 : i32
    %c0_i32_1 = arith.constant 0 : i32
    %c0_i32_2 = arith.constant 0 : i32
    return %arg0, %c0_i32, %c0_i32_0, %c0_i32_1 : i32, i32, i32, i32
  }
  func.func @transform_1(%arg0: i32) -> (i32, i32, i32, i32) {
    %c0_i32 = arith.constant 0 : i32
    %c0_i32_0 = arith.constant 0 : i32
    %c0_i32_1 = arith.constant 0 : i32
    %c0_i32_2 = arith.constant 0 : i32
    return %arg0, %c0_i32, %c0_i32_0, %c0_i32_1 : i32, i32, i32, i32
  }
  func.func @transform_2(%arg0: i32) -> (i32, i32) {
    %c0_i32 = arith.constant 0 : i32
    %c0_i32_0 = arith.constant 0 : i32
    %c0_i32_1 = arith.constant 0 : i32
    return %c0_i32, %c0_i32_0 : i32, i32
  }
  func.func @transform_3(%arg0: i32) -> (i32, i32) {
    %c0_i32 = arith.constant 0 : i32
    %c0_i32_0 = arith.constant 0 : i32
    %c0_i32_1 = arith.constant 0 : i32
    return %c0_i32, %c0_i32_0 : i32, i32
  }
  func.func @transform_4(%arg0: i32) -> (i32, i32, i32) {
    %c0_i32 = arith.constant 0 : i32
    %c0_i32_0 = arith.constant 0 : i32
    %c0_i32_1 = arith.constant 0 : i32
    %c0_i32_2 = arith.constant 0 : i32
    return %c0_i32, %c0_i32_0, %c0_i32_1 : i32, i32, i32
  }
  func.func @transform_5(%arg0: i32) -> (i32, i32, i32, i32) {
    %c0_i32 = arith.constant 0 : i32
    %c0_i32_0 = arith.constant 0 : i32
    %c0_i32_1 = arith.constant 0 : i32
    %c0_i32_2 = arith.constant 0 : i32
    %c0_i32_3 = arith.constant 0 : i32
    return %c0_i32, %c0_i32_0, %c0_i32_1, %c0_i32_2 : i32, i32, i32, i32
  }
  func.func @transform_6(%arg0: i32) -> (i32, i32) {
    %c0_i32 = arith.constant 0 : i32
    %c0_i32_0 = arith.constant 0 : i32
    %c0_i32_1 = arith.constant 0 : i32
    return %c0_i32, %c0_i32_0 : i32, i32
  }
  func.func @transform_7(%arg0: i32) -> (i32, i32, i32, i32) {
    %c0_i32 = arith.constant 0 : i32
    %c0_i32_0 = arith.constant 0 : i32
    %c0_i32_1 = arith.constant 0 : i32
    %c0_i32_2 = arith.constant 0 : i32
    return %arg0, %c0_i32, %c0_i32_0, %c0_i32_1 : i32, i32, i32, i32
  }
  func.func @transform_8(%arg0: i32) -> (i32, i32, i32, i32) {
    %c0_i32 = arith.constant 0 : i32
    %c0_i32_0 = arith.constant 0 : i32
    %c0_i32_1 = arith.constant 0 : i32
    %c0_i32_2 = arith.constant 0 : i32
    return %arg0, %c0_i32, %c0_i32_0, %c0_i32_1 : i32, i32, i32, i32
  }
}

module attributes {stable_mosaic.version = 11 : i64} {
  func.func @_fpn_level_kernel(%arg0: i32, %arg1: memref<2x8x4x64xbf16, #tpu.memory_space<vmem>>, %arg2: memref<2x4x4x64xbf16, #tpu.memory_space<vmem>>, %arg3: memref<32x64xbf16, #tpu.memory_space<vmem>>, %arg4: memref<1x128xf32, #tpu.memory_space<vmem>>, %arg5: memref<3x128x128xbf16, #tpu.memory_space<vmem>>, %arg6: memref<3x2x64x64xbf16, #tpu.memory_space<vmem>>, %arg7: memref<1x128xf32, #tpu.memory_space<vmem>>, %arg8: memref<2x8x4x128xf32, #tpu.memory_space<vmem>>, %arg9: memref<10x6x128xbf16, #tpu.memory_space<vmem>>) attributes {dimension_semantics = [#tpu.dimension_semantics<parallel>], iteration_bounds = array<i64: 1>, scalar_prefetch = 0 : i64, scratch_operands = 1 : i64, tpu.core_type = #tpu.core_type<tc>, window_params = [{transform_indices = @transform_0, window_bounds = array<i64: 2, 8, 4, 64>}, {transform_indices = @transform_1, window_bounds = array<i64: 2, 4, 4, 64>}, {pipeline_mode = #tpu.pipeline_mode<synchronous>, transform_indices = @transform_2, window_bounds = array<i64: 32, 64>}, {pipeline_mode = #tpu.pipeline_mode<synchronous>, transform_indices = @transform_3, window_bounds = array<i64: 1, 128>}, {pipeline_mode = #tpu.pipeline_mode<synchronous>, transform_indices = @transform_4, window_bounds = array<i64: 3, 128, 128>}, {pipeline_mode = #tpu.pipeline_mode<synchronous>, transform_indices = @transform_5, window_bounds = array<i64: 3, 2, 64, 64>}, {pipeline_mode = #tpu.pipeline_mode<synchronous>, transform_indices = @transform_6, window_bounds = array<i64: 1, 128>}, {transform_indices = @transform_7, window_bounds = array<i64: 2, 8, 4, 128>}]} {
    %cst = arith.constant 0.000000e+00 : bf16
    %0 = vector.broadcast %cst : bf16 to vector<1x6x128xbf16>
    %cst_0 = arith.constant 0.000000e+00 : bf16
    %1 = vector.broadcast %cst_0 : bf16 to vector<10x1x128xbf16>
    %c0 = arith.constant 0 : index
    %c0_1 = arith.constant 0 : index
    %c0_2 = arith.constant 0 : index
    %2 = vector.load %arg9[%c0, %c0_1, %c0_2] : memref<10x6x128xbf16, #tpu.memory_space<vmem>>, vector<1x6x128xbf16>
    tpu.vector_store %arg9[%c0, %c0_1, %c0_2], %0 {strides = array<i32>} : memref<10x6x128xbf16, #tpu.memory_space<vmem>>, vector<1x6x128xbf16>,
    %c9 = arith.constant 9 : index
    %c0_3 = arith.constant 0 : index
    %c0_4 = arith.constant 0 : index
    %3 = vector.load %arg9[%c9, %c0_3, %c0_4] : memref<10x6x128xbf16, #tpu.memory_space<vmem>>, vector<1x6x128xbf16>
    tpu.vector_store %arg9[%c9, %c0_3, %c0_4], %0 {strides = array<i32>} : memref<10x6x128xbf16, #tpu.memory_space<vmem>>, vector<1x6x128xbf16>,
    %c0_5 = arith.constant 0 : index
    %c0_6 = arith.constant 0 : index
    %c0_7 = arith.constant 0 : index
    %4 = vector.load %arg9[%c0_5, %c0_6, %c0_7] : memref<10x6x128xbf16, #tpu.memory_space<vmem>>, vector<10x1x128xbf16>
    tpu.vector_store %arg9[%c0_5, %c0_6, %c0_7], %1 {strides = array<i32>} : memref<10x6x128xbf16, #tpu.memory_space<vmem>>, vector<10x1x128xbf16>,
    %c0_8 = arith.constant 0 : index
    %c5 = arith.constant 5 : index
    %c0_9 = arith.constant 0 : index
    %5 = vector.load %arg9[%c0_8, %c5, %c0_9] : memref<10x6x128xbf16, #tpu.memory_space<vmem>>, vector<10x1x128xbf16>
    tpu.vector_store %arg9[%c0_8, %c5, %c0_9], %1 {strides = array<i32>} : memref<10x6x128xbf16, #tpu.memory_space<vmem>>, vector<10x1x128xbf16>,
    %c0_10 = arith.constant 0 : index
    %c0_11 = arith.constant 0 : index
    %6 = vector.load %arg3[%c0_10, %c0_11] : memref<32x64xbf16, #tpu.memory_space<vmem>>, vector<32x64xbf16>
    %c0_12 = arith.constant 0 : index
    %c0_13 = arith.constant 0 : index
    %7 = vector.load %arg4[%c0_12, %c0_13] : memref<1x128xf32, #tpu.memory_space<vmem>>, vector<1x128xf32>
    %c0_14 = arith.constant 0 : index
    %c0_15 = arith.constant 0 : index
    %8 = vector.load %arg7[%c0_14, %c0_15] : memref<1x128xf32, #tpu.memory_space<vmem>>, vector<1x128xf32>
    %c0_16 = arith.constant 0 : index
    %c0_17 = arith.constant 0 : index
    %c0_18 = arith.constant 0 : index
    %c0_19 = arith.constant 0 : index
    %9 = vector.load %arg1[%c0_16, %c0_17, %c0_18, %c0_19] : memref<2x8x4x64xbf16, #tpu.memory_space<vmem>>, vector<1x8x4x64xbf16>
    %10 = vector.shape_cast %9 : vector<1x8x4x64xbf16> to vector<8x4x64xbf16>
    %11 = vector.extract_strided_slice %10 {offsets = [0, 0, 0], sizes = [8, 4, 32], strides = [1, 1, 1]} : vector<8x4x64xbf16> to vector<8x4x32xbf16>
    %cst_20 = arith.constant dense<0.000000e+00> : vector<8x4x64xf32>
    %12 = tpu.matmul %11, %6, %cst_20 {dimension_numbers = #tpu.dot_dimension_numbers<[2], [0], [0, 1], [1], [0, 0, 0, 1, 1, 1], [], []>} : vector<8x4x32xbf16>, vector<32x64xbf16>, vector<8x4x64xf32> -> vector<8x4x64xf32>
    %13 = vector.extract_strided_slice %10 {offsets = [0, 0, 32], sizes = [8, 4, 32], strides = [1, 1, 1]} : vector<8x4x64xbf16> to vector<8x4x32xbf16>
    %cst_21 = arith.constant dense<0.000000e+00> : vector<8x4x64xf32>
    %14 = tpu.matmul %13, %6, %cst_21 {dimension_numbers = #tpu.dot_dimension_numbers<[2], [0], [0, 1], [1], [0, 0, 0, 1, 1, 1], [], []>} : vector<8x4x32xbf16>, vector<32x64xbf16>, vector<8x4x64xf32> -> vector<8x4x64xf32>
    %15 = tpu.concatenate %12, %14 in 2 : vector<8x4x64xf32>, vector<8x4x64xf32> -> vector<8x4x128xf32>
    %16 = vector.shape_cast %7 : vector<1x128xf32> to vector<1x1x128xf32>
    %17 = vector.broadcast %16 : vector<1x1x128xf32> to vector<8x4x128xf32>
    %18 = arith.addf %15, %17 : vector<8x4x128xf32>
    %c0_22 = arith.constant 0 : index
    %c0_23 = arith.constant 0 : index
    %c0_24 = arith.constant 0 : index
    %c0_25 = arith.constant 0 : index
    %19 = vector.load %arg2[%c0_22, %c0_23, %c0_24, %c0_25] : memref<2x4x4x64xbf16, #tpu.memory_space<vmem>>, vector<1x4x4x64xbf16>
    %20 = vector.shape_cast %19 : vector<1x4x4x64xbf16> to vector<4x4x64xbf16>
    %21 = tpu.concatenate %20, %20 in 2 : vector<4x4x64xbf16>, vector<4x4x64xbf16> -> vector<4x4x128xbf16>
    %22 = vector.shape_cast %21 : vector<4x4x128xbf16> to vector<4x1x4x128xbf16>
    %23 = vector.broadcast %22 : vector<4x1x4x128xbf16> to vector<4x2x4x128xbf16>
    %24 = vector.shape_cast %23 : vector<4x2x4x128xbf16> to vector<8x4x128xbf16>
    %25 = arith.extf %24 : vector<8x4x128xbf16> to vector<8x4x128xf32>
    %26 = arith.addf %18, %25 : vector<8x4x128xf32>
    %27 = arith.truncf %26 : vector<8x4x128xf32> to vector<8x4x128xbf16>
    %c1 = arith.constant 1 : index
    %c1_26 = arith.constant 1 : index
    %c0_27 = arith.constant 0 : index
    %28 = vector.load %arg9[%c1, %c1_26, %c0_27] : memref<10x6x128xbf16, #tpu.memory_space<vmem>>, vector<8x4x128xbf16>
    tpu.vector_store %arg9[%c1, %c1_26, %c0_27], %27 {strides = array<i32>} : memref<10x6x128xbf16, #tpu.memory_space<vmem>>, vector<8x4x128xbf16>,
    %c0_28 = arith.constant 0 : index
    %c1_29 = arith.constant 1 : index
    %c0_30 = arith.constant 0 : index
    %29 = vector.load %arg9[%c0_28, %c1_29, %c0_30] : memref<10x6x128xbf16, #tpu.memory_space<vmem>>, vector<8x4x128xbf16>
    %c0_31 = arith.constant 0 : index
    %c0_32 = arith.constant 0 : index
    %c0_33 = arith.constant 0 : index
    %30 = vector.load %arg5[%c0_31, %c0_32, %c0_33] : memref<3x128x128xbf16, #tpu.memory_space<vmem>>, vector<1x128x128xbf16>
    %31 = vector.shape_cast %30 : vector<1x128x128xbf16> to vector<128x128xbf16>
    %cst_34 = arith.constant dense<0.000000e+00> : vector<8x4x128xf32>
    %32 = tpu.matmul %29, %31, %cst_34 {dimension_numbers = #tpu.dot_dimension_numbers<[2], [0], [0, 1], [1], [0, 0, 0, 1, 1, 1], [], []>} : vector<8x4x128xbf16>, vector<128x128xbf16>, vector<8x4x128xf32> -> vector<8x4x128xf32>
    %c1_35 = arith.constant 1 : index
    %c1_36 = arith.constant 1 : index
    %c0_37 = arith.constant 0 : index
    %33 = vector.load %arg9[%c1_35, %c1_36, %c0_37] : memref<10x6x128xbf16, #tpu.memory_space<vmem>>, vector<8x4x128xbf16>
    %c1_38 = arith.constant 1 : index
    %c0_39 = arith.constant 0 : index
    %c0_40 = arith.constant 0 : index
    %34 = vector.load %arg5[%c1_38, %c0_39, %c0_40] : memref<3x128x128xbf16, #tpu.memory_space<vmem>>, vector<1x128x128xbf16>
    %35 = vector.shape_cast %34 : vector<1x128x128xbf16> to vector<128x128xbf16>
    %cst_41 = arith.constant dense<0.000000e+00> : vector<8x4x128xf32>
    %36 = tpu.matmul %33, %35, %cst_41 {dimension_numbers = #tpu.dot_dimension_numbers<[2], [0], [0, 1], [1], [0, 0, 0, 1, 1, 1], [], []>} : vector<8x4x128xbf16>, vector<128x128xbf16>, vector<8x4x128xf32> -> vector<8x4x128xf32>
    %37 = arith.addf %32, %36 : vector<8x4x128xf32>
    %c2 = arith.constant 2 : index
    %c1_42 = arith.constant 1 : index
    %c0_43 = arith.constant 0 : index
    %38 = vector.load %arg9[%c2, %c1_42, %c0_43] : memref<10x6x128xbf16, #tpu.memory_space<vmem>>, vector<8x4x128xbf16>
    %c2_44 = arith.constant 2 : index
    %c0_45 = arith.constant 0 : index
    %c0_46 = arith.constant 0 : index
    %39 = vector.load %arg5[%c2_44, %c0_45, %c0_46] : memref<3x128x128xbf16, #tpu.memory_space<vmem>>, vector<1x128x128xbf16>
    %40 = vector.shape_cast %39 : vector<1x128x128xbf16> to vector<128x128xbf16>
    %cst_47 = arith.constant dense<0.000000e+00> : vector<8x4x128xf32>
    %41 = tpu.matmul %38, %40, %cst_47 {dimension_numbers = #tpu.dot_dimension_numbers<[2], [0], [0, 1], [1], [0, 0, 0, 1, 1, 1], [], []>} : vector<8x4x128xbf16>, vector<128x128xbf16>, vector<8x4x128xf32> -> vector<8x4x128xf32>
    %42 = arith.addf %37, %41 : vector<8x4x128xf32>
    %c0_48 = arith.constant 0 : index
    %c0_49 = arith.constant 0 : index
    %c64 = arith.constant 64 : index
    %43 = vector.load %arg9[%c0_48, %c0_49, %c64] : memref<10x6x128xbf16, #tpu.memory_space<vmem>>, vector<8x4x64xbf16>
    %c0_50 = arith.constant 0 : index
    %c0_51 = arith.constant 0 : index
    %c0_52 = arith.constant 0 : index
    %c0_53 = arith.constant 0 : index
    %44 = vector.load %arg6[%c0_50, %c0_51, %c0_52, %c0_53] : memref<3x2x64x64xbf16, #tpu.memory_space<vmem>>, vector<1x1x64x64xbf16>
    %45 = vector.shape_cast %44 : vector<1x1x64x64xbf16> to vector<64x64xbf16>
    %cst_54 = arith.constant dense<0.000000e+00> : vector<8x4x64xf32>
    %46 = tpu.matmul %43, %45, %cst_54 {dimension_numbers = #tpu.dot_dimension_numbers<[2], [0], [0, 1], [1], [0, 0, 0, 1, 1, 1], [], []>} : vector<8x4x64xbf16>, vector<64x64xbf16>, vector<8x4x64xf32> -> vector<8x4x64xf32>
    %c0_55 = arith.constant 0 : index
    %c2_56 = arith.constant 2 : index
    %c0_57 = arith.constant 0 : index
    %47 = vector.load %arg9[%c0_55, %c2_56, %c0_57] : memref<10x6x128xbf16, #tpu.memory_space<vmem>>, vector<8x4x64xbf16>
    %c0_58 = arith.constant 0 : index
    %c1_59 = arith.constant 1 : index
    %c0_60 = arith.constant 0 : index
    %c0_61 = arith.constant 0 : index
    %48 = vector.load %arg6[%c0_58, %c1_59, %c0_60, %c0_61] : memref<3x2x64x64xbf16, #tpu.memory_space<vmem>>, vector<1x1x64x64xbf16>
    %49 = vector.shape_cast %48 : vector<1x1x64x64xbf16> to vector<64x64xbf16>
    %cst_62 = arith.constant dense<0.000000e+00> : vector<8x4x64xf32>
    %50 = tpu.matmul %47, %49, %cst_62 {dimension_numbers = #tpu.dot_dimension_numbers<[2], [0], [0, 1], [1], [0, 0, 0, 1, 1, 1], [], []>} : vector<8x4x64xbf16>, vector<64x64xbf16>, vector<8x4x64xf32> -> vector<8x4x64xf32>
    %c1_63 = arith.constant 1 : index
    %c0_64 = arith.constant 0 : index
    %c64_65 = arith.constant 64 : index
    %51 = vector.load %arg9[%c1_63, %c0_64, %c64_65] : memref<10x6x128xbf16, #tpu.memory_space<vmem>>, vector<8x4x64xbf16>
    %c1_66 = arith.constant 1 : index
    %c0_67 = arith.constant 0 : index
    %c0_68 = arith.constant 0 : index
    %c0_69 = arith.constant 0 : index
    %52 = vector.load %arg6[%c1_66, %c0_67, %c0_68, %c0_69] : memref<3x2x64x64xbf16, #tpu.memory_space<vmem>>, vector<1x1x64x64xbf16>
    %53 = vector.shape_cast %52 : vector<1x1x64x64xbf16> to vector<64x64xbf16>
    %cst_70 = arith.constant dense<0.000000e+00> : vector<8x4x64xf32>
    %54 = tpu.matmul %51, %53, %cst_70 {dimension_numbers = #tpu.dot_dimension_numbers<[2], [0], [0, 1], [1], [0, 0, 0, 1, 1, 1], [], []>} : vector<8x4x64xbf16>, vector<64x64xbf16>, vector<8x4x64xf32> -> vector<8x4x64xf32>
    %c1_71 = arith.constant 1 : index
    %c2_72 = arith.constant 2 : index
    %c0_73 = arith.constant 0 : index
    %55 = vector.load %arg9[%c1_71, %c2_72, %c0_73] : memref<10x6x128xbf16, #tpu.memory_space<vmem>>, vector<8x4x64xbf16>
    %c1_74 = arith.constant 1 : index
    %c1_75 = arith.constant 1 : index
    %c0_76 = arith.constant 0 : index
    %c0_77 = arith.constant 0 : index
    %56 = vector.load %arg6[%c1_74, %c1_75, %c0_76, %c0_77] : memref<3x2x64x64xbf16, #tpu.memory_space<vmem>>, vector<1x1x64x64xbf16>
    %57 = vector.shape_cast %56 : vector<1x1x64x64xbf16> to vector<64x64xbf16>
    %cst_78 = arith.constant dense<0.000000e+00> : vector<8x4x64xf32>
    %58 = tpu.matmul %55, %57, %cst_78 {dimension_numbers = #tpu.dot_dimension_numbers<[2], [0], [0, 1], [1], [0, 0, 0, 1, 1, 1], [], []>} : vector<8x4x64xbf16>, vector<64x64xbf16>, vector<8x4x64xf32> -> vector<8x4x64xf32>
    %59 = arith.addf %46, %54 : vector<8x4x64xf32>
    %60 = arith.addf %50, %58 : vector<8x4x64xf32>
    %c2_79 = arith.constant 2 : index
    %c0_80 = arith.constant 0 : index
    %c64_81 = arith.constant 64 : index
    %61 = vector.load %arg9[%c2_79, %c0_80, %c64_81] : memref<10x6x128xbf16, #tpu.memory_space<vmem>>, vector<8x4x64xbf16>
    %c2_82 = arith.constant 2 : index
    %c0_83 = arith.constant 0 : index
    %c0_84 = arith.constant 0 : index
    %c0_85 = arith.constant 0 : index
    %62 = vector.load %arg6[%c2_82, %c0_83, %c0_84, %c0_85] : memref<3x2x64x64xbf16, #tpu.memory_space<vmem>>, vector<1x1x64x64xbf16>
    %63 = vector.shape_cast %62 : vector<1x1x64x64xbf16> to vector<64x64xbf16>
    %cst_86 = arith.constant dense<0.000000e+00> : vector<8x4x64xf32>
    %64 = tpu.matmul %61, %63, %cst_86 {dimension_numbers = #tpu.dot_dimension_numbers<[2], [0], [0, 1], [1], [0, 0, 0, 1, 1, 1], [], []>} : vector<8x4x64xbf16>, vector<64x64xbf16>, vector<8x4x64xf32> -> vector<8x4x64xf32>
    %c2_87 = arith.constant 2 : index
    %c2_88 = arith.constant 2 : index
    %c0_89 = arith.constant 0 : index
    %65 = vector.load %arg9[%c2_87, %c2_88, %c0_89] : memref<10x6x128xbf16, #tpu.memory_space<vmem>>, vector<8x4x64xbf16>
    %c2_90 = arith.constant 2 : index
    %c1_91 = arith.constant 1 : index
    %c0_92 = arith.constant 0 : index
    %c0_93 = arith.constant 0 : index
    %66 = vector.load %arg6[%c2_90, %c1_91, %c0_92, %c0_93] : memref<3x2x64x64xbf16, #tpu.memory_space<vmem>>, vector<1x1x64x64xbf16>
    %67 = vector.shape_cast %66 : vector<1x1x64x64xbf16> to vector<64x64xbf16>
    %cst_94 = arith.constant dense<0.000000e+00> : vector<8x4x64xf32>
    %68 = tpu.matmul %65, %67, %cst_94 {dimension_numbers = #tpu.dot_dimension_numbers<[2], [0], [0, 1], [1], [0, 0, 0, 1, 1, 1], [], []>} : vector<8x4x64xbf16>, vector<64x64xbf16>, vector<8x4x64xf32> -> vector<8x4x64xf32>
    %69 = arith.addf %59, %64 : vector<8x4x64xf32>
    %70 = arith.addf %60, %68 : vector<8x4x64xf32>
    %71 = tpu.concatenate %69, %70 in 2 : vector<8x4x64xf32>, vector<8x4x64xf32> -> vector<8x4x128xf32>
    %72 = arith.addf %42, %71 : vector<8x4x128xf32>
    %73 = vector.shape_cast %8 : vector<1x128xf32> to vector<1x1x128xf32>
    %74 = vector.broadcast %73 : vector<1x1x128xf32> to vector<8x4x128xf32>
    %75 = arith.addf %72, %74 : vector<8x4x128xf32>
    %c0_95 = arith.constant 0 : index
    %c0_96 = arith.constant 0 : index
    %c0_97 = arith.constant 0 : index
    %c0_98 = arith.constant 0 : index
    %76 = vector.load %arg8[%c0_95, %c0_96, %c0_97, %c0_98] : memref<2x8x4x128xf32, #tpu.memory_space<vmem>>, vector<1x8x4x128xf32>
    %77 = vector.shape_cast %76 : vector<1x8x4x128xf32> to vector<8x4x128xf32>
    %78 = vector.shape_cast %75 : vector<8x4x128xf32> to vector<1x8x4x128xf32>
    tpu.vector_store %arg8[%c0_95, %c0_96, %c0_97, %c0_98], %78 {strides = array<i32>} : memref<2x8x4x128xf32, #tpu.memory_space<vmem>>, vector<1x8x4x128xf32>,
    %c1_99 = arith.constant 1 : index
    %c0_100 = arith.constant 0 : index
    %c0_101 = arith.constant 0 : index
    %c0_102 = arith.constant 0 : index
    %79 = vector.load %arg1[%c1_99, %c0_100, %c0_101, %c0_102] : memref<2x8x4x64xbf16, #tpu.memory_space<vmem>>, vector<1x8x4x64xbf16>
    %80 = vector.shape_cast %79 : vector<1x8x4x64xbf16> to vector<8x4x64xbf16>
    %81 = vector.extract_strided_slice %80 {offsets = [0, 0, 0], sizes = [8, 4, 32], strides = [1, 1, 1]} : vector<8x4x64xbf16> to vector<8x4x32xbf16>
    %cst_103 = arith.constant dense<0.000000e+00> : vector<8x4x64xf32>
    %82 = tpu.matmul %81, %6, %cst_103 {dimension_numbers = #tpu.dot_dimension_numbers<[2], [0], [0, 1], [1], [0, 0, 0, 1, 1, 1], [], []>} : vector<8x4x32xbf16>, vector<32x64xbf16>, vector<8x4x64xf32> -> vector<8x4x64xf32>
    %83 = vector.extract_strided_slice %80 {offsets = [0, 0, 32], sizes = [8, 4, 32], strides = [1, 1, 1]} : vector<8x4x64xbf16> to vector<8x4x32xbf16>
    %cst_104 = arith.constant dense<0.000000e+00> : vector<8x4x64xf32>
    %84 = tpu.matmul %83, %6, %cst_104 {dimension_numbers = #tpu.dot_dimension_numbers<[2], [0], [0, 1], [1], [0, 0, 0, 1, 1, 1], [], []>} : vector<8x4x32xbf16>, vector<32x64xbf16>, vector<8x4x64xf32> -> vector<8x4x64xf32>
    %85 = tpu.concatenate %82, %84 in 2 : vector<8x4x64xf32>, vector<8x4x64xf32> -> vector<8x4x128xf32>
    %86 = vector.shape_cast %7 : vector<1x128xf32> to vector<1x1x128xf32>
    %87 = vector.broadcast %86 : vector<1x1x128xf32> to vector<8x4x128xf32>
    %88 = arith.addf %85, %87 : vector<8x4x128xf32>
    %c1_105 = arith.constant 1 : index
    %c0_106 = arith.constant 0 : index
    %c0_107 = arith.constant 0 : index
    %c0_108 = arith.constant 0 : index
    %89 = vector.load %arg2[%c1_105, %c0_106, %c0_107, %c0_108] : memref<2x4x4x64xbf16, #tpu.memory_space<vmem>>, vector<1x4x4x64xbf16>
    %90 = vector.shape_cast %89 : vector<1x4x4x64xbf16> to vector<4x4x64xbf16>
    %91 = tpu.concatenate %90, %90 in 2 : vector<4x4x64xbf16>, vector<4x4x64xbf16> -> vector<4x4x128xbf16>
    %92 = vector.shape_cast %91 : vector<4x4x128xbf16> to vector<4x1x4x128xbf16>
    %93 = vector.broadcast %92 : vector<4x1x4x128xbf16> to vector<4x2x4x128xbf16>
    %94 = vector.shape_cast %93 : vector<4x2x4x128xbf16> to vector<8x4x128xbf16>
    %95 = arith.extf %94 : vector<8x4x128xbf16> to vector<8x4x128xf32>
    %96 = arith.addf %88, %95 : vector<8x4x128xf32>
    %97 = arith.truncf %96 : vector<8x4x128xf32> to vector<8x4x128xbf16>
    %c1_109 = arith.constant 1 : index
    %c1_110 = arith.constant 1 : index
    %c0_111 = arith.constant 0 : index
    %98 = vector.load %arg9[%c1_109, %c1_110, %c0_111] : memref<10x6x128xbf16, #tpu.memory_space<vmem>>, vector<8x4x128xbf16>
    tpu.vector_store %arg9[%c1_109, %c1_110, %c0_111], %97 {strides = array<i32>} : memref<10x6x128xbf16, #tpu.memory_space<vmem>>, vector<8x4x128xbf16>,
    %c0_112 = arith.constant 0 : index
    %c1_113 = arith.constant 1 : index
    %c0_114 = arith.constant 0 : index
    %99 = vector.load %arg9[%c0_112, %c1_113, %c0_114] : memref<10x6x128xbf16, #tpu.memory_space<vmem>>, vector<8x4x128xbf16>
    %c0_115 = arith.constant 0 : index
    %c0_116 = arith.constant 0 : index
    %c0_117 = arith.constant 0 : index
    %100 = vector.load %arg5[%c0_115, %c0_116, %c0_117] : memref<3x128x128xbf16, #tpu.memory_space<vmem>>, vector<1x128x128xbf16>
    %101 = vector.shape_cast %100 : vector<1x128x128xbf16> to vector<128x128xbf16>
    %cst_118 = arith.constant dense<0.000000e+00> : vector<8x4x128xf32>
    %102 = tpu.matmul %99, %101, %cst_118 {dimension_numbers = #tpu.dot_dimension_numbers<[2], [0], [0, 1], [1], [0, 0, 0, 1, 1, 1], [], []>} : vector<8x4x128xbf16>, vector<128x128xbf16>, vector<8x4x128xf32> -> vector<8x4x128xf32>
    %c1_119 = arith.constant 1 : index
    %c1_120 = arith.constant 1 : index
    %c0_121 = arith.constant 0 : index
    %103 = vector.load %arg9[%c1_119, %c1_120, %c0_121] : memref<10x6x128xbf16, #tpu.memory_space<vmem>>, vector<8x4x128xbf16>
    %c1_122 = arith.constant 1 : index
    %c0_123 = arith.constant 0 : index
    %c0_124 = arith.constant 0 : index
    %104 = vector.load %arg5[%c1_122, %c0_123, %c0_124] : memref<3x128x128xbf16, #tpu.memory_space<vmem>>, vector<1x128x128xbf16>
    %105 = vector.shape_cast %104 : vector<1x128x128xbf16> to vector<128x128xbf16>
    %cst_125 = arith.constant dense<0.000000e+00> : vector<8x4x128xf32>
    %106 = tpu.matmul %103, %105, %cst_125 {dimension_numbers = #tpu.dot_dimension_numbers<[2], [0], [0, 1], [1], [0, 0, 0, 1, 1, 1], [], []>} : vector<8x4x128xbf16>, vector<128x128xbf16>, vector<8x4x128xf32> -> vector<8x4x128xf32>
    %107 = arith.addf %102, %106 : vector<8x4x128xf32>
    %c2_126 = arith.constant 2 : index
    %c1_127 = arith.constant 1 : index
    %c0_128 = arith.constant 0 : index
    %108 = vector.load %arg9[%c2_126, %c1_127, %c0_128] : memref<10x6x128xbf16, #tpu.memory_space<vmem>>, vector<8x4x128xbf16>
    %c2_129 = arith.constant 2 : index
    %c0_130 = arith.constant 0 : index
    %c0_131 = arith.constant 0 : index
    %109 = vector.load %arg5[%c2_129, %c0_130, %c0_131] : memref<3x128x128xbf16, #tpu.memory_space<vmem>>, vector<1x128x128xbf16>
    %110 = vector.shape_cast %109 : vector<1x128x128xbf16> to vector<128x128xbf16>
    %cst_132 = arith.constant dense<0.000000e+00> : vector<8x4x128xf32>
    %111 = tpu.matmul %108, %110, %cst_132 {dimension_numbers = #tpu.dot_dimension_numbers<[2], [0], [0, 1], [1], [0, 0, 0, 1, 1, 1], [], []>} : vector<8x4x128xbf16>, vector<128x128xbf16>, vector<8x4x128xf32> -> vector<8x4x128xf32>
    %112 = arith.addf %107, %111 : vector<8x4x128xf32>
    %c0_133 = arith.constant 0 : index
    %c0_134 = arith.constant 0 : index
    %c64_135 = arith.constant 64 : index
    %113 = vector.load %arg9[%c0_133, %c0_134, %c64_135] : memref<10x6x128xbf16, #tpu.memory_space<vmem>>, vector<8x4x64xbf16>
    %c0_136 = arith.constant 0 : index
    %c0_137 = arith.constant 0 : index
    %c0_138 = arith.constant 0 : index
    %c0_139 = arith.constant 0 : index
    %114 = vector.load %arg6[%c0_136, %c0_137, %c0_138, %c0_139] : memref<3x2x64x64xbf16, #tpu.memory_space<vmem>>, vector<1x1x64x64xbf16>
    %115 = vector.shape_cast %114 : vector<1x1x64x64xbf16> to vector<64x64xbf16>
    %cst_140 = arith.constant dense<0.000000e+00> : vector<8x4x64xf32>
    %116 = tpu.matmul %113, %115, %cst_140 {dimension_numbers = #tpu.dot_dimension_numbers<[2], [0], [0, 1], [1], [0, 0, 0, 1, 1, 1], [], []>} : vector<8x4x64xbf16>, vector<64x64xbf16>, vector<8x4x64xf32> -> vector<8x4x64xf32>
    %c0_141 = arith.constant 0 : index
    %c2_142 = arith.constant 2 : index
    %c0_143 = arith.constant 0 : index
    %117 = vector.load %arg9[%c0_141, %c2_142, %c0_143] : memref<10x6x128xbf16, #tpu.memory_space<vmem>>, vector<8x4x64xbf16>
    %c0_144 = arith.constant 0 : index
    %c1_145 = arith.constant 1 : index
    %c0_146 = arith.constant 0 : index
    %c0_147 = arith.constant 0 : index
    %118 = vector.load %arg6[%c0_144, %c1_145, %c0_146, %c0_147] : memref<3x2x64x64xbf16, #tpu.memory_space<vmem>>, vector<1x1x64x64xbf16>
    %119 = vector.shape_cast %118 : vector<1x1x64x64xbf16> to vector<64x64xbf16>
    %cst_148 = arith.constant dense<0.000000e+00> : vector<8x4x64xf32>
    %120 = tpu.matmul %117, %119, %cst_148 {dimension_numbers = #tpu.dot_dimension_numbers<[2], [0], [0, 1], [1], [0, 0, 0, 1, 1, 1], [], []>} : vector<8x4x64xbf16>, vector<64x64xbf16>, vector<8x4x64xf32> -> vector<8x4x64xf32>
    %c1_149 = arith.constant 1 : index
    %c0_150 = arith.constant 0 : index
    %c64_151 = arith.constant 64 : index
    %121 = vector.load %arg9[%c1_149, %c0_150, %c64_151] : memref<10x6x128xbf16, #tpu.memory_space<vmem>>, vector<8x4x64xbf16>
    %c1_152 = arith.constant 1 : index
    %c0_153 = arith.constant 0 : index
    %c0_154 = arith.constant 0 : index
    %c0_155 = arith.constant 0 : index
    %122 = vector.load %arg6[%c1_152, %c0_153, %c0_154, %c0_155] : memref<3x2x64x64xbf16, #tpu.memory_space<vmem>>, vector<1x1x64x64xbf16>
    %123 = vector.shape_cast %122 : vector<1x1x64x64xbf16> to vector<64x64xbf16>
    %cst_156 = arith.constant dense<0.000000e+00> : vector<8x4x64xf32>
    %124 = tpu.matmul %121, %123, %cst_156 {dimension_numbers = #tpu.dot_dimension_numbers<[2], [0], [0, 1], [1], [0, 0, 0, 1, 1, 1], [], []>} : vector<8x4x64xbf16>, vector<64x64xbf16>, vector<8x4x64xf32> -> vector<8x4x64xf32>
    %c1_157 = arith.constant 1 : index
    %c2_158 = arith.constant 2 : index
    %c0_159 = arith.constant 0 : index
    %125 = vector.load %arg9[%c1_157, %c2_158, %c0_159] : memref<10x6x128xbf16, #tpu.memory_space<vmem>>, vector<8x4x64xbf16>
    %c1_160 = arith.constant 1 : index
    %c1_161 = arith.constant 1 : index
    %c0_162 = arith.constant 0 : index
    %c0_163 = arith.constant 0 : index
    %126 = vector.load %arg6[%c1_160, %c1_161, %c0_162, %c0_163] : memref<3x2x64x64xbf16, #tpu.memory_space<vmem>>, vector<1x1x64x64xbf16>
    %127 = vector.shape_cast %126 : vector<1x1x64x64xbf16> to vector<64x64xbf16>
    %cst_164 = arith.constant dense<0.000000e+00> : vector<8x4x64xf32>
    %128 = tpu.matmul %125, %127, %cst_164 {dimension_numbers = #tpu.dot_dimension_numbers<[2], [0], [0, 1], [1], [0, 0, 0, 1, 1, 1], [], []>} : vector<8x4x64xbf16>, vector<64x64xbf16>, vector<8x4x64xf32> -> vector<8x4x64xf32>
    %129 = arith.addf %116, %124 : vector<8x4x64xf32>
    %130 = arith.addf %120, %128 : vector<8x4x64xf32>
    %c2_165 = arith.constant 2 : index
    %c0_166 = arith.constant 0 : index
    %c64_167 = arith.constant 64 : index
    %131 = vector.load %arg9[%c2_165, %c0_166, %c64_167] : memref<10x6x128xbf16, #tpu.memory_space<vmem>>, vector<8x4x64xbf16>
    %c2_168 = arith.constant 2 : index
    %c0_169 = arith.constant 0 : index
    %c0_170 = arith.constant 0 : index
    %c0_171 = arith.constant 0 : index
    %132 = vector.load %arg6[%c2_168, %c0_169, %c0_170, %c0_171] : memref<3x2x64x64xbf16, #tpu.memory_space<vmem>>, vector<1x1x64x64xbf16>
    %133 = vector.shape_cast %132 : vector<1x1x64x64xbf16> to vector<64x64xbf16>
    %cst_172 = arith.constant dense<0.000000e+00> : vector<8x4x64xf32>
    %134 = tpu.matmul %131, %133, %cst_172 {dimension_numbers = #tpu.dot_dimension_numbers<[2], [0], [0, 1], [1], [0, 0, 0, 1, 1, 1], [], []>} : vector<8x4x64xbf16>, vector<64x64xbf16>, vector<8x4x64xf32> -> vector<8x4x64xf32>
    %c2_173 = arith.constant 2 : index
    %c2_174 = arith.constant 2 : index
    %c0_175 = arith.constant 0 : index
    %135 = vector.load %arg9[%c2_173, %c2_174, %c0_175] : memref<10x6x128xbf16, #tpu.memory_space<vmem>>, vector<8x4x64xbf16>
    %c2_176 = arith.constant 2 : index
    %c1_177 = arith.constant 1 : index
    %c0_178 = arith.constant 0 : index
    %c0_179 = arith.constant 0 : index
    %136 = vector.load %arg6[%c2_176, %c1_177, %c0_178, %c0_179] : memref<3x2x64x64xbf16, #tpu.memory_space<vmem>>, vector<1x1x64x64xbf16>
    %137 = vector.shape_cast %136 : vector<1x1x64x64xbf16> to vector<64x64xbf16>
    %cst_180 = arith.constant dense<0.000000e+00> : vector<8x4x64xf32>
    %138 = tpu.matmul %135, %137, %cst_180 {dimension_numbers = #tpu.dot_dimension_numbers<[2], [0], [0, 1], [1], [0, 0, 0, 1, 1, 1], [], []>} : vector<8x4x64xbf16>, vector<64x64xbf16>, vector<8x4x64xf32> -> vector<8x4x64xf32>
    %139 = arith.addf %129, %134 : vector<8x4x64xf32>
    %140 = arith.addf %130, %138 : vector<8x4x64xf32>
    %141 = tpu.concatenate %139, %140 in 2 : vector<8x4x64xf32>, vector<8x4x64xf32> -> vector<8x4x128xf32>
    %142 = arith.addf %112, %141 : vector<8x4x128xf32>
    %143 = vector.shape_cast %8 : vector<1x128xf32> to vector<1x1x128xf32>
    %144 = vector.broadcast %143 : vector<1x1x128xf32> to vector<8x4x128xf32>
    %145 = arith.addf %142, %144 : vector<8x4x128xf32>
    %c1_181 = arith.constant 1 : index
    %c0_182 = arith.constant 0 : index
    %c0_183 = arith.constant 0 : index
    %c0_184 = arith.constant 0 : index
    %146 = vector.load %arg8[%c1_181, %c0_182, %c0_183, %c0_184] : memref<2x8x4x128xf32, #tpu.memory_space<vmem>>, vector<1x8x4x128xf32>
    %147 = vector.shape_cast %146 : vector<1x8x4x128xf32> to vector<8x4x128xf32>
    %148 = vector.shape_cast %145 : vector<8x4x128xf32> to vector<1x8x4x128xf32>
    tpu.vector_store %arg8[%c1_181, %c0_182, %c0_183, %c0_184], %148 {strides = array<i32>} : memref<2x8x4x128xf32, #tpu.memory_space<vmem>>, vector<1x8x4x128xf32>,
    return
  }
  func.func @transform_0(%arg0: i32) -> (i32, i32, i32, i32) {
    %c0_i32 = arith.constant 0 : i32
    %c0_i32_0 = arith.constant 0 : i32
    %c0_i32_1 = arith.constant 0 : i32
    %c0_i32_2 = arith.constant 0 : i32
    return %arg0, %c0_i32, %c0_i32_0, %c0_i32_1 : i32, i32, i32, i32
  }
  func.func @transform_1(%arg0: i32) -> (i32, i32, i32, i32) {
    %c0_i32 = arith.constant 0 : i32
    %c0_i32_0 = arith.constant 0 : i32
    %c0_i32_1 = arith.constant 0 : i32
    %c0_i32_2 = arith.constant 0 : i32
    return %arg0, %c0_i32, %c0_i32_0, %c0_i32_1 : i32, i32, i32, i32
  }
  func.func @transform_2(%arg0: i32) -> (i32, i32) {
    %c0_i32 = arith.constant 0 : i32
    %c0_i32_0 = arith.constant 0 : i32
    %c0_i32_1 = arith.constant 0 : i32
    return %c0_i32, %c0_i32_0 : i32, i32
  }
  func.func @transform_3(%arg0: i32) -> (i32, i32) {
    %c0_i32 = arith.constant 0 : i32
    %c0_i32_0 = arith.constant 0 : i32
    %c0_i32_1 = arith.constant 0 : i32
    return %c0_i32, %c0_i32_0 : i32, i32
  }
  func.func @transform_4(%arg0: i32) -> (i32, i32, i32) {
    %c0_i32 = arith.constant 0 : i32
    %c0_i32_0 = arith.constant 0 : i32
    %c0_i32_1 = arith.constant 0 : i32
    %c0_i32_2 = arith.constant 0 : i32
    return %c0_i32, %c0_i32_0, %c0_i32_1 : i32, i32, i32
  }
  func.func @transform_5(%arg0: i32) -> (i32, i32, i32, i32) {
    %c0_i32 = arith.constant 0 : i32
    %c0_i32_0 = arith.constant 0 : i32
    %c0_i32_1 = arith.constant 0 : i32
    %c0_i32_2 = arith.constant 0 : i32
    %c0_i32_3 = arith.constant 0 : i32
    return %c0_i32, %c0_i32_0, %c0_i32_1, %c0_i32_2 : i32, i32, i32, i32
  }
  func.func @transform_6(%arg0: i32) -> (i32, i32) {
    %c0_i32 = arith.constant 0 : i32
    %c0_i32_0 = arith.constant 0 : i32
    %c0_i32_1 = arith.constant 0 : i32
    return %c0_i32, %c0_i32_0 : i32, i32
  }
  func.func @transform_7(%arg0: i32) -> (i32, i32, i32, i32) {
    %c0_i32 = arith.constant 0 : i32
    %c0_i32_0 = arith.constant 0 : i32
    %c0_i32_1 = arith.constant 0 : i32
    %c0_i32_2 = arith.constant 0 : i32
    return %arg0, %c0_i32, %c0_i32_0, %c0_i32_1 : i32, i32, i32, i32
  }
}

</mosaic_0001>

<llo_original>
// kernel: detector_backbone_with_fpn.3
$region0: #{detector_backbone_with_fpn.3}
  #allocation0 [shape = 'u32[]', space=smem, size = 0x4, offset = 0x4, fixed_abs, tag = 'smem constant byte address 0x4 - core index']
  #allocation1 [shape = 'u32[72,128]{1,0:T(1,128)}', space=vmem, size = 0x9000, scoped, tag = 'internal scratch']
  #allocation2 [shape = 'bf16[4,3,128]{2,1,0:T(4,128)(2,1)}', space=vmem, size = 0x1000, scoped, tag = 'scratch operand']
  %s0 = inlined_call_operand.vmem [shape: bf16[2,2,1,256], index: 0, kind: input, shape index: {}]
  %s1 = inlined_call_operand.vmem [shape: bf16[128,64], index: 1, kind: input, shape index: {}]
  %s2 = inlined_call_operand.vmem [shape: f32[1,128], index: 2, kind: input, shape index: {}]
  %s3 = inlined_call_operand.vmem [shape: bf16[3,128,128], index: 3, kind: input, shape index: {}]
  %s4 = inlined_call_operand.vmem [shape: bf16[3,2,64,64], index: 4, kind: input, shape index: {}]
  %s5 = inlined_call_operand.vmem [shape: f32[1,128], index: 5, kind: input, shape index: {}]
  %s6 = inlined_call_operand.vmem [shape: bf16[2,2,1,128], index: 6, kind: output, shape index: {0}]
  %s7 = inlined_call_operand.vmem [shape: f32[2,2,1,128], index: 7, kind: output, shape index: {1}]
  %8 = xla_tuple %s6, %s7
  %s9 = sld [smem:[#allocation0]]
  $region42: #{detector_backbone_with_fpn.3} parent=0
    _
  %s11 = ssub.s32 1, %s9
  %s12 = scalar_select 0, %s11, %s9
  // Predicated region
  $region2: #{detector_backbone_with_fpn.3} parent=0 // pred_check
    _
  $region3: #{detector_backbone_with_fpn.3} parent=0 // pred_check_branch
    %14 = sbr.rel (0) target = $region5
  $region4: #{detector_backbone_with_fpn.3} parent=0 // pred_region
    _
  $region5: #{detector_backbone_with_fpn.3} parent=0 // pred_fallthru
    _
  // Predicated region
  $region6: #{detector_backbone_with_fpn.3} parent=0 // pred_check
    _
  $region7: #{detector_backbone_with_fpn.3} parent=0 // pred_check_branch
    %16 = sbr.rel (0) target = $region9
  $region8: #{detector_backbone_with_fpn.3} parent=0 // pred_region
    _
  $region9: #{detector_backbone_with_fpn.3} parent=0 // pred_fallthru
    _
  // Predicated region
  $region10: #{detector_backbone_with_fpn.3} parent=0 // pred_check
    _
  $region11: #{detector_backbone_with_fpn.3} parent=0 // pred_check_branch
    %18 = sbr.rel (0) target = $region13
  $region12: #{detector_backbone_with_fpn.3} parent=0 // pred_region
    _
  $region13: #{detector_backbone_with_fpn.3} parent=0 // pred_fallthru
    _
  // Predicated region
  $region14: #{detector_backbone_with_fpn.3} parent=0 // pred_check
    _
  $region15: #{detector_backbone_with_fpn.3} parent=0 // pred_check_branch
    %20 = sbr.rel (0) target = $region17
  $region16: #{detector_backbone_with_fpn.3} parent=0 // pred_region
    _
  $region17: #{detector_backbone_with_fpn.3} parent=0 // pred_fallthru
    _
  // Predicated region
  $region18: #{detector_backbone_with_fpn.3} parent=0 // pred_check
    _
  $region19: #{detector_backbone_with_fpn.3} parent=0 // pred_check_branch
    %22 = sbr.rel (0) target = $region21
  $region20: #{detector_backbone_with_fpn.3} parent=0 // pred_region
    _
  $region21: #{detector_backbone_with_fpn.3} parent=0 // pred_fallthru
    _
  // Predicated region
  $region22: #{detector_backbone_with_fpn.3} parent=0 // pred_check
    _
  $region23: #{detector_backbone_with_fpn.3} parent=0 // pred_check_branch
    %24 = sbr.rel (0) target = $region25
  $region24: #{detector_backbone_with_fpn.3} parent=0 // pred_region
    _
  $region25: #{detector_backbone_with_fpn.3} parent=0 // pred_fallthru
    _
  %vm26 = vcmask 1041408
  %vm27 = vsmask.f32 1280
  %vm28 = vmand %vm26, %vm27
  %v29 = vld [vmem:[#allocation2] sm:$0x3]
  %v30 = vsel %vm28, 0, %v29
  %31 = vst [vmem:[#allocation2] sm:$0x3] %v30
  %s32 = scalar_lea.vmem [#allocation2], 6
  %v33 = vld [vmem:[%s32] sm:$0x3]
  %v34 = vsel %vm28, 0, %v33
  %35 = vst [vmem:[%s32] sm:$0x3] %v34
  %vm36 = vcmask 1040384
  %vm37 = vsmask.f32 256
  %vm38 = vmand %vm36, %vm37
  %v39 = vld [vmem:[#allocation2] sm:$0x1]
  %v40 = vsel %vm38, 0, %v39
  %41 = vst [vmem:[#allocation2] sm:$0x1] %v40
  %v42 = vld [vmem:[#allocation2 + $0x2] sm:$0x1]
  %v43 = vsel %vm38, 0, %v42
  %44 = vst [vmem:[#allocation2 + $0x2] sm:$0x1] %v43
  %v45 = vld [vmem:[#allocation2 + $0x4] sm:$0x1]
  %v46 = vsel %vm38, 0, %v45
  %47 = vst [vmem:[#allocation2 + $0x4] sm:$0x1] %v46
  %v48 = vld [vmem:[#allocation2 + $0x6] sm:$0x1]
  %v49 = vsel %vm38, 0, %v48
  %50 = vst [vmem:[#allocation2 + $0x6] sm:$0x1] %v49
  %vm51 = vcmask 1041409
  %vm52 = vmand %vm51, %vm27
  %v53 = vld [vmem:[#allocation2] sm:$0x2]
  %v54 = vsel %vm52, 0, %v53
  %55 = vst [vmem:[#allocation2] sm:$0x2] %v54
  %v56 = vld [vmem:[#allocation2 + $0x2] sm:$0x2]
  %v57 = vsel %vm52, 0, %v56
  %58 = vst [vmem:[#allocation2 + $0x2] sm:$0x2] %v57
  %v59 = vld [vmem:[#allocation2 + $0x4] sm:$0x2]
  %v60 = vsel %vm52, 0, %v59
  %61 = vst [vmem:[#allocation2 + $0x4] sm:$0x2] %v60
  %v62 = vld [vmem:[#allocation2 + $0x6] sm:$0x2]
  %v63 = vsel %vm52, 0, %v62
  %64 = vst [vmem:[#allocation2 + $0x6] sm:$0x2] %v63
  %v65 = vld [vmem:[%s1] sm:$0xf]
  %v66 = vld [vmem:[%s1 + $0x4] sm:$0xf]
  %v67 = vld [vmem:[%s1 + $0x8] sm:$0xf]
  %v68 = vld [vmem:[%s1 + $0xc] sm:$0xf]
  %v69 = vld [vmem:[%s1 + $0x10] sm:$0xf]
  %v70 = vld [vmem:[%s1 + $0x14] sm:$0xf]
  %v71 = vld [vmem:[%s1 + $0x18] sm:$0xf]
  %v72 = vld [vmem:[%s1 + $0x1c] sm:$0xf]
  %v73 = vld [vmem:[%s1 + $0x20] sm:$0xf]
  %v74 = vld [vmem:[%s1 + $0x24] sm:$0xf]
  %v75 = vld [vmem:[%s1 + $0x28] sm:$0xf]
  %v76 = vld [vmem:[%s1 + $0x2c] sm:$0xf]
  %v77 = vld [vmem:[%s1 + $0x30] sm:$0xf]
  %v78 = vld [vmem:[%s1 + $0x34] sm:$0xf]
  %v79 = vld [vmem:[%s1 + $0x38] sm:$0xf]
  %v80 = vld [vmem:[%s1 + $0x3c] sm:$0xf]
  %v81 = vld [vmem:[%s2] sm:$0x1]
  %v82 = vld [vmem:[%s5] sm:$0x1]
  %v83 = vld [vmem:[%s0] sm:$0x3]
  %v84 = vld [vmem:[%s0 + $0x2] sm:$0x3]
  %86 = vst [vmem:[#allocation1] ss:$9 sm:$0xff] %v83
  %v87 = vld [vmem:[#allocation1] sm:$0xff]
  %90 = vst [vmem:[#allocation1] ss:$9 sm:$0xff] %v84
  %v91 = vld [vmem:[#allocation1] sm:$0xff]
  %v93 = vunpack.c.l.b16 %v87
  %v94 = vunpack.c.l.b16 %v91
  %v95 = vrot.slane %v94, 7
  %vm96 = vcmask 1041409
  %v97 = vsel %vm96, %v95, %v93
  %v98 = vpack.c.b16 %v97, %v97
  %v116 = vunpack.c.l.b16 %v65
  %v117 = vunpack.c.l.b16 %v66
  %v118 = vunpack.c.l.b16 %v67
  %v119 = vunpack.c.l.b16 %v68
  %v120 = vunpack.c.l.b16 %v69
  %v121 = vunpack.c.l.b16 %v70
  %v122 = vunpack.c.l.b16 %v71
  %v123 = vunpack.c.l.b16 %v72
  %v124 = vunpack.c.l.b16 %v73
  %v125 = vunpack.c.l.b16 %v74
  %v126 = vunpack.c.l.b16 %v75
  %v127 = vunpack.c.l.b16 %v76
  %v128 = vunpack.c.l.b16 %v77
  %v129 = vunpack.c.l.b16 %v78
  %v130 = vunpack.c.l.b16 %v79
  %v131 = vunpack.c.l.b16 %v80
  %v132 = vpack.c.b16 %v117, %v116
  %v133 = vpack.c.b16 %v119, %v118
  %v134 = vpack.c.b16 %v121, %v120
  %v135 = vpack.c.b16 %v123, %v122
  %v136 = vpack.c.b16 %v125, %v124
  %v137 = vpack.c.b16 %v127, %v126
  %v138 = vpack.c.b16 %v129, %v128
  %v139 = vpack.c.b16 %v131, %v130
  %148 = vmatpush.bf16.msra.mxu0 %v139
  %149 = vmatpush.bf16.msra.mxu0 %v138
  %150 = vmatpush.bf16.msra.mxu0 %v137
  %151 = vmatpush.bf16.msra.mxu0 %v136
  %152 = vmatpush.bf16.msra.mxu0 %v135
  %153 = vmatpush.bf16.msra.mxu0 %v134
  %154 = vmatpush.bf16.msra.mxu0 %v133
  %155 = vmatpush.bf16.msra.mxu0 %v132
  %156 = vmatmul.bf16.gmra.mxu0 %v98
  %v157 = vpop.f32.mrf.mxu0
  %v158 = vadd.f32 0.0, %v157
  %v159 = vpop.f32.mrf.mxu0
  %160 = vdwg.mxu0
  %v162 = vrot.slane %v158, 1
  %v166 = vrot.slane %v83, 1
  %v167 = vrot.slane %v84, 1
  %169 = vst [vmem:[#allocation1] ss:$9 sm:$0xff] %v166
  %v170 = vld [vmem:[#allocation1] sm:$0xff]
  %173 = vst [vmem:[#allocation1] ss:$9 sm:$0xff] %v167
  %v174 = vld [vmem:[#allocation1] sm:$0xff]
  %v176 = vunpack.c.l.b16 %v170
  %v177 = vunpack.c.l.b16 %v174
  %v178 = vrot.slane %v177, 7
  %v179 = vsel %vm96, %v178, %v176
  %v180 = vpack.c.b16 %v179, %v179
  %182 = vmatpush.bf16.msra.mxu0 %v139
  %183 = vmatpush.bf16.msra.mxu0 %v138
  %184 = vmatpush.bf16.msra.mxu0 %v137
  %185 = vmatpush.bf16.msra.mxu0 %v136
  %186 = vmatpush.bf16.msra.mxu0 %v135
  %187 = vmatpush.bf16.msra.mxu0 %v134
  %188 = vmatpush.bf16.msra.mxu0 %v133
  %189 = vmatpush.bf16.msra.mxu0 %v132
  %190 = vmatmul.bf16.gmra.mxu0 %v180
  %v191 = vpop.f32.mrf.mxu0
  %v192 = vadd.f32 0.0, %v191
  %v193 = vpop.f32.mrf.mxu0
  %194 = vdwg.mxu0
  %v196 = vrot.slane %v192, 1
  %v197 = vperm.slane %v192, 0
  %v198 = vperm.slane %v196, 0
  %199 = vrot.lane.b32.xlu0 %v197, 64
  %v200 = vpop.permute.xlu0 %199
  %201 = vrot.lane.b32.xlu0 %v198, 64
  %v202 = vpop.permute.xlu0 %201
  %vm205 = vcmask 523264
  %v206 = vsel %vm205, %v158, %v200
  %v207 = vsel %vm205, %v162, %v202
  %v208 = vadd.f32 %v206, %v81
  %v209 = vadd.f32 %v207, %v81
  %v210 = vpack.c.bf16 %v208, %v208
  %v211 = vpack.c.bf16 %v209, %v209
  %v212 = vld [vmem:[%s6] sm:$0x1]
  %v213 = vsel %vm38, %v210, %v212
  %214 = vst [vmem:[%s6] sm:$0x1] %v213
  %v215 = vld [vmem:[%s6 + $0x1] sm:$0x1]
  %v216 = vsel %vm38, %v211, %v215
  %217 = vst [vmem:[%s6 + $0x1] sm:$0x1] %v216
  %v220 = vrot.slane %v210, 2
  %v221 = vrot.slane %v211, 2
  %vm222 = vcmask 1041408
  %v225 = vsel %vm222, %v210, %v220
  %v228 = vsel %vm222, %v211, %v221
  %v229 = vshll.u32 %v225, 16
  %v231 = vshll.u32 %v228, 16
  %s235 = scalar_lea.vmem [#allocation2], 2
  %vm236 = vsmask.f32 7938
  %vm237 = vmand %vm36, %vm236
  %v238 = vld [vmem:[%s235] sm:$0x1]
  %v239 = vsel %vm237, %v229, %v238
  %240 = vst [vmem:[%s235] sm:$0x1] %v239
  %v241 = vld [vmem:[%s235 + $0x2] sm:$0x1]
  %v242 = vsel %vm237, %v231, %v241
  %243 = vst [vmem:[%s235 + $0x2] sm:$0x1] %v242
  %v244 = vld [vmem:[#allocation2] sm:$0x1]
  %v245 = vld [vmem:[#allocation2 + $0x2] sm:$0x1]
  %v246 = vld [vmem:[%s3] sm:$0xf]
  %v247 = vld [vmem:[%s3 + $0x4] sm:$0xf]
  %v248 = vld [vmem:[%s3 + $0x8] sm:$0xf]
  %v249 = vld [vmem:[%s3 + $0xc] sm:$0xf]
  %v250 = vld [vmem:[%s3 + $0x10] sm:$0xf]
  %v251 = vld [vmem:[%s3 + $0x14] sm:$0xf]
  %v252 = vld [vmem:[%s3 + $0x18] sm:$0xf]
  %v253 = vld [vmem:[%s3 + $0x1c] sm:$0xf]
  %v254 = vld [vmem:[%s3 + $0x20] sm:$0xf]
  %v255 = vld [vmem:[%s3 + $0x24] sm:$0xf]
  %v256 = vld [vmem:[%s3 + $0x28] sm:$0xf]
  %v257 = vld [vmem:[%s3 + $0x2c] sm:$0xf]
  %v258 = vld [vmem:[%s3 + $0x30] sm:$0xf]
  %v259 = vld [vmem:[%s3 + $0x34] sm:$0xf]
  %v260 = vld [vmem:[%s3 + $0x38] sm:$0xf]
  %v261 = vld [vmem:[%s3 + $0x3c] sm:$0xf]
  %v262 = vld [vmem:[%s235] sm:$0x1]
  %v263 = vld [vmem:[%s235 + $0x2] sm:$0x1]
  %s264 = scalar_lea.vmem %s3, 64
  %v265 = vld [vmem:[%s264] sm:$0xf]
  %v266 = vld [vmem:[%s264 + $0x4] sm:$0xf]
  %v267 = vld [vmem:[%s264 + $0x8] sm:$0xf]
  %v268 = vld [vmem:[%s264 + $0xc] sm:$0xf]
  %v269 = vld [vmem:[%s264 + $0x10] sm:$0xf]
  %v270 = vld [vmem:[%s264 + $0x14] sm:$0xf]
  %v271 = vld [vmem:[%s264 + $0x18] sm:$0xf]
  %v272 = vld [vmem:[%s264 + $0x1c] sm:$0xf]
  %v273 = vld [vmem:[%s264 + $0x20] sm:$0xf]
  %v274 = vld [vmem:[%s264 + $0x24] sm:$0xf]
  %v275 = vld [vmem:[%s264 + $0x28] sm:$0xf]
  %v276 = vld [vmem:[%s264 + $0x2c] sm:$0xf]
  %v277 = vld [vmem:[%s264 + $0x30] sm:$0xf]
  %v278 = vld [vmem:[%s264 + $0x34] sm:$0xf]
  %v279 = vld [vmem:[%s264 + $0x38] sm:$0xf]
  %v280 = vld [vmem:[%s264 + $0x3c] sm:$0xf]
  %282 = vst [vmem:[#allocation1] ss:$4 sm:$0xff] %v262
  %v283 = vld.sshfl [vmem:[#allocation1] sm:$0xff pattern:$0x73625140]
  %s286 = scalar_lea.vmem [#allocation1], 32
  %287 = vst [vmem:[%s286] ss:$4 sm:$0xff] %v263
  %v288 = vld.sshfl [vmem:[#allocation1 + $0x20] sm:$0xff pattern:$0x73625140]
  %v290 = vunpack.c.l.b16 %v283
  %v291 = vunpack.c.l.b16 %v288
  %v292 = vrot.slane %v290, 1
  %v293 = vsel %vm96, %v291, %v292
  %v294 = vpack.c.b16 %v293, %v293
  %v312 = vunpack.c.l.b16 %v265
  %v313 = vunpack.c.l.b16 %v266
  %v314 = vunpack.c.l.b16 %v267
  %v315 = vunpack.c.l.b16 %v268
  %v316 = vunpack.c.l.b16 %v269
  %v317 = vunpack.c.l.b16 %v270
  %v318 = vunpack.c.l.b16 %v271
  %v319 = vunpack.c.l.b16 %v272
  %v320 = vunpack.c.l.b16 %v273
  %v321 = vunpack.c.l.b16 %v274
  %v322 = vunpack.c.l.b16 %v275
  %v323 = vunpack.c.l.b16 %v276
  %v324 = vunpack.c.l.b16 %v277
  %v325 = vunpack.c.l.b16 %v278
  %v326 = vunpack.c.l.b16 %v279
  %v327 = vunpack.c.l.b16 %v280
  %v328 = vpack.c.b16 %v313, %v312
  %v329 = vpack.c.b16 %v315, %v314
  %v330 = vpack.c.b16 %v317, %v316
  %v331 = vpack.c.b16 %v319, %v318
  %v332 = vpack.c.b16 %v321, %v320
  %v333 = vpack.c.b16 %v323, %v322
  %v334 = vpack.c.b16 %v325, %v324
  %v335 = vpack.c.b16 %v327, %v326
  %344 = vmatpush.bf16.msra.mxu0 %v335
  %345 = vmatpush.bf16.msra.mxu0 %v334
  %346 = vmatpush.bf16.msra.mxu0 %v333
  %347 = vmatpush.bf16.msra.mxu0 %v332
  %348 = vmatpush.bf16.msra.mxu0 %v331
  %349 = vmatpush.bf16.msra.mxu0 %v330
  %350 = vmatpush.bf16.msra.mxu0 %v329
  %351 = vmatpush.bf16.msra.mxu0 %v328
  %352 = vmatmul.bf16.gmra.mxu0 %v294
  %v353 = vpop.f32.mrf.mxu0
  %v354 = vadd.f32 0.0, %v353
  %v355 = vpop.f32.mrf.mxu0
  %356 = vdwg.mxu0
  %358 = vst [vmem:[#allocation1] ss:$4 sm:$0xff] %v244
  %v359 = vld.sshfl [vmem:[#allocation1] sm:$0xff pattern:$0x73625140]
  %s362 = scalar_lea.vmem [#allocation1], 32
  %363 = vst [vmem:[%s362] ss:$4 sm:$0xff] %v245
  %v364 = vld.sshfl [vmem:[#allocation1 + $0x20] sm:$0xff pattern:$0x73625140]
  %v366 = vunpack.c.l.b16 %v359
  %v367 = vunpack.c.l.b16 %v364
  %v368 = vrot.slane %v366, 1
  %v369 = vsel %vm96, %v367, %v368
  %v370 = vpack.c.b16 %v369, %v369
  %v388 = vunpack.c.l.b16 %v246
  %v389 = vunpack.c.l.b16 %v247
  %v390 = vunpack.c.l.b16 %v248
  %v391 = vunpack.c.l.b16 %v249
  %v392 = vunpack.c.l.b16 %v250
  %v393 = vunpack.c.l.b16 %v251
  %v394 = vunpack.c.l.b16 %v252
  %v395 = vunpack.c.l.b16 %v253
  %v396 = vunpack.c.l.b16 %v254
  %v397 = vunpack.c.l.b16 %v255
  %v398 = vunpack.c.l.b16 %v256
  %v399 = vunpack.c.l.b16 %v257
  %v400 = vunpack.c.l.b16 %v258
  %v401 = vunpack.c.l.b16 %v259
  %v402 = vunpack.c.l.b16 %v260
  %v403 = vunpack.c.l.b16 %v261
  %v404 = vpack.c.b16 %v389, %v388
  %v405 = vpack.c.b16 %v391, %v390
  %v406 = vpack.c.b16 %v393, %v392
  %v407 = vpack.c.b16 %v395, %v394
  %v408 = vpack.c.b16 %v397, %v396
  %v409 = vpack.c.b16 %v399, %v398
  %v410 = vpack.c.b16 %v401, %v400
  %v411 = vpack.c.b16 %v403, %v402
  %420 = vmatpush.bf16.msra.mxu0 %v411
  %421 = vmatpush.bf16.msra.mxu0 %v410
  %422 = vmatpush.bf16.msra.mxu0 %v409
  %423 = vmatpush.bf16.msra.mxu0 %v408
  %424 = vmatpush.bf16.msra.mxu0 %v407
  %425 = vmatpush.bf16.msra.mxu0 %v406
  %426 = vmatpush.bf16.msra.mxu0 %v405
  %427 = vmatpush.bf16.msra.mxu0 %v404
  %428 = vmatmul.bf16.gmra.mxu0 %v370
  %v429 = vpop.f32.mrf.mxu0
  %v430 = vadd.f32 %v354, %v429
  %v431 = vpop.f32.mrf.mxu0
  %432 = vdwg.mxu0
  %v434 = vrot.slane %v430, 1
  %s436 = scalar_lea.vmem [#allocation2], 4
  %v437 = vld [vmem:[%s436] sm:$0x1]
  %v438 = vld [vmem:[%s436 + $0x2] sm:$0x1]
  %s439 = scalar_lea.vmem %s3, 128
  %v440 = vld [vmem:[%s439] sm:$0xf]
  %v441 = vld [vmem:[%s439 + $0x4] sm:$0xf]
  %v442 = vld [vmem:[%s439 + $0x8] sm:$0xf]
  %v443 = vld [vmem:[%s439 + $0xc] sm:$0xf]
  %v444 = vld [vmem:[%s439 + $0x10] sm:$0xf]
  %v445 = vld [vmem:[%s439 + $0x14] sm:$0xf]
  %v446 = vld [vmem:[%s439 + $0x18] sm:$0xf]
  %v447 = vld [vmem:[%s439 + $0x1c] sm:$0xf]
  %v448 = vld [vmem:[%s439 + $0x20] sm:$0xf]
  %v449 = vld [vmem:[%s439 + $0x24] sm:$0xf]
  %v450 = vld [vmem:[%s439 + $0x28] sm:$0xf]
  %v451 = vld [vmem:[%s439 + $0x2c] sm:$0xf]
  %v452 = vld [vmem:[%s439 + $0x30] sm:$0xf]
  %v453 = vld [vmem:[%s439 + $0x34] sm:$0xf]
  %v454 = vld [vmem:[%s439 + $0x38] sm:$0xf]
  %v455 = vld [vmem:[%s439 + $0x3c] sm:$0xf]
  %457 = vst [vmem:[#allocation1] ss:$4 sm:$0xff] %v437
  %v458 = vld.sshfl [vmem:[#allocation1] sm:$0xff pattern:$0x73625140]
  %s461 = scalar_lea.vmem [#allocation1], 32
  %462 = vst [vmem:[%s461] ss:$4 sm:$0xff] %v438
  %v463 = vld.sshfl [vmem:[#allocation1 + $0x20] sm:$0xff pattern:$0x73625140]
  %v465 = vunpack.c.l.b16 %v458
  %v466 = vunpack.c.l.b16 %v463
  %v467 = vrot.slane %v465, 1
  %v468 = vsel %vm96, %v466, %v467
  %v469 = vpack.c.b16 %v468, %v468
  %v487 = vunpack.c.l.b16 %v440
  %v488 = vunpack.c.l.b16 %v441
  %v489 = vunpack.c.l.b16 %v442
  %v490 = vunpack.c.l.b16 %v443
  %v491 = vunpack.c.l.b16 %v444
  %v492 = vunpack.c.l.b16 %v445
  %v493 = vunpack.c.l.b16 %v446
  %v494 = vunpack.c.l.b16 %v447
  %v495 = vunpack.c.l.b16 %v448
  %v496 = vunpack.c.l.b16 %v449
  %v497 = vunpack.c.l.b16 %v450
  %v498 = vunpack.c.l.b16 %v451
  %v499 = vunpack.c.l.b16 %v452
  %v500 = vunpack.c.l.b16 %v453
  %v501 = vunpack.c.l.b16 %v454
  %v502 = vunpack.c.l.b16 %v455
  %v503 = vpack.c.b16 %v488, %v487
  %v504 = vpack.c.b16 %v490, %v489
  %v505 = vpack.c.b16 %v492, %v491
  %v506 = vpack.c.b16 %v494, %v493
  %v507 = vpack.c.b16 %v496, %v495
  %v508 = vpack.c.b16 %v498, %v497
  %v509 = vpack.c.b16 %v500, %v499
  %v510 = vpack.c.b16 %v502, %v501
  %519 = vmatpush.bf16.msra.mxu0 %v510
  %520 = vmatpush.bf16.msra.mxu0 %v509
  %521 = vmatpush.bf16.msra.mxu0 %v508
  %522 = vmatpush.bf16.msra.mxu0 %v507
  %523 = vmatpush.bf16.msra.mxu0 %v506
  %524 = vmatpush.bf16.msra.mxu0 %v505
  %525 = vmatpush.bf16.msra.mxu0 %v504
  %526 = vmatpush.bf16.msra.mxu0 %v503
  %527 = vmatmul.bf16.gmra.mxu0 %v469
  %v528 = vpop.f32.mrf.mxu0
  %v529 = vadd.f32 0.0, %v528
  %v530 = vpop.f32.mrf.mxu0
  %531 = vdwg.mxu0
  %v533 = vrot.slane %v529, 1
  %v535 = vadd.f32 %v430, %v529
  %v536 = vadd.f32 %v434, %v533
  %v537 = vld [vmem:[#allocation2] sm:$0x1]
  %v538 = vld [vmem:[#allocation2 + $0x2] sm:$0x1]
  %v539 = vld [vmem:[%s4] sm:$0xf]
  %v540 = vld [vmem:[%s4 + $0x4] sm:$0xf]
  %v541 = vld [vmem:[%s4 + $0x8] sm:$0xf]
  %v542 = vld [vmem:[%s4 + $0xc] sm:$0xf]
  %v543 = vld [vmem:[%s4 + $0x10] sm:$0xf]
  %v544 = vld [vmem:[%s4 + $0x14] sm:$0xf]
  %v545 = vld [vmem:[%s4 + $0x18] sm:$0xf]
  %v546 = vld [vmem:[%s4 + $0x1c] sm:$0xf]
  %v547 = vld [vmem:[#allocation2] sm:$0x2]
  %v548 = vld [vmem:[#allocation2 + $0x2] sm:$0x2]
  %s549 = scalar_lea.vmem %s4, 32
  %v550 = vld [vmem:[%s549] sm:$0xf]
  %v551 = vld [vmem:[%s549 + $0x4] sm:$0xf]
  %v552 = vld [vmem:[%s549 + $0x8] sm:$0xf]
  %v553 = vld [vmem:[%s549 + $0xc] sm:$0xf]
  %v554 = vld [vmem:[%s549 + $0x10] sm:$0xf]
  %v555 = vld [vmem:[%s549 + $0x14] sm:$0xf]
  %v556 = vld [vmem:[%s549 + $0x18] sm:$0xf]
  %v557 = vld [vmem:[%s549 + $0x1c] sm:$0xf]
  %v558 = vld [vmem:[%s235] sm:$0x1]
  %v559 = vld [vmem:[%s235 + $0x2] sm:$0x1]
  %s560 = scalar_lea.vmem %s4, 64
  %v561 = vld [vmem:[%s560] sm:$0xf]
  %v562 = vld [vmem:[%s560 + $0x4] sm:$0xf]
  %v563 = vld [vmem:[%s560 + $0x8] sm:$0xf]
  %v564 = vld [vmem:[%s560 + $0xc] sm:$0xf]
  %v565 = vld [vmem:[%s560 + $0x10] sm:$0xf]
  %v566 = vld [vmem:[%s560 + $0x14] sm:$0xf]
  %v567 = vld [vmem:[%s560 + $0x18] sm:$0xf]
  %v568 = vld [vmem:[%s560 + $0x1c] sm:$0xf]
  %570 = vst [vmem:[#allocation1] ss:$4 sm:$0xff] %v558
  %v571 = vld.sshfl [vmem:[#allocation1] sm:$0xff pattern:$0x73625140]
  %s574 = scalar_lea.vmem [#allocation1], 32
  %575 = vst [vmem:[%s574] ss:$4 sm:$0xff] %v559
  %v576 = vld.sshfl [vmem:[#allocation1 + $0x20] sm:$0xff pattern:$0x73625140]
  %v578 = vunpack.c.l.b16 %v571
  %v579 = vunpack.c.l.b16 %v576
  %v580 = vrot.slane %v579, 7
  %v581 = vsel %vm96, %v580, %v578
  %v582 = vpack.c.b16 %v581, %v581
  %583 = vrot.lane.b32.xlu0 %v582, 64
  %v584 = vpop.permute.xlu0 %583
  %v593 = vunpack.c.l.b16 %v561
  %v594 = vunpack.c.l.b16 %v562
  %v595 = vunpack.c.l.b16 %v563
  %v596 = vunpack.c.l.b16 %v564
  %v597 = vunpack.c.l.b16 %v565
  %v598 = vunpack.c.l.b16 %v566
  %v599 = vunpack.c.l.b16 %v567
  %v600 = vunpack.c.l.b16 %v568
  %v601 = vpack.c.b16 %v594, %v593
  %v602 = vpack.c.b16 %v596, %v595
  %v603 = vpack.c.b16 %v598, %v597
  %v604 = vpack.c.b16 %v600, %v599
  %v610 = vsel %vm205, %v584, 0
  %612 = vmatpush.bf16.msra.mxu0 0
  %613 = vmatpush.bf16.msra.mxu0 0
  %614 = vmatpush.bf16.msra.mxu0 0
  %615 = vmatpush.bf16.msra.mxu0 0
  %616 = vmatpush.bf16.msra.mxu0 %v604
  %617 = vmatpush.bf16.msra.mxu0 %v603
  %618 = vmatpush.bf16.msra.mxu0 %v602
  %619 = vmatpush.bf16.msra.mxu0 %v601
  %620 = vmatmul.bf16.gmra.mxu0 %v610
  %v621 = vpop.f32.mrf.mxu0
  %v622 = vadd.f32 0.0, %v621
  %v623 = vpop.f32.mrf.mxu0
  %624 = vdwg.mxu0
  %v625 = vld [vmem:[%s235] sm:$0x2]
  %v626 = vld [vmem:[%s235 + $0x2] sm:$0x2]
  %s627 = scalar_lea.vmem %s4, 96
  %v628 = vld [vmem:[%s627] sm:$0xf]
  %v629 = vld [vmem:[%s627 + $0x4] sm:$0xf]
  %v630 = vld [vmem:[%s627 + $0x8] sm:$0xf]
  %v631 = vld [vmem:[%s627 + $0xc] sm:$0xf]
  %v632 = vld [vmem:[%s627 + $0x10] sm:$0xf]
  %v633 = vld [vmem:[%s627 + $0x14] sm:$0xf]
  %v634 = vld [vmem:[%s627 + $0x18] sm:$0xf]
  %v635 = vld [vmem:[%s627 + $0x1c] sm:$0xf]
  %637 = vst [vmem:[#allocation1] ss:$4 sm:$0xff] %v625
  %v638 = vld.sshfl [vmem:[#allocation1] sm:$0xff pattern:$0x73625140]
  %s641 = scalar_lea.vmem [#allocation1], 32
  %642 = vst [vmem:[%s641] ss:$4 sm:$0xff] %v626
  %v643 = vld.sshfl [vmem:[#allocation1 + $0x20] sm:$0xff pattern:$0x73625140]
  %v645 = vunpack.c.l.b16 %v638
  %v646 = vunpack.c.l.b16 %v643
  %v647 = vrot.slane %v645, 2
  %v648 = vrot.slane %v646, 1
  %v649 = vsel %vm96, %v648, %v647
  %v650 = vpack.c.b16 %v649, %v649
  %v659 = vunpack.c.l.b16 %v628
  %v660 = vunpack.c.l.b16 %v629
  %v661 = vunpack.c.l.b16 %v630
  %v662 = vunpack.c.l.b16 %v631
  %v663 = vunpack.c.l.b16 %v632
  %v664 = vunpack.c.l.b16 %v633
  %v665 = vunpack.c.l.b16 %v634
  %v666 = vunpack.c.l.b16 %v635
  %v667 = vpack.c.b16 %v660, %v659
  %v668 = vpack.c.b16 %v662, %v661
  %v669 = vpack.c.b16 %v664, %v663
  %v670 = vpack.c.b16 %v666, %v665
  %v676 = vsel %vm205, %v650, 0
  %678 = vmatpush.bf16.msra.mxu0 0
  %679 = vmatpush.bf16.msra.mxu0 0
  %680 = vmatpush.bf16.msra.mxu0 0
  %681 = vmatpush.bf16.msra.mxu0 0
  %682 = vmatpush.bf16.msra.mxu0 %v670
  %683 = vmatpush.bf16.msra.mxu0 %v669
  %684 = vmatpush.bf16.msra.mxu0 %v668
  %685 = vmatpush.bf16.msra.mxu0 %v667
  %686 = vmatmul.bf16.gmra.mxu0 %v676
  %v687 = vpop.f32.mrf.mxu0
  %v688 = vadd.f32 0.0, %v687
  %v689 = vpop.f32.mrf.mxu0
  %690 = vdwg.mxu0
  %692 = vst [vmem:[#allocation1] ss:$4 sm:$0xff] %v537
  %v693 = vld.sshfl [vmem:[#allocation1] sm:$0xff pattern:$0x73625140]
  %s696 = scalar_lea.vmem [#allocation1], 32
  %697 = vst [vmem:[%s696] ss:$4 sm:$0xff] %v538
  %v698 = vld.sshfl [vmem:[#allocation1 + $0x20] sm:$0xff pattern:$0x73625140]
  %v700 = vunpack.c.l.b16 %v693
  %v701 = vunpack.c.l.b16 %v698
  %v702 = vrot.slane %v701, 7
  %v703 = vsel %vm96, %v702, %v700
  %v704 = vpack.c.b16 %v703, %v703
  %705 = vrot.lane.b32.xlu0 %v704, 64
  %v706 = vpop.permute.xlu0 %705
  %v715 = vunpack.c.l.b16 %v539
  %v716 = vunpack.c.l.b16 %v540
  %v717 = vunpack.c.l.b16 %v541
  %v718 = vunpack.c.l.b16 %v542
  %v719 = vunpack.c.l.b16 %v543
  %v720 = vunpack.c.l.b16 %v544
  %v721 = vunpack.c.l.b16 %v545
  %v722 = vunpack.c.l.b16 %v546
  %v723 = vpack.c.b16 %v716, %v715
  %v724 = vpack.c.b16 %v718, %v717
  %v725 = vpack.c.b16 %v720, %v719
  %v726 = vpack.c.b16 %v722, %v721
  %v732 = vsel %vm205, %v706, 0
  %734 = vmatpush.bf16.msra.mxu0 0
  %735 = vmatpush.bf16.msra.mxu0 0
  %736 = vmatpush.bf16.msra.mxu0 0
  %737 = vmatpush.bf16.msra.mxu0 0
  %738 = vmatpush.bf16.msra.mxu0 %v726
  %739 = vmatpush.bf16.msra.mxu0 %v725
  %740 = vmatpush.bf16.msra.mxu0 %v724
  %741 = vmatpush.bf16.msra.mxu0 %v723
  %742 = vmatmul.bf16.gmra.mxu0 %v732
  %v743 = vpop.f32.mrf.mxu0
  %v744 = vadd.f32 %v622, %v743
  %v745 = vpop.f32.mrf.mxu0
  %746 = vdwg.mxu0
  %v748 = vrot.slane %v744, 1
  %751 = vst [vmem:[#allocation1] ss:$4 sm:$0xff] %v547
  %v752 = vld.sshfl [vmem:[#allocation1] sm:$0xff pattern:$0x73625140]
  %s755 = scalar_lea.vmem [#allocation1], 32
  %756 = vst [vmem:[%s755] ss:$4 sm:$0xff] %v548
  %v757 = vld.sshfl [vmem:[#allocation1 + $0x20] sm:$0xff pattern:$0x73625140]
  %v759 = vunpack.c.l.b16 %v752
  %v760 = vunpack.c.l.b16 %v757
  %v761 = vrot.slane %v759, 2
  %v762 = vrot.slane %v760, 1
  %v763 = vsel %vm96, %v762, %v761
  %v764 = vpack.c.b16 %v763, %v763
  %v773 = vunpack.c.l.b16 %v550
  %v774 = vunpack.c.l.b16 %v551
  %v775 = vunpack.c.l.b16 %v552
  %v776 = vunpack.c.l.b16 %v553
  %v777 = vunpack.c.l.b16 %v554
  %v778 = vunpack.c.l.b16 %v555
  %v779 = vunpack.c.l.b16 %v556
  %v780 = vunpack.c.l.b16 %v557
  %v781 = vpack.c.b16 %v774, %v773
  %v782 = vpack.c.b16 %v776, %v775
  %v783 = vpack.c.b16 %v778, %v777
  %v784 = vpack.c.b16 %v780, %v779
  %v790 = vsel %vm205, %v764, 0
  %792 = vmatpush.bf16.msra.mxu0 0
  %793 = vmatpush.bf16.msra.mxu0 0
  %794 = vmatpush.bf16.msra.mxu0 0
  %795 = vmatpush.bf16.msra.mxu0 0
  %796 = vmatpush.bf16.msra.mxu0 %v784
  %797 = vmatpush.bf16.msra.mxu0 %v783
  %798 = vmatpush.bf16.msra.mxu0 %v782
  %799 = vmatpush.bf16.msra.mxu0 %v781
  %800 = vmatmul.bf16.gmra.mxu0 %v790
  %v801 = vpop.f32.mrf.mxu0
  %v802 = vadd.f32 %v688, %v801
  %v803 = vpop.f32.mrf.mxu0
  %804 = vdwg.mxu0
  %v806 = vrot.slane %v802, 1
  %v808 = vld [vmem:[%s436] sm:$0x1]
  %v809 = vld [vmem:[%s436 + $0x2] sm:$0x1]
  %s810 = scalar_lea.vmem %s4, 128
  %v811 = vld [vmem:[%s810] sm:$0xf]
  %v812 = vld [vmem:[%s810 + $0x4] sm:$0xf]
  %v813 = vld [vmem:[%s810 + $0x8] sm:$0xf]
  %v814 = vld [vmem:[%s810 + $0xc] sm:$0xf]
  %v815 = vld [vmem:[%s810 + $0x10] sm:$0xf]
  %v816 = vld [vmem:[%s810 + $0x14] sm:$0xf]
  %v817 = vld [vmem:[%s810 + $0x18] sm:$0xf]
  %v818 = vld [vmem:[%s810 + $0x1c] sm:$0xf]
  %820 = vst [vmem:[#allocation1] ss:$4 sm:$0xff] %v808
  %v821 = vld.sshfl [vmem:[#allocation1] sm:$0xff pattern:$0x73625140]
  %s824 = scalar_lea.vmem [#allocation1], 32
  %825 = vst [vmem:[%s824] ss:$4 sm:$0xff] %v809
  %v826 = vld.sshfl [vmem:[#allocation1 + $0x20] sm:$0xff pattern:$0x73625140]
  %v828 = vunpack.c.l.b16 %v821
  %v829 = vunpack.c.l.b16 %v826
  %v830 = vrot.slane %v829, 7
  %v831 = vsel %vm96, %v830, %v828
  %v832 = vpack.c.b16 %v831, %v831
  %833 = vrot.lane.b32.xlu0 %v832, 64
  %v834 = vpop.permute.xlu0 %833
  %v843 = vunpack.c.l.b16 %v811
  %v844 = vunpack.c.l.b16 %v812
  %v845 = vunpack.c.l.b16 %v813
  %v846 = vunpack.c.l.b16 %v814
  %v847 = vunpack.c.l.b16 %v815
  %v848 = vunpack.c.l.b16 %v816
  %v849 = vunpack.c.l.b16 %v817
  %v850 = vunpack.c.l.b16 %v818
  %v851 = vpack.c.b16 %v844, %v843
  %v852 = vpack.c.b16 %v846, %v845
  %v853 = vpack.c.b16 %v848, %v847
  %v854 = vpack.c.b16 %v850, %v849
  %v860 = vsel %vm205, %v834, 0
  %862 = vmatpush.bf16.msra.mxu0 0
  %863 = vmatpush.bf16.msra.mxu0 0
  %864 = vmatpush.bf16.msra.mxu0 0
  %865 = vmatpush.bf16.msra.mxu0 0
  %866 = vmatpush.bf16.msra.mxu0 %v854
  %867 = vmatpush.bf16.msra.mxu0 %v853
  %868 = vmatpush.bf16.msra.mxu0 %v852
  %869 = vmatpush.bf16.msra.mxu0 %v851
  %870 = vmatmul.bf16.gmra.mxu0 %v860
  %v871 = vpop.f32.mrf.mxu0
  %v872 = vadd.f32 0.0, %v871
  %v873 = vpop.f32.mrf.mxu0
  %874 = vdwg.mxu0
  %v876 = vrot.slane %v872, 1
  %v878 = vld [vmem:[%s436] sm:$0x2]
  %v879 = vld [vmem:[%s436 + $0x2] sm:$0x2]
  %s880 = scalar_lea.vmem %s4, 160
  %v881 = vld [vmem:[%s880] sm:$0xf]
  %v882 = vld [vmem:[%s880 + $0x4] sm:$0xf]
  %v883 = vld [vmem:[%s880 + $0x8] sm:$0xf]
  %v884 = vld [vmem:[%s880 + $0xc] sm:$0xf]
  %v885 = vld [vmem:[%s880 + $0x10] sm:$0xf]
  %v886 = vld [vmem:[%s880 + $0x14] sm:$0xf]
  %v887 = vld [vmem:[%s880 + $0x18] sm:$0xf]
  %v888 = vld [vmem:[%s880 + $0x1c] sm:$0xf]
  %890 = vst [vmem:[#allocation1] ss:$4 sm:$0xff] %v878
  %v891 = vld.sshfl [vmem:[#allocation1] sm:$0xff pattern:$0x73625140]
  %s894 = scalar_lea.vmem [#allocation1], 32
  %895 = vst [vmem:[%s894] ss:$4 sm:$0xff] %v879
  %v896 = vld.sshfl [vmem:[#allocation1 + $0x20] sm:$0xff pattern:$0x73625140]
  %v898 = vunpack.c.l.b16 %v891
  %v899 = vunpack.c.l.b16 %v896
  %v900 = vrot.slane %v898, 2
  %v901 = vrot.slane %v899, 1
  %v902 = vsel %vm96, %v901, %v900
  %v903 = vpack.c.b16 %v902, %v902
  %v912 = vunpack.c.l.b16 %v881
  %v913 = vunpack.c.l.b16 %v882
  %v914 = vunpack.c.l.b16 %v883
  %v915 = vunpack.c.l.b16 %v884
  %v916 = vunpack.c.l.b16 %v885
  %v917 = vunpack.c.l.b16 %v886
  %v918 = vunpack.c.l.b16 %v887
  %v919 = vunpack.c.l.b16 %v888
  %v920 = vpack.c.b16 %v913, %v912
  %v921 = vpack.c.b16 %v915, %v914
  %v922 = vpack.c.b16 %v917, %v916
  %v923 = vpack.c.b16 %v919, %v918
  %v929 = vsel %vm205, %v903, 0
  %931 = vmatpush.bf16.msra.mxu0 0
  %932 = vmatpush.bf16.msra.mxu0 0
  %933 = vmatpush.bf16.msra.mxu0 0
  %934 = vmatpush.bf16.msra.mxu0 0
  %935 = vmatpush.bf16.msra.mxu0 %v923
  %936 = vmatpush.bf16.msra.mxu0 %v922
  %937 = vmatpush.bf16.msra.mxu0 %v921
  %938 = vmatpush.bf16.msra.mxu0 %v920
  %939 = vmatmul.bf16.gmra.mxu0 %v929
  %v940 = vpop.f32.mrf.mxu0
  %v941 = vadd.f32 0.0, %v940
  %v942 = vpop.f32.mrf.mxu0
  %943 = vdwg.mxu0
  %v945 = vrot.slane %v941, 1
  %v947 = vadd.f32 %v744, %v872
  %v948 = vadd.f32 %v748, %v876
  %v949 = vadd.f32 %v802, %v941
  %v950 = vadd.f32 %v806, %v945
  %v953 = vperm.slane %v949, 0
  %v954 = vperm.slane %v950, 0
  %955 = vrot.lane.b32.xlu0 %v953, 64
  %v956 = vpop.permute.xlu0 %955
  %957 = vrot.lane.b32.xlu0 %v954, 64
  %v958 = vpop.permute.xlu0 %957
  %v961 = vsel %vm205, %v947, %v956
  %v962 = vsel %vm205, %v948, %v958
  %v963 = vadd.f32 %v535, %v961
  %v964 = vadd.f32 %v536, %v962
  %v965 = vadd.f32 %v963, %v82
  %v966 = vadd.f32 %v964, %v82
  %967 = vst [vmem:[%s7] sm:$0x1] %v965
  %968 = vst [vmem:[%s7 + $0x1] sm:$0x1] %v966
  %s969 = scalar_lea.vmem %s0, 4
  %v970 = vld [vmem:[%s969] sm:$0x3]
  %v971 = vld [vmem:[%s969 + $0x2] sm:$0x3]
  %973 = vst [vmem:[#allocation1] ss:$9 sm:$0xff] %v970
  %v974 = vld [vmem:[#allocation1] sm:$0xff]
  %977 = vst [vmem:[#allocation1] ss:$9 sm:$0xff] %v971
  %v978 = vld [vmem:[#allocation1] sm:$0xff]
  %v980 = vunpack.c.l.b16 %v974
  %v981 = vunpack.c.l.b16 %v978
  %v982 = vrot.slane %v981, 7
  %v983 = vsel %vm96, %v982, %v980
  %v984 = vpack.c.b16 %v983, %v983
  %986 = vmatpush.bf16.msra.mxu0 %v139
  %987 = vmatpush.bf16.msra.mxu0 %v138
  %988 = vmatpush.bf16.msra.mxu0 %v137
  %989 = vmatpush.bf16.msra.mxu0 %v136
  %990 = vmatpush.bf16.msra.mxu0 %v135
  %991 = vmatpush.bf16.msra.mxu0 %v134
  %992 = vmatpush.bf16.msra.mxu0 %v133
  %993 = vmatpush.bf16.msra.mxu0 %v132
  %994 = vmatmul.bf16.gmra.mxu0 %v984
  %v995 = vpop.f32.mrf.mxu0
  %v996 = vadd.f32 0.0, %v995
  %v997 = vpop.f32.mrf.mxu0
  %998 = vdwg.mxu0
  %v1000 = vrot.slane %v996, 1
  %v1004 = vrot.slane %v970, 1
  %v1005 = vrot.slane %v971, 1
  %1007 = vst [vmem:[#allocation1] ss:$9 sm:$0xff] %v1004
  %v1008 = vld [vmem:[#allocation1] sm:$0xff]
  %1011 = vst [vmem:[#allocation1] ss:$9 sm:$0xff] %v1005
  %v1012 = vld [vmem:[#allocation1] sm:$0xff]
  %v1014 = vunpack.c.l.b16 %v1008
  %v1015 = vunpack.c.l.b16 %v1012
  %v1016 = vrot.slane %v1015, 7
  %v1017 = vsel %vm96, %v1016, %v1014
  %v1018 = vpack.c.b16 %v1017, %v1017
  %1020 = vmatpush.bf16.msra.mxu0 %v139
  %1021 = vmatpush.bf16.msra.mxu0 %v138
  %1022 = vmatpush.bf16.msra.mxu0 %v137
  %1023 = vmatpush.bf16.msra.mxu0 %v136
  %1024 = vmatpush.bf16.msra.mxu0 %v135
  %1025 = vmatpush.bf16.msra.mxu0 %v134
  %1026 = vmatpush.bf16.msra.mxu0 %v133
  %1027 = vmatpush.bf16.msra.mxu0 %v132
  %1028 = vmatmul.bf16.gmra.mxu0 %v1018
  %v1029 = vpop.f32.mrf.mxu0
  %v1030 = vadd.f32 0.0, %v1029
  %v1031 = vpop.f32.mrf.mxu0
  %1032 = vdwg.mxu0
  %v1034 = vrot.slane %v1030, 1
  %v1035 = vperm.slane %v1030, 0
  %v1036 = vperm.slane %v1034, 0
  %1037 = vrot.lane.b32.xlu0 %v1035, 64
  %v1038 = vpop.permute.xlu0 %1037
  %1039 = vrot.lane.b32.xlu0 %v1036, 64
  %v1040 = vpop.permute.xlu0 %1039
  %v1043 = vsel %vm205, %v996, %v1038
  %v1044 = vsel %vm205, %v1000, %v1040
  %v1045 = vadd.f32 %v1043, %v81
  %v1046 = vadd.f32 %v1044, %v81
  %v1047 = vpack.c.bf16 %v1045, %v1045
  %v1048 = vpack.c.bf16 %v1046, %v1046
  %s1049 = scalar_lea.vmem %s6, 2
  %v1050 = vld [vmem:[%s1049] sm:$0x1]
  %v1051 = vsel %vm38, %v1047, %v1050
  %1052 = vst [vmem:[%s1049] sm:$0x1] %v1051
  %v1053 = vld [vmem:[%s1049 + $0x1] sm:$0x1]
  %v1054 = vsel %vm38, %v1048, %v1053
  %1055 = vst [vmem:[%s1049 + $0x1] sm:$0x1] %v1054
  %v1058 = vrot.slane %v1047, 2
  %v1059 = vrot.slane %v1048, 2
  %v1062 = vsel %vm222, %v1047, %v1058
  %v1065 = vsel %vm222, %v1048, %v1059
  %v1066 = vshll.u32 %v1062, 16
  %v1068 = vshll.u32 %v1065, 16
  %v1072 = vld [vmem:[%s235] sm:$0x1]
  %v1073 = vsel %vm237, %v1066, %v1072
  %1074 = vst [vmem:[%s235] sm:$0x1] %v1073
  %v1075 = vld [vmem:[%s235 + $0x2] sm:$0x1]
  %v1076 = vsel %vm237, %v1068, %v1075
  %1077 = vst [vmem:[%s235 + $0x2] sm:$0x1] %v1076
  %v1078 = vld [vmem:[#allocation2] sm:$0x1]
  %v1079 = vld [vmem:[#allocation2 + $0x2] sm:$0x1]
  %v1080 = vld [vmem:[%s3] sm:$0xf]
  %v1081 = vld [vmem:[%s3 + $0x4] sm:$0xf]
  %v1082 = vld [vmem:[%s3 + $0x8] sm:$0xf]
  %v1083 = vld [vmem:[%s3 + $0xc] sm:$0xf]
  %v1084 = vld [vmem:[%s3 + $0x10] sm:$0xf]
  %v1085 = vld [vmem:[%s3 + $0x14] sm:$0xf]
  %v1086 = vld [vmem:[%s3 + $0x18] sm:$0xf]
  %v1087 = vld [vmem:[%s3 + $0x1c] sm:$0xf]
  %v1088 = vld [vmem:[%s3 + $0x20] sm:$0xf]
  %v1089 = vld [vmem:[%s3 + $0x24] sm:$0xf]
  %v1090 = vld [vmem:[%s3 + $0x28] sm:$0xf]
  %v1091 = vld [vmem:[%s3 + $0x2c] sm:$0xf]
  %v1092 = vld [vmem:[%s3 + $0x30] sm:$0xf]
  %v1093 = vld [vmem:[%s3 + $0x34] sm:$0xf]
  %v1094 = vld [vmem:[%s3 + $0x38] sm:$0xf]
  %v1095 = vld [vmem:[%s3 + $0x3c] sm:$0xf]
  %v1096 = vld [vmem:[%s235] sm:$0x1]
  %v1097 = vld [vmem:[%s235 + $0x2] sm:$0x1]
  %v1098 = vld [vmem:[%s264] sm:$0xf]
  %v1099 = vld [vmem:[%s264 + $0x4] sm:$0xf]
  %v1100 = vld [vmem:[%s264 + $0x8] sm:$0xf]
  %v1101 = vld [vmem:[%s264 + $0xc] sm:$0xf]
  %v1102 = vld [vmem:[%s264 + $0x10] sm:$0xf]
  %v1103 = vld [vmem:[%s264 + $0x14] sm:$0xf]
  %v1104 = vld [vmem:[%s264 + $0x18] sm:$0xf]
  %v1105 = vld [vmem:[%s264 + $0x1c] sm:$0xf]
  %v1106 = vld [vmem:[%s264 + $0x20] sm:$0xf]
  %v1107 = vld [vmem:[%s264 + $0x24] sm:$0xf]
  %v1108 = vld [vmem:[%s264 + $0x28] sm:$0xf]
  %v1109 = vld [vmem:[%s264 + $0x2c] sm:$0xf]
  %v1110 = vld [vmem:[%s264 + $0x30] sm:$0xf]
  %v1111 = vld [vmem:[%s264 + $0x34] sm:$0xf]
  %v1112 = vld [vmem:[%s264 + $0x38] sm:$0xf]
  %v1113 = vld [vmem:[%s264 + $0x3c] sm:$0xf]
  %1115 = vst [vmem:[#allocation1] ss:$4 sm:$0xff] %v1096
  %v1116 = vld.sshfl [vmem:[#allocation1] sm:$0xff pattern:$0x73625140]
  %s1119 = scalar_lea.vmem [#allocation1], 32
  %1120 = vst [vmem:[%s1119] ss:$4 sm:$0xff] %v1097
  %v1121 = vld.sshfl [vmem:[#allocation1 + $0x20] sm:$0xff pattern:$0x73625140]
  %v1123 = vunpack.c.l.b16 %v1116
  %v1124 = vunpack.c.l.b16 %v1121
  %v1125 = vrot.slane %v1123, 1
  %v1126 = vsel %vm96, %v1124, %v1125
  %v1127 = vpack.c.b16 %v1126, %v1126
  %v1145 = vunpack.c.l.b16 %v1098
  %v1146 = vunpack.c.l.b16 %v1099
  %v1147 = vunpack.c.l.b16 %v1100
  %v1148 = vunpack.c.l.b16 %v1101
  %v1149 = vunpack.c.l.b16 %v1102
  %v1150 = vunpack.c.l.b16 %v1103
  %v1151 = vunpack.c.l.b16 %v1104
  %v1152 = vunpack.c.l.b16 %v1105
  %v1153 = vunpack.c.l.b16 %v1106
  %v1154 = vunpack.c.l.b16 %v1107
  %v1155 = vunpack.c.l.b16 %v1108
  %v1156 = vunpack.c.l.b16 %v1109
  %v1157 = vunpack.c.l.b16 %v1110
  %v1158 = vunpack.c.l.b16 %v1111
  %v1159 = vunpack.c.l.b16 %v1112
  %v1160 = vunpack.c.l.b16 %v1113
  %v1161 = vpack.c.b16 %v1146, %v1145
  %v1162 = vpack.c.b16 %v1148, %v1147
  %v1163 = vpack.c.b16 %v1150, %v1149
  %v1164 = vpack.c.b16 %v1152, %v1151
  %v1165 = vpack.c.b16 %v1154, %v1153
  %v1166 = vpack.c.b16 %v1156, %v1155
  %v1167 = vpack.c.b16 %v1158, %v1157
  %v1168 = vpack.c.b16 %v1160, %v1159
  %1177 = vmatpush.bf16.msra.mxu0 %v1168
  %1178 = vmatpush.bf16.msra.mxu0 %v1167
  %1179 = vmatpush.bf16.msra.mxu0 %v1166
  %1180 = vmatpush.bf16.msra.mxu0 %v1165
  %1181 = vmatpush.bf16.msra.mxu0 %v1164
  %1182 = vmatpush.bf16.msra.mxu0 %v1163
  %1183 = vmatpush.bf16.msra.mxu0 %v1162
  %1184 = vmatpush.bf16.msra.mxu0 %v1161
  %1185 = vmatmul.bf16.gmra.mxu0 %v1127
  %v1186 = vpop.f32.mrf.mxu0
  %v1187 = vadd.f32 0.0, %v1186
  %v1188 = vpop.f32.mrf.mxu0
  %1189 = vdwg.mxu0
  %1191 = vst [vmem:[#allocation1] ss:$4 sm:$0xff] %v1078
  %v1192 = vld.sshfl [vmem:[#allocation1] sm:$0xff pattern:$0x73625140]
  %s1195 = scalar_lea.vmem [#allocation1], 32
  %1196 = vst [vmem:[%s1195] ss:$4 sm:$0xff] %v1079
  %v1197 = vld.sshfl [vmem:[#allocation1 + $0x20] sm:$0xff pattern:$0x73625140]
  %v1199 = vunpack.c.l.b16 %v1192
  %v1200 = vunpack.c.l.b16 %v1197
  %v1201 = vrot.slane %v1199, 1
  %v1202 = vsel %vm96, %v1200, %v1201
  %v1203 = vpack.c.b16 %v1202, %v1202
  %v1221 = vunpack.c.l.b16 %v1080
  %v1222 = vunpack.c.l.b16 %v1081
  %v1223 = vunpack.c.l.b16 %v1082
  %v1224 = vunpack.c.l.b16 %v1083
  %v1225 = vunpack.c.l.b16 %v1084
  %v1226 = vunpack.c.l.b16 %v1085
  %v1227 = vunpack.c.l.b16 %v1086
  %v1228 = vunpack.c.l.b16 %v1087
  %v1229 = vunpack.c.l.b16 %v1088
  %v1230 = vunpack.c.l.b16 %v1089
  %v1231 = vunpack.c.l.b16 %v1090
  %v1232 = vunpack.c.l.b16 %v1091
  %v1233 = vunpack.c.l.b16 %v1092
  %v1234 = vunpack.c.l.b16 %v1093
  %v1235 = vunpack.c.l.b16 %v1094
  %v1236 = vunpack.c.l.b16 %v1095
  %v1237 = vpack.c.b16 %v1222, %v1221
  %v1238 = vpack.c.b16 %v1224, %v1223
  %v1239 = vpack.c.b16 %v1226, %v1225
  %v1240 = vpack.c.b16 %v1228, %v1227
  %v1241 = vpack.c.b16 %v1230, %v1229
  %v1242 = vpack.c.b16 %v1232, %v1231
  %v1243 = vpack.c.b16 %v1234, %v1233
  %v1244 = vpack.c.b16 %v1236, %v1235
  %1253 = vmatpush.bf16.msra.mxu0 %v1244
  %1254 = vmatpush.bf16.msra.mxu0 %v1243
  %1255 = vmatpush.bf16.msra.mxu0 %v1242
  %1256 = vmatpush.bf16.msra.mxu0 %v1241
  %1257 = vmatpush.bf16.msra.mxu0 %v1240
  %1258 = vmatpush.bf16.msra.mxu0 %v1239
  %1259 = vmatpush.bf16.msra.mxu0 %v1238
  %1260 = vmatpush.bf16.msra.mxu0 %v1237
  %1261 = vmatmul.bf16.gmra.mxu0 %v1203
  %v1262 = vpop.f32.mrf.mxu0
  %v1263 = vadd.f32 %v1187, %v1262
  %v1264 = vpop.f32.mrf.mxu0
  %1265 = vdwg.mxu0
  %v1267 = vrot.slane %v1263, 1
  %v1269 = vld [vmem:[%s436] sm:$0x1]
  %v1270 = vld [vmem:[%s436 + $0x2] sm:$0x1]
  %v1271 = vld [vmem:[%s439] sm:$0xf]
  %v1272 = vld [vmem:[%s439 + $0x4] sm:$0xf]
  %v1273 = vld [vmem:[%s439 + $0x8] sm:$0xf]
  %v1274 = vld [vmem:[%s439 + $0xc] sm:$0xf]
  %v1275 = vld [vmem:[%s439 + $0x10] sm:$0xf]
  %v1276 = vld [vmem:[%s439 + $0x14] sm:$0xf]
  %v1277 = vld [vmem:[%s439 + $0x18] sm:$0xf]
  %v1278 = vld [vmem:[%s439 + $0x1c] sm:$0xf]
  %v1279 = vld [vmem:[%s439 + $0x20] sm:$0xf]
  %v1280 = vld [vmem:[%s439 + $0x24] sm:$0xf]
  %v1281 = vld [vmem:[%s439 + $0x28] sm:$0xf]
  %v1282 = vld [vmem:[%s439 + $0x2c] sm:$0xf]
  %v1283 = vld [vmem:[%s439 + $0x30] sm:$0xf]
  %v1284 = vld [vmem:[%s439 + $0x34] sm:$0xf]
  %v1285 = vld [vmem:[%s439 + $0x38] sm:$0xf]
  %v1286 = vld [vmem:[%s439 + $0x3c] sm:$0xf]
  %1288 = vst [vmem:[#allocation1] ss:$4 sm:$0xff] %v1269
  %v1289 = vld.sshfl [vmem:[#allocation1] sm:$0xff pattern:$0x73625140]
  %s1292 = scalar_lea.vmem [#allocation1], 32
  %1293 = vst [vmem:[%s1292] ss:$4 sm:$0xff] %v1270
  %v1294 = vld.sshfl [vmem:[#allocation1 + $0x20] sm:$0xff pattern:$0x73625140]
  %v1296 = vunpack.c.l.b16 %v1289
  %v1297 = vunpack.c.l.b16 %v1294
  %v1298 = vrot.slane %v1296, 1
  %v1299 = vsel %vm96, %v1297, %v1298
  %v1300 = vpack.c.b16 %v1299, %v1299
  %v1318 = vunpack.c.l.b16 %v1271
  %v1319 = vunpack.c.l.b16 %v1272
  %v1320 = vunpack.c.l.b16 %v1273
  %v1321 = vunpack.c.l.b16 %v1274
  %v1322 = vunpack.c.l.b16 %v1275
  %v1323 = vunpack.c.l.b16 %v1276
  %v1324 = vunpack.c.l.b16 %v1277
  %v1325 = vunpack.c.l.b16 %v1278
  %v1326 = vunpack.c.l.b16 %v1279
  %v1327 = vunpack.c.l.b16 %v1280
  %v1328 = vunpack.c.l.b16 %v1281
  %v1329 = vunpack.c.l.b16 %v1282
  %v1330 = vunpack.c.l.b16 %v1283
  %v1331 = vunpack.c.l.b16 %v1284
  %v1332 = vunpack.c.l.b16 %v1285
  %v1333 = vunpack.c.l.b16 %v1286
  %v1334 = vpack.c.b16 %v1319, %v1318
  %v1335 = vpack.c.b16 %v1321, %v1320
  %v1336 = vpack.c.b16 %v1323, %v1322
  %v1337 = vpack.c.b16 %v1325, %v1324
  %v1338 = vpack.c.b16 %v1327, %v1326
  %v1339 = vpack.c.b16 %v1329, %v1328
  %v1340 = vpack.c.b16 %v1331, %v1330
  %v1341 = vpack.c.b16 %v1333, %v1332
  %1350 = vmatpush.bf16.msra.mxu0 %v1341
  %1351 = vmatpush.bf16.msra.mxu0 %v1340
  %1352 = vmatpush.bf16.msra.mxu0 %v1339
  %1353 = vmatpush.bf16.msra.mxu0 %v1338
  %1354 = vmatpush.bf16.msra.mxu0 %v1337
  %1355 = vmatpush.bf16.msra.mxu0 %v1336
  %1356 = vmatpush.bf16.msra.mxu0 %v1335
  %1357 = vmatpush.bf16.msra.mxu0 %v1334
  %1358 = vmatmul.bf16.gmra.mxu0 %v1300
  %v1359 = vpop.f32.mrf.mxu0
  %v1360 = vadd.f32 0.0, %v1359
  %v1361 = vpop.f32.mrf.mxu0
  %1362 = vdwg.mxu0
  %v1364 = vrot.slane %v1360, 1
  %v1366 = vadd.f32 %v1263, %v1360
  %v1367 = vadd.f32 %v1267, %v1364
  %v1368 = vld [vmem:[#allocation2] sm:$0x1]
  %v1369 = vld [vmem:[#allocation2 + $0x2] sm:$0x1]
  %v1370 = vld [vmem:[%s4] sm:$0xf]
  %v1371 = vld [vmem:[%s4 + $0x4] sm:$0xf]
  %v1372 = vld [vmem:[%s4 + $0x8] sm:$0xf]
  %v1373 = vld [vmem:[%s4 + $0xc] sm:$0xf]
  %v1374 = vld [vmem:[%s4 + $0x10] sm:$0xf]
  %v1375 = vld [vmem:[%s4 + $0x14] sm:$0xf]
  %v1376 = vld [vmem:[%s4 + $0x18] sm:$0xf]
  %v1377 = vld [vmem:[%s4 + $0x1c] sm:$0xf]
  %v1378 = vld [vmem:[#allocation2] sm:$0x2]
  %v1379 = vld [vmem:[#allocation2 + $0x2] sm:$0x2]
  %v1380 = vld [vmem:[%s549] sm:$0xf]
  %v1381 = vld [vmem:[%s549 + $0x4] sm:$0xf]
  %v1382 = vld [vmem:[%s549 + $0x8] sm:$0xf]
  %v1383 = vld [vmem:[%s549 + $0xc] sm:$0xf]
  %v1384 = vld [vmem:[%s549 + $0x10] sm:$0xf]
  %v1385 = vld [vmem:[%s549 + $0x14] sm:$0xf]
  %v1386 = vld [vmem:[%s549 + $0x18] sm:$0xf]
  %v1387 = vld [vmem:[%s549 + $0x1c] sm:$0xf]
  %v1388 = vld [vmem:[%s235] sm:$0x1]
  %v1389 = vld [vmem:[%s235 + $0x2] sm:$0x1]
  %v1390 = vld [vmem:[%s560] sm:$0xf]
  %v1391 = vld [vmem:[%s560 + $0x4] sm:$0xf]
  %v1392 = vld [vmem:[%s560 + $0x8] sm:$0xf]
  %v1393 = vld [vmem:[%s560 + $0xc] sm:$0xf]
  %v1394 = vld [vmem:[%s560 + $0x10] sm:$0xf]
  %v1395 = vld [vmem:[%s560 + $0x14] sm:$0xf]
  %v1396 = vld [vmem:[%s560 + $0x18] sm:$0xf]
  %v1397 = vld [vmem:[%s560 + $0x1c] sm:$0xf]
  %1399 = vst [vmem:[#allocation1] ss:$4 sm:$0xff] %v1388
  %v1400 = vld.sshfl [vmem:[#allocation1] sm:$0xff pattern:$0x73625140]
  %s1403 = scalar_lea.vmem [#allocation1], 32
  %1404 = vst [vmem:[%s1403] ss:$4 sm:$0xff] %v1389
  %v1405 = vld.sshfl [vmem:[#allocation1 + $0x20] sm:$0xff pattern:$0x73625140]
  %v1407 = vunpack.c.l.b16 %v1400
  %v1408 = vunpack.c.l.b16 %v1405
  %v1409 = vrot.slane %v1408, 7
  %v1410 = vsel %vm96, %v1409, %v1407
  %v1411 = vpack.c.b16 %v1410, %v1410
  %1412 = vrot.lane.b32.xlu0 %v1411, 64
  %v1413 = vpop.permute.xlu0 %1412
  %v1422 = vunpack.c.l.b16 %v1390
  %v1423 = vunpack.c.l.b16 %v1391
  %v1424 = vunpack.c.l.b16 %v1392
  %v1425 = vunpack.c.l.b16 %v1393
  %v1426 = vunpack.c.l.b16 %v1394
  %v1427 = vunpack.c.l.b16 %v1395
  %v1428 = vunpack.c.l.b16 %v1396
  %v1429 = vunpack.c.l.b16 %v1397
  %v1430 = vpack.c.b16 %v1423, %v1422
  %v1431 = vpack.c.b16 %v1425, %v1424
  %v1432 = vpack.c.b16 %v1427, %v1426
  %v1433 = vpack.c.b16 %v1429, %v1428
  %v1439 = vsel %vm205, %v1413, 0
  %1441 = vmatpush.bf16.msra.mxu0 0
  %1442 = vmatpush.bf16.msra.mxu0 0
  %1443 = vmatpush.bf16.msra.mxu0 0
  %1444 = vmatpush.bf16.msra.mxu0 0
  %1445 = vmatpush.bf16.msra.mxu0 %v1433
  %1446 = vmatpush.bf16.msra.mxu0 %v1432
  %1447 = vmatpush.bf16.msra.mxu0 %v1431
  %1448 = vmatpush.bf16.msra.mxu0 %v1430
  %1449 = vmatmul.bf16.gmra.mxu0 %v1439
  %v1450 = vpop.f32.mrf.mxu0
  %v1451 = vadd.f32 0.0, %v1450
  %v1452 = vpop.f32.mrf.mxu0
  %1453 = vdwg.mxu0
  %v1454 = vld [vmem:[%s235] sm:$0x2]
  %v1455 = vld [vmem:[%s235 + $0x2] sm:$0x2]
  %v1456 = vld [vmem:[%s627] sm:$0xf]
  %v1457 = vld [vmem:[%s627 + $0x4] sm:$0xf]
  %v1458 = vld [vmem:[%s627 + $0x8] sm:$0xf]
  %v1459 = vld [vmem:[%s627 + $0xc] sm:$0xf]
  %v1460 = vld [vmem:[%s627 + $0x10] sm:$0xf]
  %v1461 = vld [vmem:[%s627 + $0x14] sm:$0xf]
  %v1462 = vld [vmem:[%s627 + $0x18] sm:$0xf]
  %v1463 = vld [vmem:[%s627 + $0x1c] sm:$0xf]
  %1465 = vst [vmem:[#allocation1] ss:$4 sm:$0xff] %v1454
  %v1466 = vld.sshfl [vmem:[#allocation1] sm:$0xff pattern:$0x73625140]
  %s1469 = scalar_lea.vmem [#allocation1], 32
  %1470 = vst [vmem:[%s1469] ss:$4 sm:$0xff] %v1455
  %v1471 = vld.sshfl [vmem:[#allocation1 + $0x20] sm:$0xff pattern:$0x73625140]
  %v1473 = vunpack.c.l.b16 %v1466
  %v1474 = vunpack.c.l.b16 %v1471
  %v1475 = vrot.slane %v1473, 2
  %v1476 = vrot.slane %v1474, 1
  %v1477 = vsel %vm96, %v1476, %v1475
  %v1478 = vpack.c.b16 %v1477, %v1477
  %v1487 = vunpack.c.l.b16 %v1456
  %v1488 = vunpack.c.l.b16 %v1457
  %v1489 = vunpack.c.l.b16 %v1458
  %v1490 = vunpack.c.l.b16 %v1459
  %v1491 = vunpack.c.l.b16 %v1460
  %v1492 = vunpack.c.l.b16 %v1461
  %v1493 = vunpack.c.l.b16 %v1462
  %v1494 = vunpack.c.l.b16 %v1463
  %v1495 = vpack.c.b16 %v1488, %v1487
  %v1496 = vpack.c.b16 %v1490, %v1489
  %v1497 = vpack.c.b16 %v1492, %v1491
  %v1498 = vpack.c.b16 %v1494, %v1493
  %v1504 = vsel %vm205, %v1478, 0
  %1506 = vmatpush.bf16.msra.mxu0 0
  %1507 = vmatpush.bf16.msra.mxu0 0
  %1508 = vmatpush.bf16.msra.mxu0 0
  %1509 = vmatpush.bf16.msra.mxu0 0
  %1510 = vmatpush.bf16.msra.mxu0 %v1498
  %1511 = vmatpush.bf16.msra.mxu0 %v1497
  %1512 = vmatpush.bf16.msra.mxu0 %v1496
  %1513 = vmatpush.bf16.msra.mxu0 %v1495
  %1514 = vmatmul.bf16.gmra.mxu0 %v1504
  %v1515 = vpop.f32.mrf.mxu0
  %v1516 = vadd.f32 0.0, %v1515
  %v1517 = vpop.f32.mrf.mxu0
  %1518 = vdwg.mxu0
  %1520 = vst [vmem:[#allocation1] ss:$4 sm:$0xff] %v1368
  %v1521 = vld.sshfl [vmem:[#allocation1] sm:$0xff pattern:$0x73625140]
  %s1524 = scalar_lea.vmem [#allocation1], 32
  %1525 = vst [vmem:[%s1524] ss:$4 sm:$0xff] %v1369
  %v1526 = vld.sshfl [vmem:[#allocation1 + $0x20] sm:$0xff pattern:$0x73625140]
  %v1528 = vunpack.c.l.b16 %v1521
  %v1529 = vunpack.c.l.b16 %v1526
  %v1530 = vrot.slane %v1529, 7
  %v1531 = vsel %vm96, %v1530, %v1528
  %v1532 = vpack.c.b16 %v1531, %v1531
  %1533 = vrot.lane.b32.xlu0 %v1532, 64
  %v1534 = vpop.permute.xlu0 %1533
  %v1543 = vunpack.c.l.b16 %v1370
  %v1544 = vunpack.c.l.b16 %v1371
  %v1545 = vunpack.c.l.b16 %v1372
  %v1546 = vunpack.c.l.b16 %v1373
  %v1547 = vunpack.c.l.b16 %v1374
  %v1548 = vunpack.c.l.b16 %v1375
  %v1549 = vunpack.c.l.b16 %v1376
  %v1550 = vunpack.c.l.b16 %v1377
  %v1551 = vpack.c.b16 %v1544, %v1543
  %v1552 = vpack.c.b16 %v1546, %v1545
  %v1553 = vpack.c.b16 %v1548, %v1547
  %v1554 = vpack.c.b16 %v1550, %v1549
  %v1560 = vsel %vm205, %v1534, 0
  %1562 = vmatpush.bf16.msra.mxu0 0
  %1563 = vmatpush.bf16.msra.mxu0 0
  %1564 = vmatpush.bf16.msra.mxu0 0
  %1565 = vmatpush.bf16.msra.mxu0 0
  %1566 = vmatpush.bf16.msra.mxu0 %v1554
  %1567 = vmatpush.bf16.msra.mxu0 %v1553
  %1568 = vmatpush.bf16.msra.mxu0 %v1552
  %1569 = vmatpush.bf16.msra.mxu0 %v1551
  %1570 = vmatmul.bf16.gmra.mxu0 %v1560
  %v1571 = vpop.f32.mrf.mxu0
  %v1572 = vadd.f32 %v1451, %v1571
  %v1573 = vpop.f32.mrf.mxu0
  %1574 = vdwg.mxu0
  %v1576 = vrot.slane %v1572, 1
  %1579 = vst [vmem:[#allocation1] ss:$4 sm:$0xff] %v1378
  %v1580 = vld.sshfl [vmem:[#allocation1] sm:$0xff pattern:$0x73625140]
  %s1583 = scalar_lea.vmem [#allocation1], 32
  %1584 = vst [vmem:[%s1583] ss:$4 sm:$0xff] %v1379
  %v1585 = vld.sshfl [vmem:[#allocation1 + $0x20] sm:$0xff pattern:$0x73625140]
  %v1587 = vunpack.c.l.b16 %v1580
  %v1588 = vunpack.c.l.b16 %v1585
  %v1589 = vrot.slane %v1587, 2
  %v1590 = vrot.slane %v1588, 1
  %v1591 = vsel %vm96, %v1590, %v1589
  %v1592 = vpack.c.b16 %v1591, %v1591
  %v1601 = vunpack.c.l.b16 %v1380
  %v1602 = vunpack.c.l.b16 %v1381
  %v1603 = vunpack.c.l.b16 %v1382
  %v1604 = vunpack.c.l.b16 %v1383
  %v1605 = vunpack.c.l.b16 %v1384
  %v1606 = vunpack.c.l.b16 %v1385
  %v1607 = vunpack.c.l.b16 %v1386
  %v1608 = vunpack.c.l.b16 %v1387
  %v1609 = vpack.c.b16 %v1602, %v1601
  %v1610 = vpack.c.b16 %v1604, %v1603
  %v1611 = vpack.c.b16 %v1606, %v1605
  %v1612 = vpack.c.b16 %v1608, %v1607
  %v1618 = vsel %vm205, %v1592, 0
  %1620 = vmatpush.bf16.msra.mxu0 0
  %1621 = vmatpush.bf16.msra.mxu0 0
  %1622 = vmatpush.bf16.msra.mxu0 0
  %1623 = vmatpush.bf16.msra.mxu0 0
  %1624 = vmatpush.bf16.msra.mxu0 %v1612
  %1625 = vmatpush.bf16.msra.mxu0 %v1611
  %1626 = vmatpush.bf16.msra.mxu0 %v1610
  %1627 = vmatpush.bf16.msra.mxu0 %v1609
  %1628 = vmatmul.bf16.gmra.mxu0 %v1618
  %v1629 = vpop.f32.mrf.mxu0
  %v1630 = vadd.f32 %v1516, %v1629
  %v1631 = vpop.f32.mrf.mxu0
  %1632 = vdwg.mxu0
  %v1634 = vrot.slane %v1630, 1
  %v1636 = vld [vmem:[%s436] sm:$0x1]
  %v1637 = vld [vmem:[%s436 + $0x2] sm:$0x1]
  %v1638 = vld [vmem:[%s810] sm:$0xf]
  %v1639 = vld [vmem:[%s810 + $0x4] sm:$0xf]
  %v1640 = vld [vmem:[%s810 + $0x8] sm:$0xf]
  %v1641 = vld [vmem:[%s810 + $0xc] sm:$0xf]
  %v1642 = vld [vmem:[%s810 + $0x10] sm:$0xf]
  %v1643 = vld [vmem:[%s810 + $0x14] sm:$0xf]
  %v1644 = vld [vmem:[%s810 + $0x18] sm:$0xf]
  %v1645 = vld [vmem:[%s810 + $0x1c] sm:$0xf]
  %1647 = vst [vmem:[#allocation1] ss:$4 sm:$0xff] %v1636
  %v1648 = vld.sshfl [vmem:[#allocation1] sm:$0xff pattern:$0x73625140]
  %s1651 = scalar_lea.vmem [#allocation1], 32
  %1652 = vst [vmem:[%s1651] ss:$4 sm:$0xff] %v1637
  %v1653 = vld.sshfl [vmem:[#allocation1 + $0x20] sm:$0xff pattern:$0x73625140]
  %v1655 = vunpack.c.l.b16 %v1648
  %v1656 = vunpack.c.l.b16 %v1653
  %v1657 = vrot.slane %v1656, 7
  %v1658 = vsel %vm96, %v1657, %v1655
  %v1659 = vpack.c.b16 %v1658, %v1658
  %1660 = vrot.lane.b32.xlu0 %v1659, 64
  %v1661 = vpop.permute.xlu0 %1660
  %v1670 = vunpack.c.l.b16 %v1638
  %v1671 = vunpack.c.l.b16 %v1639
  %v1672 = vunpack.c.l.b16 %v1640
  %v1673 = vunpack.c.l.b16 %v1641
  %v1674 = vunpack.c.l.b16 %v1642
  %v1675 = vunpack.c.l.b16 %v1643
  %v1676 = vunpack.c.l.b16 %v1644
  %v1677 = vunpack.c.l.b16 %v1645
  %v1678 = vpack.c.b16 %v1671, %v1670
  %v1679 = vpack.c.b16 %v1673, %v1672
  %v1680 = vpack.c.b16 %v1675, %v1674
  %v1681 = vpack.c.b16 %v1677, %v1676
  %v1687 = vsel %vm205, %v1661, 0
  %1689 = vmatpush.bf16.msra.mxu0 0
  %1690 = vmatpush.bf16.msra.mxu0 0
  %1691 = vmatpush.bf16.msra.mxu0 0
  %1692 = vmatpush.bf16.msra.mxu0 0
  %1693 = vmatpush.bf16.msra.mxu0 %v1681
  %1694 = vmatpush.bf16.msra.mxu0 %v1680
  %1695 = vmatpush.bf16.msra.mxu0 %v1679
  %1696 = vmatpush.bf16.msra.mxu0 %v1678
  %1697 = vmatmul.bf16.gmra.mxu0 %v1687
  %v1698 = vpop.f32.mrf.mxu0
  %v1699 = vadd.f32 0.0, %v1698
  %v1700 = vpop.f32.mrf.mxu0
  %1701 = vdwg.mxu0
  %v1703 = vrot.slane %v1699, 1
  %v1705 = vld [vmem:[%s436] sm:$0x2]
  %v1706 = vld [vmem:[%s436 + $0x2] sm:$0x2]
  %v1707 = vld [vmem:[%s880] sm:$0xf]
  %v1708 = vld [vmem:[%s880 + $0x4] sm:$0xf]
  %v1709 = vld [vmem:[%s880 + $0x8] sm:$0xf]
  %v1710 = vld [vmem:[%s880 + $0xc] sm:$0xf]
  %v1711 = vld [vmem:[%s880 + $0x10] sm:$0xf]
  %v1712 = vld [vmem:[%s880 + $0x14] sm:$0xf]
  %v1713 = vld [vmem:[%s880 + $0x18] sm:$0xf]
  %v1714 = vld [vmem:[%s880 + $0x1c] sm:$0xf]
  %1716 = vst [vmem:[#allocation1] ss:$4 sm:$0xff] %v1705
  %v1717 = vld.sshfl [vmem:[#allocation1] sm:$0xff pattern:$0x73625140]
  %s1720 = scalar_lea.vmem [#allocation1], 32
  %1721 = vst [vmem:[%s1720] ss:$4 sm:$0xff] %v1706
  %v1722 = vld.sshfl [vmem:[#allocation1 + $0x20] sm:$0xff pattern:$0x73625140]
  %v1724 = vunpack.c.l.b16 %v1717
  %v1725 = vunpack.c.l.b16 %v1722
  %v1726 = vrot.slane %v1724, 2
  %v1727 = vrot.slane %v1725, 1
  %v1728 = vsel %vm96, %v1727, %v1726
  %v1729 = vpack.c.b16 %v1728, %v1728
  %v1738 = vunpack.c.l.b16 %v1707
  %v1739 = vunpack.c.l.b16 %v1708
  %v1740 = vunpack.c.l.b16 %v1709
  %v1741 = vunpack.c.l.b16 %v1710
  %v1742 = vunpack.c.l.b16 %v1711
  %v1743 = vunpack.c.l.b16 %v1712
  %v1744 = vunpack.c.l.b16 %v1713
  %v1745 = vunpack.c.l.b16 %v1714
  %v1746 = vpack.c.b16 %v1739, %v1738
  %v1747 = vpack.c.b16 %v1741, %v1740
  %v1748 = vpack.c.b16 %v1743, %v1742
  %v1749 = vpack.c.b16 %v1745, %v1744
  %v1755 = vsel %vm205, %v1729, 0
  %1757 = vmatpush.bf16.msra.mxu0 0
  %1758 = vmatpush.bf16.msra.mxu0 0
  %1759 = vmatpush.bf16.msra.mxu0 0
  %1760 = vmatpush.bf16.msra.mxu0 0
  %1761 = vmatpush.bf16.msra.mxu0 %v1749
  %1762 = vmatpush.bf16.msra.mxu0 %v1748
  %1763 = vmatpush.bf16.msra.mxu0 %v1747
  %1764 = vmatpush.bf16.msra.mxu0 %v1746
  %1765 = vmatmul.bf16.gmra.mxu0 %v1755
  %v1766 = vpop.f32.mrf.mxu0
  %v1767 = vadd.f32 0.0, %v1766
  %v1768 = vpop.f32.mrf.mxu0
  %1769 = vdwg.mxu0
  %v1771 = vrot.slane %v1767, 1
  %v1773 = vadd.f32 %v1572, %v1699
  %v1774 = vadd.f32 %v1576, %v1703
  %v1775 = vadd.f32 %v1630, %v1767
  %v1776 = vadd.f32 %v1634, %v1771
  %v1779 = vperm.slane %v1775, 0
  %v1780 = vperm.slane %v1776, 0
  %1781 = vrot.lane.b32.xlu0 %v1779, 64
  %v1782 = vpop.permute.xlu0 %1781
  %1783 = vrot.lane.b32.xlu0 %v1780, 64
  %v1784 = vpop.permute.xlu0 %1783
  %v1787 = vsel %vm205, %v1773, %v1782
  %v1788 = vsel %vm205, %v1774, %v1784
  %v1789 = vadd.f32 %v1366, %v1787
  %v1790 = vadd.f32 %v1367, %v1788
  %v1791 = vadd.f32 %v1789, %v82
  %v1792 = vadd.f32 %v1790, %v82
  %s1793 = scalar_lea.vmem %s7, 2
  %1794 = vst [vmem:[%s1793] sm:$0x1] %v1791
  %1795 = vst [vmem:[%s1793 + $0x1] sm:$0x1] %v1792
  // Predicated region
  $region26: #{detector_backbone_with_fpn.3} parent=0 // pred_check
    _
  $region27: #{detector_backbone_with_fpn.3} parent=0 // pred_check_branch
    %1797 = sbr.rel (0) target = $region29
  $region28: #{detector_backbone_with_fpn.3} parent=0 // pred_region
    _
  $region29: #{detector_backbone_with_fpn.3} parent=0 // pred_fallthru
    _
  // Predicated region
  $region30: #{detector_backbone_with_fpn.3} parent=0 // pred_check
    _
  $region31: #{detector_backbone_with_fpn.3} parent=0 // pred_check_branch
    %1799 = sbr.rel (0) target = $region33
  $region32: #{detector_backbone_with_fpn.3} parent=0 // pred_region
    _
  $region33: #{detector_backbone_with_fpn.3} parent=0 // pred_fallthru
    _
  // Predicated region
  $region34: #{detector_backbone_with_fpn.3} parent=0 // pred_check
    _
  $region35: #{detector_backbone_with_fpn.3} parent=0 // pred_check_branch
    %1801 = sbr.rel (0) target = $region37
  $region36: #{detector_backbone_with_fpn.3} parent=0 // pred_region
    _
  $region37: #{detector_backbone_with_fpn.3} parent=0 // pred_fallthru
    _
  // Predicated region
  $region38: #{detector_backbone_with_fpn.3} parent=0 // pred_check
    _
  $region39: #{detector_backbone_with_fpn.3} parent=0 // pred_check_branch
    %1803 = sbr.rel (0) target = $region41
  $region40: #{detector_backbone_with_fpn.3} parent=0 // pred_region
    _
  $region41: #{detector_backbone_with_fpn.3} parent=0 // pred_fallthru
    _

// kernel: detector_backbone_with_fpn.4
$region0: #{detector_backbone_with_fpn.4}
  #allocation0 [shape = 'u32[]', space=smem, size = 0x4, offset = 0x4, fixed_abs, tag = 'smem constant byte address 0x4 - core index']
  #allocation1 [shape = 'u32[72,128]{1,0:T(1,128)}', space=vmem, size = 0x9000, scoped, tag = 'internal scratch']
  #allocation2 [shape = 'bf16[6,4,128]{2,1,0:T(4,128)(2,1)}', space=vmem, size = 0x1800, scoped, tag = 'scratch operand']
  %s0 = inlined_call_operand.vmem [shape: bf16[2,4,2,128], index: 0, kind: input, shape index: {}]
  %s1 = inlined_call_operand.vmem [shape: bf16[2,2,2,64], index: 1, kind: input, shape index: {}]
  %s2 = inlined_call_operand.vmem [shape: bf16[64,64], index: 2, kind: input, shape index: {}]
  %s3 = inlined_call_operand.vmem [shape: f32[1,128], index: 3, kind: input, shape index: {}]
  %s4 = inlined_call_operand.vmem [shape: bf16[3,128,128], index: 4, kind: input, shape index: {}]
  %s5 = inlined_call_operand.vmem [shape: bf16[3,2,64,64], index: 5, kind: input, shape index: {}]
  %s6 = inlined_call_operand.vmem [shape: f32[1,128], index: 6, kind: input, shape index: {}]
  %s7 = inlined_call_operand.vmem [shape: bf16[2,4,2,128], index: 7, kind: output, shape index: {0}]
  %s8 = inlined_call_operand.vmem [shape: f32[2,4,2,128], index: 8, kind: output, shape index: {1}]
  %9 = xla_tuple %s7, %s8
  %s10 = sld [smem:[#allocation0]]
  $region46: #{detector_backbone_with_fpn.4} parent=0
    _
  %s12 = ssub.s32 1, %s10
  %s13 = scalar_select 0, %s12, %s10
  // Predicated region
  $region2: #{detector_backbone_with_fpn.4} parent=0 // pred_check
    _
  $region3: #{detector_backbone_with_fpn.4} parent=0 // pred_check_branch
    %15 = sbr.rel (0) target = $region5
  $region4: #{detector_backbone_with_fpn.4} parent=0 // pred_region
    _
  $region5: #{detector_backbone_with_fpn.4} parent=0 // pred_fallthru
    _
  // Predicated region
  $region6: #{detector_backbone_with_fpn.4} parent=0 // pred_check
    _
  $region7: #{detector_backbone_with_fpn.4} parent=0 // pred_check_branch
    %17 = sbr.rel (0) target = $region9
  $region8: #{detector_backbone_with_fpn.4} parent=0 // pred_region
    _
  $region9: #{detector_backbone_with_fpn.4} parent=0 // pred_fallthru
    _
  // Predicated region
  $region10: #{detector_backbone_with_fpn.4} parent=0 // pred_check
    _
  $region11: #{detector_backbone_with_fpn.4} parent=0 // pred_check_branch
    %19 = sbr.rel (0) target = $region13
  $region12: #{detector_backbone_with_fpn.4} parent=0 // pred_region
    _
  $region13: #{detector_backbone_with_fpn.4} parent=0 // pred_fallthru
    _
  // Predicated region
  $region14: #{detector_backbone_with_fpn.4} parent=0 // pred_check
    _
  $region15: #{detector_backbone_with_fpn.4} parent=0 // pred_check_branch
    %21 = sbr.rel (0) target = $region17
  $region16: #{detector_backbone_with_fpn.4} parent=0 // pred_region
    _
  $region17: #{detector_backbone_with_fpn.4} parent=0 // pred_fallthru
    _
  // Predicated region
  $region18: #{detector_backbone_with_fpn.4} parent=0 // pred_check
    _
  $region19: #{detector_backbone_with_fpn.4} parent=0 // pred_check_branch
    %23 = sbr.rel (0) target = $region21
  $region20: #{detector_backbone_with_fpn.4} parent=0 // pred_region
    _
  $region21: #{detector_backbone_with_fpn.4} parent=0 // pred_fallthru
    _
  // Predicated region
  $region22: #{detector_backbone_with_fpn.4} parent=0 // pred_check
    _
  $region23: #{detector_backbone_with_fpn.4} parent=0 // pred_check_branch
    %25 = sbr.rel (0) target = $region25
  $region24: #{detector_backbone_with_fpn.4} parent=0 // pred_region
    _
  $region25: #{detector_backbone_with_fpn.4} parent=0 // pred_fallthru
    _
  // Predicated region
  $region26: #{detector_backbone_with_fpn.4} parent=0 // pred_check
    _
  $region27: #{detector_backbone_with_fpn.4} parent=0 // pred_check_branch
    %27 = sbr.rel (0) target = $region29
  $region28: #{detector_backbone_with_fpn.4} parent=0 // pred_region
    _
  $region29: #{detector_backbone_with_fpn.4} parent=0 // pred_fallthru
    _
  %29 = vst [vmem:[#allocation2] sm:$0x3] 0
  %s30 = scalar_lea.vmem [#allocation2], 10
  %31 = vst [vmem:[%s30] sm:$0x3] 0
  %vm32 = vcmask 1040384
  %vm33 = vsmask.f32 256
  %vm34 = vmand %vm32, %vm33
  %v35 = vld [vmem:[#allocation2] sm:$0x1]
  %v36 = vsel %vm34, 0, %v35
  %37 = vst [vmem:[#allocation2] sm:$0x1] %v36
  %v38 = vld [vmem:[#allocation2 + $0x2] sm:$0x1]
  %v39 = vsel %vm34, 0, %v38
  %40 = vst [vmem:[#allocation2 + $0x2] sm:$0x1] %v39
  %v41 = vld [vmem:[#allocation2 + $0x4] sm:$0x1]
  %v42 = vsel %vm34, 0, %v41
  %43 = vst [vmem:[#allocation2 + $0x4] sm:$0x1] %v42
  %v44 = vld [vmem:[#allocation2 + $0x6] sm:$0x1]
  %v45 = vsel %vm34, 0, %v44
  %46 = vst [vmem:[#allocation2 + $0x6] sm:$0x1] %v45
  %v47 = vld [vmem:[#allocation2 + $0x8] sm:$0x1]
  %v48 = vsel %vm34, 0, %v47
  %49 = vst [vmem:[#allocation2 + $0x8] sm:$0x1] %v48
  %v50 = vld [vmem:[#allocation2 + $0xa] sm:$0x1]
  %v51 = vsel %vm34, 0, %v50
  %52 = vst [vmem:[#allocation2 + $0xa] sm:$0x1] %v51
  %vm53 = vcmask 1041409
  %vm54 = vsmask.f32 7942
  %vm55 = vmand %vm53, %vm54
  %v56 = vld [vmem:[#allocation2] sm:$0x2]
  %v57 = vsel %vm55, 0, %v56
  %58 = vst [vmem:[#allocation2] sm:$0x2] %v57
  %v59 = vld [vmem:[#allocation2 + $0x2] sm:$0x2]
  %v60 = vsel %vm55, 0, %v59
  %61 = vst [vmem:[#allocation2 + $0x2] sm:$0x2] %v60
  %v62 = vld [vmem:[#allocation2 + $0x4] sm:$0x2]
  %v63 = vsel %vm55, 0, %v62
  %64 = vst [vmem:[#allocation2 + $0x4] sm:$0x2] %v63
  %v65 = vld [vmem:[#allocation2 + $0x6] sm:$0x2]
  %v66 = vsel %vm55, 0, %v65
  %67 = vst [vmem:[#allocation2 + $0x6] sm:$0x2] %v66
  %v68 = vld [vmem:[#allocation2 + $0x8] sm:$0x2]
  %v69 = vsel %vm55, 0, %v68
  %70 = vst [vmem:[#allocation2 + $0x8] sm:$0x2] %v69
  %v71 = vld [vmem:[#allocation2 + $0xa] sm:$0x2]
  %v72 = vsel %vm55, 0, %v71
  %73 = vst [vmem:[#allocation2 + $0xa] sm:$0x2] %v72
  %v74 = vld [vmem:[%s2] sm:$0xf]
  %v75 = vld [vmem:[%s2 + $0x4] sm:$0xf]
  %v76 = vld [vmem:[%s2 + $0x8] sm:$0xf]
  %v77 = vld [vmem:[%s2 + $0xc] sm:$0xf]
  %v78 = vld [vmem:[%s2 + $0x10] sm:$0xf]
  %v79 = vld [vmem:[%s2 + $0x14] sm:$0xf]
  %v80 = vld [vmem:[%s2 + $0x18] sm:$0xf]
  %v81 = vld [vmem:[%s2 + $0x1c] sm:$0xf]
  %v82 = vld [vmem:[%s3] sm:$0x1]
  %v83 = vld [vmem:[%s6] sm:$0x1]
  %v84 = vld [vmem:[%s0] sm:$0x1]
  %v85 = vld [vmem:[%s0 + $0x1] sm:$0x1]
  %v86 = vld [vmem:[%s0 + $0x2] sm:$0x1]
  %v87 = vld [vmem:[%s0 + $0x3] sm:$0x1]
  %89 = vst [vmem:[#allocation1] ss:$9 sm:$0xff] %v84
  %s91 = scalar_lea.vmem [#allocation1], 1
  %92 = vst [vmem:[%s91] ss:$9 sm:$0xff] %v85
  %s94 = scalar_lea.vmem [#allocation1], 2
  %95 = vst [vmem:[%s94] ss:$9 sm:$0xff] %v86
  %s97 = scalar_lea.vmem [#allocation1], 3
  %98 = vst [vmem:[%s97] ss:$9 sm:$0xff] %v87
  %v99 = vld [vmem:[#allocation1] sm:$0xff]
  %v108 = vunpack.c.l.b16 %v74
  %v109 = vunpack.c.l.b16 %v75
  %v110 = vunpack.c.l.b16 %v76
  %v111 = vunpack.c.l.b16 %v77
  %v112 = vunpack.c.l.b16 %v78
  %v113 = vunpack.c.l.b16 %v79
  %v114 = vunpack.c.l.b16 %v80
  %v115 = vunpack.c.l.b16 %v81
  %v116 = vpack.c.b16 %v109, %v108
  %v117 = vpack.c.b16 %v111, %v110
  %v118 = vpack.c.b16 %v113, %v112
  %v119 = vpack.c.b16 %v115, %v114
  %vm124 = vcmask 523264
  %v125 = vsel %vm124, %v99, 0
  %127 = vmatpush.bf16.msra.mxu0 0
  %128 = vmatpush.bf16.msra.mxu0 0
  %129 = vmatpush.bf16.msra.mxu0 0
  %130 = vmatpush.bf16.msra.mxu0 0
  %131 = vmatpush.bf16.msra.mxu0 %v119
  %132 = vmatpush.bf16.msra.mxu0 %v118
  %133 = vmatpush.bf16.msra.mxu0 %v117
  %134 = vmatpush.bf16.msra.mxu0 %v116
  %135 = vmatmul.bf16.gmra.mxu0 %v125
  %v136 = vpop.f32.mrf.mxu0
  %v137 = vadd.f32 0.0, %v136
  %v138 = vpop.f32.mrf.mxu0
  %139 = vdwg.mxu0
  %v141 = vrot.slane %v137, 2
  %v142 = vrot.slane %v137, 4
  %v143 = vrot.slane %v137, 6
  %147 = vst [vmem:[#allocation1] ss:$9 sm:$0xff] %v84
  %s148 = scalar_lea.vmem [#allocation1], 1
  %149 = vst [vmem:[%s148] ss:$9 sm:$0xff] %v85
  %s150 = scalar_lea.vmem [#allocation1], 2
  %151 = vst [vmem:[%s150] ss:$9 sm:$0xff] %v86
  %s152 = scalar_lea.vmem [#allocation1], 3
  %153 = vst [vmem:[%s152] ss:$9 sm:$0xff] %v87
  %v154 = vld [vmem:[#allocation1] sm:$0xff]
  %156 = vrot.lane.b32.xlu0 %v154, 64
  %v157 = vpop.permute.xlu0 %156
  %v159 = vsel %vm124, %v157, 0
  %161 = vmatpush.bf16.msra.mxu0 0
  %162 = vmatpush.bf16.msra.mxu0 0
  %163 = vmatpush.bf16.msra.mxu0 0
  %164 = vmatpush.bf16.msra.mxu0 0
  %165 = vmatpush.bf16.msra.mxu0 %v119
  %166 = vmatpush.bf16.msra.mxu0 %v118
  %167 = vmatpush.bf16.msra.mxu0 %v117
  %168 = vmatpush.bf16.msra.mxu0 %v116
  %169 = vmatmul.bf16.gmra.mxu0 %v159
  %v170 = vpop.f32.mrf.mxu0
  %v171 = vadd.f32 0.0, %v170
  %v172 = vpop.f32.mrf.mxu0
  %173 = vdwg.mxu0
  %v175 = vrot.slane %v171, 2
  %v176 = vrot.slane %v171, 4
  %v177 = vrot.slane %v171, 6
  %178 = vst [vmem:[#allocation1] ss:$4 sm:$0xff] %v171
  %v179 = vld.sshfl [vmem:[#allocation1] sm:$0xff pattern:$0x73625140]
  %s180 = scalar_lea.vmem [#allocation1], 32
  %181 = vst [vmem:[%s180] ss:$4 sm:$0xff] %v175
  %v182 = vld.sshfl [vmem:[#allocation1 + $0x20] sm:$0xff pattern:$0x73625140]
  %183 = vst [vmem:[#allocation1] ss:$4 sm:$0xff] %v176
  %v184 = vld.sshfl [vmem:[#allocation1] sm:$0xff pattern:$0x73625140]
  %185 = vst [vmem:[%s180] ss:$4 sm:$0xff] %v177
  %v186 = vld.sshfl [vmem:[#allocation1 + $0x20] sm:$0xff pattern:$0x73625140]
  %187 = vrot.lane.b32.xlu0 %v179, 64
  %v188 = vpop.permute.xlu0 %187
  %189 = vrot.lane.b32.xlu0 %v182, 64
  %v190 = vpop.permute.xlu0 %189
  %191 = vrot.lane.b32.xlu0 %v184, 64
  %v192 = vpop.permute.xlu0 %191
  %193 = vrot.lane.b32.xlu0 %v186, 64
  %v194 = vpop.permute.xlu0 %193
  %v199 = vsel %vm124, %v137, %v188
  %v200 = vsel %vm124, %v141, %v190
  %v201 = vsel %vm124, %v142, %v192
  %v202 = vsel %vm124, %v143, %v194
  %v204 = vperm.slane %v82, 0
  %v206 = vadd.f32 %v199, %v204
  %v207 = vadd.f32 %v200, %v204
  %v208 = vadd.f32 %v201, %v204
  %v209 = vadd.f32 %v202, %v204
  %v210 = vld [vmem:[%s1] sm:$0x1]
  %v211 = vld [vmem:[%s1 + $0x1] sm:$0x1]
  %213 = vst [vmem:[#allocation1] ss:$9 sm:$0xff] %v210
  %v214 = vld [vmem:[#allocation1] sm:$0xff]
  %217 = vst [vmem:[#allocation1] ss:$9 sm:$0xff] %v211
  %v218 = vld [vmem:[#allocation1] sm:$0xff]
  %220 = vrot.lane.b32.xlu0 %v214, 64
  %v221 = vpop.permute.xlu0 %220
  %222 = vrot.lane.b32.xlu0 %v218, 64
  %v223 = vpop.permute.xlu0 %222
  %v225 = vsel %vm124, %v210, %v221
  %v228 = vsel %vm124, %v211, %v223
  %v230 = vunpack.c.l.bf16 %v225
  %v231 = vunpack.c.l.bf16 %v228
  %v232 = vadd.f32 %v206, %v230
  %v233 = vadd.f32 %v207, %v230
  %v234 = vadd.f32 %v208, %v231
  %v235 = vadd.f32 %v209, %v231
  %v236 = vpack.c.bf16 %v232, %v232
  %v237 = vpack.c.bf16 %v233, %v233
  %v238 = vpack.c.bf16 %v234, %v234
  %v239 = vpack.c.bf16 %v235, %v235
  %240 = vst [vmem:[%s7] sm:$0x1] %v236
  %241 = vst [vmem:[%s7 + $0x1] sm:$0x1] %v237
  %242 = vst [vmem:[%s7 + $0x2] sm:$0x1] %v238
  %243 = vst [vmem:[%s7 + $0x3] sm:$0x1] %v239
  %v248 = vrot.slane %v236, 2
  %v249 = vrot.slane %v237, 2
  %v250 = vrot.slane %v238, 2
  %v251 = vrot.slane %v239, 2
  %vm252 = vcmask 1041408
  %v255 = vsel %vm252, %v236, %v248
  %v258 = vsel %vm252, %v237, %v249
  %v261 = vsel %vm252, %v238, %v250
  %v264 = vsel %vm252, %v239, %v251
  %v265 = vshrl.u32 %v255, 16
  %v267 = vrot.slane %v265, 7
  %v268 = vshll.u32 %v255, 16
  %v270 = vor.u32 %v267, %v268
  %v271 = vshrl.u32 %v258, 16
  %v273 = vrot.slane %v271, 7
  %v274 = vshll.u32 %v258, 16
  %v276 = vor.u32 %v273, %v274
  %v277 = vshrl.u32 %v261, 16
  %v279 = vrot.slane %v277, 7
  %v280 = vshll.u32 %v261, 16
  %v282 = vor.u32 %v279, %v280
  %v283 = vshrl.u32 %v264, 16
  %v285 = vrot.slane %v283, 7
  %v286 = vshll.u32 %v264, 16
  %v288 = vor.u32 %v285, %v286
  %s293 = scalar_lea.vmem [#allocation2], 2
  %vm294 = vcmask 1041408
  %vm295 = vsmask.f32 1282
  %vm296 = vmand %vm294, %vm295
  %v297 = vld [vmem:[%s293] sm:$0x3]
  %v298 = vsel %vm296, %v270, %v297
  %299 = vst [vmem:[%s293] sm:$0x3] %v298
  %v300 = vld [vmem:[%s293 + $0x2] sm:$0x3]
  %v301 = vsel %vm296, %v276, %v300
  %302 = vst [vmem:[%s293 + $0x2] sm:$0x3] %v301
  %v303 = vld [vmem:[%s293 + $0x4] sm:$0x3]
  %v304 = vsel %vm296, %v282, %v303
  %305 = vst [vmem:[%s293 + $0x4] sm:$0x3] %v304
  %v306 = vld [vmem:[%s293 + $0x6] sm:$0x3]
  %v307 = vsel %vm296, %v288, %v306
  %308 = vst [vmem:[%s293 + $0x6] sm:$0x3] %v307
  %v309 = vld [vmem:[#allocation2] sm:$0x3]
  %v310 = vld [vmem:[#allocation2 + $0x2] sm:$0x3]
  %v311 = vld [vmem:[#allocation2 + $0x4] sm:$0x3]
  %v312 = vld [vmem:[#allocation2 + $0x6] sm:$0x3]
  %v313 = vld [vmem:[%s4] sm:$0xf]
  %v314 = vld [vmem:[%s4 + $0x4] sm:$0xf]
  %v315 = vld [vmem:[%s4 + $0x8] sm:$0xf]
  %v316 = vld [vmem:[%s4 + $0xc] sm:$0xf]
  %v317 = vld [vmem:[%s4 + $0x10] sm:$0xf]
  %v318 = vld [vmem:[%s4 + $0x14] sm:$0xf]
  %v319 = vld [vmem:[%s4 + $0x18] sm:$0xf]
  %v320 = vld [vmem:[%s4 + $0x1c] sm:$0xf]
  %v321 = vld [vmem:[%s4 + $0x20] sm:$0xf]
  %v322 = vld [vmem:[%s4 + $0x24] sm:$0xf]
  %v323 = vld [vmem:[%s4 + $0x28] sm:$0xf]
  %v324 = vld [vmem:[%s4 + $0x2c] sm:$0xf]
  %v325 = vld [vmem:[%s4 + $0x30] sm:$0xf]
  %v326 = vld [vmem:[%s4 + $0x34] sm:$0xf]
  %v327 = vld [vmem:[%s4 + $0x38] sm:$0xf]
  %v328 = vld [vmem:[%s4 + $0x3c] sm:$0xf]
  %v329 = vld [vmem:[%s293] sm:$0x3]
  %v330 = vld [vmem:[%s293 + $0x2] sm:$0x3]
  %v331 = vld [vmem:[%s293 + $0x4] sm:$0x3]
  %v332 = vld [vmem:[%s293 + $0x6] sm:$0x3]
  %s333 = scalar_lea.vmem %s4, 64
  %v334 = vld [vmem:[%s333] sm:$0xf]
  %v335 = vld [vmem:[%s333 + $0x4] sm:$0xf]
  %v336 = vld [vmem:[%s333 + $0x8] sm:$0xf]
  %v337 = vld [vmem:[%s333 + $0xc] sm:$0xf]
  %v338 = vld [vmem:[%s333 + $0x10] sm:$0xf]
  %v339 = vld [vmem:[%s333 + $0x14] sm:$0xf]
  %v340 = vld [vmem:[%s333 + $0x18] sm:$0xf]
  %v341 = vld [vmem:[%s333 + $0x1c] sm:$0xf]
  %v342 = vld [vmem:[%s333 + $0x20] sm:$0xf]
  %v343 = vld [vmem:[%s333 + $0x24] sm:$0xf]
  %v344 = vld [vmem:[%s333 + $0x28] sm:$0xf]
  %v345 = vld [vmem:[%s333 + $0x2c] sm:$0xf]
  %v346 = vld [vmem:[%s333 + $0x30] sm:$0xf]
  %v347 = vld [vmem:[%s333 + $0x34] sm:$0xf]
  %v348 = vld [vmem:[%s333 + $0x38] sm:$0xf]
  %v349 = vld [vmem:[%s333 + $0x3c] sm:$0xf]
  %v354 = vrot.slane %v329, 1
  %v355 = vrot.slane %v329, 2
  %v356 = vrot.slane %v329, 3
  %v357 = vrot.slane %v330, 1
  %v358 = vrot.slane %v330, 2
  %v359 = vrot.slane %v330, 3
  %v360 = vrot.slane %v331, 1
  %v361 = vrot.slane %v331, 2
  %v362 = vrot.slane %v331, 3
  %v363 = vrot.slane %v332, 1
  %v364 = vrot.slane %v332, 2
  %v365 = vrot.slane %v332, 3
  %vm366 = vcmask 1040384
  %v369 = vsel %vm366, %v329, %v354
  %vm370 = vcmask 1042434
  %v373 = vsel %vm370, %v355, %v356
  %v374 = vsel %vm252, %v369, %v373
  %vm375 = vcmask 1041409
  %v376 = vsel %vm375, %v329, %v354
  %vm377 = vcmask 1043459
  %v378 = vsel %vm377, %v355, %v356
  %vm379 = vcmask 1042433
  %v380 = vsel %vm379, %v376, %v378
  %v382 = vrot.slane %v380, 1
  %v385 = vsel %vm366, %v330, %v357
  %v388 = vsel %vm370, %v358, %v359
  %v389 = vsel %vm252, %v385, %v388
  %v390 = vsel %vm375, %v330, %v357
  %v391 = vsel %vm377, %v358, %v359
  %v392 = vsel %vm379, %v390, %v391
  %v394 = vrot.slane %v392, 1
  %v397 = vsel %vm366, %v331, %v360
  %v400 = vsel %vm370, %v361, %v362
  %v401 = vsel %vm252, %v397, %v400
  %v402 = vsel %vm375, %v331, %v360
  %v403 = vsel %vm377, %v361, %v362
  %v404 = vsel %vm379, %v402, %v403
  %v406 = vrot.slane %v404, 1
  %v409 = vsel %vm366, %v332, %v363
  %v412 = vsel %vm370, %v364, %v365
  %v413 = vsel %vm252, %v409, %v412
  %v414 = vsel %vm375, %v332, %v363
  %v415 = vsel %vm377, %v364, %v365
  %v416 = vsel %vm379, %v414, %v415
  %v418 = vrot.slane %v416, 1
  %vm419 = vsmask.f32 1284
  %vm420 = vmor %vm33, %vm419
  %vm421 = vsmask.f32 2312
  %vm422 = vmor %vm420, %vm421
  %vm423 = vsmask.f32 3340
  %vm424 = vmor %vm422, %vm423
  %vm425 = vsmask.f32 4368
  %vm426 = vmor %vm424, %vm425
  %vm427 = vsmask.f32 5396
  %vm428 = vmor %vm426, %vm427
  %vm429 = vsmask.f32 6424
  %vm430 = vmor %vm428, %vm429
  %vm431 = vsmask.f32 7452
  %vm432 = vmor %vm430, %vm431
  %v433 = vshrl.u32 %v374, 16
  %v435 = vrot.slane %v433, 7
  %v436 = vrot.slane %v435, 1
  %v438 = vshll.u32 %v382, 16
  %v440 = vsel %vm432, %v436, %v438
  %v441 = vshrl.u32 %v389, 16
  %v443 = vrot.slane %v441, 7
  %v444 = vrot.slane %v443, 1
  %v446 = vshll.u32 %v394, 16
  %v448 = vsel %vm432, %v444, %v446
  %v449 = vshrl.u32 %v401, 16
  %v451 = vrot.slane %v449, 7
  %v452 = vrot.slane %v451, 1
  %v454 = vshll.u32 %v406, 16
  %v456 = vsel %vm432, %v452, %v454
  %v457 = vshrl.u32 %v413, 16
  %v459 = vrot.slane %v457, 7
  %v460 = vrot.slane %v459, 1
  %v462 = vshll.u32 %v418, 16
  %v464 = vsel %vm432, %v460, %v462
  %466 = vst [vmem:[#allocation1] ss:$9 sm:$0xff] %v440
  %s468 = scalar_lea.vmem [#allocation1], 1
  %469 = vst [vmem:[%s468] ss:$9 sm:$0xff] %v448
  %s471 = scalar_lea.vmem [#allocation1], 2
  %472 = vst [vmem:[%s471] ss:$9 sm:$0xff] %v456
  %s474 = scalar_lea.vmem [#allocation1], 3
  %475 = vst [vmem:[%s474] ss:$9 sm:$0xff] %v464
  %v476 = vld [vmem:[#allocation1] sm:$0xff]
  %v494 = vunpack.c.l.b16 %v334
  %v495 = vunpack.c.l.b16 %v335
  %v496 = vunpack.c.l.b16 %v336
  %v497 = vunpack.c.l.b16 %v337
  %v498 = vunpack.c.l.b16 %v338
  %v499 = vunpack.c.l.b16 %v339
  %v500 = vunpack.c.l.b16 %v340
  %v501 = vunpack.c.l.b16 %v341
  %v502 = vunpack.c.l.b16 %v342
  %v503 = vunpack.c.l.b16 %v343
  %v504 = vunpack.c.l.b16 %v344
  %v505 = vunpack.c.l.b16 %v345
  %v506 = vunpack.c.l.b16 %v346
  %v507 = vunpack.c.l.b16 %v347
  %v508 = vunpack.c.l.b16 %v348
  %v509 = vunpack.c.l.b16 %v349
  %v510 = vpack.c.b16 %v495, %v494
  %v511 = vpack.c.b16 %v497, %v496
  %v512 = vpack.c.b16 %v499, %v498
  %v513 = vpack.c.b16 %v501, %v500
  %v514 = vpack.c.b16 %v503, %v502
  %v515 = vpack.c.b16 %v505, %v504
  %v516 = vpack.c.b16 %v507, %v506
  %v517 = vpack.c.b16 %v509, %v508
  %526 = vmatpush.bf16.msra.mxu0 %v517
  %527 = vmatpush.bf16.msra.mxu0 %v516
  %528 = vmatpush.bf16.msra.mxu0 %v515
  %529 = vmatpush.bf16.msra.mxu0 %v514
  %530 = vmatpush.bf16.msra.mxu0 %v513
  %531 = vmatpush.bf16.msra.mxu0 %v512
  %532 = vmatpush.bf16.msra.mxu0 %v511
  %533 = vmatpush.bf16.msra.mxu0 %v510
  %534 = vmatmul.bf16.gmra.mxu0 %v476
  %v535 = vpop.f32.mrf.mxu0
  %v536 = vadd.f32 0.0, %v535
  %v537 = vpop.f32.mrf.mxu0
  %538 = vdwg.mxu0
  %v543 = vrot.slane %v309, 1
  %v544 = vrot.slane %v309, 2
  %v545 = vrot.slane %v309, 3
  %v546 = vrot.slane %v310, 1
  %v547 = vrot.slane %v310, 2
  %v548 = vrot.slane %v310, 3
  %v549 = vrot.slane %v311, 1
  %v550 = vrot.slane %v311, 2
  %v551 = vrot.slane %v311, 3
  %v552 = vrot.slane %v312, 1
  %v553 = vrot.slane %v312, 2
  %v554 = vrot.slane %v312, 3
  %v557 = vsel %vm366, %v309, %v543
  %v560 = vsel %vm370, %v544, %v545
  %v561 = vsel %vm252, %v557, %v560
  %v562 = vsel %vm375, %v309, %v543
  %v563 = vsel %vm377, %v544, %v545
  %v564 = vsel %vm379, %v562, %v563
  %v566 = vrot.slane %v564, 1
  %v569 = vsel %vm366, %v310, %v546
  %v572 = vsel %vm370, %v547, %v548
  %v573 = vsel %vm252, %v569, %v572
  %v574 = vsel %vm375, %v310, %v546
  %v575 = vsel %vm377, %v547, %v548
  %v576 = vsel %vm379, %v574, %v575
  %v578 = vrot.slane %v576, 1
  %v581 = vsel %vm366, %v311, %v549
  %v584 = vsel %vm370, %v550, %v551
  %v585 = vsel %vm252, %v581, %v584
  %v586 = vsel %vm375, %v311, %v549
  %v587 = vsel %vm377, %v550, %v551
  %v588 = vsel %vm379, %v586, %v587
  %v590 = vrot.slane %v588, 1
  %v593 = vsel %vm366, %v312, %v552
  %v596 = vsel %vm370, %v553, %v554
  %v597 = vsel %vm252, %v593, %v596
  %v598 = vsel %vm375, %v312, %v552
  %v599 = vsel %vm377, %v553, %v554
  %v600 = vsel %vm379, %v598, %v599
  %v602 = vrot.slane %v600, 1
  %v603 = vshrl.u32 %v561, 16
  %v605 = vrot.slane %v603, 7
  %v606 = vrot.slane %v605, 1
  %v608 = vshll.u32 %v566, 16
  %v610 = vsel %vm432, %v606, %v608
  %v611 = vshrl.u32 %v573, 16
  %v613 = vrot.slane %v611, 7
  %v614 = vrot.slane %v613, 1
  %v616 = vshll.u32 %v578, 16
  %v618 = vsel %vm432, %v614, %v616
  %v619 = vshrl.u32 %v585, 16
  %v621 = vrot.slane %v619, 7
  %v622 = vrot.slane %v621, 1
  %v624 = vshll.u32 %v590, 16
  %v626 = vsel %vm432, %v622, %v624
  %v627 = vshrl.u32 %v597, 16
  %v629 = vrot.slane %v627, 7
  %v630 = vrot.slane %v629, 1
  %v632 = vshll.u32 %v602, 16
  %v634 = vsel %vm432, %v630, %v632
  %636 = vst [vmem:[#allocation1] ss:$9 sm:$0xff] %v610
  %s638 = scalar_lea.vmem [#allocation1], 1
  %639 = vst [vmem:[%s638] ss:$9 sm:$0xff] %v618
  %s641 = scalar_lea.vmem [#allocation1], 2
  %642 = vst [vmem:[%s641] ss:$9 sm:$0xff] %v626
  %s644 = scalar_lea.vmem [#allocation1], 3
  %645 = vst [vmem:[%s644] ss:$9 sm:$0xff] %v634
  %v646 = vld [vmem:[#allocation1] sm:$0xff]
  %v664 = vunpack.c.l.b16 %v313
  %v665 = vunpack.c.l.b16 %v314
  %v666 = vunpack.c.l.b16 %v315
  %v667 = vunpack.c.l.b16 %v316
  %v668 = vunpack.c.l.b16 %v317
  %v669 = vunpack.c.l.b16 %v318
  %v670 = vunpack.c.l.b16 %v319
  %v671 = vunpack.c.l.b16 %v320
  %v672 = vunpack.c.l.b16 %v321
  %v673 = vunpack.c.l.b16 %v322
  %v674 = vunpack.c.l.b16 %v323
  %v675 = vunpack.c.l.b16 %v324
  %v676 = vunpack.c.l.b16 %v325
  %v677 = vunpack.c.l.b16 %v326
  %v678 = vunpack.c.l.b16 %v327
  %v679 = vunpack.c.l.b16 %v328
  %v680 = vpack.c.b16 %v665, %v664
  %v681 = vpack.c.b16 %v667, %v666
  %v682 = vpack.c.b16 %v669, %v668
  %v683 = vpack.c.b16 %v671, %v670
  %v684 = vpack.c.b16 %v673, %v672
  %v685 = vpack.c.b16 %v675, %v674
  %v686 = vpack.c.b16 %v677, %v676
  %v687 = vpack.c.b16 %v679, %v678
  %696 = vmatpush.bf16.msra.mxu0 %v687
  %697 = vmatpush.bf16.msra.mxu0 %v686
  %698 = vmatpush.bf16.msra.mxu0 %v685
  %699 = vmatpush.bf16.msra.mxu0 %v684
  %700 = vmatpush.bf16.msra.mxu0 %v683
  %701 = vmatpush.bf16.msra.mxu0 %v682
  %702 = vmatpush.bf16.msra.mxu0 %v681
  %703 = vmatpush.bf16.msra.mxu0 %v680
  %704 = vmatmul.bf16.gmra.mxu0 %v646
  %v705 = vpop.f32.mrf.mxu0
  %v706 = vadd.f32 %v536, %v705
  %v707 = vpop.f32.mrf.mxu0
  %708 = vdwg.mxu0
  %v710 = vrot.slane %v706, 2
  %v711 = vrot.slane %v706, 4
  %v712 = vrot.slane %v706, 6
  %s716 = scalar_lea.vmem [#allocation2], 4
  %v717 = vld [vmem:[%s716] sm:$0x3]
  %v718 = vld [vmem:[%s716 + $0x2] sm:$0x3]
  %v719 = vld [vmem:[%s716 + $0x4] sm:$0x3]
  %v720 = vld [vmem:[%s716 + $0x6] sm:$0x3]
  %s721 = scalar_lea.vmem %s4, 128
  %v722 = vld [vmem:[%s721] sm:$0xf]
  %v723 = vld [vmem:[%s721 + $0x4] sm:$0xf]
  %v724 = vld [vmem:[%s721 + $0x8] sm:$0xf]
  %v725 = vld [vmem:[%s721 + $0xc] sm:$0xf]
  %v726 = vld [vmem:[%s721 + $0x10] sm:$0xf]
  %v727 = vld [vmem:[%s721 + $0x14] sm:$0xf]
  %v728 = vld [vmem:[%s721 + $0x18] sm:$0xf]
  %v729 = vld [vmem:[%s721 + $0x1c] sm:$0xf]
  %v730 = vld [vmem:[%s721 + $0x20] sm:$0xf]
  %v731 = vld [vmem:[%s721 + $0x24] sm:$0xf]
  %v732 = vld [vmem:[%s721 + $0x28] sm:$0xf]
  %v733 = vld [vmem:[%s721 + $0x2c] sm:$0xf]
  %v734 = vld [vmem:[%s721 + $0x30] sm:$0xf]
  %v735 = vld [vmem:[%s721 + $0x34] sm:$0xf]
  %v736 = vld [vmem:[%s721 + $0x38] sm:$0xf]
  %v737 = vld [vmem:[%s721 + $0x3c] sm:$0xf]
  %v742 = vrot.slane %v717, 1
  %v743 = vrot.slane %v717, 2
  %v744 = vrot.slane %v717, 3
  %v745 = vrot.slane %v718, 1
  %v746 = vrot.slane %v718, 2
  %v747 = vrot.slane %v718, 3
  %v748 = vrot.slane %v719, 1
  %v749 = vrot.slane %v719, 2
  %v750 = vrot.slane %v719, 3
  %v751 = vrot.slane %v720, 1
  %v752 = vrot.slane %v720, 2
  %v753 = vrot.slane %v720, 3
  %v756 = vsel %vm366, %v717, %v742
  %v759 = vsel %vm370, %v743, %v744
  %v760 = vsel %vm252, %v756, %v759
  %v761 = vsel %vm375, %v717, %v742
  %v762 = vsel %vm377, %v743, %v744
  %v763 = vsel %vm379, %v761, %v762
  %v765 = vrot.slane %v763, 1
  %v768 = vsel %vm366, %v718, %v745
  %v771 = vsel %vm370, %v746, %v747
  %v772 = vsel %vm252, %v768, %v771
  %v773 = vsel %vm375, %v718, %v745
  %v774 = vsel %vm377, %v746, %v747
  %v775 = vsel %vm379, %v773, %v774
  %v777 = vrot.slane %v775, 1
  %v780 = vsel %vm366, %v719, %v748
  %v783 = vsel %vm370, %v749, %v750
  %v784 = vsel %vm252, %v780, %v783
  %v785 = vsel %vm375, %v719, %v748
  %v786 = vsel %vm377, %v749, %v750
  %v787 = vsel %vm379, %v785, %v786
  %v789 = vrot.slane %v787, 1
  %v792 = vsel %vm366, %v720, %v751
  %v795 = vsel %vm370, %v752, %v753
  %v796 = vsel %vm252, %v792, %v795
  %v797 = vsel %vm375, %v720, %v751
  %v798 = vsel %vm377, %v752, %v753
  %v799 = vsel %vm379, %v797, %v798
  %v801 = vrot.slane %v799, 1
  %v802 = vshrl.u32 %v760, 16
  %v804 = vrot.slane %v802, 7
  %v805 = vrot.slane %v804, 1
  %v807 = vshll.u32 %v765, 16
  %v809 = vsel %vm432, %v805, %v807
  %v810 = vshrl.u32 %v772, 16
  %v812 = vrot.slane %v810, 7
  %v813 = vrot.slane %v812, 1
  %v815 = vshll.u32 %v777, 16
  %v817 = vsel %vm432, %v813, %v815
  %v818 = vshrl.u32 %v784, 16
  %v820 = vrot.slane %v818, 7
  %v821 = vrot.slane %v820, 1
  %v823 = vshll.u32 %v789, 16
  %v825 = vsel %vm432, %v821, %v823
  %v826 = vshrl.u32 %v796, 16
  %v828 = vrot.slane %v826, 7
  %v829 = vrot.slane %v828, 1
  %v831 = vshll.u32 %v801, 16
  %v833 = vsel %vm432, %v829, %v831
  %835 = vst [vmem:[#allocation1] ss:$9 sm:$0xff] %v809
  %s837 = scalar_lea.vmem [#allocation1], 1
  %838 = vst [vmem:[%s837] ss:$9 sm:$0xff] %v817
  %s840 = scalar_lea.vmem [#allocation1], 2
  %841 = vst [vmem:[%s840] ss:$9 sm:$0xff] %v825
  %s843 = scalar_lea.vmem [#allocation1], 3
  %844 = vst [vmem:[%s843] ss:$9 sm:$0xff] %v833
  %v845 = vld [vmem:[#allocation1] sm:$0xff]
  %v863 = vunpack.c.l.b16 %v722
  %v864 = vunpack.c.l.b16 %v723
  %v865 = vunpack.c.l.b16 %v724
  %v866 = vunpack.c.l.b16 %v725
  %v867 = vunpack.c.l.b16 %v726
  %v868 = vunpack.c.l.b16 %v727
  %v869 = vunpack.c.l.b16 %v728
  %v870 = vunpack.c.l.b16 %v729
  %v871 = vunpack.c.l.b16 %v730
  %v872 = vunpack.c.l.b16 %v731
  %v873 = vunpack.c.l.b16 %v732
  %v874 = vunpack.c.l.b16 %v733
  %v875 = vunpack.c.l.b16 %v734
  %v876 = vunpack.c.l.b16 %v735
  %v877 = vunpack.c.l.b16 %v736
  %v878 = vunpack.c.l.b16 %v737
  %v879 = vpack.c.b16 %v864, %v863
  %v880 = vpack.c.b16 %v866, %v865
  %v881 = vpack.c.b16 %v868, %v867
  %v882 = vpack.c.b16 %v870, %v869
  %v883 = vpack.c.b16 %v872, %v871
  %v884 = vpack.c.b16 %v874, %v873
  %v885 = vpack.c.b16 %v876, %v875
  %v886 = vpack.c.b16 %v878, %v877
  %895 = vmatpush.bf16.msra.mxu0 %v886
  %896 = vmatpush.bf16.msra.mxu0 %v885
  %897 = vmatpush.bf16.msra.mxu0 %v884
  %898 = vmatpush.bf16.msra.mxu0 %v883
  %899 = vmatpush.bf16.msra.mxu0 %v882
  %900 = vmatpush.bf16.msra.mxu0 %v881
  %901 = vmatpush.bf16.msra.mxu0 %v880
  %902 = vmatpush.bf16.msra.mxu0 %v879
  %903 = vmatmul.bf16.gmra.mxu0 %v845
  %v904 = vpop.f32.mrf.mxu0
  %v905 = vadd.f32 0.0, %v904
  %v906 = vpop.f32.mrf.mxu0
  %907 = vdwg.mxu0
  %v909 = vrot.slane %v905, 2
  %v910 = vrot.slane %v905, 4
  %v911 = vrot.slane %v905, 6
  %v915 = vadd.f32 %v706, %v905
  %v916 = vadd.f32 %v710, %v909
  %v917 = vadd.f32 %v711, %v910
  %v918 = vadd.f32 %v712, %v911
  %v919 = vld [vmem:[#allocation2] sm:$0x1]
  %v920 = vld [vmem:[#allocation2 + $0x2] sm:$0x1]
  %v921 = vld [vmem:[#allocation2 + $0x4] sm:$0x1]
  %v922 = vld [vmem:[#allocation2 + $0x6] sm:$0x1]
  %v923 = vld [vmem:[%s5] sm:$0xf]
  %v924 = vld [vmem:[%s5 + $0x4] sm:$0xf]
  %v925 = vld [vmem:[%s5 + $0x8] sm:$0xf]
  %v926 = vld [vmem:[%s5 + $0xc] sm:$0xf]
  %v927 = vld [vmem:[%s5 + $0x10] sm:$0xf]
  %v928 = vld [vmem:[%s5 + $0x14] sm:$0xf]
  %v929 = vld [vmem:[%s5 + $0x18] sm:$0xf]
  %v930 = vld [vmem:[%s5 + $0x1c] sm:$0xf]
  %v931 = vld [vmem:[#allocation2] sm:$0x2]
  %v932 = vld [vmem:[#allocation2 + $0x2] sm:$0x2]
  %v933 = vld [vmem:[#allocation2 + $0x4] sm:$0x2]
  %v934 = vld [vmem:[#allocation2 + $0x6] sm:$0x2]
  %s935 = scalar_lea.vmem %s5, 32
  %v936 = vld [vmem:[%s935] sm:$0xf]
  %v937 = vld [vmem:[%s935 + $0x4] sm:$0xf]
  %v938 = vld [vmem:[%s935 + $0x8] sm:$0xf]
  %v939 = vld [vmem:[%s935 + $0xc] sm:$0xf]
  %v940 = vld [vmem:[%s935 + $0x10] sm:$0xf]
  %v941 = vld [vmem:[%s935 + $0x14] sm:$0xf]
  %v942 = vld [vmem:[%s935 + $0x18] sm:$0xf]
  %v943 = vld [vmem:[%s935 + $0x1c] sm:$0xf]
  %v944 = vld [vmem:[%s293] sm:$0x1]
  %v945 = vld [vmem:[%s293 + $0x2] sm:$0x1]
  %v946 = vld [vmem:[%s293 + $0x4] sm:$0x1]
  %v947 = vld [vmem:[%s293 + $0x6] sm:$0x1]
  %s948 = scalar_lea.vmem %s5, 64
  %v949 = vld [vmem:[%s948] sm:$0xf]
  %v950 = vld [vmem:[%s948 + $0x4] sm:$0xf]
  %v951 = vld [vmem:[%s948 + $0x8] sm:$0xf]
  %v952 = vld [vmem:[%s948 + $0xc] sm:$0xf]
  %v953 = vld [vmem:[%s948 + $0x10] sm:$0xf]
  %v954 = vld [vmem:[%s948 + $0x14] sm:$0xf]
  %v955 = vld [vmem:[%s948 + $0x18] sm:$0xf]
  %v956 = vld [vmem:[%s948 + $0x1c] sm:$0xf]
  %958 = vst [vmem:[#allocation1] ss:$9 sm:$0xff] %v944
  %s960 = scalar_lea.vmem [#allocation1], 1
  %961 = vst [vmem:[%s960] ss:$9 sm:$0xff] %v945
  %s963 = scalar_lea.vmem [#allocation1], 2
  %964 = vst [vmem:[%s963] ss:$9 sm:$0xff] %v946
  %s966 = scalar_lea.vmem [#allocation1], 3
  %967 = vst [vmem:[%s966] ss:$9 sm:$0xff] %v947
  %v968 = vld [vmem:[#allocation1] sm:$0xff]
  %970 = vrot.lane.b32.xlu0 %v968, 64
  %v971 = vpop.permute.xlu0 %970
  %v980 = vunpack.c.l.b16 %v949
  %v981 = vunpack.c.l.b16 %v950
  %v982 = vunpack.c.l.b16 %v951
  %v983 = vunpack.c.l.b16 %v952
  %v984 = vunpack.c.l.b16 %v953
  %v985 = vunpack.c.l.b16 %v954
  %v986 = vunpack.c.l.b16 %v955
  %v987 = vunpack.c.l.b16 %v956
  %v988 = vpack.c.b16 %v981, %v980
  %v989 = vpack.c.b16 %v983, %v982
  %v990 = vpack.c.b16 %v985, %v984
  %v991 = vpack.c.b16 %v987, %v986
  %v997 = vsel %vm124, %v971, 0
  %999 = vmatpush.bf16.msra.mxu0 0
  %1000 = vmatpush.bf16.msra.mxu0 0
  %1001 = vmatpush.bf16.msra.mxu0 0
  %1002 = vmatpush.bf16.msra.mxu0 0
  %1003 = vmatpush.bf16.msra.mxu0 %v991
  %1004 = vmatpush.bf16.msra.mxu0 %v990
  %1005 = vmatpush.bf16.msra.mxu0 %v989
  %1006 = vmatpush.bf16.msra.mxu0 %v988
  %1007 = vmatmul.bf16.gmra.mxu0 %v997
  %v1008 = vpop.f32.mrf.mxu0
  %v1009 = vadd.f32 0.0, %v1008
  %v1010 = vpop.f32.mrf.mxu0
  %1011 = vdwg.mxu0
  %v1012 = vld [vmem:[%s293] sm:$0x2]
  %v1013 = vld [vmem:[%s293 + $0x2] sm:$0x2]
  %v1014 = vld [vmem:[%s293 + $0x4] sm:$0x2]
  %v1015 = vld [vmem:[%s293 + $0x6] sm:$0x2]
  %s1016 = scalar_lea.vmem %s5, 96
  %v1017 = vld [vmem:[%s1016] sm:$0xf]
  %v1018 = vld [vmem:[%s1016 + $0x4] sm:$0xf]
  %v1019 = vld [vmem:[%s1016 + $0x8] sm:$0xf]
  %v1020 = vld [vmem:[%s1016 + $0xc] sm:$0xf]
  %v1021 = vld [vmem:[%s1016 + $0x10] sm:$0xf]
  %v1022 = vld [vmem:[%s1016 + $0x14] sm:$0xf]
  %v1023 = vld [vmem:[%s1016 + $0x18] sm:$0xf]
  %v1024 = vld [vmem:[%s1016 + $0x1c] sm:$0xf]
  %1026 = vst [vmem:[#allocation1] sm:$0xff] %v1012
  %s1027 = scalar_lea.vmem [#allocation1], 1
  %v1028 = vld [vmem:[%s1027] ss:$2 sm:$0xff]
  %1030 = vst [vmem:[#allocation1 + $0x10] sm:$0xff] %v1013
  %s1031 = scalar_lea.vmem [#allocation1], 17
  %v1032 = vld [vmem:[%s1031] ss:$2 sm:$0xff]
  %1034 = vst [vmem:[#allocation1 + $0x20] sm:$0xff] %v1014
  %s1035 = scalar_lea.vmem [#allocation1], 33
  %v1036 = vld [vmem:[%s1035] ss:$2 sm:$0xff]
  %1038 = vst [vmem:[#allocation1 + $0x30] sm:$0xff] %v1015
  %s1039 = scalar_lea.vmem [#allocation1], 49
  %v1040 = vld [vmem:[%s1039] ss:$2 sm:$0xff]
  %1041 = vst [vmem:[#allocation1] ss:$9 sm:$0xff] %v1028
  %s1042 = scalar_lea.vmem [#allocation1], 1
  %1043 = vst [vmem:[%s1042] ss:$9 sm:$0xff] %v1032
  %s1044 = scalar_lea.vmem [#allocation1], 2
  %1045 = vst [vmem:[%s1044] ss:$9 sm:$0xff] %v1036
  %s1046 = scalar_lea.vmem [#allocation1], 3
  %1047 = vst [vmem:[%s1046] ss:$9 sm:$0xff] %v1040
  %v1048 = vld [vmem:[#allocation1] sm:$0xff]
  %v1057 = vunpack.c.l.b16 %v1017
  %v1058 = vunpack.c.l.b16 %v1018
  %v1059 = vunpack.c.l.b16 %v1019
  %v1060 = vunpack.c.l.b16 %v1020
  %v1061 = vunpack.c.l.b16 %v1021
  %v1062 = vunpack.c.l.b16 %v1022
  %v1063 = vunpack.c.l.b16 %v1023
  %v1064 = vunpack.c.l.b16 %v1024
  %v1065 = vpack.c.b16 %v1058, %v1057
  %v1066 = vpack.c.b16 %v1060, %v1059
  %v1067 = vpack.c.b16 %v1062, %v1061
  %v1068 = vpack.c.b16 %v1064, %v1063
  %v1073 = vsel %vm124, %v1048, 0
  %1075 = vmatpush.bf16.msra.mxu0 0
  %1076 = vmatpush.bf16.msra.mxu0 0
  %1077 = vmatpush.bf16.msra.mxu0 0
  %1078 = vmatpush.bf16.msra.mxu0 0
  %1079 = vmatpush.bf16.msra.mxu0 %v1068
  %1080 = vmatpush.bf16.msra.mxu0 %v1067
  %1081 = vmatpush.bf16.msra.mxu0 %v1066
  %1082 = vmatpush.bf16.msra.mxu0 %v1065
  %1083 = vmatmul.bf16.gmra.mxu0 %v1073
  %v1084 = vpop.f32.mrf.mxu0
  %v1085 = vadd.f32 0.0, %v1084
  %v1086 = vpop.f32.mrf.mxu0
  %1087 = vdwg.mxu0
  %1089 = vst [vmem:[#allocation1] ss:$9 sm:$0xff] %v919
  %s1091 = scalar_lea.vmem [#allocation1], 1
  %1092 = vst [vmem:[%s1091] ss:$9 sm:$0xff] %v920
  %s1094 = scalar_lea.vmem [#allocation1], 2
  %1095 = vst [vmem:[%s1094] ss:$9 sm:$0xff] %v921
  %s1097 = scalar_lea.vmem [#allocation1], 3
  %1098 = vst [vmem:[%s1097] ss:$9 sm:$0xff] %v922
  %v1099 = vld [vmem:[#allocation1] sm:$0xff]
  %1101 = vrot.lane.b32.xlu0 %v1099, 64
  %v1102 = vpop.permute.xlu0 %1101
  %v1111 = vunpack.c.l.b16 %v923
  %v1112 = vunpack.c.l.b16 %v924
  %v1113 = vunpack.c.l.b16 %v925
  %v1114 = vunpack.c.l.b16 %v926
  %v1115 = vunpack.c.l.b16 %v927
  %v1116 = vunpack.c.l.b16 %v928
  %v1117 = vunpack.c.l.b16 %v929
  %v1118 = vunpack.c.l.b16 %v930
  %v1119 = vpack.c.b16 %v1112, %v1111
  %v1120 = vpack.c.b16 %v1114, %v1113
  %v1121 = vpack.c.b16 %v1116, %v1115
  %v1122 = vpack.c.b16 %v1118, %v1117
  %v1128 = vsel %vm124, %v1102, 0
  %1130 = vmatpush.bf16.msra.mxu0 0
  %1131 = vmatpush.bf16.msra.mxu0 0
  %1132 = vmatpush.bf16.msra.mxu0 0
  %1133 = vmatpush.bf16.msra.mxu0 0
  %1134 = vmatpush.bf16.msra.mxu0 %v1122
  %1135 = vmatpush.bf16.msra.mxu0 %v1121
  %1136 = vmatpush.bf16.msra.mxu0 %v1120
  %1137 = vmatpush.bf16.msra.mxu0 %v1119
  %1138 = vmatmul.bf16.gmra.mxu0 %v1128
  %v1139 = vpop.f32.mrf.mxu0
  %v1140 = vadd.f32 %v1009, %v1139
  %v1141 = vpop.f32.mrf.mxu0
  %1142 = vdwg.mxu0
  %v1144 = vrot.slane %v1140, 2
  %v1145 = vrot.slane %v1140, 4
  %v1146 = vrot.slane %v1140, 6
  %1151 = vst [vmem:[#allocation1] sm:$0xff] %v931
  %s1152 = scalar_lea.vmem [#allocation1], 1
  %v1153 = vld [vmem:[%s1152] ss:$2 sm:$0xff]
  %1155 = vst [vmem:[#allocation1 + $0x10] sm:$0xff] %v932
  %s1156 = scalar_lea.vmem [#allocation1], 17
  %v1157 = vld [vmem:[%s1156] ss:$2 sm:$0xff]
  %1159 = vst [vmem:[#allocation1 + $0x20] sm:$0xff] %v933
  %s1160 = scalar_lea.vmem [#allocation1], 33
  %v1161 = vld [vmem:[%s1160] ss:$2 sm:$0xff]
  %1163 = vst [vmem:[#allocation1 + $0x30] sm:$0xff] %v934
  %s1164 = scalar_lea.vmem [#allocation1], 49
  %v1165 = vld [vmem:[%s1164] ss:$2 sm:$0xff]
  %1166 = vst [vmem:[#allocation1] ss:$9 sm:$0xff] %v1153
  %s1167 = scalar_lea.vmem [#allocation1], 1
  %1168 = vst [vmem:[%s1167] ss:$9 sm:$0xff] %v1157
  %s1169 = scalar_lea.vmem [#allocation1], 2
  %1170 = vst [vmem:[%s1169] ss:$9 sm:$0xff] %v1161
  %s1171 = scalar_lea.vmem [#allocation1], 3
  %1172 = vst [vmem:[%s1171] ss:$9 sm:$0xff] %v1165
  %v1173 = vld [vmem:[#allocation1] sm:$0xff]
  %v1182 = vunpack.c.l.b16 %v936
  %v1183 = vunpack.c.l.b16 %v937
  %v1184 = vunpack.c.l.b16 %v938
  %v1185 = vunpack.c.l.b16 %v939
  %v1186 = vunpack.c.l.b16 %v940
  %v1187 = vunpack.c.l.b16 %v941
  %v1188 = vunpack.c.l.b16 %v942
  %v1189 = vunpack.c.l.b16 %v943
  %v1190 = vpack.c.b16 %v1183, %v1182
  %v1191 = vpack.c.b16 %v1185, %v1184
  %v1192 = vpack.c.b16 %v1187, %v1186
  %v1193 = vpack.c.b16 %v1189, %v1188
  %v1198 = vsel %vm124, %v1173, 0
  %1200 = vmatpush.bf16.msra.mxu0 0
  %1201 = vmatpush.bf16.msra.mxu0 0
  %1202 = vmatpush.bf16.msra.mxu0 0
  %1203 = vmatpush.bf16.msra.mxu0 0
  %1204 = vmatpush.bf16.msra.mxu0 %v1193
  %1205 = vmatpush.bf16.msra.mxu0 %v1192
  %1206 = vmatpush.bf16.msra.mxu0 %v1191
  %1207 = vmatpush.bf16.msra.mxu0 %v1190
  %1208 = vmatmul.bf16.gmra.mxu0 %v1198
  %v1209 = vpop.f32.mrf.mxu0
  %v1210 = vadd.f32 %v1085, %v1209
  %v1211 = vpop.f32.mrf.mxu0
  %1212 = vdwg.mxu0
  %v1214 = vrot.slane %v1210, 2
  %v1215 = vrot.slane %v1210, 4
  %v1216 = vrot.slane %v1210, 6
  %v1220 = vld [vmem:[%s716] sm:$0x1]
  %v1221 = vld [vmem:[%s716 + $0x2] sm:$0x1]
  %v1222 = vld [vmem:[%s716 + $0x4] sm:$0x1]
  %v1223 = vld [vmem:[%s716 + $0x6] sm:$0x1]
  %s1224 = scalar_lea.vmem %s5, 128
  %v1225 = vld [vmem:[%s1224] sm:$0xf]
  %v1226 = vld [vmem:[%s1224 + $0x4] sm:$0xf]
  %v1227 = vld [vmem:[%s1224 + $0x8] sm:$0xf]
  %v1228 = vld [vmem:[%s1224 + $0xc] sm:$0xf]
  %v1229 = vld [vmem:[%s1224 + $0x10] sm:$0xf]
  %v1230 = vld [vmem:[%s1224 + $0x14] sm:$0xf]
  %v1231 = vld [vmem:[%s1224 + $0x18] sm:$0xf]
  %v1232 = vld [vmem:[%s1224 + $0x1c] sm:$0xf]
  %1234 = vst [vmem:[#allocation1] ss:$9 sm:$0xff] %v1220
  %s1236 = scalar_lea.vmem [#allocation1], 1
  %1237 = vst [vmem:[%s1236] ss:$9 sm:$0xff] %v1221
  %s1239 = scalar_lea.vmem [#allocation1], 2
  %1240 = vst [vmem:[%s1239] ss:$9 sm:$0xff] %v1222
  %s1242 = scalar_lea.vmem [#allocation1], 3
  %1243 = vst [vmem:[%s1242] ss:$9 sm:$0xff] %v1223
  %v1244 = vld [vmem:[#allocation1] sm:$0xff]
  %1246 = vrot.lane.b32.xlu0 %v1244, 64
  %v1247 = vpop.permute.xlu0 %1246
  %v1256 = vunpack.c.l.b16 %v1225
  %v1257 = vunpack.c.l.b16 %v1226
  %v1258 = vunpack.c.l.b16 %v1227
  %v1259 = vunpack.c.l.b16 %v1228
  %v1260 = vunpack.c.l.b16 %v1229
  %v1261 = vunpack.c.l.b16 %v1230
  %v1262 = vunpack.c.l.b16 %v1231
  %v1263 = vunpack.c.l.b16 %v1232
  %v1264 = vpack.c.b16 %v1257, %v1256
  %v1265 = vpack.c.b16 %v1259, %v1258
  %v1266 = vpack.c.b16 %v1261, %v1260
  %v1267 = vpack.c.b16 %v1263, %v1262
  %v1273 = vsel %vm124, %v1247, 0
  %1275 = vmatpush.bf16.msra.mxu0 0
  %1276 = vmatpush.bf16.msra.mxu0 0
  %1277 = vmatpush.bf16.msra.mxu0 0
  %1278 = vmatpush.bf16.msra.mxu0 0
  %1279 = vmatpush.bf16.msra.mxu0 %v1267
  %1280 = vmatpush.bf16.msra.mxu0 %v1266
  %1281 = vmatpush.bf16.msra.mxu0 %v1265
  %1282 = vmatpush.bf16.msra.mxu0 %v1264
  %1283 = vmatmul.bf16.gmra.mxu0 %v1273
  %v1284 = vpop.f32.mrf.mxu0
  %v1285 = vadd.f32 0.0, %v1284
  %v1286 = vpop.f32.mrf.mxu0
  %1287 = vdwg.mxu0
  %v1289 = vrot.slane %v1285, 2
  %v1290 = vrot.slane %v1285, 4
  %v1291 = vrot.slane %v1285, 6
  %v1295 = vld [vmem:[%s716] sm:$0x2]
  %v1296 = vld [vmem:[%s716 + $0x2] sm:$0x2]
  %v1297 = vld [vmem:[%s716 + $0x4] sm:$0x2]
  %v1298 = vld [vmem:[%s716 + $0x6] sm:$0x2]
  %s1299 = scalar_lea.vmem %s5, 160
  %v1300 = vld [vmem:[%s1299] sm:$0xf]
  %v1301 = vld [vmem:[%s1299 + $0x4] sm:$0xf]
  %v1302 = vld [vmem:[%s1299 + $0x8] sm:$0xf]
  %v1303 = vld [vmem:[%s1299 + $0xc] sm:$0xf]
  %v1304 = vld [vmem:[%s1299 + $0x10] sm:$0xf]
  %v1305 = vld [vmem:[%s1299 + $0x14] sm:$0xf]
  %v1306 = vld [vmem:[%s1299 + $0x18] sm:$0xf]
  %v1307 = vld [vmem:[%s1299 + $0x1c] sm:$0xf]
  %1309 = vst [vmem:[#allocation1] sm:$0xff] %v1295
  %s1310 = scalar_lea.vmem [#allocation1], 1
  %v1311 = vld [vmem:[%s1310] ss:$2 sm:$0xff]
  %1313 = vst [vmem:[#allocation1 + $0x10] sm:$0xff] %v1296
  %s1314 = scalar_lea.vmem [#allocation1], 17
  %v1315 = vld [vmem:[%s1314] ss:$2 sm:$0xff]
  %1317 = vst [vmem:[#allocation1 + $0x20] sm:$0xff] %v1297
  %s1318 = scalar_lea.vmem [#allocation1], 33
  %v1319 = vld [vmem:[%s1318] ss:$2 sm:$0xff]
  %1321 = vst [vmem:[#allocation1 + $0x30] sm:$0xff] %v1298
  %s1322 = scalar_lea.vmem [#allocation1], 49
  %v1323 = vld [vmem:[%s1322] ss:$2 sm:$0xff]
  %1324 = vst [vmem:[#allocation1] ss:$9 sm:$0xff] %v1311
  %s1325 = scalar_lea.vmem [#allocation1], 1
  %1326 = vst [vmem:[%s1325] ss:$9 sm:$0xff] %v1315
  %s1327 = scalar_lea.vmem [#allocation1], 2
  %1328 = vst [vmem:[%s1327] ss:$9 sm:$0xff] %v1319
  %s1329 = scalar_lea.vmem [#allocation1], 3
  %1330 = vst [vmem:[%s1329] ss:$9 sm:$0xff] %v1323
  %v1331 = vld [vmem:[#allocation1] sm:$0xff]
  %v1340 = vunpack.c.l.b16 %v1300
  %v1341 = vunpack.c.l.b16 %v1301
  %v1342 = vunpack.c.l.b16 %v1302
  %v1343 = vunpack.c.l.b16 %v1303
  %v1344 = vunpack.c.l.b16 %v1304
  %v1345 = vunpack.c.l.b16 %v1305
  %v1346 = vunpack.c.l.b16 %v1306
  %v1347 = vunpack.c.l.b16 %v1307
  %v1348 = vpack.c.b16 %v1341, %v1340
  %v1349 = vpack.c.b16 %v1343, %v1342
  %v1350 = vpack.c.b16 %v1345, %v1344
  %v1351 = vpack.c.b16 %v1347, %v1346
  %v1356 = vsel %vm124, %v1331, 0
  %1358 = vmatpush.bf16.msra.mxu0 0
  %1359 = vmatpush.bf16.msra.mxu0 0
  %1360 = vmatpush.bf16.msra.mxu0 0
  %1361 = vmatpush.bf16.msra.mxu0 0
  %1362 = vmatpush.bf16.msra.mxu0 %v1351
  %1363 = vmatpush.bf16.msra.mxu0 %v1350
  %1364 = vmatpush.bf16.msra.mxu0 %v1349
  %1365 = vmatpush.bf16.msra.mxu0 %v1348
  %1366 = vmatmul.bf16.gmra.mxu0 %v1356
  %v1367 = vpop.f32.mrf.mxu0
  %v1368 = vadd.f32 0.0, %v1367
  %v1369 = vpop.f32.mrf.mxu0
  %1370 = vdwg.mxu0
  %v1372 = vrot.slane %v1368, 2
  %v1373 = vrot.slane %v1368, 4
  %v1374 = vrot.slane %v1368, 6
  %v1378 = vadd.f32 %v1140, %v1285
  %v1379 = vadd.f32 %v1144, %v1289
  %v1380 = vadd.f32 %v1145, %v1290
  %v1381 = vadd.f32 %v1146, %v1291
  %v1382 = vadd.f32 %v1210, %v1368
  %v1383 = vadd.f32 %v1214, %v1372
  %v1384 = vadd.f32 %v1215, %v1373
  %v1385 = vadd.f32 %v1216, %v1374
  %1390 = vst [vmem:[#allocation1] ss:$4 sm:$0xff] %v1382
  %v1391 = vld.sshfl [vmem:[#allocation1] sm:$0xff pattern:$0x73625140]
  %s1392 = scalar_lea.vmem [#allocation1], 32
  %1393 = vst [vmem:[%s1392] ss:$4 sm:$0xff] %v1383
  %v1394 = vld.sshfl [vmem:[#allocation1 + $0x20] sm:$0xff pattern:$0x73625140]
  %1395 = vst [vmem:[#allocation1] ss:$4 sm:$0xff] %v1384
  %v1396 = vld.sshfl [vmem:[#allocation1] sm:$0xff pattern:$0x73625140]
  %1397 = vst [vmem:[%s1392] ss:$4 sm:$0xff] %v1385
  %v1398 = vld.sshfl [vmem:[#allocation1 + $0x20] sm:$0xff pattern:$0x73625140]
  %1399 = vrot.lane.b32.xlu0 %v1391, 64
  %v1400 = vpop.permute.xlu0 %1399
  %1401 = vrot.lane.b32.xlu0 %v1394, 64
  %v1402 = vpop.permute.xlu0 %1401
  %1403 = vrot.lane.b32.xlu0 %v1396, 64
  %v1404 = vpop.permute.xlu0 %1403
  %1405 = vrot.lane.b32.xlu0 %v1398, 64
  %v1406 = vpop.permute.xlu0 %1405
  %v1411 = vsel %vm124, %v1378, %v1400
  %v1412 = vsel %vm124, %v1379, %v1402
  %v1413 = vsel %vm124, %v1380, %v1404
  %v1414 = vsel %vm124, %v1381, %v1406
  %v1415 = vadd.f32 %v915, %v1411
  %v1416 = vadd.f32 %v916, %v1412
  %v1417 = vadd.f32 %v917, %v1413
  %v1418 = vadd.f32 %v918, %v1414
  %v1420 = vperm.slane %v83, 0
  %v1422 = vadd.f32 %v1415, %v1420
  %v1423 = vadd.f32 %v1416, %v1420
  %v1424 = vadd.f32 %v1417, %v1420
  %v1425 = vadd.f32 %v1418, %v1420
  %1426 = vst [vmem:[%s8] sm:$0x3] %v1422
  %1427 = vst [vmem:[%s8 + $0x2] sm:$0x3] %v1423
  %1428 = vst [vmem:[%s8 + $0x4] sm:$0x3] %v1424
  %1429 = vst [vmem:[%s8 + $0x6] sm:$0x3] %v1425
  %s1430 = scalar_lea.vmem %s0, 4
  %v1431 = vld [vmem:[%s1430] sm:$0x1]
  %v1432 = vld [vmem:[%s1430 + $0x1] sm:$0x1]
  %v1433 = vld [vmem:[%s1430 + $0x2] sm:$0x1]
  %v1434 = vld [vmem:[%s1430 + $0x3] sm:$0x1]
  %1436 = vst [vmem:[#allocation1] ss:$9 sm:$0xff] %v1431
  %s1438 = scalar_lea.vmem [#allocation1], 1
  %1439 = vst [vmem:[%s1438] ss:$9 sm:$0xff] %v1432
  %s1441 = scalar_lea.vmem [#allocation1], 2
  %1442 = vst [vmem:[%s1441] ss:$9 sm:$0xff] %v1433
  %s1444 = scalar_lea.vmem [#allocation1], 3
  %1445 = vst [vmem:[%s1444] ss:$9 sm:$0xff] %v1434
  %v1446 = vld [vmem:[#allocation1] sm:$0xff]
  %v1447 = vsel %vm124, %v1446, 0
  %1449 = vmatpush.bf16.msra.mxu0 0
  %1450 = vmatpush.bf16.msra.mxu0 0
  %1451 = vmatpush.bf16.msra.mxu0 0
  %1452 = vmatpush.bf16.msra.mxu0 0
  %1453 = vmatpush.bf16.msra.mxu0 %v119
  %1454 = vmatpush.bf16.msra.mxu0 %v118
  %1455 = vmatpush.bf16.msra.mxu0 %v117
  %1456 = vmatpush.bf16.msra.mxu0 %v116
  %1457 = vmatmul.bf16.gmra.mxu0 %v1447
  %v1458 = vpop.f32.mrf.mxu0
  %v1459 = vadd.f32 0.0, %v1458
  %v1460 = vpop.f32.mrf.mxu0
  %1461 = vdwg.mxu0
  %v1463 = vrot.slane %v1459, 2
  %v1464 = vrot.slane %v1459, 4
  %v1465 = vrot.slane %v1459, 6
  %1469 = vst [vmem:[#allocation1] ss:$9 sm:$0xff] %v1431
  %s1470 = scalar_lea.vmem [#allocation1], 1
  %1471 = vst [vmem:[%s1470] ss:$9 sm:$0xff] %v1432
  %s1472 = scalar_lea.vmem [#allocation1], 2
  %1473 = vst [vmem:[%s1472] ss:$9 sm:$0xff] %v1433
  %s1474 = scalar_lea.vmem [#allocation1], 3
  %1475 = vst [vmem:[%s1474] ss:$9 sm:$0xff] %v1434
  %v1476 = vld [vmem:[#allocation1] sm:$0xff]
  %1478 = vrot.lane.b32.xlu0 %v1476, 64
  %v1479 = vpop.permute.xlu0 %1478
  %v1481 = vsel %vm124, %v1479, 0
  %1483 = vmatpush.bf16.msra.mxu0 0
  %1484 = vmatpush.bf16.msra.mxu0 0
  %1485 = vmatpush.bf16.msra.mxu0 0
  %1486 = vmatpush.bf16.msra.mxu0 0
  %1487 = vmatpush.bf16.msra.mxu0 %v119
  %1488 = vmatpush.bf16.msra.mxu0 %v118
  %1489 = vmatpush.bf16.msra.mxu0 %v117
  %1490 = vmatpush.bf16.msra.mxu0 %v116
  %1491 = vmatmul.bf16.gmra.mxu0 %v1481
  %v1492 = vpop.f32.mrf.mxu0
  %v1493 = vadd.f32 0.0, %v1492
  %v1494 = vpop.f32.mrf.mxu0
  %1495 = vdwg.mxu0
  %v1497 = vrot.slane %v1493, 2
  %v1498 = vrot.slane %v1493, 4
  %v1499 = vrot.slane %v1493, 6
  %1500 = vst [vmem:[#allocation1] ss:$4 sm:$0xff] %v1493
  %v1501 = vld.sshfl [vmem:[#allocation1] sm:$0xff pattern:$0x73625140]
  %s1502 = scalar_lea.vmem [#allocation1], 32
  %1503 = vst [vmem:[%s1502] ss:$4 sm:$0xff] %v1497
  %v1504 = vld.sshfl [vmem:[#allocation1 + $0x20] sm:$0xff pattern:$0x73625140]
  %1505 = vst [vmem:[#allocation1] ss:$4 sm:$0xff] %v1498
  %v1506 = vld.sshfl [vmem:[#allocation1] sm:$0xff pattern:$0x73625140]
  %1507 = vst [vmem:[%s1502] ss:$4 sm:$0xff] %v1499
  %v1508 = vld.sshfl [vmem:[#allocation1 + $0x20] sm:$0xff pattern:$0x73625140]
  %1509 = vrot.lane.b32.xlu0 %v1501, 64
  %v1510 = vpop.permute.xlu0 %1509
  %1511 = vrot.lane.b32.xlu0 %v1504, 64
  %v1512 = vpop.permute.xlu0 %1511
  %1513 = vrot.lane.b32.xlu0 %v1506, 64
  %v1514 = vpop.permute.xlu0 %1513
  %1515 = vrot.lane.b32.xlu0 %v1508, 64
  %v1516 = vpop.permute.xlu0 %1515
  %v1521 = vsel %vm124, %v1459, %v1510
  %v1522 = vsel %vm124, %v1463, %v1512
  %v1523 = vsel %vm124, %v1464, %v1514
  %v1524 = vsel %vm124, %v1465, %v1516
  %v1525 = vadd.f32 %v1521, %v204
  %v1526 = vadd.f32 %v1522, %v204
  %v1527 = vadd.f32 %v1523, %v204
  %v1528 = vadd.f32 %v1524, %v204
  %s1529 = scalar_lea.vmem %s1, 2
  %v1530 = vld [vmem:[%s1529] sm:$0x1]
  %v1531 = vld [vmem:[%s1529 + $0x1] sm:$0x1]
  %1533 = vst [vmem:[#allocation1] ss:$9 sm:$0xff] %v1530
  %v1534 = vld [vmem:[#allocation1] sm:$0xff]
  %1537 = vst [vmem:[#allocation1] ss:$9 sm:$0xff] %v1531
  %v1538 = vld [vmem:[#allocation1] sm:$0xff]
  %1540 = vrot.lane.b32.xlu0 %v1534, 64
  %v1541 = vpop.permute.xlu0 %1540
  %1542 = vrot.lane.b32.xlu0 %v1538, 64
  %v1543 = vpop.permute.xlu0 %1542
  %v1545 = vsel %vm124, %v1530, %v1541
  %v1548 = vsel %vm124, %v1531, %v1543
  %v1550 = vunpack.c.l.bf16 %v1545
  %v1551 = vunpack.c.l.bf16 %v1548
  %v1552 = vadd.f32 %v1525, %v1550
  %v1553 = vadd.f32 %v1526, %v1550
  %v1554 = vadd.f32 %v1527, %v1551
  %v1555 = vadd.f32 %v1528, %v1551
  %v1556 = vpack.c.bf16 %v1552, %v1552
  %v1557 = vpack.c.bf16 %v1553, %v1553
  %v1558 = vpack.c.bf16 %v1554, %v1554
  %v1559 = vpack.c.bf16 %v1555, %v1555
  %s1560 = scalar_lea.vmem %s7, 4
  %1561 = vst [vmem:[%s1560] sm:$0x1] %v1556
  %1562 = vst [vmem:[%s1560 + $0x1] sm:$0x1] %v1557
  %1563 = vst [vmem:[%s1560 + $0x2] sm:$0x1] %v1558
  %1564 = vst [vmem:[%s1560 + $0x3] sm:$0x1] %v1559
  %v1569 = vrot.slane %v1556, 2
  %v1570 = vrot.slane %v1557, 2
  %v1571 = vrot.slane %v1558, 2
  %v1572 = vrot.slane %v1559, 2
  %v1575 = vsel %vm252, %v1556, %v1569
  %v1578 = vsel %vm252, %v1557, %v1570
  %v1581 = vsel %vm252, %v1558, %v1571
  %v1584 = vsel %vm252, %v1559, %v1572
  %v1585 = vshrl.u32 %v1575, 16
  %v1587 = vrot.slane %v1585, 7
  %v1588 = vshll.u32 %v1575, 16
  %v1590 = vor.u32 %v1587, %v1588
  %v1591 = vshrl.u32 %v1578, 16
  %v1593 = vrot.slane %v1591, 7
  %v1594 = vshll.u32 %v1578, 16
  %v1596 = vor.u32 %v1593, %v1594
  %v1597 = vshrl.u32 %v1581, 16
  %v1599 = vrot.slane %v1597, 7
  %v1600 = vshll.u32 %v1581, 16
  %v1602 = vor.u32 %v1599, %v1600
  %v1603 = vshrl.u32 %v1584, 16
  %v1605 = vrot.slane %v1603, 7
  %v1606 = vshll.u32 %v1584, 16
  %v1608 = vor.u32 %v1605, %v1606
  %v1613 = vld [vmem:[%s293] sm:$0x3]
  %v1614 = vsel %vm296, %v1590, %v1613
  %1615 = vst [vmem:[%s293] sm:$0x3] %v1614
  %v1616 = vld [vmem:[%s293 + $0x2] sm:$0x3]
  %v1617 = vsel %vm296, %v1596, %v1616
  %1618 = vst [vmem:[%s293 + $0x2] sm:$0x3] %v1617
  %v1619 = vld [vmem:[%s293 + $0x4] sm:$0x3]
  %v1620 = vsel %vm296, %v1602, %v1619
  %1621 = vst [vmem:[%s293 + $0x4] sm:$0x3] %v1620
  %v1622 = vld [vmem:[%s293 + $0x6] sm:$0x3]
  %v1623 = vsel %vm296, %v1608, %v1622
  %1624 = vst [vmem:[%s293 + $0x6] sm:$0x3] %v1623
  %v1625 = vld [vmem:[#allocation2] sm:$0x3]
  %v1626 = vld [vmem:[#allocation2 + $0x2] sm:$0x3]
  %v1627 = vld [vmem:[#allocation2 + $0x4] sm:$0x3]
  %v1628 = vld [vmem:[#allocation2 + $0x6] sm:$0x3]
  %v1629 = vld [vmem:[%s4] sm:$0xf]
  %v1630 = vld [vmem:[%s4 + $0x4] sm:$0xf]
  %v1631 = vld [vmem:[%s4 + $0x8] sm:$0xf]
  %v1632 = vld [vmem:[%s4 + $0xc] sm:$0xf]
  %v1633 = vld [vmem:[%s4 + $0x10] sm:$0xf]
  %v1634 = vld [vmem:[%s4 + $0x14] sm:$0xf]
  %v1635 = vld [vmem:[%s4 + $0x18] sm:$0xf]
  %v1636 = vld [vmem:[%s4 + $0x1c] sm:$0xf]
  %v1637 = vld [vmem:[%s4 + $0x20] sm:$0xf]
  %v1638 = vld [vmem:[%s4 + $0x24] sm:$0xf]
  %v1639 = vld [vmem:[%s4 + $0x28] sm:$0xf]
  %v1640 = vld [vmem:[%s4 + $0x2c] sm:$0xf]
  %v1641 = vld [vmem:[%s4 + $0x30] sm:$0xf]
  %v1642 = vld [vmem:[%s4 + $0x34] sm:$0xf]
  %v1643 = vld [vmem:[%s4 + $0x38] sm:$0xf]
  %v1644 = vld [vmem:[%s4 + $0x3c] sm:$0xf]
  %v1645 = vld [vmem:[%s293] sm:$0x3]
  %v1646 = vld [vmem:[%s293 + $0x2] sm:$0x3]
  %v1647 = vld [vmem:[%s293 + $0x4] sm:$0x3]
  %v1648 = vld [vmem:[%s293 + $0x6] sm:$0x3]
  %v1649 = vld [vmem:[%s333] sm:$0xf]
  %v1650 = vld [vmem:[%s333 + $0x4] sm:$0xf]
  %v1651 = vld [vmem:[%s333 + $0x8] sm:$0xf]
  %v1652 = vld [vmem:[%s333 + $0xc] sm:$0xf]
  %v1653 = vld [vmem:[%s333 + $0x10] sm:$0xf]
  %v1654 = vld [vmem:[%s333 + $0x14] sm:$0xf]
  %v1655 = vld [vmem:[%s333 + $0x18] sm:$0xf]
  %v1656 = vld [vmem:[%s333 + $0x1c] sm:$0xf]
  %v1657 = vld [vmem:[%s333 + $0x20] sm:$0xf]
  %v1658 = vld [vmem:[%s333 + $0x24] sm:$0xf]
  %v1659 = vld [vmem:[%s333 + $0x28] sm:$0xf]
  %v1660 = vld [vmem:[%s333 + $0x2c] sm:$0xf]
  %v1661 = vld [vmem:[%s333 + $0x30] sm:$0xf]
  %v1662 = vld [vmem:[%s333 + $0x34] sm:$0xf]
  %v1663 = vld [vmem:[%s333 + $0x38] sm:$0xf]
  %v1664 = vld [vmem:[%s333 + $0x3c] sm:$0xf]
  %v1669 = vrot.slane %v1645, 1
  %v1670 = vrot.slane %v1645, 2
  %v1671 = vrot.slane %v1645, 3
  %v1672 = vrot.slane %v1646, 1
  %v1673 = vrot.slane %v1646, 2
  %v1674 = vrot.slane %v1646, 3
  %v1675 = vrot.slane %v1647, 1
  %v1676 = vrot.slane %v1647, 2
  %v1677 = vrot.slane %v1647, 3
  %v1678 = vrot.slane %v1648, 1
  %v1679 = vrot.slane %v1648, 2
  %v1680 = vrot.slane %v1648, 3
  %v1683 = vsel %vm366, %v1645, %v1669
  %v1686 = vsel %vm370, %v1670, %v1671
  %v1687 = vsel %vm252, %v1683, %v1686
  %v1688 = vsel %vm375, %v1645, %v1669
  %v1689 = vsel %vm377, %v1670, %v1671
  %v1690 = vsel %vm379, %v1688, %v1689
  %v1692 = vrot.slane %v1690, 1
  %v1695 = vsel %vm366, %v1646, %v1672
  %v1698 = vsel %vm370, %v1673, %v1674
  %v1699 = vsel %vm252, %v1695, %v1698
  %v1700 = vsel %vm375, %v1646, %v1672
  %v1701 = vsel %vm377, %v1673, %v1674
  %v1702 = vsel %vm379, %v1700, %v1701
  %v1704 = vrot.slane %v1702, 1
  %v1707 = vsel %vm366, %v1647, %v1675
  %v1710 = vsel %vm370, %v1676, %v1677
  %v1711 = vsel %vm252, %v1707, %v1710
  %v1712 = vsel %vm375, %v1647, %v1675
  %v1713 = vsel %vm377, %v1676, %v1677
  %v1714 = vsel %vm379, %v1712, %v1713
  %v1716 = vrot.slane %v1714, 1
  %v1719 = vsel %vm366, %v1648, %v1678
  %v1722 = vsel %vm370, %v1679, %v1680
  %v1723 = vsel %vm252, %v1719, %v1722
  %v1724 = vsel %vm375, %v1648, %v1678
  %v1725 = vsel %vm377, %v1679, %v1680
  %v1726 = vsel %vm379, %v1724, %v1725
  %v1728 = vrot.slane %v1726, 1
  %v1729 = vshrl.u32 %v1687, 16
  %v1731 = vrot.slane %v1729, 7
  %v1732 = vrot.slane %v1731, 1
  %v1734 = vshll.u32 %v1692, 16
  %v1736 = vsel %vm432, %v1732, %v1734
  %v1737 = vshrl.u32 %v1699, 16
  %v1739 = vrot.slane %v1737, 7
  %v1740 = vrot.slane %v1739, 1
  %v1742 = vshll.u32 %v1704, 16
  %v1744 = vsel %vm432, %v1740, %v1742
  %v1745 = vshrl.u32 %v1711, 16
  %v1747 = vrot.slane %v1745, 7
  %v1748 = vrot.slane %v1747, 1
  %v1750 = vshll.u32 %v1716, 16
  %v1752 = vsel %vm432, %v1748, %v1750
  %v1753 = vshrl.u32 %v1723, 16
  %v1755 = vrot.slane %v1753, 7
  %v1756 = vrot.slane %v1755, 1
  %v1758 = vshll.u32 %v1728, 16
  %v1760 = vsel %vm432, %v1756, %v1758
  %1762 = vst [vmem:[#allocation1] ss:$9 sm:$0xff] %v1736
  %s1764 = scalar_lea.vmem [#allocation1], 1
  %1765 = vst [vmem:[%s1764] ss:$9 sm:$0xff] %v1744
  %s1767 = scalar_lea.vmem [#allocation1], 2
  %1768 = vst [vmem:[%s1767] ss:$9 sm:$0xff] %v1752
  %s1770 = scalar_lea.vmem [#allocation1], 3
  %1771 = vst [vmem:[%s1770] ss:$9 sm:$0xff] %v1760
  %v1772 = vld [vmem:[#allocation1] sm:$0xff]
  %v1790 = vunpack.c.l.b16 %v1649
  %v1791 = vunpack.c.l.b16 %v1650
  %v1792 = vunpack.c.l.b16 %v1651
  %v1793 = vunpack.c.l.b16 %v1652
  %v1794 = vunpack.c.l.b16 %v1653
  %v1795 = vunpack.c.l.b16 %v1654
  %v1796 = vunpack.c.l.b16 %v1655
  %v1797 = vunpack.c.l.b16 %v1656
  %v1798 = vunpack.c.l.b16 %v1657
  %v1799 = vunpack.c.l.b16 %v1658
  %v1800 = vunpack.c.l.b16 %v1659
  %v1801 = vunpack.c.l.b16 %v1660
  %v1802 = vunpack.c.l.b16 %v1661
  %v1803 = vunpack.c.l.b16 %v1662
  %v1804 = vunpack.c.l.b16 %v1663
  %v1805 = vunpack.c.l.b16 %v1664
  %v1806 = vpack.c.b16 %v1791, %v1790
  %v1807 = vpack.c.b16 %v1793, %v1792
  %v1808 = vpack.c.b16 %v1795, %v1794
  %v1809 = vpack.c.b16 %v1797, %v1796
  %v1810 = vpack.c.b16 %v1799, %v1798
  %v1811 = vpack.c.b16 %v1801, %v1800
  %v1812 = vpack.c.b16 %v1803, %v1802
  %v1813 = vpack.c.b16 %v1805, %v1804
  %1822 = vmatpush.bf16.msra.mxu0 %v1813
  %1823 = vmatpush.bf16.msra.mxu0 %v1812
  %1824 = vmatpush.bf16.msra.mxu0 %v1811
  %1825 = vmatpush.bf16.msra.mxu0 %v1810
  %1826 = vmatpush.bf16.msra.mxu0 %v1809
  %1827 = vmatpush.bf16.msra.mxu0 %v1808
  %1828 = vmatpush.bf16.msra.mxu0 %v1807
  %1829 = vmatpush.bf16.msra.mxu0 %v1806
  %1830 = vmatmul.bf16.gmra.mxu0 %v1772
  %v1831 = vpop.f32.mrf.mxu0
  %v1832 = vadd.f32 0.0, %v1831
  %v1833 = vpop.f32.mrf.mxu0
  %1834 = vdwg.mxu0
  %v1839 = vrot.slane %v1625, 1
  %v1840 = vrot.slane %v1625, 2
  %v1841 = vrot.slane %v1625, 3
  %v1842 = vrot.slane %v1626, 1
  %v1843 = vrot.slane %v1626, 2
  %v1844 = vrot.slane %v1626, 3
  %v1845 = vrot.slane %v1627, 1
  %v1846 = vrot.slane %v1627, 2
  %v1847 = vrot.slane %v1627, 3
  %v1848 = vrot.slane %v1628, 1
  %v1849 = vrot.slane %v1628, 2
  %v1850 = vrot.slane %v1628, 3
  %v1853 = vsel %vm366, %v1625, %v1839
  %v1856 = vsel %vm370, %v1840, %v1841
  %v1857 = vsel %vm252, %v1853, %v1856
  %v1858 = vsel %vm375, %v1625, %v1839
  %v1859 = vsel %vm377, %v1840, %v1841
  %v1860 = vsel %vm379, %v1858, %v1859
  %v1862 = vrot.slane %v1860, 1
  %v1865 = vsel %vm366, %v1626, %v1842
  %v1868 = vsel %vm370, %v1843, %v1844
  %v1869 = vsel %vm252, %v1865, %v1868
  %v1870 = vsel %vm375, %v1626, %v1842
  %v1871 = vsel %vm377, %v1843, %v1844
  %v1872 = vsel %vm379, %v1870, %v1871
  %v1874 = vrot.slane %v1872, 1
  %v1877 = vsel %vm366, %v1627, %v1845
  %v1880 = vsel %vm370, %v1846, %v1847
  %v1881 = vsel %vm252, %v1877, %v1880
  %v1882 = vsel %vm375, %v1627, %v1845
  %v1883 = vsel %vm377, %v1846, %v1847
  %v1884 = vsel %vm379, %v1882, %v1883
  %v1886 = vrot.slane %v1884, 1
  %v1889 = vsel %vm366, %v1628, %v1848
  %v1892 = vsel %vm370, %v1849, %v1850
  %v1893 = vsel %vm252, %v1889, %v1892
  %v1894 = vsel %vm375, %v1628, %v1848
  %v1895 = vsel %vm377, %v1849, %v1850
  %v1896 = vsel %vm379, %v1894, %v1895
  %v1898 = vrot.slane %v1896, 1
  %v1899 = vshrl.u32 %v1857, 16
  %v1901 = vrot.slane %v1899, 7
  %v1902 = vrot.slane %v1901, 1
  %v1904 = vshll.u32 %v1862, 16
  %v1906 = vsel %vm432, %v1902, %v1904
  %v1907 = vshrl.u32 %v1869, 16
  %v1909 = vrot.slane %v1907, 7
  %v1910 = vrot.slane %v1909, 1
  %v1912 = vshll.u32 %v1874, 16
  %v1914 = vsel %vm432, %v1910, %v1912
  %v1915 = vshrl.u32 %v1881, 16
  %v1917 = vrot.slane %v1915, 7
  %v1918 = vrot.slane %v1917, 1
  %v1920 = vshll.u32 %v1886, 16
  %v1922 = vsel %vm432, %v1918, %v1920
  %v1923 = vshrl.u32 %v1893, 16
  %v1925 = vrot.slane %v1923, 7
  %v1926 = vrot.slane %v1925, 1
  %v1928 = vshll.u32 %v1898, 16
  %v1930 = vsel %vm432, %v1926, %v1928
  %1932 = vst [vmem:[#allocation1] ss:$9 sm:$0xff] %v1906
  %s1934 = scalar_lea.vmem [#allocation1], 1
  %1935 = vst [vmem:[%s1934] ss:$9 sm:$0xff] %v1914
  %s1937 = scalar_lea.vmem [#allocation1], 2
  %1938 = vst [vmem:[%s1937] ss:$9 sm:$0xff] %v1922
  %s1940 = scalar_lea.vmem [#allocation1], 3
  %1941 = vst [vmem:[%s1940] ss:$9 sm:$0xff] %v1930
  %v1942 = vld [vmem:[#allocation1] sm:$0xff]
  %v1960 = vunpack.c.l.b16 %v1629
  %v1961 = vunpack.c.l.b16 %v1630
  %v1962 = vunpack.c.l.b16 %v1631
  %v1963 = vunpack.c.l.b16 %v1632
  %v1964 = vunpack.c.l.b16 %v1633
  %v1965 = vunpack.c.l.b16 %v1634
  %v1966 = vunpack.c.l.b16 %v1635
  %v1967 = vunpack.c.l.b16 %v1636
  %v1968 = vunpack.c.l.b16 %v1637
  %v1969 = vunpack.c.l.b16 %v1638
  %v1970 = vunpack.c.l.b16 %v1639
  %v1971 = vunpack.c.l.b16 %v1640
  %v1972 = vunpack.c.l.b16 %v1641
  %v1973 = vunpack.c.l.b16 %v1642
  %v1974 = vunpack.c.l.b16 %v1643
  %v1975 = vunpack.c.l.b16 %v1644
  %v1976 = vpack.c.b16 %v1961, %v1960
  %v1977 = vpack.c.b16 %v1963, %v1962
  %v1978 = vpack.c.b16 %v1965, %v1964
  %v1979 = vpack.c.b16 %v1967, %v1966
  %v1980 = vpack.c.b16 %v1969, %v1968
  %v1981 = vpack.c.b16 %v1971, %v1970
  %v1982 = vpack.c.b16 %v1973, %v1972
  %v1983 = vpack.c.b16 %v1975, %v1974
  %1992 = vmatpush.bf16.msra.mxu0 %v1983
  %1993 = vmatpush.bf16.msra.mxu0 %v1982
  %1994 = vmatpush.bf16.msra.mxu0 %v1981
  %1995 = vmatpush.bf16.msra.mxu0 %v1980
  %1996 = vmatpush.bf16.msra.mxu0 %v1979
  %1997 = vmatpush.bf16.msra.mxu0 %v1978
  %1998 = vmatpush.bf16.msra.mxu0 %v1977
  %1999 = vmatpush.bf16.msra.mxu0 %v1976
  %2000 = vmatmul.bf16.gmra.mxu0 %v1942
  %v2001 = vpop.f32.mrf.mxu0
  %v2002 = vadd.f32 %v1832, %v2001
  %v2003 = vpop.f32.mrf.mxu0
  %2004 = vdwg.mxu0
  %v2006 = vrot.slane %v2002, 2
  %v2007 = vrot.slane %v2002, 4
  %v2008 = vrot.slane %v2002, 6
  %v2012 = vld [vmem:[%s716] sm:$0x3]
  %v2013 = vld [vmem:[%s716 + $0x2] sm:$0x3]
  %v2014 = vld [vmem:[%s716 + $0x4] sm:$0x3]
  %v2015 = vld [vmem:[%s716 + $0x6] sm:$0x3]
  %v2016 = vld [vmem:[%s721] sm:$0xf]
  %v2017 = vld [vmem:[%s721 + $0x4] sm:$0xf]
  %v2018 = vld [vmem:[%s721 + $0x8] sm:$0xf]
  %v2019 = vld [vmem:[%s721 + $0xc] sm:$0xf]
  %v2020 = vld [vmem:[%s721 + $0x10] sm:$0xf]
  %v2021 = vld [vmem:[%s721 + $0x14] sm:$0xf]
  %v2022 = vld [vmem:[%s721 + $0x18] sm:$0xf]
  %v2023 = vld [vmem:[%s721 + $0x1c] sm:$0xf]
  %v2024 = vld [vmem:[%s721 + $0x20] sm:$0xf]
  %v2025 = vld [vmem:[%s721 + $0x24] sm:$0xf]
  %v2026 = vld [vmem:[%s721 + $0x28] sm:$0xf]
  %v2027 = vld [vmem:[%s721 + $0x2c] sm:$0xf]
  %v2028 = vld [vmem:[%s721 + $0x30] sm:$0xf]
  %v2029 = vld [vmem:[%s721 + $0x34] sm:$0xf]
  %v2030 = vld [vmem:[%s721 + $0x38] sm:$0xf]
  %v2031 = vld [vmem:[%s721 + $0x3c] sm:$0xf]
  %v2036 = vrot.slane %v2012, 1
  %v2037 = vrot.slane %v2012, 2
  %v2038 = vrot.slane %v2012, 3
  %v2039 = vrot.slane %v2013, 1
  %v2040 = vrot.slane %v2013, 2
  %v2041 = vrot.slane %v2013, 3
  %v2042 = vrot.slane %v2014, 1
  %v2043 = vrot.slane %v2014, 2
  %v2044 = vrot.slane %v2014, 3
  %v2045 = vrot.slane %v2015, 1
  %v2046 = vrot.slane %v2015, 2
  %v2047 = vrot.slane %v2015, 3
  %v2050 = vsel %vm366, %v2012, %v2036
  %v2053 = vsel %vm370, %v2037, %v2038
  %v2054 = vsel %vm252, %v2050, %v2053
  %v2055 = vsel %vm375, %v2012, %v2036
  %v2056 = vsel %vm377, %v2037, %v2038
  %v2057 = vsel %vm379, %v2055, %v2056
  %v2059 = vrot.slane %v2057, 1
  %v2062 = vsel %vm366, %v2013, %v2039
  %v2065 = vsel %vm370, %v2040, %v2041
  %v2066 = vsel %vm252, %v2062, %v2065
  %v2067 = vsel %vm375, %v2013, %v2039
  %v2068 = vsel %vm377, %v2040, %v2041
  %v2069 = vsel %vm379, %v2067, %v2068
  %v2071 = vrot.slane %v2069, 1
  %v2074 = vsel %vm366, %v2014, %v2042
  %v2077 = vsel %vm370, %v2043, %v2044
  %v2078 = vsel %vm252, %v2074, %v2077
  %v2079 = vsel %vm375, %v2014, %v2042
  %v2080 = vsel %vm377, %v2043, %v2044
  %v2081 = vsel %vm379, %v2079, %v2080
  %v2083 = vrot.slane %v2081, 1
  %v2086 = vsel %vm366, %v2015, %v2045
  %v2089 = vsel %vm370, %v2046, %v2047
  %v2090 = vsel %vm252, %v2086, %v2089
  %v2091 = vsel %vm375, %v2015, %v2045
  %v2092 = vsel %vm377, %v2046, %v2047
  %v2093 = vsel %vm379, %v2091, %v2092
  %v2095 = vrot.slane %v2093, 1
  %v2096 = vshrl.u32 %v2054, 16
  %v2098 = vrot.slane %v2096, 7
  %v2099 = vrot.slane %v2098, 1
  %v2101 = vshll.u32 %v2059, 16
  %v2103 = vsel %vm432, %v2099, %v2101
  %v2104 = vshrl.u32 %v2066, 16
  %v2106 = vrot.slane %v2104, 7
  %v2107 = vrot.slane %v2106, 1
  %v2109 = vshll.u32 %v2071, 16
  %v2111 = vsel %vm432, %v2107, %v2109
  %v2112 = vshrl.u32 %v2078, 16
  %v2114 = vrot.slane %v2112, 7
  %v2115 = vrot.slane %v2114, 1
  %v2117 = vshll.u32 %v2083, 16
  %v2119 = vsel %vm432, %v2115, %v2117
  %v2120 = vshrl.u32 %v2090, 16
  %v2122 = vrot.slane %v2120, 7
  %v2123 = vrot.slane %v2122, 1
  %v2125 = vshll.u32 %v2095, 16
  %v2127 = vsel %vm432, %v2123, %v2125
  %2129 = vst [vmem:[#allocation1] ss:$9 sm:$0xff] %v2103
  %s2131 = scalar_lea.vmem [#allocation1], 1
  %2132 = vst [vmem:[%s2131] ss:$9 sm:$0xff] %v2111
  %s2134 = scalar_lea.vmem [#allocation1], 2
  %2135 = vst [vmem:[%s2134] ss:$9 sm:$0xff] %v2119
  %s2137 = scalar_lea.vmem [#allocation1], 3
  %2138 = vst [vmem:[%s2137] ss:$9 sm:$0xff] %v2127
  %v2139 = vld [vmem:[#allocation1] sm:$0xff]
  %v2157 = vunpack.c.l.b16 %v2016
  %v2158 = vunpack.c.l.b16 %v2017
  %v2159 = vunpack.c.l.b16 %v2018
  %v2160 = vunpack.c.l.b16 %v2019
  %v2161 = vunpack.c.l.b16 %v2020
  %v2162 = vunpack.c.l.b16 %v2021
  %v2163 = vunpack.c.l.b16 %v2022
  %v2164 = vunpack.c.l.b16 %v2023
  %v2165 = vunpack.c.l.b16 %v2024
  %v2166 = vunpack.c.l.b16 %v2025
  %v2167 = vunpack.c.l.b16 %v2026
  %v2168 = vunpack.c.l.b16 %v2027
  %v2169 = vunpack.c.l.b16 %v2028
  %v2170 = vunpack.c.l.b16 %v2029
  %v2171 = vunpack.c.l.b16 %v2030
  %v2172 = vunpack.c.l.b16 %v2031
  %v2173 = vpack.c.b16 %v2158, %v2157
  %v2174 = vpack.c.b16 %v2160, %v2159
  %v2175 = vpack.c.b16 %v2162, %v2161
  %v2176 = vpack.c.b16 %v2164, %v2163
  %v2177 = vpack.c.b16 %v2166, %v2165
  %v2178 = vpack.c.b16 %v2168, %v2167
  %v2179 = vpack.c.b16 %v2170, %v2169
  %v2180 = vpack.c.b16 %v2172, %v2171
  %2189 = vmatpush.bf16.msra.mxu0 %v2180
  %2190 = vmatpush.bf16.msra.mxu0 %v2179
  %2191 = vmatpush.bf16.msra.mxu0 %v2178
  %2192 = vmatpush.bf16.msra.mxu0 %v2177
  %2193 = vmatpush.bf16.msra.mxu0 %v2176
  %2194 = vmatpush.bf16.msra.mxu0 %v2175
  %2195 = vmatpush.bf16.msra.mxu0 %v2174
  %2196 = vmatpush.bf16.msra.mxu0 %v2173
  %2197 = vmatmul.bf16.gmra.mxu0 %v2139
  %v2198 = vpop.f32.mrf.mxu0
  %v2199 = vadd.f32 0.0, %v2198
  %v2200 = vpop.f32.mrf.mxu0
  %2201 = vdwg.mxu0
  %v2203 = vrot.slane %v2199, 2
  %v2204 = vrot.slane %v2199, 4
  %v2205 = vrot.slane %v2199, 6
  %v2209 = vadd.f32 %v2002, %v2199
  %v2210 = vadd.f32 %v2006, %v2203
  %v2211 = vadd.f32 %v2007, %v2204
  %v2212 = vadd.f32 %v2008, %v2205
  %v2213 = vld [vmem:[#allocation2] sm:$0x1]
  %v2214 = vld [vmem:[#allocation2 + $0x2] sm:$0x1]
  %v2215 = vld [vmem:[#allocation2 + $0x4] sm:$0x1]
  %v2216 = vld [vmem:[#allocation2 + $0x6] sm:$0x1]
  %v2217 = vld [vmem:[%s5] sm:$0xf]
  %v2218 = vld [vmem:[%s5 + $0x4] sm:$0xf]
  %v2219 = vld [vmem:[%s5 + $0x8] sm:$0xf]
  %v2220 = vld [vmem:[%s5 + $0xc] sm:$0xf]
  %v2221 = vld [vmem:[%s5 + $0x10] sm:$0xf]
  %v2222 = vld [vmem:[%s5 + $0x14] sm:$0xf]
  %v2223 = vld [vmem:[%s5 + $0x18] sm:$0xf]
  %v2224 = vld [vmem:[%s5 + $0x1c] sm:$0xf]
  %v2225 = vld [vmem:[#allocation2] sm:$0x2]
  %v2226 = vld [vmem:[#allocation2 + $0x2] sm:$0x2]
  %v2227 = vld [vmem:[#allocation2 + $0x4] sm:$0x2]
  %v2228 = vld [vmem:[#allocation2 + $0x6] sm:$0x2]
  %v2229 = vld [vmem:[%s935] sm:$0xf]
  %v2230 = vld [vmem:[%s935 + $0x4] sm:$0xf]
  %v2231 = vld [vmem:[%s935 + $0x8] sm:$0xf]
  %v2232 = vld [vmem:[%s935 + $0xc] sm:$0xf]
  %v2233 = vld [vmem:[%s935 + $0x10] sm:$0xf]
  %v2234 = vld [vmem:[%s935 + $0x14] sm:$0xf]
  %v2235 = vld [vmem:[%s935 + $0x18] sm:$0xf]
  %v2236 = vld [vmem:[%s935 + $0x1c] sm:$0xf]
  %v2237 = vld [vmem:[%s293] sm:$0x1]
  %v2238 = vld [vmem:[%s293 + $0x2] sm:$0x1]
  %v2239 = vld [vmem:[%s293 + $0x4] sm:$0x1]
  %v2240 = vld [vmem:[%s293 + $0x6] sm:$0x1]
  %v2241 = vld [vmem:[%s948] sm:$0xf]
  %v2242 = vld [vmem:[%s948 + $0x4] sm:$0xf]
  %v2243 = vld [vmem:[%s948 + $0x8] sm:$0xf]
  %v2244 = vld [vmem:[%s948 + $0xc] sm:$0xf]
  %v2245 = vld [vmem:[%s948 + $0x10] sm:$0xf]
  %v2246 = vld [vmem:[%s948 + $0x14] sm:$0xf]
  %v2247 = vld [vmem:[%s948 + $0x18] sm:$0xf]
  %v2248 = vld [vmem:[%s948 + $0x1c] sm:$0xf]
  %2250 = vst [vmem:[#allocation1] ss:$9 sm:$0xff] %v2237
  %s2252 = scalar_lea.vmem [#allocation1], 1
  %2253 = vst [vmem:[%s2252] ss:$9 sm:$0xff] %v2238
  %s2255 = scalar_lea.vmem [#allocation1], 2
  %2256 = vst [vmem:[%s2255] ss:$9 sm:$0xff] %v2239
  %s2258 = scalar_lea.vmem [#allocation1], 3
  %2259 = vst [vmem:[%s2258] ss:$9 sm:$0xff] %v2240
  %v2260 = vld [vmem:[#allocation1] sm:$0xff]
  %2262 = vrot.lane.b32.xlu0 %v2260, 64
  %v2263 = vpop.permute.xlu0 %2262
  %v2272 = vunpack.c.l.b16 %v2241
  %v2273 = vunpack.c.l.b16 %v2242
  %v2274 = vunpack.c.l.b16 %v2243
  %v2275 = vunpack.c.l.b16 %v2244
  %v2276 = vunpack.c.l.b16 %v2245
  %v2277 = vunpack.c.l.b16 %v2246
  %v2278 = vunpack.c.l.b16 %v2247
  %v2279 = vunpack.c.l.b16 %v2248
  %v2280 = vpack.c.b16 %v2273, %v2272
  %v2281 = vpack.c.b16 %v2275, %v2274
  %v2282 = vpack.c.b16 %v2277, %v2276
  %v2283 = vpack.c.b16 %v2279, %v2278
  %v2289 = vsel %vm124, %v2263, 0
  %2291 = vmatpush.bf16.msra.mxu0 0
  %2292 = vmatpush.bf16.msra.mxu0 0
  %2293 = vmatpush.bf16.msra.mxu0 0
  %2294 = vmatpush.bf16.msra.mxu0 0
  %2295 = vmatpush.bf16.msra.mxu0 %v2283
  %2296 = vmatpush.bf16.msra.mxu0 %v2282
  %2297 = vmatpush.bf16.msra.mxu0 %v2281
  %2298 = vmatpush.bf16.msra.mxu0 %v2280
  %2299 = vmatmul.bf16.gmra.mxu0 %v2289
  %v2300 = vpop.f32.mrf.mxu0
  %v2301 = vadd.f32 0.0, %v2300
  %v2302 = vpop.f32.mrf.mxu0
  %2303 = vdwg.mxu0
  %v2304 = vld [vmem:[%s293] sm:$0x2]
  %v2305 = vld [vmem:[%s293 + $0x2] sm:$0x2]
  %v2306 = vld [vmem:[%s293 + $0x4] sm:$0x2]
  %v2307 = vld [vmem:[%s293 + $0x6] sm:$0x2]
  %v2308 = vld [vmem:[%s1016] sm:$0xf]
  %v2309 = vld [vmem:[%s1016 + $0x4] sm:$0xf]
  %v2310 = vld [vmem:[%s1016 + $0x8] sm:$0xf]
  %v2311 = vld [vmem:[%s1016 + $0xc] sm:$0xf]
  %v2312 = vld [vmem:[%s1016 + $0x10] sm:$0xf]
  %v2313 = vld [vmem:[%s1016 + $0x14] sm:$0xf]
  %v2314 = vld [vmem:[%s1016 + $0x18] sm:$0xf]
  %v2315 = vld [vmem:[%s1016 + $0x1c] sm:$0xf]
  %2317 = vst [vmem:[#allocation1] sm:$0xff] %v2304
  %s2318 = scalar_lea.vmem [#allocation1], 1
  %v2319 = vld [vmem:[%s2318] ss:$2 sm:$0xff]
  %2321 = vst [vmem:[#allocation1 + $0x10] sm:$0xff] %v2305
  %s2322 = scalar_lea.vmem [#allocation1], 17
  %v2323 = vld [vmem:[%s2322] ss:$2 sm:$0xff]
  %2325 = vst [vmem:[#allocation1 + $0x20] sm:$0xff] %v2306
  %s2326 = scalar_lea.vmem [#allocation1], 33
  %v2327 = vld [vmem:[%s2326] ss:$2 sm:$0xff]
  %2329 = vst [vmem:[#allocation1 + $0x30] sm:$0xff] %v2307
  %s2330 = scalar_lea.vmem [#allocation1], 49
  %v2331 = vld [vmem:[%s2330] ss:$2 sm:$0xff]
  %2332 = vst [vmem:[#allocation1] ss:$9 sm:$0xff] %v2319
  %s2333 = scalar_lea.vmem [#allocation1], 1
  %2334 = vst [vmem:[%s2333] ss:$9 sm:$0xff] %v2323
  %s2335 = scalar_lea.vmem [#allocation1], 2
  %2336 = vst [vmem:[%s2335] ss:$9 sm:$0xff] %v2327
  %s2337 = scalar_lea.vmem [#allocation1], 3
  %2338 = vst [vmem:[%s2337] ss:$9 sm:$0xff] %v2331
  %v2339 = vld [vmem:[#allocation1] sm:$0xff]
  %v2348 = vunpack.c.l.b16 %v2308
  %v2349 = vunpack.c.l.b16 %v2309
  %v2350 = vunpack.c.l.b16 %v2310
  %v2351 = vunpack.c.l.b16 %v2311
  %v2352 = vunpack.c.l.b16 %v2312
  %v2353 = vunpack.c.l.b16 %v2313
  %v2354 = vunpack.c.l.b16 %v2314
  %v2355 = vunpack.c.l.b16 %v2315
  %v2356 = vpack.c.b16 %v2349, %v2348
  %v2357 = vpack.c.b16 %v2351, %v2350
  %v2358 = vpack.c.b16 %v2353, %v2352
  %v2359 = vpack.c.b16 %v2355, %v2354
  %v2364 = vsel %vm124, %v2339, 0
  %2366 = vmatpush.bf16.msra.mxu0 0
  %2367 = vmatpush.bf16.msra.mxu0 0
  %2368 = vmatpush.bf16.msra.mxu0 0
  %2369 = vmatpush.bf16.msra.mxu0 0
  %2370 = vmatpush.bf16.msra.mxu0 %v2359
  %2371 = vmatpush.bf16.msra.mxu0 %v2358
  %2372 = vmatpush.bf16.msra.mxu0 %v2357
  %2373 = vmatpush.bf16.msra.mxu0 %v2356
  %2374 = vmatmul.bf16.gmra.mxu0 %v2364
  %v2375 = vpop.f32.mrf.mxu0
  %v2376 = vadd.f32 0.0, %v2375
  %v2377 = vpop.f32.mrf.mxu0
  %2378 = vdwg.mxu0
  %2380 = vst [vmem:[#allocation1] ss:$9 sm:$0xff] %v2213
  %s2382 = scalar_lea.vmem [#allocation1], 1
  %2383 = vst [vmem:[%s2382] ss:$9 sm:$0xff] %v2214
  %s2385 = scalar_lea.vmem [#allocation1], 2
  %2386 = vst [vmem:[%s2385] ss:$9 sm:$0xff] %v2215
  %s2388 = scalar_lea.vmem [#allocation1], 3
  %2389 = vst [vmem:[%s2388] ss:$9 sm:$0xff] %v2216
  %v2390 = vld [vmem:[#allocation1] sm:$0xff]
  %2392 = vrot.lane.b32.xlu0 %v2390, 64
  %v2393 = vpop.permute.xlu0 %2392
  %v2402 = vunpack.c.l.b16 %v2217
  %v2403 = vunpack.c.l.b16 %v2218
  %v2404 = vunpack.c.l.b16 %v2219
  %v2405 = vunpack.c.l.b16 %v2220
  %v2406 = vunpack.c.l.b16 %v2221
  %v2407 = vunpack.c.l.b16 %v2222
  %v2408 = vunpack.c.l.b16 %v2223
  %v2409 = vunpack.c.l.b16 %v2224
  %v2410 = vpack.c.b16 %v2403, %v2402
  %v2411 = vpack.c.b16 %v2405, %v2404
  %v2412 = vpack.c.b16 %v2407, %v2406
  %v2413 = vpack.c.b16 %v2409, %v2408
  %v2419 = vsel %vm124, %v2393, 0
  %2421 = vmatpush.bf16.msra.mxu0 0
  %2422 = vmatpush.bf16.msra.mxu0 0
  %2423 = vmatpush.bf16.msra.mxu0 0
  %2424 = vmatpush.bf16.msra.mxu0 0
  %2425 = vmatpush.bf16.msra.mxu0 %v2413
  %2426 = vmatpush.bf16.msra.mxu0 %v2412
  %2427 = vmatpush.bf16.msra.mxu0 %v2411
  %2428 = vmatpush.bf16.msra.mxu0 %v2410
  %2429 = vmatmul.bf16.gmra.mxu0 %v2419
  %v2430 = vpop.f32.mrf.mxu0
  %v2431 = vadd.f32 %v2301, %v2430
  %v2432 = vpop.f32.mrf.mxu0
  %2433 = vdwg.mxu0
  %v2435 = vrot.slane %v2431, 2
  %v2436 = vrot.slane %v2431, 4
  %v2437 = vrot.slane %v2431, 6
  %2442 = vst [vmem:[#allocation1] sm:$0xff] %v2225
  %s2443 = scalar_lea.vmem [#allocation1], 1
  %v2444 = vld [vmem:[%s2443] ss:$2 sm:$0xff]
  %2446 = vst [vmem:[#allocation1 + $0x10] sm:$0xff] %v2226
  %s2447 = scalar_lea.vmem [#allocation1], 17
  %v2448 = vld [vmem:[%s2447] ss:$2 sm:$0xff]
  %2450 = vst [vmem:[#allocation1 + $0x20] sm:$0xff] %v2227
  %s2451 = scalar_lea.vmem [#allocation1], 33
  %v2452 = vld [vmem:[%s2451] ss:$2 sm:$0xff]
  %2454 = vst [vmem:[#allocation1 + $0x30] sm:$0xff] %v2228
  %s2455 = scalar_lea.vmem [#allocation1], 49
  %v2456 = vld [vmem:[%s2455] ss:$2 sm:$0xff]
  %2457 = vst [vmem:[#allocation1] ss:$9 sm:$0xff] %v2444
  %s2458 = scalar_lea.vmem [#allocation1], 1
  %2459 = vst [vmem:[%s2458] ss:$9 sm:$0xff] %v2448
  %s2460 = scalar_lea.vmem [#allocation1], 2
  %2461 = vst [vmem:[%s2460] ss:$9 sm:$0xff] %v2452
  %s2462 = scalar_lea.vmem [#allocation1], 3
  %2463 = vst [vmem:[%s2462] ss:$9 sm:$0xff] %v2456
  %v2464 = vld [vmem:[#allocation1] sm:$0xff]
  %v2473 = vunpack.c.l.b16 %v2229
  %v2474 = vunpack.c.l.b16 %v2230
  %v2475 = vunpack.c.l.b16 %v2231
  %v2476 = vunpack.c.l.b16 %v2232
  %v2477 = vunpack.c.l.b16 %v2233
  %v2478 = vunpack.c.l.b16 %v2234
  %v2479 = vunpack.c.l.b16 %v2235
  %v2480 = vunpack.c.l.b16 %v2236
  %v2481 = vpack.c.b16 %v2474, %v2473
  %v2482 = vpack.c.b16 %v2476, %v2475
  %v2483 = vpack.c.b16 %v2478, %v2477
  %v2484 = vpack.c.b16 %v2480, %v2479
  %v2489 = vsel %vm124, %v2464, 0
  %2491 = vmatpush.bf16.msra.mxu0 0
  %2492 = vmatpush.bf16.msra.mxu0 0
  %2493 = vmatpush.bf16.msra.mxu0 0
  %2494 = vmatpush.bf16.msra.mxu0 0
  %2495 = vmatpush.bf16.msra.mxu0 %v2484
  %2496 = vmatpush.bf16.msra.mxu0 %v2483
  %2497 = vmatpush.bf16.msra.mxu0 %v2482
  %2498 = vmatpush.bf16.msra.mxu0 %v2481
  %2499 = vmatmul.bf16.gmra.mxu0 %v2489
  %v2500 = vpop.f32.mrf.mxu0
  %v2501 = vadd.f32 %v2376, %v2500
  %v2502 = vpop.f32.mrf.mxu0
  %2503 = vdwg.mxu0
  %v2505 = vrot.slane %v2501, 2
  %v2506 = vrot.slane %v2501, 4
  %v2507 = vrot.slane %v2501, 6
  %v2511 = vld [vmem:[%s716] sm:$0x1]
  %v2512 = vld [vmem:[%s716 + $0x2] sm:$0x1]
  %v2513 = vld [vmem:[%s716 + $0x4] sm:$0x1]
  %v2514 = vld [vmem:[%s716 + $0x6] sm:$0x1]
  %v2515 = vld [vmem:[%s1224] sm:$0xf]
  %v2516 = vld [vmem:[%s1224 + $0x4] sm:$0xf]
  %v2517 = vld [vmem:[%s1224 + $0x8] sm:$0xf]
  %v2518 = vld [vmem:[%s1224 + $0xc] sm:$0xf]
  %v2519 = vld [vmem:[%s1224 + $0x10] sm:$0xf]
  %v2520 = vld [vmem:[%s1224 + $0x14] sm:$0xf]
  %v2521 = vld [vmem:[%s1224 + $0x18] sm:$0xf]
  %v2522 = vld [vmem:[%s1224 + $0x1c] sm:$0xf]
  %2524 = vst [vmem:[#allocation1] ss:$9 sm:$0xff] %v2511
  %s2526 = scalar_lea.vmem [#allocation1], 1
  %2527 = vst [vmem:[%s2526] ss:$9 sm:$0xff] %v2512
  %s2529 = scalar_lea.vmem [#allocation1], 2
  %2530 = vst [vmem:[%s2529] ss:$9 sm:$0xff] %v2513
  %s2532 = scalar_lea.vmem [#allocation1], 3
  %2533 = vst [vmem:[%s2532] ss:$9 sm:$0xff] %v2514
  %v2534 = vld [vmem:[#allocation1] sm:$0xff]
  %2536 = vrot.lane.b32.xlu0 %v2534, 64
  %v2537 = vpop.permute.xlu0 %2536
  %v2546 = vunpack.c.l.b16 %v2515
  %v2547 = vunpack.c.l.b16 %v2516
  %v2548 = vunpack.c.l.b16 %v2517
  %v2549 = vunpack.c.l.b16 %v2518
  %v2550 = vunpack.c.l.b16 %v2519
  %v2551 = vunpack.c.l.b16 %v2520
  %v2552 = vunpack.c.l.b16 %v2521
  %v2553 = vunpack.c.l.b16 %v2522
  %v2554 = vpack.c.b16 %v2547, %v2546
  %v2555 = vpack.c.b16 %v2549, %v2548
  %v2556 = vpack.c.b16 %v2551, %v2550
  %v2557 = vpack.c.b16 %v2553, %v2552
  %v2563 = vsel %vm124, %v2537, 0
  %2565 = vmatpush.bf16.msra.mxu0 0
  %2566 = vmatpush.bf16.msra.mxu0 0
  %2567 = vmatpush.bf16.msra.mxu0 0
  %2568 = vmatpush.bf16.msra.mxu0 0
  %2569 = vmatpush.bf16.msra.mxu0 %v2557
  %2570 = vmatpush.bf16.msra.mxu0 %v2556
  %2571 = vmatpush.bf16.msra.mxu0 %v2555
  %2572 = vmatpush.bf16.msra.mxu0 %v2554
  %2573 = vmatmul.bf16.gmra.mxu0 %v2563
  %v2574 = vpop.f32.mrf.mxu0
  %v2575 = vadd.f32 0.0, %v2574
  %v2576 = vpop.f32.mrf.mxu0
  %2577 = vdwg.mxu0
  %v2579 = vrot.slane %v2575, 2
  %v2580 = vrot.slane %v2575, 4
  %v2581 = vrot.slane %v2575, 6
  %v2585 = vld [vmem:[%s716] sm:$0x2]
  %v2586 = vld [vmem:[%s716 + $0x2] sm:$0x2]
  %v2587 = vld [vmem:[%s716 + $0x4] sm:$0x2]
  %v2588 = vld [vmem:[%s716 + $0x6] sm:$0x2]
  %v2589 = vld [vmem:[%s1299] sm:$0xf]
  %v2590 = vld [vmem:[%s1299 + $0x4] sm:$0xf]
  %v2591 = vld [vmem:[%s1299 + $0x8] sm:$0xf]
  %v2592 = vld [vmem:[%s1299 + $0xc] sm:$0xf]
  %v2593 = vld [vmem:[%s1299 + $0x10] sm:$0xf]
  %v2594 = vld [vmem:[%s1299 + $0x14] sm:$0xf]
  %v2595 = vld [vmem:[%s1299 + $0x18] sm:$0xf]
  %v2596 = vld [vmem:[%s1299 + $0x1c] sm:$0xf]
  %2598 = vst [vmem:[#allocation1] sm:$0xff] %v2585
  %s2599 = scalar_lea.vmem [#allocation1], 1
  %v2600 = vld [vmem:[%s2599] ss:$2 sm:$0xff]
  %2602 = vst [vmem:[#allocation1 + $0x10] sm:$0xff] %v2586
  %s2603 = scalar_lea.vmem [#allocation1], 17
  %v2604 = vld [vmem:[%s2603] ss:$2 sm:$0xff]
  %2606 = vst [vmem:[#allocation1 + $0x20] sm:$0xff] %v2587
  %s2607 = scalar_lea.vmem [#allocation1], 33
  %v2608 = vld [vmem:[%s2607] ss:$2 sm:$0xff]
  %2610 = vst [vmem:[#allocation1 + $0x30] sm:$0xff] %v2588
  %s2611 = scalar_lea.vmem [#allocation1], 49
  %v2612 = vld [vmem:[%s2611] ss:$2 sm:$0xff]
  %2613 = vst [vmem:[#allocation1] ss:$9 sm:$0xff] %v2600
  %s2614 = scalar_lea.vmem [#allocation1], 1
  %2615 = vst [vmem:[%s2614] ss:$9 sm:$0xff] %v2604
  %s2616 = scalar_lea.vmem [#allocation1], 2
  %2617 = vst [vmem:[%s2616] ss:$9 sm:$0xff] %v2608
  %s2618 = scalar_lea.vmem [#allocation1], 3
  %2619 = vst [vmem:[%s2618] ss:$9 sm:$0xff] %v2612
  %v2620 = vld [vmem:[#allocation1] sm:$0xff]
  %v2629 = vunpack.c.l.b16 %v2589
  %v2630 = vunpack.c.l.b16 %v2590
  %v2631 = vunpack.c.l.b16 %v2591
  %v2632 = vunpack.c.l.b16 %v2592
  %v2633 = vunpack.c.l.b16 %v2593
  %v2634 = vunpack.c.l.b16 %v2594
  %v2635 = vunpack.c.l.b16 %v2595
  %v2636 = vunpack.c.l.b16 %v2596
  %v2637 = vpack.c.b16 %v2630, %v2629
  %v2638 = vpack.c.b16 %v2632, %v2631
  %v2639 = vpack.c.b16 %v2634, %v2633
  %v2640 = vpack.c.b16 %v2636, %v2635
  %v2645 = vsel %vm124, %v2620, 0
  %2647 = vmatpush.bf16.msra.mxu0 0
  %2648 = vmatpush.bf16.msra.mxu0 0
  %2649 = vmatpush.bf16.msra.mxu0 0
  %2650 = vmatpush.bf16.msra.mxu0 0
  %2651 = vmatpush.bf16.msra.mxu0 %v2640
  %2652 = vmatpush.bf16.msra.mxu0 %v2639
  %2653 = vmatpush.bf16.msra.mxu0 %v2638
  %2654 = vmatpush.bf16.msra.mxu0 %v2637
  %2655 = vmatmul.bf16.gmra.mxu0 %v2645
  %v2656 = vpop.f32.mrf.mxu0
  %v2657 = vadd.f32 0.0, %v2656
  %v2658 = vpop.f32.mrf.mxu0
  %2659 = vdwg.mxu0
  %v2661 = vrot.slane %v2657, 2
  %v2662 = vrot.slane %v2657, 4
  %v2663 = vrot.slane %v2657, 6
  %v2667 = vadd.f32 %v2431, %v2575
  %v2668 = vadd.f32 %v2435, %v2579
  %v2669 = vadd.f32 %v2436, %v2580
  %v2670 = vadd.f32 %v2437, %v2581
  %v2671 = vadd.f32 %v2501, %v2657
  %v2672 = vadd.f32 %v2505, %v2661
  %v2673 = vadd.f32 %v2506, %v2662
  %v2674 = vadd.f32 %v2507, %v2663
  %2679 = vst [vmem:[#allocation1] ss:$4 sm:$0xff] %v2671
  %v2680 = vld.sshfl [vmem:[#allocation1] sm:$0xff pattern:$0x73625140]
  %s2681 = scalar_lea.vmem [#allocation1], 32
  %2682 = vst [vmem:[%s2681] ss:$4 sm:$0xff] %v2672
  %v2683 = vld.sshfl [vmem:[#allocation1 + $0x20] sm:$0xff pattern:$0x73625140]
  %2684 = vst [vmem:[#allocation1] ss:$4 sm:$0xff] %v2673
  %v2685 = vld.sshfl [vmem:[#allocation1] sm:$0xff pattern:$0x73625140]
  %2686 = vst [vmem:[%s2681] ss:$4 sm:$0xff] %v2674
  %v2687 = vld.sshfl [vmem:[#allocation1 + $0x20] sm:$0xff pattern:$0x73625140]
  %2688 = vrot.lane.b32.xlu0 %v2680, 64
  %v2689 = vpop.permute.xlu0 %2688
  %2690 = vrot.lane.b32.xlu0 %v2683, 64
  %v2691 = vpop.permute.xlu0 %2690
  %2692 = vrot.lane.b32.xlu0 %v2685, 64
  %v2693 = vpop.permute.xlu0 %2692
  %2694 = vrot.lane.b32.xlu0 %v2687, 64
  %v2695 = vpop.permute.xlu0 %2694
  %v2700 = vsel %vm124, %v2667, %v2689
  %v2701 = vsel %vm124, %v2668, %v2691
  %v2702 = vsel %vm124, %v2669, %v2693
  %v2703 = vsel %vm124, %v2670, %v2695
  %v2704 = vadd.f32 %v2209, %v2700
  %v2705 = vadd.f32 %v2210, %v2701
  %v2706 = vadd.f32 %v2211, %v2702
  %v2707 = vadd.f32 %v2212, %v2703
  %v2708 = vadd.f32 %v2704, %v1420
  %v2709 = vadd.f32 %v2705, %v1420
  %v2710 = vadd.f32 %v2706, %v1420
  %v2711 = vadd.f32 %v2707, %v1420
  %s2712 = scalar_lea.vmem %s8, 8
  %2713 = vst [vmem:[%s2712] sm:$0x3] %v2708
  %2714 = vst [vmem:[%s2712 + $0x2] sm:$0x3] %v2709
  %2715 = vst [vmem:[%s2712 + $0x4] sm:$0x3] %v2710
  %2716 = vst [vmem:[%s2712 + $0x6] sm:$0x3] %v2711
  // Predicated region
  $region30: #{detector_backbone_with_fpn.4} parent=0 // pred_check
    _
  $region31: #{detector_backbone_with_fpn.4} parent=0 // pred_check_branch
    %2718 = sbr.rel (0) target = $region33
  $region32: #{detector_backbone_with_fpn.4} parent=0 // pred_region
    _
  $region33: #{detector_backbone_with_fpn.4} parent=0 // pred_fallthru
    _
  // Predicated region
  $region34: #{detector_backbone_with_fpn.4} parent=0 // pred_check
    _
  $region35: #{detector_backbone_with_fpn.4} parent=0 // pred_check_branch
    %2720 = sbr.rel (0) target = $region37
  $region36: #{detector_backbone_with_fpn.4} parent=0 // pred_region
    _
  $region37: #{detector_backbone_with_fpn.4} parent=0 // pred_fallthru
    _
  // Predicated region
  $region38: #{detector_backbone_with_fpn.4} parent=0 // pred_check
    _
  $region39: #{detector_backbone_with_fpn.4} parent=0 // pred_check_branch
    %2722 = sbr.rel (0) target = $region41
  $region40: #{detector_backbone_with_fpn.4} parent=0 // pred_region
    _
  $region41: #{detector_backbone_with_fpn.4} parent=0 // pred_fallthru
    _
  // Predicated region
  $region42: #{detector_backbone_with_fpn.4} parent=0 // pred_check
    _
  $region43: #{detector_backbone_with_fpn.4} parent=0 // pred_check_branch
    %2724 = sbr.rel (0) target = $region45
  $region44: #{detector_backbone_with_fpn.4} parent=0 // pred_region
    _
  $region45: #{detector_backbone_with_fpn.4} parent=0 // pred_fallthru
    _

// kernel: detector_backbone_with_fpn.5
$region0: #{detector_backbone_with_fpn.5}
  #allocation0 [shape = 'u32[]', space=smem, size = 0x4, offset = 0x4, fixed_abs, tag = 'smem constant byte address 0x4 - core index']
  #allocation1 [shape = 'u32[72,128]{1,0:T(1,128)}', space=vmem, size = 0x9000, scoped, tag = 'internal scratch']
  #allocation2 [shape = 'bf16[10,6,128]{2,1,0:T(8,128)(2,1)}', space=vmem, size = 0x5000, scoped, tag = 'scratch operand']
  %s0 = inlined_call_operand.vmem [shape: bf16[2,8,4,64], index: 0, kind: input, shape index: {}]
  %s1 = inlined_call_operand.vmem [shape: bf16[2,4,4,64], index: 1, kind: input, shape index: {}]
  %s2 = inlined_call_operand.vmem [shape: bf16[32,64], index: 2, kind: input, shape index: {}]
  %s3 = inlined_call_operand.vmem [shape: f32[1,128], index: 3, kind: input, shape index: {}]
  %s4 = inlined_call_operand.vmem [shape: bf16[3,128,128], index: 4, kind: input, shape index: {}]
  %s5 = inlined_call_operand.vmem [shape: bf16[3,2,64,64], index: 5, kind: input, shape index: {}]
  %s6 = inlined_call_operand.vmem [shape: f32[1,128], index: 6, kind: input, shape index: {}]
  %s7 = inlined_call_operand.vmem [shape: f32[2,8,4,128], index: 7, kind: output, shape index: {}]
  %s8 = sld [smem:[#allocation0]]
  $region38: #{detector_backbone_with_fpn.5} parent=0
    _
  %s10 = ssub.s32 1, %s8
  %s11 = scalar_select 0, %s10, %s8
  // Predicated region
  $region2: #{detector_backbone_with_fpn.5} parent=0 // pred_check
    _
  $region3: #{detector_backbone_with_fpn.5} parent=0 // pred_check_branch
    %13 = sbr.rel (0) target = $region5
  $region4: #{detector_backbone_with_fpn.5} parent=0 // pred_region
    _
  $region5: #{detector_backbone_with_fpn.5} parent=0 // pred_fallthru
    _
  // Predicated region
  $region6: #{detector_backbone_with_fpn.5} parent=0 // pred_check
    _
  $region7: #{detector_backbone_with_fpn.5} parent=0 // pred_check_branch
    %15 = sbr.rel (0) target = $region9
  $region8: #{detector_backbone_with_fpn.5} parent=0 // pred_region
    _
  $region9: #{detector_backbone_with_fpn.5} parent=0 // pred_fallthru
    _
  // Predicated region
  $region10: #{detector_backbone_with_fpn.5} parent=0 // pred_check
    _
  $region11: #{detector_backbone_with_fpn.5} parent=0 // pred_check_branch
    %17 = sbr.rel (0) target = $region13
  $region12: #{detector_backbone_with_fpn.5} parent=0 // pred_region
    _
  $region13: #{detector_backbone_with_fpn.5} parent=0 // pred_fallthru
    _
  // Predicated region
  $region14: #{detector_backbone_with_fpn.5} parent=0 // pred_check
    _
  $region15: #{detector_backbone_with_fpn.5} parent=0 // pred_check_branch
    %19 = sbr.rel (0) target = $region17
  $region16: #{detector_backbone_with_fpn.5} parent=0 // pred_region
    _
  $region17: #{detector_backbone_with_fpn.5} parent=0 // pred_fallthru
    _
  // Predicated region
  $region18: #{detector_backbone_with_fpn.5} parent=0 // pred_check
    _
  $region19: #{detector_backbone_with_fpn.5} parent=0 // pred_check_branch
    %21 = sbr.rel (0) target = $region21
  $region20: #{detector_backbone_with_fpn.5} parent=0 // pred_region
    _
  $region21: #{detector_backbone_with_fpn.5} parent=0 // pred_fallthru
    _
  // Predicated region
  $region22: #{detector_backbone_with_fpn.5} parent=0 // pred_check
    _
  $region23: #{detector_backbone_with_fpn.5} parent=0 // pred_check_branch
    %23 = sbr.rel (0) target = $region25
  $region24: #{detector_backbone_with_fpn.5} parent=0 // pred_region
    _
  $region25: #{detector_backbone_with_fpn.5} parent=0 // pred_fallthru
    _
  // Predicated region
  $region26: #{detector_backbone_with_fpn.5} parent=0 // pred_check
    _
  $region27: #{detector_backbone_with_fpn.5} parent=0 // pred_check_branch
    %25 = sbr.rel (0) target = $region29
  $region28: #{detector_backbone_with_fpn.5} parent=0 // pred_region
    _
  $region29: #{detector_backbone_with_fpn.5} parent=0 // pred_fallthru
    _
  %27 = vst [vmem:[#allocation2] sm:$0x7] 0
  %s28 = scalar_lea.vmem [#allocation2], 36
  %29 = vst [vmem:[%s28] sm:$0x7] 0
  %vm30 = vcmask 1040384
  %vm31 = vsmask.f32 256
  %vm32 = vmand %vm30, %vm31
  %v33 = vld [vmem:[#allocation2] sm:$0x1]
  %v34 = vsel %vm32, 0, %v33
  %35 = vst [vmem:[#allocation2] sm:$0x1] %v34
  %v36 = vld [vmem:[#allocation2 + $0x4] sm:$0x1]
  %v37 = vsel %vm32, 0, %v36
  %38 = vst [vmem:[#allocation2 + $0x4] sm:$0x1] %v37
  %v39 = vld [vmem:[#allocation2 + $0x8] sm:$0x1]
  %v40 = vsel %vm32, 0, %v39
  %41 = vst [vmem:[#allocation2 + $0x8] sm:$0x1] %v40
  %v42 = vld [vmem:[#allocation2 + $0xc] sm:$0x1]
  %v43 = vsel %vm32, 0, %v42
  %44 = vst [vmem:[#allocation2 + $0xc] sm:$0x1] %v43
  %v45 = vld [vmem:[#allocation2 + $0x10] sm:$0x1]
  %v46 = vsel %vm32, 0, %v45
  %47 = vst [vmem:[#allocation2 + $0x10] sm:$0x1] %v46
  %v48 = vld [vmem:[#allocation2 + $0x14] sm:$0x1]
  %v49 = vsel %vm32, 0, %v48
  %50 = vst [vmem:[#allocation2 + $0x14] sm:$0x1] %v49
  %v51 = vld [vmem:[#allocation2 + $0x18] sm:$0x1]
  %v52 = vsel %vm32, 0, %v51
  %53 = vst [vmem:[#allocation2 + $0x18] sm:$0x1] %v52
  %v54 = vld [vmem:[#allocation2 + $0x1c] sm:$0x1]
  %v55 = vsel %vm32, 0, %v54
  %56 = vst [vmem:[#allocation2 + $0x1c] sm:$0x1] %v55
  %v57 = vld [vmem:[#allocation2 + $0x20] sm:$0x1]
  %v58 = vsel %vm32, 0, %v57
  %59 = vst [vmem:[#allocation2 + $0x20] sm:$0x1] %v58
  %v60 = vld [vmem:[#allocation2 + $0x24] sm:$0x1]
  %v61 = vsel %vm32, 0, %v60
  %62 = vst [vmem:[#allocation2 + $0x24] sm:$0x1] %v61
  %vm63 = vcmask 1042434
  %vm64 = vsmask.f32 7946
  %vm65 = vmand %vm63, %vm64
  %v66 = vld [vmem:[#allocation2] sm:$0x4]
  %v67 = vsel %vm65, 0, %v66
  %68 = vst [vmem:[#allocation2] sm:$0x4] %v67
  %v69 = vld [vmem:[#allocation2 + $0x4] sm:$0x4]
  %v70 = vsel %vm65, 0, %v69
  %71 = vst [vmem:[#allocation2 + $0x4] sm:$0x4] %v70
  %v72 = vld [vmem:[#allocation2 + $0x8] sm:$0x4]
  %v73 = vsel %vm65, 0, %v72
  %74 = vst [vmem:[#allocation2 + $0x8] sm:$0x4] %v73
  %v75 = vld [vmem:[#allocation2 + $0xc] sm:$0x4]
  %v76 = vsel %vm65, 0, %v75
  %77 = vst [vmem:[#allocation2 + $0xc] sm:$0x4] %v76
  %v78 = vld [vmem:[#allocation2 + $0x10] sm:$0x4]
  %v79 = vsel %vm65, 0, %v78
  %80 = vst [vmem:[#allocation2 + $0x10] sm:$0x4] %v79
  %v81 = vld [vmem:[#allocation2 + $0x14] sm:$0x4]
  %v82 = vsel %vm65, 0, %v81
  %83 = vst [vmem:[#allocation2 + $0x14] sm:$0x4] %v82
  %v84 = vld [vmem:[#allocation2 + $0x18] sm:$0x4]
  %v85 = vsel %vm65, 0, %v84
  %86 = vst [vmem:[#allocation2 + $0x18] sm:$0x4] %v85
  %v87 = vld [vmem:[#allocation2 + $0x1c] sm:$0x4]
  %v88 = vsel %vm65, 0, %v87
  %89 = vst [vmem:[#allocation2 + $0x1c] sm:$0x4] %v88
  %v90 = vld [vmem:[#allocation2 + $0x20] sm:$0x4]
  %v91 = vsel %vm65, 0, %v90
  %92 = vst [vmem:[#allocation2 + $0x20] sm:$0x4] %v91
  %v93 = vld [vmem:[#allocation2 + $0x24] sm:$0x4]
  %v94 = vsel %vm65, 0, %v93
  %95 = vst [vmem:[#allocation2 + $0x24] sm:$0x4] %v94
  %v96 = vld [vmem:[%s2] sm:$0xf]
  %v97 = vld [vmem:[%s2 + $0x4] sm:$0xf]
  %v98 = vld [vmem:[%s2 + $0x8] sm:$0xf]
  %v99 = vld [vmem:[%s2 + $0xc] sm:$0xf]
  %v100 = vld [vmem:[%s3] sm:$0x1]
  %v101 = vld [vmem:[%s6] sm:$0x1]
  %v102 = vld [vmem:[%s0] sm:$0x3]
  %v103 = vld [vmem:[%s0 + $0x2] sm:$0x3]
  %v104 = vld [vmem:[%s0 + $0x4] sm:$0x3]
  %v105 = vld [vmem:[%s0 + $0x6] sm:$0x3]
  %v106 = vld [vmem:[%s0 + $0x8] sm:$0x3]
  %v107 = vld [vmem:[%s0 + $0xa] sm:$0x3]
  %v108 = vld [vmem:[%s0 + $0xc] sm:$0x3]
  %v109 = vld [vmem:[%s0 + $0xe] sm:$0x3]
  %111 = vst [vmem:[#allocation1] ss:$4 sm:$0xff] %v102
  %s113 = scalar_lea.vmem [#allocation1], 1
  %114 = vst [vmem:[%s113] ss:$4 sm:$0xff] %v103
  %s116 = scalar_lea.vmem [#allocation1], 2
  %117 = vst [vmem:[%s116] ss:$4 sm:$0xff] %v104
  %s119 = scalar_lea.vmem [#allocation1], 3
  %120 = vst [vmem:[%s119] ss:$4 sm:$0xff] %v105
  %s122 = scalar_lea.vmem [#allocation1], 32
  %123 = vst [vmem:[%s122] ss:$4 sm:$0xff] %v106
  %s125 = scalar_lea.vmem [#allocation1], 33
  %126 = vst [vmem:[%s125] ss:$4 sm:$0xff] %v107
  %s128 = scalar_lea.vmem [#allocation1], 34
  %129 = vst [vmem:[%s128] ss:$4 sm:$0xff] %v108
  %s131 = scalar_lea.vmem [#allocation1], 35
  %132 = vst [vmem:[%s131] ss:$4 sm:$0xff] %v109
  %v133 = vld.sshfl [vmem:[#allocation1] sm:$0xff pattern:$0x73625140]
  %v134 = vld.sshfl [vmem:[#allocation1 + $0x20] sm:$0xff pattern:$0x73625140]
  %v139 = vunpack.c.l.b16 %v96
  %v140 = vunpack.c.l.b16 %v97
  %v141 = vunpack.c.l.b16 %v98
  %v142 = vunpack.c.l.b16 %v99
  %v143 = vpack.c.b16 %v140, %v139
  %v144 = vpack.c.b16 %v142, %v141
  %vm147 = vcmask 261120
  %v148 = vsel %vm147, %v133, 0
  %v150 = vsel %vm147, %v134, 0
  %152 = vmatpush.bf16.msra.mxu0 0
  %153 = vmatpush.bf16.msra.mxu0 0
  %154 = vmatpush.bf16.msra.mxu0 0
  %155 = vmatpush.bf16.msra.mxu0 0
  %156 = vmatpush.bf16.msra.mxu0 0
  %157 = vmatpush.bf16.msra.mxu0 0
  %158 = vmatpush.bf16.msra.mxu0 %v144
  %159 = vmatpush.bf16.msra.mxu0 %v143
  %160 = vmatmul.bf16.gmra.mxu0 %v148
  %v161 = vpop.f32.mrf.mxu0
  %v162 = vadd.f32 0.0, %v161
  %v163 = vpop.f32.mrf.mxu0
  %v164 = vadd.f32 0.0, %v163
  %165 = vmatmul.bf16.gmra.mxu0 %v150
  %v166 = vpop.f32.mrf.mxu0
  %v167 = vadd.f32 0.0, %v166
  %v168 = vpop.f32.mrf.mxu0
  %v169 = vadd.f32 0.0, %v168
  %170 = vdwg.mxu0
  %v175 = vrot.slane %v162, 4
  %v176 = vrot.slane %v164, 4
  %v177 = vrot.slane %v167, 4
  %v178 = vrot.slane %v169, 4
  %183 = vst [vmem:[#allocation1] ss:$4 sm:$0xff] %v102
  %s184 = scalar_lea.vmem [#allocation1], 1
  %185 = vst [vmem:[%s184] ss:$4 sm:$0xff] %v103
  %s186 = scalar_lea.vmem [#allocation1], 2
  %187 = vst [vmem:[%s186] ss:$4 sm:$0xff] %v104
  %s188 = scalar_lea.vmem [#allocation1], 3
  %189 = vst [vmem:[%s188] ss:$4 sm:$0xff] %v105
  %s190 = scalar_lea.vmem [#allocation1], 32
  %191 = vst [vmem:[%s190] ss:$4 sm:$0xff] %v106
  %s192 = scalar_lea.vmem [#allocation1], 33
  %193 = vst [vmem:[%s192] ss:$4 sm:$0xff] %v107
  %s194 = scalar_lea.vmem [#allocation1], 34
  %195 = vst [vmem:[%s194] ss:$4 sm:$0xff] %v108
  %s196 = scalar_lea.vmem [#allocation1], 35
  %197 = vst [vmem:[%s196] ss:$4 sm:$0xff] %v109
  %v198 = vld.sshfl [vmem:[#allocation1] sm:$0xff pattern:$0x73625140]
  %v200 = vld.sshfl [vmem:[#allocation1 + $0x20] sm:$0xff pattern:$0x73625140]
  %202 = vrot.lane.b32.xlu0 %v198, 96
  %v203 = vpop.permute.xlu0 %202
  %204 = vrot.lane.b32.xlu0 %v200, 96
  %v205 = vpop.permute.xlu0 %204
  %v207 = vsel %vm147, %v203, 0
  %v210 = vsel %vm147, %v205, 0
  %212 = vmatpush.bf16.msra.mxu0 0
  %213 = vmatpush.bf16.msra.mxu0 0
  %214 = vmatpush.bf16.msra.mxu0 0
  %215 = vmatpush.bf16.msra.mxu0 0
  %216 = vmatpush.bf16.msra.mxu0 0
  %217 = vmatpush.bf16.msra.mxu0 0
  %218 = vmatpush.bf16.msra.mxu0 %v144
  %219 = vmatpush.bf16.msra.mxu0 %v143
  %220 = vmatmul.bf16.gmra.mxu0 %v207
  %v221 = vpop.f32.mrf.mxu0
  %v222 = vadd.f32 0.0, %v221
  %v223 = vpop.f32.mrf.mxu0
  %v224 = vadd.f32 0.0, %v223
  %225 = vmatmul.bf16.gmra.mxu0 %v210
  %v226 = vpop.f32.mrf.mxu0
  %v227 = vadd.f32 0.0, %v226
  %v228 = vpop.f32.mrf.mxu0
  %v229 = vadd.f32 0.0, %v228
  %230 = vdwg.mxu0
  %v235 = vrot.slane %v222, 4
  %v236 = vrot.slane %v224, 4
  %v237 = vrot.slane %v227, 4
  %v238 = vrot.slane %v229, 4
  %239 = vst [vmem:[#allocation1] ss:$2 sm:$0xff] %v222
  %v240 = vld.sshfl [vmem:[#allocation1] sm:$0xff pattern:$0x75316420]
  %s241 = scalar_lea.vmem [#allocation1], 16
  %242 = vst [vmem:[%s241] ss:$2 sm:$0xff] %v235
  %v243 = vld.sshfl [vmem:[#allocation1 + $0x10] sm:$0xff pattern:$0x75316420]
  %s244 = scalar_lea.vmem [#allocation1], 32
  %245 = vst [vmem:[%s244] ss:$2 sm:$0xff] %v224
  %v246 = vld.sshfl [vmem:[#allocation1 + $0x20] sm:$0xff pattern:$0x75316420]
  %s247 = scalar_lea.vmem [#allocation1], 48
  %248 = vst [vmem:[%s247] ss:$2 sm:$0xff] %v236
  %v249 = vld.sshfl [vmem:[#allocation1 + $0x30] sm:$0xff pattern:$0x75316420]
  %250 = vst [vmem:[#allocation1] ss:$2 sm:$0xff] %v227
  %v251 = vld.sshfl [vmem:[#allocation1] sm:$0xff pattern:$0x75316420]
  %252 = vst [vmem:[%s241] ss:$2 sm:$0xff] %v237
  %v253 = vld.sshfl [vmem:[#allocation1 + $0x10] sm:$0xff pattern:$0x75316420]
  %254 = vst [vmem:[%s244] ss:$2 sm:$0xff] %v229
  %v255 = vld.sshfl [vmem:[#allocation1 + $0x20] sm:$0xff pattern:$0x75316420]
  %256 = vst [vmem:[%s247] ss:$2 sm:$0xff] %v238
  %v257 = vld.sshfl [vmem:[#allocation1 + $0x30] sm:$0xff pattern:$0x75316420]
  %258 = vrot.lane.b32.xlu0 %v240, 64
  %v259 = vpop.permute.xlu0 %258
  %260 = vrot.lane.b32.xlu0 %v243, 64
  %v261 = vpop.permute.xlu0 %260
  %262 = vrot.lane.b32.xlu0 %v246, 64
  %v263 = vpop.permute.xlu0 %262
  %264 = vrot.lane.b32.xlu0 %v249, 64
  %v265 = vpop.permute.xlu0 %264
  %266 = vrot.lane.b32.xlu0 %v251, 64
  %v267 = vpop.permute.xlu0 %266
  %268 = vrot.lane.b32.xlu0 %v253, 64
  %v269 = vpop.permute.xlu0 %268
  %270 = vrot.lane.b32.xlu0 %v255, 64
  %v271 = vpop.permute.xlu0 %270
  %272 = vrot.lane.b32.xlu0 %v257, 64
  %v273 = vpop.permute.xlu0 %272
  %vm282 = vcmask 523264
  %v283 = vsel %vm282, %v162, %v259
  %v284 = vsel %vm282, %v175, %v261
  %v285 = vsel %vm282, %v164, %v263
  %v286 = vsel %vm282, %v176, %v265
  %v287 = vsel %vm282, %v167, %v267
  %v288 = vsel %vm282, %v177, %v269
  %v289 = vsel %vm282, %v169, %v271
  %v290 = vsel %vm282, %v178, %v273
  %v292 = vperm.slane %v100, 0
  %v294 = vadd.f32 %v283, %v292
  %v295 = vadd.f32 %v284, %v292
  %v296 = vadd.f32 %v285, %v292
  %v297 = vadd.f32 %v286, %v292
  %v298 = vadd.f32 %v287, %v292
  %v299 = vadd.f32 %v288, %v292
  %v300 = vadd.f32 %v289, %v292
  %v301 = vadd.f32 %v290, %v292
  %v302 = vld [vmem:[%s1] sm:$0x3]
  %v303 = vld [vmem:[%s1 + $0x2] sm:$0x3]
  %v304 = vld [vmem:[%s1 + $0x4] sm:$0x3]
  %v305 = vld [vmem:[%s1 + $0x6] sm:$0x3]
  %307 = vst [vmem:[#allocation1] ss:$4 sm:$0xff] %v302
  %v308 = vld.sshfl [vmem:[#allocation1] sm:$0xff pattern:$0x73625140]
  %s311 = scalar_lea.vmem [#allocation1], 32
  %312 = vst [vmem:[%s311] ss:$4 sm:$0xff] %v303
  %v313 = vld.sshfl [vmem:[#allocation1 + $0x20] sm:$0xff pattern:$0x73625140]
  %316 = vst [vmem:[#allocation1] ss:$4 sm:$0xff] %v304
  %v317 = vld.sshfl [vmem:[#allocation1] sm:$0xff pattern:$0x73625140]
  %320 = vst [vmem:[%s311] ss:$4 sm:$0xff] %v305
  %v321 = vld.sshfl [vmem:[#allocation1 + $0x20] sm:$0xff pattern:$0x73625140]
  %323 = vrot.lane.b32.xlu0 %v308, 64
  %v324 = vpop.permute.xlu0 %323
  %325 = vrot.lane.b32.xlu0 %v313, 64
  %v326 = vpop.permute.xlu0 %325
  %327 = vrot.lane.b32.xlu0 %v317, 64
  %v328 = vpop.permute.xlu0 %327
  %329 = vrot.lane.b32.xlu0 %v321, 64
  %v330 = vpop.permute.xlu0 %329
  %v332 = vsel %vm282, %v302, %v324
  %v335 = vsel %vm282, %v303, %v326
  %v338 = vsel %vm282, %v304, %v328
  %v341 = vsel %vm282, %v305, %v330
  %v343 = vunpack.c.l.bf16 %v332
  %v344 = vunpack.c.l.bf16 %v335
  %v345 = vunpack.c.l.bf16 %v338
  %v346 = vunpack.c.l.bf16 %v341
  %v347 = vadd.f32 %v294, %v343
  %v348 = vadd.f32 %v295, %v343
  %v349 = vadd.f32 %v296, %v344
  %v350 = vadd.f32 %v297, %v344
  %v351 = vadd.f32 %v298, %v345
  %v352 = vadd.f32 %v299, %v345
  %v353 = vadd.f32 %v300, %v346
  %v354 = vadd.f32 %v301, %v346
  %v355 = vpack.c.bf16 %v347, %v347
  %v356 = vpack.c.bf16 %v348, %v348
  %v357 = vpack.c.bf16 %v349, %v349
  %v358 = vpack.c.bf16 %v350, %v350
  %v359 = vpack.c.bf16 %v351, %v351
  %v360 = vpack.c.bf16 %v352, %v352
  %v361 = vpack.c.bf16 %v353, %v353
  %v362 = vpack.c.bf16 %v354, %v354
  %v364 = vshrl.u32 %v355, 16
  %v366 = vrot.slane %v364, 7
  %v367 = vshll.u32 %v355, 16
  %v369 = vor.u32 %v366, %v367
  %v371 = vshrl.u32 %v356, 16
  %v373 = vrot.slane %v371, 7
  %v374 = vshll.u32 %v356, 16
  %v376 = vor.u32 %v373, %v374
  %v378 = vshrl.u32 %v357, 16
  %v380 = vrot.slane %v378, 7
  %v381 = vshll.u32 %v357, 16
  %v383 = vor.u32 %v380, %v381
  %v385 = vshrl.u32 %v358, 16
  %v387 = vrot.slane %v385, 7
  %v388 = vshll.u32 %v358, 16
  %v390 = vor.u32 %v387, %v388
  %v392 = vshrl.u32 %v359, 16
  %v394 = vrot.slane %v392, 7
  %v395 = vshll.u32 %v359, 16
  %v397 = vor.u32 %v394, %v395
  %v399 = vshrl.u32 %v360, 16
  %v401 = vrot.slane %v399, 7
  %v402 = vshll.u32 %v360, 16
  %v404 = vor.u32 %v401, %v402
  %v406 = vshrl.u32 %v361, 16
  %v408 = vrot.slane %v406, 7
  %v409 = vshll.u32 %v361, 16
  %v411 = vor.u32 %v408, %v409
  %v413 = vshrl.u32 %v362, 16
  %v415 = vrot.slane %v413, 7
  %v416 = vshll.u32 %v362, 16
  %v418 = vor.u32 %v415, %v416
  %s427 = scalar_lea.vmem [#allocation2], 4
  %vm428 = vcmask 1042432
  %vm429 = vsmask.f32 2306
  %vm430 = vmand %vm428, %vm429
  %v431 = vld [vmem:[%s427] sm:$0x7]
  %v432 = vsel %vm430, %v369, %v431
  %433 = vst [vmem:[%s427] sm:$0x7] %v432
  %v434 = vld [vmem:[%s427 + $0x4] sm:$0x7]
  %v435 = vsel %vm430, %v376, %v434
  %436 = vst [vmem:[%s427 + $0x4] sm:$0x7] %v435
  %v437 = vld [vmem:[%s427 + $0x8] sm:$0x7]
  %v438 = vsel %vm430, %v383, %v437
  %439 = vst [vmem:[%s427 + $0x8] sm:$0x7] %v438
  %v440 = vld [vmem:[%s427 + $0xc] sm:$0x7]
  %v441 = vsel %vm430, %v390, %v440
  %442 = vst [vmem:[%s427 + $0xc] sm:$0x7] %v441
  %v443 = vld [vmem:[%s427 + $0x10] sm:$0x7]
  %v444 = vsel %vm430, %v397, %v443
  %445 = vst [vmem:[%s427 + $0x10] sm:$0x7] %v444
  %v446 = vld [vmem:[%s427 + $0x14] sm:$0x7]
  %v447 = vsel %vm430, %v404, %v446
  %448 = vst [vmem:[%s427 + $0x14] sm:$0x7] %v447
  %v449 = vld [vmem:[%s427 + $0x18] sm:$0x7]
  %v450 = vsel %vm430, %v411, %v449
  %451 = vst [vmem:[%s427 + $0x18] sm:$0x7] %v450
  %v452 = vld [vmem:[%s427 + $0x1c] sm:$0x7]
  %v453 = vsel %vm430, %v418, %v452
  %454 = vst [vmem:[%s427 + $0x1c] sm:$0x7] %v453
  %v455 = vld [vmem:[#allocation2] sm:$0x7]
  %v456 = vld [vmem:[#allocation2 + $0x4] sm:$0x7]
  %v457 = vld [vmem:[#allocation2 + $0x8] sm:$0x7]
  %v458 = vld [vmem:[#allocation2 + $0xc] sm:$0x7]
  %v459 = vld [vmem:[#allocation2 + $0x10] sm:$0x7]
  %v460 = vld [vmem:[#allocation2 + $0x14] sm:$0x7]
  %v461 = vld [vmem:[#allocation2 + $0x18] sm:$0x7]
  %v462 = vld [vmem:[#allocation2 + $0x1c] sm:$0x7]
  %v463 = vld [vmem:[%s4] sm:$0xf]
  %v464 = vld [vmem:[%s4 + $0x4] sm:$0xf]
  %v465 = vld [vmem:[%s4 + $0x8] sm:$0xf]
  %v466 = vld [vmem:[%s4 + $0xc] sm:$0xf]
  %v467 = vld [vmem:[%s4 + $0x10] sm:$0xf]
  %v468 = vld [vmem:[%s4 + $0x14] sm:$0xf]
  %v469 = vld [vmem:[%s4 + $0x18] sm:$0xf]
  %v470 = vld [vmem:[%s4 + $0x1c] sm:$0xf]
  %v471 = vld [vmem:[%s4 + $0x20] sm:$0xf]
  %v472 = vld [vmem:[%s4 + $0x24] sm:$0xf]
  %v473 = vld [vmem:[%s4 + $0x28] sm:$0xf]
  %v474 = vld [vmem:[%s4 + $0x2c] sm:$0xf]
  %v475 = vld [vmem:[%s4 + $0x30] sm:$0xf]
  %v476 = vld [vmem:[%s4 + $0x34] sm:$0xf]
  %v477 = vld [vmem:[%s4 + $0x38] sm:$0xf]
  %v478 = vld [vmem:[%s4 + $0x3c] sm:$0xf]
  %v479 = vld [vmem:[%s427] sm:$0x7]
  %v480 = vld [vmem:[%s427 + $0x4] sm:$0x7]
  %v481 = vld [vmem:[%s427 + $0x8] sm:$0x7]
  %v482 = vld [vmem:[%s427 + $0xc] sm:$0x7]
  %v483 = vld [vmem:[%s427 + $0x10] sm:$0x7]
  %v484 = vld [vmem:[%s427 + $0x14] sm:$0x7]
  %v485 = vld [vmem:[%s427 + $0x18] sm:$0x7]
  %v486 = vld [vmem:[%s427 + $0x1c] sm:$0x7]
  %s487 = scalar_lea.vmem %s4, 64
  %v488 = vld [vmem:[%s487] sm:$0xf]
  %v489 = vld [vmem:[%s487 + $0x4] sm:$0xf]
  %v490 = vld [vmem:[%s487 + $0x8] sm:$0xf]
  %v491 = vld [vmem:[%s487 + $0xc] sm:$0xf]
  %v492 = vld [vmem:[%s487 + $0x10] sm:$0xf]
  %v493 = vld [vmem:[%s487 + $0x14] sm:$0xf]
  %v494 = vld [vmem:[%s487 + $0x18] sm:$0xf]
  %v495 = vld [vmem:[%s487 + $0x1c] sm:$0xf]
  %v496 = vld [vmem:[%s487 + $0x20] sm:$0xf]
  %v497 = vld [vmem:[%s487 + $0x24] sm:$0xf]
  %v498 = vld [vmem:[%s487 + $0x28] sm:$0xf]
  %v499 = vld [vmem:[%s487 + $0x2c] sm:$0xf]
  %v500 = vld [vmem:[%s487 + $0x30] sm:$0xf]
  %v501 = vld [vmem:[%s487 + $0x34] sm:$0xf]
  %v502 = vld [vmem:[%s487 + $0x38] sm:$0xf]
  %v503 = vld [vmem:[%s487 + $0x3c] sm:$0xf]
  %v512 = vrot.slane %v479, 2
  %v513 = vrot.slane %v480, 2
  %v514 = vrot.slane %v481, 2
  %v515 = vrot.slane %v482, 2
  %v516 = vrot.slane %v483, 2
  %v517 = vrot.slane %v484, 2
  %v518 = vrot.slane %v485, 2
  %v519 = vrot.slane %v486, 2
  %vm520 = vcmask 1041408
  %v523 = vsel %vm520, %v479, %v512
  %vm524 = vcmask 1043458
  %v525 = vsel %vm524, %v479, %v512
  %v527 = vrot.slane %v525, 2
  %v530 = vsel %vm520, %v480, %v513
  %v531 = vsel %vm524, %v480, %v513
  %v533 = vrot.slane %v531, 2
  %v536 = vsel %vm520, %v481, %v514
  %v537 = vsel %vm524, %v481, %v514
  %v539 = vrot.slane %v537, 2
  %v542 = vsel %vm520, %v482, %v515
  %v543 = vsel %vm524, %v482, %v515
  %v545 = vrot.slane %v543, 2
  %v548 = vsel %vm520, %v483, %v516
  %v549 = vsel %vm524, %v483, %v516
  %v551 = vrot.slane %v549, 2
  %v554 = vsel %vm520, %v484, %v517
  %v555 = vsel %vm524, %v484, %v517
  %v557 = vrot.slane %v555, 2
  %v560 = vsel %vm520, %v485, %v518
  %v561 = vsel %vm524, %v485, %v518
  %v563 = vrot.slane %v561, 2
  %v566 = vsel %vm520, %v486, %v519
  %v567 = vsel %vm524, %v486, %v519
  %v569 = vrot.slane %v567, 2
  %vm570 = vsmask.f32 1280
  %vm571 = vsmask.f32 3336
  %vm572 = vmor %vm570, %vm571
  %vm573 = vsmask.f32 5392
  %vm574 = vmor %vm572, %vm573
  %vm575 = vsmask.f32 7448
  %vm576 = vmor %vm574, %vm575
  %v577 = vshrl.u32 %v523, 16
  %v579 = vrot.slane %v577, 6
  %v580 = vshll.u32 %v523, 16
  %v582 = vrot.slane %v580, 7
  %v583 = vor.u32 %v579, %v582
  %v584 = vrot.slane %v583, 2
  %v586 = vshll.u32 %v527, 16
  %v588 = vrot.slane %v586, 7
  %v589 = vsel %vm576, %v584, %v588
  %v590 = vshrl.u32 %v530, 16
  %v592 = vrot.slane %v590, 6
  %v593 = vshll.u32 %v530, 16
  %v595 = vrot.slane %v593, 7
  %v596 = vor.u32 %v592, %v595
  %v597 = vrot.slane %v596, 2
  %v599 = vshll.u32 %v533, 16
  %v601 = vrot.slane %v599, 7
  %v602 = vsel %vm576, %v597, %v601
  %v603 = vshrl.u32 %v536, 16
  %v605 = vrot.slane %v603, 6
  %v606 = vshll.u32 %v536, 16
  %v608 = vrot.slane %v606, 7
  %v609 = vor.u32 %v605, %v608
  %v610 = vrot.slane %v609, 2
  %v612 = vshll.u32 %v539, 16
  %v614 = vrot.slane %v612, 7
  %v615 = vsel %vm576, %v610, %v614
  %v616 = vshrl.u32 %v542, 16
  %v618 = vrot.slane %v616, 6
  %v619 = vshll.u32 %v542, 16
  %v621 = vrot.slane %v619, 7
  %v622 = vor.u32 %v618, %v621
  %v623 = vrot.slane %v622, 2
  %v625 = vshll.u32 %v545, 16
  %v627 = vrot.slane %v625, 7
  %v628 = vsel %vm576, %v623, %v627
  %v629 = vshrl.u32 %v548, 16
  %v631 = vrot.slane %v629, 6
  %v632 = vshll.u32 %v548, 16
  %v634 = vrot.slane %v632, 7
  %v635 = vor.u32 %v631, %v634
  %v636 = vrot.slane %v635, 2
  %v638 = vshll.u32 %v551, 16
  %v640 = vrot.slane %v638, 7
  %v641 = vsel %vm576, %v636, %v640
  %v642 = vshrl.u32 %v554, 16
  %v644 = vrot.slane %v642, 6
  %v645 = vshll.u32 %v554, 16
  %v647 = vrot.slane %v645, 7
  %v648 = vor.u32 %v644, %v647
  %v649 = vrot.slane %v648, 2
  %v651 = vshll.u32 %v557, 16
  %v653 = vrot.slane %v651, 7
  %v654 = vsel %vm576, %v649, %v653
  %v655 = vshrl.u32 %v560, 16
  %v657 = vrot.slane %v655, 6
  %v658 = vshll.u32 %v560, 16
  %v660 = vrot.slane %v658, 7
  %v661 = vor.u32 %v657, %v660
  %v662 = vrot.slane %v661, 2
  %v664 = vshll.u32 %v563, 16
  %v666 = vrot.slane %v664, 7
  %v667 = vsel %vm576, %v662, %v666
  %v668 = vshrl.u32 %v566, 16
  %v670 = vrot.slane %v668, 6
  %v671 = vshll.u32 %v566, 16
  %v673 = vrot.slane %v671, 7
  %v674 = vor.u32 %v670, %v673
  %v675 = vrot.slane %v674, 2
  %v677 = vshll.u32 %v569, 16
  %v679 = vrot.slane %v677, 7
  %v680 = vsel %vm576, %v675, %v679
  %682 = vst [vmem:[#allocation1] ss:$4 sm:$0xff] %v589
  %s684 = scalar_lea.vmem [#allocation1], 1
  %685 = vst [vmem:[%s684] ss:$4 sm:$0xff] %v602
  %s687 = scalar_lea.vmem [#allocation1], 2
  %688 = vst [vmem:[%s687] ss:$4 sm:$0xff] %v615
  %s690 = scalar_lea.vmem [#allocation1], 3
  %691 = vst [vmem:[%s690] ss:$4 sm:$0xff] %v628
  %s693 = scalar_lea.vmem [#allocation1], 32
  %694 = vst [vmem:[%s693] ss:$4 sm:$0xff] %v641
  %s696 = scalar_lea.vmem [#allocation1], 33
  %697 = vst [vmem:[%s696] ss:$4 sm:$0xff] %v654
  %s699 = scalar_lea.vmem [#allocation1], 34
  %700 = vst [vmem:[%s699] ss:$4 sm:$0xff] %v667
  %s702 = scalar_lea.vmem [#allocation1], 35
  %703 = vst [vmem:[%s702] ss:$4 sm:$0xff] %v680
  %v704 = vld.sshfl [vmem:[#allocation1] sm:$0xff pattern:$0x73625140]
  %v705 = vld.sshfl [vmem:[#allocation1 + $0x20] sm:$0xff pattern:$0x73625140]
  %v724 = vunpack.c.l.b16 %v488
  %v725 = vunpack.c.l.b16 %v489
  %v726 = vunpack.c.l.b16 %v490
  %v727 = vunpack.c.l.b16 %v491
  %v728 = vunpack.c.l.b16 %v492
  %v729 = vunpack.c.l.b16 %v493
  %v730 = vunpack.c.l.b16 %v494
  %v731 = vunpack.c.l.b16 %v495
  %v732 = vunpack.c.l.b16 %v496
  %v733 = vunpack.c.l.b16 %v497
  %v734 = vunpack.c.l.b16 %v498
  %v735 = vunpack.c.l.b16 %v499
  %v736 = vunpack.c.l.b16 %v500
  %v737 = vunpack.c.l.b16 %v501
  %v738 = vunpack.c.l.b16 %v502
  %v739 = vunpack.c.l.b16 %v503
  %v740 = vpack.c.b16 %v725, %v724
  %v741 = vpack.c.b16 %v727, %v726
  %v742 = vpack.c.b16 %v729, %v728
  %v743 = vpack.c.b16 %v731, %v730
  %v744 = vpack.c.b16 %v733, %v732
  %v745 = vpack.c.b16 %v735, %v734
  %v746 = vpack.c.b16 %v737, %v736
  %v747 = vpack.c.b16 %v739, %v738
  %756 = vmatpush.bf16.msra.mxu0 %v747
  %757 = vmatpush.bf16.msra.mxu0 %v746
  %758 = vmatpush.bf16.msra.mxu0 %v745
  %759 = vmatpush.bf16.msra.mxu0 %v744
  %760 = vmatpush.bf16.msra.mxu0 %v743
  %761 = vmatpush.bf16.msra.mxu0 %v742
  %762 = vmatpush.bf16.msra.mxu0 %v741
  %763 = vmatpush.bf16.msra.mxu0 %v740
  %764 = vmatmul.bf16.gmra.mxu0 %v704
  %v765 = vpop.f32.mrf.mxu0
  %v766 = vadd.f32 0.0, %v765
  %v767 = vpop.f32.mrf.mxu0
  %v768 = vadd.f32 0.0, %v767
  %769 = vmatmul.bf16.gmra.mxu0 %v705
  %v770 = vpop.f32.mrf.mxu0
  %v771 = vadd.f32 0.0, %v770
  %v772 = vpop.f32.mrf.mxu0
  %v773 = vadd.f32 0.0, %v772
  %774 = vdwg.mxu0
  %v783 = vrot.slane %v455, 2
  %v784 = vrot.slane %v456, 2
  %v785 = vrot.slane %v457, 2
  %v786 = vrot.slane %v458, 2
  %v787 = vrot.slane %v459, 2
  %v788 = vrot.slane %v460, 2
  %v789 = vrot.slane %v461, 2
  %v790 = vrot.slane %v462, 2
  %v793 = vsel %vm520, %v455, %v783
  %v794 = vsel %vm524, %v455, %v783
  %v796 = vrot.slane %v794, 2
  %v799 = vsel %vm520, %v456, %v784
  %v800 = vsel %vm524, %v456, %v784
  %v802 = vrot.slane %v800, 2
  %v805 = vsel %vm520, %v457, %v785
  %v806 = vsel %vm524, %v457, %v785
  %v808 = vrot.slane %v806, 2
  %v811 = vsel %vm520, %v458, %v786
  %v812 = vsel %vm524, %v458, %v786
  %v814 = vrot.slane %v812, 2
  %v817 = vsel %vm520, %v459, %v787
  %v818 = vsel %vm524, %v459, %v787
  %v820 = vrot.slane %v818, 2
  %v823 = vsel %vm520, %v460, %v788
  %v824 = vsel %vm524, %v460, %v788
  %v826 = vrot.slane %v824, 2
  %v829 = vsel %vm520, %v461, %v789
  %v830 = vsel %vm524, %v461, %v789
  %v832 = vrot.slane %v830, 2
  %v835 = vsel %vm520, %v462, %v790
  %v836 = vsel %vm524, %v462, %v790
  %v838 = vrot.slane %v836, 2
  %v839 = vshrl.u32 %v793, 16
  %v841 = vrot.slane %v839, 6
  %v842 = vshll.u32 %v793, 16
  %v844 = vrot.slane %v842, 7
  %v845 = vor.u32 %v841, %v844
  %v846 = vrot.slane %v845, 2
  %v848 = vshll.u32 %v796, 16
  %v850 = vrot.slane %v848, 7
  %v851 = vsel %vm576, %v846, %v850
  %v852 = vshrl.u32 %v799, 16
  %v854 = vrot.slane %v852, 6
  %v855 = vshll.u32 %v799, 16
  %v857 = vrot.slane %v855, 7
  %v858 = vor.u32 %v854, %v857
  %v859 = vrot.slane %v858, 2
  %v861 = vshll.u32 %v802, 16
  %v863 = vrot.slane %v861, 7
  %v864 = vsel %vm576, %v859, %v863
  %v865 = vshrl.u32 %v805, 16
  %v867 = vrot.slane %v865, 6
  %v868 = vshll.u32 %v805, 16
  %v870 = vrot.slane %v868, 7
  %v871 = vor.u32 %v867, %v870
  %v872 = vrot.slane %v871, 2
  %v874 = vshll.u32 %v808, 16
  %v876 = vrot.slane %v874, 7
  %v877 = vsel %vm576, %v872, %v876
  %v878 = vshrl.u32 %v811, 16
  %v880 = vrot.slane %v878, 6
  %v881 = vshll.u32 %v811, 16
  %v883 = vrot.slane %v881, 7
  %v884 = vor.u32 %v880, %v883
  %v885 = vrot.slane %v884, 2
  %v887 = vshll.u32 %v814, 16
  %v889 = vrot.slane %v887, 7
  %v890 = vsel %vm576, %v885, %v889
  %v891 = vshrl.u32 %v817, 16
  %v893 = vrot.slane %v891, 6
  %v894 = vshll.u32 %v817, 16
  %v896 = vrot.slane %v894, 7
  %v897 = vor.u32 %v893, %v896
  %v898 = vrot.slane %v897, 2
  %v900 = vshll.u32 %v820, 16
  %v902 = vrot.slane %v900, 7
  %v903 = vsel %vm576, %v898, %v902
  %v904 = vshrl.u32 %v823, 16
  %v906 = vrot.slane %v904, 6
  %v907 = vshll.u32 %v823, 16
  %v909 = vrot.slane %v907, 7
  %v910 = vor.u32 %v906, %v909
  %v911 = vrot.slane %v910, 2
  %v913 = vshll.u32 %v826, 16
  %v915 = vrot.slane %v913, 7
  %v916 = vsel %vm576, %v911, %v915
  %v917 = vshrl.u32 %v829, 16
  %v919 = vrot.slane %v917, 6
  %v920 = vshll.u32 %v829, 16
  %v922 = vrot.slane %v920, 7
  %v923 = vor.u32 %v919, %v922
  %v924 = vrot.slane %v923, 2
  %v926 = vshll.u32 %v832, 16
  %v928 = vrot.slane %v926, 7
  %v929 = vsel %vm576, %v924, %v928
  %v930 = vshrl.u32 %v835, 16
  %v932 = vrot.slane %v930, 6
  %v933 = vshll.u32 %v835, 16
  %v935 = vrot.slane %v933, 7
  %v936 = vor.u32 %v932, %v935
  %v937 = vrot.slane %v936, 2
  %v939 = vshll.u32 %v838, 16
  %v941 = vrot.slane %v939, 7
  %v942 = vsel %vm576, %v937, %v941
  %944 = vst [vmem:[#allocation1] ss:$4 sm:$0xff] %v851
  %s946 = scalar_lea.vmem [#allocation1], 1
  %947 = vst [vmem:[%s946] ss:$4 sm:$0xff] %v864
  %s949 = scalar_lea.vmem [#allocation1], 2
  %950 = vst [vmem:[%s949] ss:$4 sm:$0xff] %v877
  %s952 = scalar_lea.vmem [#allocation1], 3
  %953 = vst [vmem:[%s952] ss:$4 sm:$0xff] %v890
  %s955 = scalar_lea.vmem [#allocation1], 32
  %956 = vst [vmem:[%s955] ss:$4 sm:$0xff] %v903
  %s958 = scalar_lea.vmem [#allocation1], 33
  %959 = vst [vmem:[%s958] ss:$4 sm:$0xff] %v916
  %s961 = scalar_lea.vmem [#allocation1], 34
  %962 = vst [vmem:[%s961] ss:$4 sm:$0xff] %v929
  %s964 = scalar_lea.vmem [#allocation1], 35
  %965 = vst [vmem:[%s964] ss:$4 sm:$0xff] %v942
  %v966 = vld.sshfl [vmem:[#allocation1] sm:$0xff pattern:$0x73625140]
  %v967 = vld.sshfl [vmem:[#allocation1 + $0x20] sm:$0xff pattern:$0x73625140]
  %v986 = vunpack.c.l.b16 %v463
  %v987 = vunpack.c.l.b16 %v464
  %v988 = vunpack.c.l.b16 %v465
  %v989 = vunpack.c.l.b16 %v466
  %v990 = vunpack.c.l.b16 %v467
  %v991 = vunpack.c.l.b16 %v468
  %v992 = vunpack.c.l.b16 %v469
  %v993 = vunpack.c.l.b16 %v470
  %v994 = vunpack.c.l.b16 %v471
  %v995 = vunpack.c.l.b16 %v472
  %v996 = vunpack.c.l.b16 %v473
  %v997 = vunpack.c.l.b16 %v474
  %v998 = vunpack.c.l.b16 %v475
  %v999 = vunpack.c.l.b16 %v476
  %v1000 = vunpack.c.l.b16 %v477
  %v1001 = vunpack.c.l.b16 %v478
  %v1002 = vpack.c.b16 %v987, %v986
  %v1003 = vpack.c.b16 %v989, %v988
  %v1004 = vpack.c.b16 %v991, %v990
  %v1005 = vpack.c.b16 %v993, %v992
  %v1006 = vpack.c.b16 %v995, %v994
  %v1007 = vpack.c.b16 %v997, %v996
  %v1008 = vpack.c.b16 %v999, %v998
  %v1009 = vpack.c.b16 %v1001, %v1000
  %1018 = vmatpush.bf16.msra.mxu0 %v1009
  %1019 = vmatpush.bf16.msra.mxu0 %v1008
  %1020 = vmatpush.bf16.msra.mxu0 %v1007
  %1021 = vmatpush.bf16.msra.mxu0 %v1006
  %1022 = vmatpush.bf16.msra.mxu0 %v1005
  %1023 = vmatpush.bf16.msra.mxu0 %v1004
  %1024 = vmatpush.bf16.msra.mxu0 %v1003
  %1025 = vmatpush.bf16.msra.mxu0 %v1002
  %1026 = vmatmul.bf16.gmra.mxu0 %v966
  %v1027 = vpop.f32.mrf.mxu0
  %v1028 = vadd.f32 %v766, %v1027
  %v1029 = vpop.f32.mrf.mxu0
  %v1030 = vadd.f32 %v768, %v1029
  %1031 = vmatmul.bf16.gmra.mxu0 %v967
  %v1032 = vpop.f32.mrf.mxu0
  %v1033 = vadd.f32 %v771, %v1032
  %v1034 = vpop.f32.mrf.mxu0
  %v1035 = vadd.f32 %v773, %v1034
  %1036 = vdwg.mxu0
  %v1041 = vrot.slane %v1028, 4
  %v1042 = vrot.slane %v1030, 4
  %v1043 = vrot.slane %v1033, 4
  %v1044 = vrot.slane %v1035, 4
  %s1049 = scalar_lea.vmem [#allocation2], 8
  %v1050 = vld [vmem:[%s1049] sm:$0x7]
  %v1051 = vld [vmem:[%s1049 + $0x4] sm:$0x7]
  %v1052 = vld [vmem:[%s1049 + $0x8] sm:$0x7]
  %v1053 = vld [vmem:[%s1049 + $0xc] sm:$0x7]
  %v1054 = vld [vmem:[%s1049 + $0x10] sm:$0x7]
  %v1055 = vld [vmem:[%s1049 + $0x14] sm:$0x7]
  %v1056 = vld [vmem:[%s1049 + $0x18] sm:$0x7]
  %v1057 = vld [vmem:[%s1049 + $0x1c] sm:$0x7]
  %s1058 = scalar_lea.vmem %s4, 128
  %v1059 = vld [vmem:[%s1058] sm:$0xf]
  %v1060 = vld [vmem:[%s1058 + $0x4] sm:$0xf]
  %v1061 = vld [vmem:[%s1058 + $0x8] sm:$0xf]
  %v1062 = vld [vmem:[%s1058 + $0xc] sm:$0xf]
  %v1063 = vld [vmem:[%s1058 + $0x10] sm:$0xf]
  %v1064 = vld [vmem:[%s1058 + $0x14] sm:$0xf]
  %v1065 = vld [vmem:[%s1058 + $0x18] sm:$0xf]
  %v1066 = vld [vmem:[%s1058 + $0x1c] sm:$0xf]
  %v1067 = vld [vmem:[%s1058 + $0x20] sm:$0xf]
  %v1068 = vld [vmem:[%s1058 + $0x24] sm:$0xf]
  %v1069 = vld [vmem:[%s1058 + $0x28] sm:$0xf]
  %v1070 = vld [vmem:[%s1058 + $0x2c] sm:$0xf]
  %v1071 = vld [vmem:[%s1058 + $0x30] sm:$0xf]
  %v1072 = vld [vmem:[%s1058 + $0x34] sm:$0xf]
  %v1073 = vld [vmem:[%s1058 + $0x38] sm:$0xf]
  %v1074 = vld [vmem:[%s1058 + $0x3c] sm:$0xf]
  %v1083 = vrot.slane %v1050, 2
  %v1084 = vrot.slane %v1051, 2
  %v1085 = vrot.slane %v1052, 2
  %v1086 = vrot.slane %v1053, 2
  %v1087 = vrot.slane %v1054, 2
  %v1088 = vrot.slane %v1055, 2
  %v1089 = vrot.slane %v1056, 2
  %v1090 = vrot.slane %v1057, 2
  %v1093 = vsel %vm520, %v1050, %v1083
  %v1094 = vsel %vm524, %v1050, %v1083
  %v1096 = vrot.slane %v1094, 2
  %v1099 = vsel %vm520, %v1051, %v1084
  %v1100 = vsel %vm524, %v1051, %v1084
  %v1102 = vrot.slane %v1100, 2
  %v1105 = vsel %vm520, %v1052, %v1085
  %v1106 = vsel %vm524, %v1052, %v1085
  %v1108 = vrot.slane %v1106, 2
  %v1111 = vsel %vm520, %v1053, %v1086
  %v1112 = vsel %vm524, %v1053, %v1086
  %v1114 = vrot.slane %v1112, 2
  %v1117 = vsel %vm520, %v1054, %v1087
  %v1118 = vsel %vm524, %v1054, %v1087
  %v1120 = vrot.slane %v1118, 2
  %v1123 = vsel %vm520, %v1055, %v1088
  %v1124 = vsel %vm524, %v1055, %v1088
  %v1126 = vrot.slane %v1124, 2
  %v1129 = vsel %vm520, %v1056, %v1089
  %v1130 = vsel %vm524, %v1056, %v1089
  %v1132 = vrot.slane %v1130, 2
  %v1135 = vsel %vm520, %v1057, %v1090
  %v1136 = vsel %vm524, %v1057, %v1090
  %v1138 = vrot.slane %v1136, 2
  %v1139 = vshrl.u32 %v1093, 16
  %v1141 = vrot.slane %v1139, 6
  %v1142 = vshll.u32 %v1093, 16
  %v1144 = vrot.slane %v1142, 7
  %v1145 = vor.u32 %v1141, %v1144
  %v1146 = vrot.slane %v1145, 2
  %v1148 = vshll.u32 %v1096, 16
  %v1150 = vrot.slane %v1148, 7
  %v1151 = vsel %vm576, %v1146, %v1150
  %v1152 = vshrl.u32 %v1099, 16
  %v1154 = vrot.slane %v1152, 6
  %v1155 = vshll.u32 %v1099, 16
  %v1157 = vrot.slane %v1155, 7
  %v1158 = vor.u32 %v1154, %v1157
  %v1159 = vrot.slane %v1158, 2
  %v1161 = vshll.u32 %v1102, 16
  %v1163 = vrot.slane %v1161, 7
  %v1164 = vsel %vm576, %v1159, %v1163
  %v1165 = vshrl.u32 %v1105, 16
  %v1167 = vrot.slane %v1165, 6
  %v1168 = vshll.u32 %v1105, 16
  %v1170 = vrot.slane %v1168, 7
  %v1171 = vor.u32 %v1167, %v1170
  %v1172 = vrot.slane %v1171, 2
  %v1174 = vshll.u32 %v1108, 16
  %v1176 = vrot.slane %v1174, 7
  %v1177 = vsel %vm576, %v1172, %v1176
  %v1178 = vshrl.u32 %v1111, 16
  %v1180 = vrot.slane %v1178, 6
  %v1181 = vshll.u32 %v1111, 16
  %v1183 = vrot.slane %v1181, 7
  %v1184 = vor.u32 %v1180, %v1183
  %v1185 = vrot.slane %v1184, 2
  %v1187 = vshll.u32 %v1114, 16
  %v1189 = vrot.slane %v1187, 7
  %v1190 = vsel %vm576, %v1185, %v1189
  %v1191 = vshrl.u32 %v1117, 16
  %v1193 = vrot.slane %v1191, 6
  %v1194 = vshll.u32 %v1117, 16
  %v1196 = vrot.slane %v1194, 7
  %v1197 = vor.u32 %v1193, %v1196
  %v1198 = vrot.slane %v1197, 2
  %v1200 = vshll.u32 %v1120, 16
  %v1202 = vrot.slane %v1200, 7
  %v1203 = vsel %vm576, %v1198, %v1202
  %v1204 = vshrl.u32 %v1123, 16
  %v1206 = vrot.slane %v1204, 6
  %v1207 = vshll.u32 %v1123, 16
  %v1209 = vrot.slane %v1207, 7
  %v1210 = vor.u32 %v1206, %v1209
  %v1211 = vrot.slane %v1210, 2
  %v1213 = vshll.u32 %v1126, 16
  %v1215 = vrot.slane %v1213, 7
  %v1216 = vsel %vm576, %v1211, %v1215
  %v1217 = vshrl.u32 %v1129, 16
  %v1219 = vrot.slane %v1217, 6
  %v1220 = vshll.u32 %v1129, 16
  %v1222 = vrot.slane %v1220, 7
  %v1223 = vor.u32 %v1219, %v1222
  %v1224 = vrot.slane %v1223, 2
  %v1226 = vshll.u32 %v1132, 16
  %v1228 = vrot.slane %v1226, 7
  %v1229 = vsel %vm576, %v1224, %v1228
  %v1230 = vshrl.u32 %v1135, 16
  %v1232 = vrot.slane %v1230, 6
  %v1233 = vshll.u32 %v1135, 16
  %v1235 = vrot.slane %v1233, 7
  %v1236 = vor.u32 %v1232, %v1235
  %v1237 = vrot.slane %v1236, 2
  %v1239 = vshll.u32 %v1138, 16
  %v1241 = vrot.slane %v1239, 7
  %v1242 = vsel %vm576, %v1237, %v1241
  %1244 = vst [vmem:[#allocation1] ss:$4 sm:$0xff] %v1151
  %s1246 = scalar_lea.vmem [#allocation1], 1
  %1247 = vst [vmem:[%s1246] ss:$4 sm:$0xff] %v1164
  %s1249 = scalar_lea.vmem [#allocation1], 2
  %1250 = vst [vmem:[%s1249] ss:$4 sm:$0xff] %v1177
  %s1252 = scalar_lea.vmem [#allocation1], 3
  %1253 = vst [vmem:[%s1252] ss:$4 sm:$0xff] %v1190
  %s1255 = scalar_lea.vmem [#allocation1], 32
  %1256 = vst [vmem:[%s1255] ss:$4 sm:$0xff] %v1203
  %s1258 = scalar_lea.vmem [#allocation1], 33
  %1259 = vst [vmem:[%s1258] ss:$4 sm:$0xff] %v1216
  %s1261 = scalar_lea.vmem [#allocation1], 34
  %1262 = vst [vmem:[%s1261] ss:$4 sm:$0xff] %v1229
  %s1264 = scalar_lea.vmem [#allocation1], 35
  %1265 = vst [vmem:[%s1264] ss:$4 sm:$0xff] %v1242
  %v1266 = vld.sshfl [vmem:[#allocation1] sm:$0xff pattern:$0x73625140]
  %v1267 = vld.sshfl [vmem:[#allocation1 + $0x20] sm:$0xff pattern:$0x73625140]
  %v1286 = vunpack.c.l.b16 %v1059
  %v1287 = vunpack.c.l.b16 %v1060
  %v1288 = vunpack.c.l.b16 %v1061
  %v1289 = vunpack.c.l.b16 %v1062
  %v1290 = vunpack.c.l.b16 %v1063
  %v1291 = vunpack.c.l.b16 %v1064
  %v1292 = vunpack.c.l.b16 %v1065
  %v1293 = vunpack.c.l.b16 %v1066
  %v1294 = vunpack.c.l.b16 %v1067
  %v1295 = vunpack.c.l.b16 %v1068
  %v1296 = vunpack.c.l.b16 %v1069
  %v1297 = vunpack.c.l.b16 %v1070
  %v1298 = vunpack.c.l.b16 %v1071
  %v1299 = vunpack.c.l.b16 %v1072
  %v1300 = vunpack.c.l.b16 %v1073
  %v1301 = vunpack.c.l.b16 %v1074
  %v1302 = vpack.c.b16 %v1287, %v1286
  %v1303 = vpack.c.b16 %v1289, %v1288
  %v1304 = vpack.c.b16 %v1291, %v1290
  %v1305 = vpack.c.b16 %v1293, %v1292
  %v1306 = vpack.c.b16 %v1295, %v1294
  %v1307 = vpack.c.b16 %v1297, %v1296
  %v1308 = vpack.c.b16 %v1299, %v1298
  %v1309 = vpack.c.b16 %v1301, %v1300
  %1318 = vmatpush.bf16.msra.mxu0 %v1309
  %1319 = vmatpush.bf16.msra.mxu0 %v1308
  %1320 = vmatpush.bf16.msra.mxu0 %v1307
  %1321 = vmatpush.bf16.msra.mxu0 %v1306
  %1322 = vmatpush.bf16.msra.mxu0 %v1305
  %1323 = vmatpush.bf16.msra.mxu0 %v1304
  %1324 = vmatpush.bf16.msra.mxu0 %v1303
  %1325 = vmatpush.bf16.msra.mxu0 %v1302
  %1326 = vmatmul.bf16.gmra.mxu0 %v1266
  %v1327 = vpop.f32.mrf.mxu0
  %v1328 = vadd.f32 0.0, %v1327
  %v1329 = vpop.f32.mrf.mxu0
  %v1330 = vadd.f32 0.0, %v1329
  %1331 = vmatmul.bf16.gmra.mxu0 %v1267
  %v1332 = vpop.f32.mrf.mxu0
  %v1333 = vadd.f32 0.0, %v1332
  %v1334 = vpop.f32.mrf.mxu0
  %v1335 = vadd.f32 0.0, %v1334
  %1336 = vdwg.mxu0
  %v1341 = vrot.slane %v1328, 4
  %v1342 = vrot.slane %v1330, 4
  %v1343 = vrot.slane %v1333, 4
  %v1344 = vrot.slane %v1335, 4
  %v1349 = vadd.f32 %v1028, %v1328
  %v1350 = vadd.f32 %v1041, %v1341
  %v1351 = vadd.f32 %v1030, %v1330
  %v1352 = vadd.f32 %v1042, %v1342
  %v1353 = vadd.f32 %v1033, %v1333
  %v1354 = vadd.f32 %v1043, %v1343
  %v1355 = vadd.f32 %v1035, %v1335
  %v1356 = vadd.f32 %v1044, %v1344
  %v1357 = vld [vmem:[#allocation2] sm:$0x3]
  %v1358 = vld [vmem:[#allocation2 + $0x4] sm:$0x3]
  %v1359 = vld [vmem:[#allocation2 + $0x8] sm:$0x3]
  %v1360 = vld [vmem:[#allocation2 + $0xc] sm:$0x3]
  %v1361 = vld [vmem:[#allocation2 + $0x10] sm:$0x3]
  %v1362 = vld [vmem:[#allocation2 + $0x14] sm:$0x3]
  %v1363 = vld [vmem:[#allocation2 + $0x18] sm:$0x3]
  %v1364 = vld [vmem:[#allocation2 + $0x1c] sm:$0x3]
  %v1365 = vld [vmem:[%s5] sm:$0xf]
  %v1366 = vld [vmem:[%s5 + $0x4] sm:$0xf]
  %v1367 = vld [vmem:[%s5 + $0x8] sm:$0xf]
  %v1368 = vld [vmem:[%s5 + $0xc] sm:$0xf]
  %v1369 = vld [vmem:[%s5 + $0x10] sm:$0xf]
  %v1370 = vld [vmem:[%s5 + $0x14] sm:$0xf]
  %v1371 = vld [vmem:[%s5 + $0x18] sm:$0xf]
  %v1372 = vld [vmem:[%s5 + $0x1c] sm:$0xf]
  %v1373 = vld [vmem:[#allocation2] sm:$0x6]
  %v1374 = vld [vmem:[#allocation2 + $0x4] sm:$0x6]
  %v1375 = vld [vmem:[#allocation2 + $0x8] sm:$0x6]
  %v1376 = vld [vmem:[#allocation2 + $0xc] sm:$0x6]
  %v1377 = vld [vmem:[#allocation2 + $0x10] sm:$0x6]
  %v1378 = vld [vmem:[#allocation2 + $0x14] sm:$0x6]
  %v1379 = vld [vmem:[#allocation2 + $0x18] sm:$0x6]
  %v1380 = vld [vmem:[#allocation2 + $0x1c] sm:$0x6]
  %s1381 = scalar_lea.vmem %s5, 32
  %v1382 = vld [vmem:[%s1381] sm:$0xf]
  %v1383 = vld [vmem:[%s1381 + $0x4] sm:$0xf]
  %v1384 = vld [vmem:[%s1381 + $0x8] sm:$0xf]
  %v1385 = vld [vmem:[%s1381 + $0xc] sm:$0xf]
  %v1386 = vld [vmem:[%s1381 + $0x10] sm:$0xf]
  %v1387 = vld [vmem:[%s1381 + $0x14] sm:$0xf]
  %v1388 = vld [vmem:[%s1381 + $0x18] sm:$0xf]
  %v1389 = vld [vmem:[%s1381 + $0x1c] sm:$0xf]
  %v1390 = vld [vmem:[%s427] sm:$0x3]
  %v1391 = vld [vmem:[%s427 + $0x4] sm:$0x3]
  %v1392 = vld [vmem:[%s427 + $0x8] sm:$0x3]
  %v1393 = vld [vmem:[%s427 + $0xc] sm:$0x3]
  %v1394 = vld [vmem:[%s427 + $0x10] sm:$0x3]
  %v1395 = vld [vmem:[%s427 + $0x14] sm:$0x3]
  %v1396 = vld [vmem:[%s427 + $0x18] sm:$0x3]
  %v1397 = vld [vmem:[%s427 + $0x1c] sm:$0x3]
  %s1398 = scalar_lea.vmem %s5, 64
  %v1399 = vld [vmem:[%s1398] sm:$0xf]
  %v1400 = vld [vmem:[%s1398 + $0x4] sm:$0xf]
  %v1401 = vld [vmem:[%s1398 + $0x8] sm:$0xf]
  %v1402 = vld [vmem:[%s1398 + $0xc] sm:$0xf]
  %v1403 = vld [vmem:[%s1398 + $0x10] sm:$0xf]
  %v1404 = vld [vmem:[%s1398 + $0x14] sm:$0xf]
  %v1405 = vld [vmem:[%s1398 + $0x18] sm:$0xf]
  %v1406 = vld [vmem:[%s1398 + $0x1c] sm:$0xf]
  %1408 = vst [vmem:[#allocation1] ss:$4 sm:$0xff] %v1390
  %s1410 = scalar_lea.vmem [#allocation1], 1
  %1411 = vst [vmem:[%s1410] ss:$4 sm:$0xff] %v1391
  %s1413 = scalar_lea.vmem [#allocation1], 2
  %1414 = vst [vmem:[%s1413] ss:$4 sm:$0xff] %v1392
  %s1416 = scalar_lea.vmem [#allocation1], 3
  %1417 = vst [vmem:[%s1416] ss:$4 sm:$0xff] %v1393
  %s1419 = scalar_lea.vmem [#allocation1], 32
  %1420 = vst [vmem:[%s1419] ss:$4 sm:$0xff] %v1394
  %s1422 = scalar_lea.vmem [#allocation1], 33
  %1423 = vst [vmem:[%s1422] ss:$4 sm:$0xff] %v1395
  %s1425 = scalar_lea.vmem [#allocation1], 34
  %1426 = vst [vmem:[%s1425] ss:$4 sm:$0xff] %v1396
  %s1428 = scalar_lea.vmem [#allocation1], 35
  %1429 = vst [vmem:[%s1428] ss:$4 sm:$0xff] %v1397
  %v1430 = vld.sshfl [vmem:[#allocation1] sm:$0xff pattern:$0x73625140]
  %v1432 = vld.sshfl [vmem:[#allocation1 + $0x20] sm:$0xff pattern:$0x73625140]
  %1434 = vrot.lane.b32.xlu0 %v1430, 64
  %v1435 = vpop.permute.xlu0 %1434
  %1436 = vrot.lane.b32.xlu0 %v1432, 64
  %v1437 = vpop.permute.xlu0 %1436
  %v1446 = vunpack.c.l.b16 %v1399
  %v1447 = vunpack.c.l.b16 %v1400
  %v1448 = vunpack.c.l.b16 %v1401
  %v1449 = vunpack.c.l.b16 %v1402
  %v1450 = vunpack.c.l.b16 %v1403
  %v1451 = vunpack.c.l.b16 %v1404
  %v1452 = vunpack.c.l.b16 %v1405
  %v1453 = vunpack.c.l.b16 %v1406
  %v1454 = vpack.c.b16 %v1447, %v1446
  %v1455 = vpack.c.b16 %v1449, %v1448
  %v1456 = vpack.c.b16 %v1451, %v1450
  %v1457 = vpack.c.b16 %v1453, %v1452
  %v1463 = vsel %vm282, %v1435, 0
  %v1466 = vsel %vm282, %v1437, 0
  %1468 = vmatpush.bf16.msra.mxu0 0
  %1469 = vmatpush.bf16.msra.mxu0 0
  %1470 = vmatpush.bf16.msra.mxu0 0
  %1471 = vmatpush.bf16.msra.mxu0 0
  %1472 = vmatpush.bf16.msra.mxu0 %v1457
  %1473 = vmatpush.bf16.msra.mxu0 %v1456
  %1474 = vmatpush.bf16.msra.mxu0 %v1455
  %1475 = vmatpush.bf16.msra.mxu0 %v1454
  %1476 = vmatmul.bf16.gmra.mxu0 %v1463
  %v1477 = vpop.f32.mrf.mxu0
  %v1478 = vadd.f32 0.0, %v1477
  %v1479 = vpop.f32.mrf.mxu0
  %v1480 = vadd.f32 0.0, %v1479
  %1481 = vmatmul.bf16.gmra.mxu0 %v1466
  %v1482 = vpop.f32.mrf.mxu0
  %v1483 = vadd.f32 0.0, %v1482
  %v1484 = vpop.f32.mrf.mxu0
  %v1485 = vadd.f32 0.0, %v1484
  %1486 = vdwg.mxu0
  %v1487 = vld [vmem:[%s427] sm:$0x6]
  %v1488 = vld [vmem:[%s427 + $0x4] sm:$0x6]
  %v1489 = vld [vmem:[%s427 + $0x8] sm:$0x6]
  %v1490 = vld [vmem:[%s427 + $0xc] sm:$0x6]
  %v1491 = vld [vmem:[%s427 + $0x10] sm:$0x6]
  %v1492 = vld [vmem:[%s427 + $0x14] sm:$0x6]
  %v1493 = vld [vmem:[%s427 + $0x18] sm:$0x6]
  %v1494 = vld [vmem:[%s427 + $0x1c] sm:$0x6]
  %s1495 = scalar_lea.vmem %s5, 96
  %v1496 = vld [vmem:[%s1495] sm:$0xf]
  %v1497 = vld [vmem:[%s1495 + $0x4] sm:$0xf]
  %v1498 = vld [vmem:[%s1495 + $0x8] sm:$0xf]
  %v1499 = vld [vmem:[%s1495 + $0xc] sm:$0xf]
  %v1500 = vld [vmem:[%s1495 + $0x10] sm:$0xf]
  %v1501 = vld [vmem:[%s1495 + $0x14] sm:$0xf]
  %v1502 = vld [vmem:[%s1495 + $0x18] sm:$0xf]
  %v1503 = vld [vmem:[%s1495 + $0x1c] sm:$0xf]
  %v1512 = vrot.slane %v1487, 2
  %v1513 = vrot.slane %v1488, 2
  %v1514 = vrot.slane %v1489, 2
  %v1515 = vrot.slane %v1490, 2
  %v1516 = vrot.slane %v1491, 2
  %v1517 = vrot.slane %v1492, 2
  %v1518 = vrot.slane %v1493, 2
  %v1519 = vrot.slane %v1494, 2
  %v1522 = vsel %vm520, %v1487, %v1512
  %v1524 = vsel %vm524, %v1487, %v1512
  %v1526 = vrot.slane %v1524, 2
  %v1529 = vsel %vm520, %v1488, %v1513
  %v1531 = vsel %vm524, %v1488, %v1513
  %v1533 = vrot.slane %v1531, 2
  %v1536 = vsel %vm520, %v1489, %v1514
  %v1538 = vsel %vm524, %v1489, %v1514
  %v1540 = vrot.slane %v1538, 2
  %v1543 = vsel %vm520, %v1490, %v1515
  %v1545 = vsel %vm524, %v1490, %v1515
  %v1547 = vrot.slane %v1545, 2
  %v1550 = vsel %vm520, %v1491, %v1516
  %v1552 = vsel %vm524, %v1491, %v1516
  %v1554 = vrot.slane %v1552, 2
  %v1557 = vsel %vm520, %v1492, %v1517
  %v1559 = vsel %vm524, %v1492, %v1517
  %v1561 = vrot.slane %v1559, 2
  %v1564 = vsel %vm520, %v1493, %v1518
  %v1566 = vsel %vm524, %v1493, %v1518
  %v1568 = vrot.slane %v1566, 2
  %v1571 = vsel %vm520, %v1494, %v1519
  %v1573 = vsel %vm524, %v1494, %v1519
  %v1575 = vrot.slane %v1573, 2
  %vm1576 = vmor %vm30, %vm63
  %vm1577 = vcmask 1044484
  %vm1578 = vmor %vm1576, %vm1577
  %vm1579 = vcmask 1046534
  %vm1580 = vmor %vm1578, %vm1579
  %v1581 = vrot.slane %v1522, 7
  %v1582 = vrot.slane %v1581, 2
  %v1583 = vrot.slane %v1526, 7
  %v1584 = vsel %vm1580, %v1582, %v1583
  %v1585 = vrot.slane %v1529, 7
  %v1586 = vrot.slane %v1585, 2
  %v1587 = vrot.slane %v1533, 7
  %v1588 = vsel %vm1580, %v1586, %v1587
  %v1589 = vrot.slane %v1536, 7
  %v1590 = vrot.slane %v1589, 2
  %v1591 = vrot.slane %v1540, 7
  %v1592 = vsel %vm1580, %v1590, %v1591
  %v1593 = vrot.slane %v1543, 7
  %v1594 = vrot.slane %v1593, 2
  %v1595 = vrot.slane %v1547, 7
  %v1596 = vsel %vm1580, %v1594, %v1595
  %v1597 = vrot.slane %v1550, 7
  %v1598 = vrot.slane %v1597, 2
  %v1599 = vrot.slane %v1554, 7
  %v1600 = vsel %vm1580, %v1598, %v1599
  %v1601 = vrot.slane %v1557, 7
  %v1602 = vrot.slane %v1601, 2
  %v1603 = vrot.slane %v1561, 7
  %v1604 = vsel %vm1580, %v1602, %v1603
  %v1605 = vrot.slane %v1564, 7
  %v1606 = vrot.slane %v1605, 2
  %v1607 = vrot.slane %v1568, 7
  %v1608 = vsel %vm1580, %v1606, %v1607
  %v1609 = vrot.slane %v1571, 7
  %v1610 = vrot.slane %v1609, 2
  %v1611 = vrot.slane %v1575, 7
  %v1612 = vsel %vm1580, %v1610, %v1611
  %1614 = vst [vmem:[#allocation1] ss:$4 sm:$0xff] %v1584
  %s1616 = scalar_lea.vmem [#allocation1], 1
  %1617 = vst [vmem:[%s1616] ss:$4 sm:$0xff] %v1588
  %s1619 = scalar_lea.vmem [#allocation1], 2
  %1620 = vst [vmem:[%s1619] ss:$4 sm:$0xff] %v1592
  %s1622 = scalar_lea.vmem [#allocation1], 3
  %1623 = vst [vmem:[%s1622] ss:$4 sm:$0xff] %v1596
  %s1625 = scalar_lea.vmem [#allocation1], 32
  %1626 = vst [vmem:[%s1625] ss:$4 sm:$0xff] %v1600
  %s1628 = scalar_lea.vmem [#allocation1], 33
  %1629 = vst [vmem:[%s1628] ss:$4 sm:$0xff] %v1604
  %s1631 = scalar_lea.vmem [#allocation1], 34
  %1632 = vst [vmem:[%s1631] ss:$4 sm:$0xff] %v1608
  %s1634 = scalar_lea.vmem [#allocation1], 35
  %1635 = vst [vmem:[%s1634] ss:$4 sm:$0xff] %v1612
  %v1636 = vld.sshfl [vmem:[#allocation1] sm:$0xff pattern:$0x73625140]
  %v1637 = vld.sshfl [vmem:[#allocation1 + $0x20] sm:$0xff pattern:$0x73625140]
  %v1646 = vunpack.c.l.b16 %v1496
  %v1647 = vunpack.c.l.b16 %v1497
  %v1648 = vunpack.c.l.b16 %v1498
  %v1649 = vunpack.c.l.b16 %v1499
  %v1650 = vunpack.c.l.b16 %v1500
  %v1651 = vunpack.c.l.b16 %v1501
  %v1652 = vunpack.c.l.b16 %v1502
  %v1653 = vunpack.c.l.b16 %v1503
  %v1654 = vpack.c.b16 %v1647, %v1646
  %v1655 = vpack.c.b16 %v1649, %v1648
  %v1656 = vpack.c.b16 %v1651, %v1650
  %v1657 = vpack.c.b16 %v1653, %v1652
  %v1662 = vsel %vm282, %v1636, 0
  %v1664 = vsel %vm282, %v1637, 0
  %1666 = vmatpush.bf16.msra.mxu0 0
  %1667 = vmatpush.bf16.msra.mxu0 0
  %1668 = vmatpush.bf16.msra.mxu0 0
  %1669 = vmatpush.bf16.msra.mxu0 0
  %1670 = vmatpush.bf16.msra.mxu0 %v1657
  %1671 = vmatpush.bf16.msra.mxu0 %v1656
  %1672 = vmatpush.bf16.msra.mxu0 %v1655
  %1673 = vmatpush.bf16.msra.mxu0 %v1654
  %1674 = vmatmul.bf16.gmra.mxu0 %v1662
  %v1675 = vpop.f32.mrf.mxu0
  %v1676 = vadd.f32 0.0, %v1675
  %v1677 = vpop.f32.mrf.mxu0
  %v1678 = vadd.f32 0.0, %v1677
  %1679 = vmatmul.bf16.gmra.mxu0 %v1664
  %v1680 = vpop.f32.mrf.mxu0
  %v1681 = vadd.f32 0.0, %v1680
  %v1682 = vpop.f32.mrf.mxu0
  %v1683 = vadd.f32 0.0, %v1682
  %1684 = vdwg.mxu0
  %1686 = vst [vmem:[#allocation1] ss:$4 sm:$0xff] %v1357
  %s1688 = scalar_lea.vmem [#allocation1], 1
  %1689 = vst [vmem:[%s1688] ss:$4 sm:$0xff] %v1358
  %s1691 = scalar_lea.vmem [#allocation1], 2
  %1692 = vst [vmem:[%s1691] ss:$4 sm:$0xff] %v1359
  %s1694 = scalar_lea.vmem [#allocation1], 3
  %1695 = vst [vmem:[%s1694] ss:$4 sm:$0xff] %v1360
  %s1697 = scalar_lea.vmem [#allocation1], 32
  %1698 = vst [vmem:[%s1697] ss:$4 sm:$0xff] %v1361
  %s1700 = scalar_lea.vmem [#allocation1], 33
  %1701 = vst [vmem:[%s1700] ss:$4 sm:$0xff] %v1362
  %s1703 = scalar_lea.vmem [#allocation1], 34
  %1704 = vst [vmem:[%s1703] ss:$4 sm:$0xff] %v1363
  %s1706 = scalar_lea.vmem [#allocation1], 35
  %1707 = vst [vmem:[%s1706] ss:$4 sm:$0xff] %v1364
  %v1708 = vld.sshfl [vmem:[#allocation1] sm:$0xff pattern:$0x73625140]
  %v1710 = vld.sshfl [vmem:[#allocation1 + $0x20] sm:$0xff pattern:$0x73625140]
  %1712 = vrot.lane.b32.xlu0 %v1708, 64
  %v1713 = vpop.permute.xlu0 %1712
  %1714 = vrot.lane.b32.xlu0 %v1710, 64
  %v1715 = vpop.permute.xlu0 %1714
  %v1724 = vunpack.c.l.b16 %v1365
  %v1725 = vunpack.c.l.b16 %v1366
  %v1726 = vunpack.c.l.b16 %v1367
  %v1727 = vunpack.c.l.b16 %v1368
  %v1728 = vunpack.c.l.b16 %v1369
  %v1729 = vunpack.c.l.b16 %v1370
  %v1730 = vunpack.c.l.b16 %v1371
  %v1731 = vunpack.c.l.b16 %v1372
  %v1732 = vpack.c.b16 %v1725, %v1724
  %v1733 = vpack.c.b16 %v1727, %v1726
  %v1734 = vpack.c.b16 %v1729, %v1728
  %v1735 = vpack.c.b16 %v1731, %v1730
  %v1741 = vsel %vm282, %v1713, 0
  %v1744 = vsel %vm282, %v1715, 0
  %1746 = vmatpush.bf16.msra.mxu0 0
  %1747 = vmatpush.bf16.msra.mxu0 0
  %1748 = vmatpush.bf16.msra.mxu0 0
  %1749 = vmatpush.bf16.msra.mxu0 0
  %1750 = vmatpush.bf16.msra.mxu0 %v1735
  %1751 = vmatpush.bf16.msra.mxu0 %v1734
  %1752 = vmatpush.bf16.msra.mxu0 %v1733
  %1753 = vmatpush.bf16.msra.mxu0 %v1732
  %1754 = vmatmul.bf16.gmra.mxu0 %v1741
  %v1755 = vpop.f32.mrf.mxu0
  %v1756 = vadd.f32 %v1478, %v1755
  %v1757 = vpop.f32.mrf.mxu0
  %v1758 = vadd.f32 %v1480, %v1757
  %1759 = vmatmul.bf16.gmra.mxu0 %v1744
  %v1760 = vpop.f32.mrf.mxu0
  %v1761 = vadd.f32 %v1483, %v1760
  %v1762 = vpop.f32.mrf.mxu0
  %v1763 = vadd.f32 %v1485, %v1762
  %1764 = vdwg.mxu0
  %v1769 = vrot.slane %v1756, 4
  %v1770 = vrot.slane %v1758, 4
  %v1771 = vrot.slane %v1761, 4
  %v1772 = vrot.slane %v1763, 4
  %v1785 = vrot.slane %v1373, 2
  %v1786 = vrot.slane %v1374, 2
  %v1787 = vrot.slane %v1375, 2
  %v1788 = vrot.slane %v1376, 2
  %v1789 = vrot.slane %v1377, 2
  %v1790 = vrot.slane %v1378, 2
  %v1791 = vrot.slane %v1379, 2
  %v1792 = vrot.slane %v1380, 2
  %v1795 = vsel %vm520, %v1373, %v1785
  %v1797 = vsel %vm524, %v1373, %v1785
  %v1799 = vrot.slane %v1797, 2
  %v1802 = vsel %vm520, %v1374, %v1786
  %v1804 = vsel %vm524, %v1374, %v1786
  %v1806 = vrot.slane %v1804, 2
  %v1809 = vsel %vm520, %v1375, %v1787
  %v1811 = vsel %vm524, %v1375, %v1787
  %v1813 = vrot.slane %v1811, 2
  %v1816 = vsel %vm520, %v1376, %v1788
  %v1818 = vsel %vm524, %v1376, %v1788
  %v1820 = vrot.slane %v1818, 2
  %v1823 = vsel %vm520, %v1377, %v1789
  %v1825 = vsel %vm524, %v1377, %v1789
  %v1827 = vrot.slane %v1825, 2
  %v1830 = vsel %vm520, %v1378, %v1790
  %v1832 = vsel %vm524, %v1378, %v1790
  %v1834 = vrot.slane %v1832, 2
  %v1837 = vsel %vm520, %v1379, %v1791
  %v1839 = vsel %vm524, %v1379, %v1791
  %v1841 = vrot.slane %v1839, 2
  %v1844 = vsel %vm520, %v1380, %v1792
  %v1846 = vsel %vm524, %v1380, %v1792
  %v1848 = vrot.slane %v1846, 2
  %v1849 = vrot.slane %v1795, 7
  %v1850 = vrot.slane %v1849, 2
  %v1851 = vrot.slane %v1799, 7
  %v1852 = vsel %vm1580, %v1850, %v1851
  %v1853 = vrot.slane %v1802, 7
  %v1854 = vrot.slane %v1853, 2
  %v1855 = vrot.slane %v1806, 7
  %v1856 = vsel %vm1580, %v1854, %v1855
  %v1857 = vrot.slane %v1809, 7
  %v1858 = vrot.slane %v1857, 2
  %v1859 = vrot.slane %v1813, 7
  %v1860 = vsel %vm1580, %v1858, %v1859
  %v1861 = vrot.slane %v1816, 7
  %v1862 = vrot.slane %v1861, 2
  %v1863 = vrot.slane %v1820, 7
  %v1864 = vsel %vm1580, %v1862, %v1863
  %v1865 = vrot.slane %v1823, 7
  %v1866 = vrot.slane %v1865, 2
  %v1867 = vrot.slane %v1827, 7
  %v1868 = vsel %vm1580, %v1866, %v1867
  %v1869 = vrot.slane %v1830, 7
  %v1870 = vrot.slane %v1869, 2
  %v1871 = vrot.slane %v1834, 7
  %v1872 = vsel %vm1580, %v1870, %v1871
  %v1873 = vrot.slane %v1837, 7
  %v1874 = vrot.slane %v1873, 2
  %v1875 = vrot.slane %v1841, 7
  %v1876 = vsel %vm1580, %v1874, %v1875
  %v1877 = vrot.slane %v1844, 7
  %v1878 = vrot.slane %v1877, 2
  %v1879 = vrot.slane %v1848, 7
  %v1880 = vsel %vm1580, %v1878, %v1879
  %1882 = vst [vmem:[#allocation1] ss:$4 sm:$0xff] %v1852
  %s1884 = scalar_lea.vmem [#allocation1], 1
  %1885 = vst [vmem:[%s1884] ss:$4 sm:$0xff] %v1856
  %s1887 = scalar_lea.vmem [#allocation1], 2
  %1888 = vst [vmem:[%s1887] ss:$4 sm:$0xff] %v1860
  %s1890 = scalar_lea.vmem [#allocation1], 3
  %1891 = vst [vmem:[%s1890] ss:$4 sm:$0xff] %v1864
  %s1893 = scalar_lea.vmem [#allocation1], 32
  %1894 = vst [vmem:[%s1893] ss:$4 sm:$0xff] %v1868
  %s1896 = scalar_lea.vmem [#allocation1], 33
  %1897 = vst [vmem:[%s1896] ss:$4 sm:$0xff] %v1872
  %s1899 = scalar_lea.vmem [#allocation1], 34
  %1900 = vst [vmem:[%s1899] ss:$4 sm:$0xff] %v1876
  %s1902 = scalar_lea.vmem [#allocation1], 35
  %1903 = vst [vmem:[%s1902] ss:$4 sm:$0xff] %v1880
  %v1904 = vld.sshfl [vmem:[#allocation1] sm:$0xff pattern:$0x73625140]
  %v1905 = vld.sshfl [vmem:[#allocation1 + $0x20] sm:$0xff pattern:$0x73625140]
  %v1914 = vunpack.c.l.b16 %v1382
  %v1915 = vunpack.c.l.b16 %v1383
  %v1916 = vunpack.c.l.b16 %v1384
  %v1917 = vunpack.c.l.b16 %v1385
  %v1918 = vunpack.c.l.b16 %v1386
  %v1919 = vunpack.c.l.b16 %v1387
  %v1920 = vunpack.c.l.b16 %v1388
  %v1921 = vunpack.c.l.b16 %v1389
  %v1922 = vpack.c.b16 %v1915, %v1914
  %v1923 = vpack.c.b16 %v1917, %v1916
  %v1924 = vpack.c.b16 %v1919, %v1918
  %v1925 = vpack.c.b16 %v1921, %v1920
  %v1930 = vsel %vm282, %v1904, 0
  %v1932 = vsel %vm282, %v1905, 0
  %1934 = vmatpush.bf16.msra.mxu0 0
  %1935 = vmatpush.bf16.msra.mxu0 0
  %1936 = vmatpush.bf16.msra.mxu0 0
  %1937 = vmatpush.bf16.msra.mxu0 0
  %1938 = vmatpush.bf16.msra.mxu0 %v1925
  %1939 = vmatpush.bf16.msra.mxu0 %v1924
  %1940 = vmatpush.bf16.msra.mxu0 %v1923
  %1941 = vmatpush.bf16.msra.mxu0 %v1922
  %1942 = vmatmul.bf16.gmra.mxu0 %v1930
  %v1943 = vpop.f32.mrf.mxu0
  %v1944 = vadd.f32 %v1676, %v1943
  %v1945 = vpop.f32.mrf.mxu0
  %v1946 = vadd.f32 %v1678, %v1945
  %1947 = vmatmul.bf16.gmra.mxu0 %v1932
  %v1948 = vpop.f32.mrf.mxu0
  %v1949 = vadd.f32 %v1681, %v1948
  %v1950 = vpop.f32.mrf.mxu0
  %v1951 = vadd.f32 %v1683, %v1950
  %1952 = vdwg.mxu0
  %v1957 = vrot.slane %v1944, 4
  %v1958 = vrot.slane %v1946, 4
  %v1959 = vrot.slane %v1949, 4
  %v1960 = vrot.slane %v1951, 4
  %v1965 = vld [vmem:[%s1049] sm:$0x3]
  %v1966 = vld [vmem:[%s1049 + $0x4] sm:$0x3]
  %v1967 = vld [vmem:[%s1049 + $0x8] sm:$0x3]
  %v1968 = vld [vmem:[%s1049 + $0xc] sm:$0x3]
  %v1969 = vld [vmem:[%s1049 + $0x10] sm:$0x3]
  %v1970 = vld [vmem:[%s1049 + $0x14] sm:$0x3]
  %v1971 = vld [vmem:[%s1049 + $0x18] sm:$0x3]
  %v1972 = vld [vmem:[%s1049 + $0x1c] sm:$0x3]
  %s1973 = scalar_lea.vmem %s5, 128
  %v1974 = vld [vmem:[%s1973] sm:$0xf]
  %v1975 = vld [vmem:[%s1973 + $0x4] sm:$0xf]
  %v1976 = vld [vmem:[%s1973 + $0x8] sm:$0xf]
  %v1977 = vld [vmem:[%s1973 + $0xc] sm:$0xf]
  %v1978 = vld [vmem:[%s1973 + $0x10] sm:$0xf]
  %v1979 = vld [vmem:[%s1973 + $0x14] sm:$0xf]
  %v1980 = vld [vmem:[%s1973 + $0x18] sm:$0xf]
  %v1981 = vld [vmem:[%s1973 + $0x1c] sm:$0xf]
  %1983 = vst [vmem:[#allocation1] ss:$4 sm:$0xff] %v1965
  %s1985 = scalar_lea.vmem [#allocation1], 1
  %1986 = vst [vmem:[%s1985] ss:$4 sm:$0xff] %v1966
  %s1988 = scalar_lea.vmem [#allocation1], 2
  %1989 = vst [vmem:[%s1988] ss:$4 sm:$0xff] %v1967
  %s1991 = scalar_lea.vmem [#allocation1], 3
  %1992 = vst [vmem:[%s1991] ss:$4 sm:$0xff] %v1968
  %s1994 = scalar_lea.vmem [#allocation1], 32
  %1995 = vst [vmem:[%s1994] ss:$4 sm:$0xff] %v1969
  %s1997 = scalar_lea.vmem [#allocation1], 33
  %1998 = vst [vmem:[%s1997] ss:$4 sm:$0xff] %v1970
  %s2000 = scalar_lea.vmem [#allocation1], 34
  %2001 = vst [vmem:[%s2000] ss:$4 sm:$0xff] %v1971
  %s2003 = scalar_lea.vmem [#allocation1], 35
  %2004 = vst [vmem:[%s2003] ss:$4 sm:$0xff] %v1972
  %v2005 = vld.sshfl [vmem:[#allocation1] sm:$0xff pattern:$0x73625140]
  %v2007 = vld.sshfl [vmem:[#allocation1 + $0x20] sm:$0xff pattern:$0x73625140]
  %2009 = vrot.lane.b32.xlu0 %v2005, 64
  %v2010 = vpop.permute.xlu0 %2009
  %2011 = vrot.lane.b32.xlu0 %v2007, 64
  %v2012 = vpop.permute.xlu0 %2011
  %v2021 = vunpack.c.l.b16 %v1974
  %v2022 = vunpack.c.l.b16 %v1975
  %v2023 = vunpack.c.l.b16 %v1976
  %v2024 = vunpack.c.l.b16 %v1977
  %v2025 = vunpack.c.l.b16 %v1978
  %v2026 = vunpack.c.l.b16 %v1979
  %v2027 = vunpack.c.l.b16 %v1980
  %v2028 = vunpack.c.l.b16 %v1981
  %v2029 = vpack.c.b16 %v2022, %v2021
  %v2030 = vpack.c.b16 %v2024, %v2023
  %v2031 = vpack.c.b16 %v2026, %v2025
  %v2032 = vpack.c.b16 %v2028, %v2027
  %v2038 = vsel %vm282, %v2010, 0
  %v2041 = vsel %vm282, %v2012, 0
  %2043 = vmatpush.bf16.msra.mxu0 0
  %2044 = vmatpush.bf16.msra.mxu0 0
  %2045 = vmatpush.bf16.msra.mxu0 0
  %2046 = vmatpush.bf16.msra.mxu0 0
  %2047 = vmatpush.bf16.msra.mxu0 %v2032
  %2048 = vmatpush.bf16.msra.mxu0 %v2031
  %2049 = vmatpush.bf16.msra.mxu0 %v2030
  %2050 = vmatpush.bf16.msra.mxu0 %v2029
  %2051 = vmatmul.bf16.gmra.mxu0 %v2038
  %v2052 = vpop.f32.mrf.mxu0
  %v2053 = vadd.f32 0.0, %v2052
  %v2054 = vpop.f32.mrf.mxu0
  %v2055 = vadd.f32 0.0, %v2054
  %2056 = vmatmul.bf16.gmra.mxu0 %v2041
  %v2057 = vpop.f32.mrf.mxu0
  %v2058 = vadd.f32 0.0, %v2057
  %v2059 = vpop.f32.mrf.mxu0
  %v2060 = vadd.f32 0.0, %v2059
  %2061 = vdwg.mxu0
  %v2066 = vrot.slane %v2053, 4
  %v2067 = vrot.slane %v2055, 4
  %v2068 = vrot.slane %v2058, 4
  %v2069 = vrot.slane %v2060, 4
  %v2074 = vld [vmem:[%s1049] sm:$0x6]
  %v2075 = vld [vmem:[%s1049 + $0x4] sm:$0x6]
  %v2076 = vld [vmem:[%s1049 + $0x8] sm:$0x6]
  %v2077 = vld [vmem:[%s1049 + $0xc] sm:$0x6]
  %v2078 = vld [vmem:[%s1049 + $0x10] sm:$0x6]
  %v2079 = vld [vmem:[%s1049 + $0x14] sm:$0x6]
  %v2080 = vld [vmem:[%s1049 + $0x18] sm:$0x6]
  %v2081 = vld [vmem:[%s1049 + $0x1c] sm:$0x6]
  %s2082 = scalar_lea.vmem %s5, 160
  %v2083 = vld [vmem:[%s2082] sm:$0xf]
  %v2084 = vld [vmem:[%s2082 + $0x4] sm:$0xf]
  %v2085 = vld [vmem:[%s2082 + $0x8] sm:$0xf]
  %v2086 = vld [vmem:[%s2082 + $0xc] sm:$0xf]
  %v2087 = vld [vmem:[%s2082 + $0x10] sm:$0xf]
  %v2088 = vld [vmem:[%s2082 + $0x14] sm:$0xf]
  %v2089 = vld [vmem:[%s2082 + $0x18] sm:$0xf]
  %v2090 = vld [vmem:[%s2082 + $0x1c] sm:$0xf]
  %v2099 = vrot.slane %v2074, 2
  %v2100 = vrot.slane %v2075, 2
  %v2101 = vrot.slane %v2076, 2
  %v2102 = vrot.slane %v2077, 2
  %v2103 = vrot.slane %v2078, 2
  %v2104 = vrot.slane %v2079, 2
  %v2105 = vrot.slane %v2080, 2
  %v2106 = vrot.slane %v2081, 2
  %v2109 = vsel %vm520, %v2074, %v2099
  %v2111 = vsel %vm524, %v2074, %v2099
  %v2113 = vrot.slane %v2111, 2
  %v2116 = vsel %vm520, %v2075, %v2100
  %v2118 = vsel %vm524, %v2075, %v2100
  %v2120 = vrot.slane %v2118, 2
  %v2123 = vsel %vm520, %v2076, %v2101
  %v2125 = vsel %vm524, %v2076, %v2101
  %v2127 = vrot.slane %v2125, 2
  %v2130 = vsel %vm520, %v2077, %v2102
  %v2132 = vsel %vm524, %v2077, %v2102
  %v2134 = vrot.slane %v2132, 2
  %v2137 = vsel %vm520, %v2078, %v2103
  %v2139 = vsel %vm524, %v2078, %v2103
  %v2141 = vrot.slane %v2139, 2
  %v2144 = vsel %vm520, %v2079, %v2104
  %v2146 = vsel %vm524, %v2079, %v2104
  %v2148 = vrot.slane %v2146, 2
  %v2151 = vsel %vm520, %v2080, %v2105
  %v2153 = vsel %vm524, %v2080, %v2105
  %v2155 = vrot.slane %v2153, 2
  %v2158 = vsel %vm520, %v2081, %v2106
  %v2160 = vsel %vm524, %v2081, %v2106
  %v2162 = vrot.slane %v2160, 2
  %v2163 = vrot.slane %v2109, 7
  %v2164 = vrot.slane %v2163, 2
  %v2165 = vrot.slane %v2113, 7
  %v2166 = vsel %vm1580, %v2164, %v2165
  %v2167 = vrot.slane %v2116, 7
  %v2168 = vrot.slane %v2167, 2
  %v2169 = vrot.slane %v2120, 7
  %v2170 = vsel %vm1580, %v2168, %v2169
  %v2171 = vrot.slane %v2123, 7
  %v2172 = vrot.slane %v2171, 2
  %v2173 = vrot.slane %v2127, 7
  %v2174 = vsel %vm1580, %v2172, %v2173
  %v2175 = vrot.slane %v2130, 7
  %v2176 = vrot.slane %v2175, 2
  %v2177 = vrot.slane %v2134, 7
  %v2178 = vsel %vm1580, %v2176, %v2177
  %v2179 = vrot.slane %v2137, 7
  %v2180 = vrot.slane %v2179, 2
  %v2181 = vrot.slane %v2141, 7
  %v2182 = vsel %vm1580, %v2180, %v2181
  %v2183 = vrot.slane %v2144, 7
  %v2184 = vrot.slane %v2183, 2
  %v2185 = vrot.slane %v2148, 7
  %v2186 = vsel %vm1580, %v2184, %v2185
  %v2187 = vrot.slane %v2151, 7
  %v2188 = vrot.slane %v2187, 2
  %v2189 = vrot.slane %v2155, 7
  %v2190 = vsel %vm1580, %v2188, %v2189
  %v2191 = vrot.slane %v2158, 7
  %v2192 = vrot.slane %v2191, 2
  %v2193 = vrot.slane %v2162, 7
  %v2194 = vsel %vm1580, %v2192, %v2193
  %2196 = vst [vmem:[#allocation1] ss:$4 sm:$0xff] %v2166
  %s2198 = scalar_lea.vmem [#allocation1], 1
  %2199 = vst [vmem:[%s2198] ss:$4 sm:$0xff] %v2170
  %s2201 = scalar_lea.vmem [#allocation1], 2
  %2202 = vst [vmem:[%s2201] ss:$4 sm:$0xff] %v2174
  %s2204 = scalar_lea.vmem [#allocation1], 3
  %2205 = vst [vmem:[%s2204] ss:$4 sm:$0xff] %v2178
  %s2207 = scalar_lea.vmem [#allocation1], 32
  %2208 = vst [vmem:[%s2207] ss:$4 sm:$0xff] %v2182
  %s2210 = scalar_lea.vmem [#allocation1], 33
  %2211 = vst [vmem:[%s2210] ss:$4 sm:$0xff] %v2186
  %s2213 = scalar_lea.vmem [#allocation1], 34
  %2214 = vst [vmem:[%s2213] ss:$4 sm:$0xff] %v2190
  %s2216 = scalar_lea.vmem [#allocation1], 35
  %2217 = vst [vmem:[%s2216] ss:$4 sm:$0xff] %v2194
  %v2218 = vld.sshfl [vmem:[#allocation1] sm:$0xff pattern:$0x73625140]
  %v2219 = vld.sshfl [vmem:[#allocation1 + $0x20] sm:$0xff pattern:$0x73625140]
  %v2228 = vunpack.c.l.b16 %v2083
  %v2229 = vunpack.c.l.b16 %v2084
  %v2230 = vunpack.c.l.b16 %v2085
  %v2231 = vunpack.c.l.b16 %v2086
  %v2232 = vunpack.c.l.b16 %v2087
  %v2233 = vunpack.c.l.b16 %v2088
  %v2234 = vunpack.c.l.b16 %v2089
  %v2235 = vunpack.c.l.b16 %v2090
  %v2236 = vpack.c.b16 %v2229, %v2228
  %v2237 = vpack.c.b16 %v2231, %v2230
  %v2238 = vpack.c.b16 %v2233, %v2232
  %v2239 = vpack.c.b16 %v2235, %v2234
  %v2244 = vsel %vm282, %v2218, 0
  %v2246 = vsel %vm282, %v2219, 0
  %2248 = vmatpush.bf16.msra.mxu0 0
  %2249 = vmatpush.bf16.msra.mxu0 0
  %2250 = vmatpush.bf16.msra.mxu0 0
  %2251 = vmatpush.bf16.msra.mxu0 0
  %2252 = vmatpush.bf16.msra.mxu0 %v2239
  %2253 = vmatpush.bf16.msra.mxu0 %v2238
  %2254 = vmatpush.bf16.msra.mxu0 %v2237
  %2255 = vmatpush.bf16.msra.mxu0 %v2236
  %2256 = vmatmul.bf16.gmra.mxu0 %v2244
  %v2257 = vpop.f32.mrf.mxu0
  %v2258 = vadd.f32 0.0, %v2257
  %v2259 = vpop.f32.mrf.mxu0
  %v2260 = vadd.f32 0.0, %v2259
  %2261 = vmatmul.bf16.gmra.mxu0 %v2246
  %v2262 = vpop.f32.mrf.mxu0
  %v2263 = vadd.f32 0.0, %v2262
  %v2264 = vpop.f32.mrf.mxu0
  %v2265 = vadd.f32 0.0, %v2264
  %2266 = vdwg.mxu0
  %v2271 = vrot.slane %v2258, 4
  %v2272 = vrot.slane %v2260, 4
  %v2273 = vrot.slane %v2263, 4
  %v2274 = vrot.slane %v2265, 4
  %v2279 = vadd.f32 %v1756, %v2053
  %v2280 = vadd.f32 %v1769, %v2066
  %v2281 = vadd.f32 %v1758, %v2055
  %v2282 = vadd.f32 %v1770, %v2067
  %v2283 = vadd.f32 %v1761, %v2058
  %v2284 = vadd.f32 %v1771, %v2068
  %v2285 = vadd.f32 %v1763, %v2060
  %v2286 = vadd.f32 %v1772, %v2069
  %v2287 = vadd.f32 %v1944, %v2258
  %v2288 = vadd.f32 %v1957, %v2271
  %v2289 = vadd.f32 %v1946, %v2260
  %v2290 = vadd.f32 %v1958, %v2272
  %v2291 = vadd.f32 %v1949, %v2263
  %v2292 = vadd.f32 %v1959, %v2273
  %v2293 = vadd.f32 %v1951, %v2265
  %v2294 = vadd.f32 %v1960, %v2274
  %2303 = vst [vmem:[#allocation1] ss:$2 sm:$0xff] %v2287
  %v2304 = vld.sshfl [vmem:[#allocation1] sm:$0xff pattern:$0x75316420]
  %s2305 = scalar_lea.vmem [#allocation1], 16
  %2306 = vst [vmem:[%s2305] ss:$2 sm:$0xff] %v2288
  %v2307 = vld.sshfl [vmem:[#allocation1 + $0x10] sm:$0xff pattern:$0x75316420]
  %s2308 = scalar_lea.vmem [#allocation1], 32
  %2309 = vst [vmem:[%s2308] ss:$2 sm:$0xff] %v2289
  %v2310 = vld.sshfl [vmem:[#allocation1 + $0x20] sm:$0xff pattern:$0x75316420]
  %s2311 = scalar_lea.vmem [#allocation1], 48
  %2312 = vst [vmem:[%s2311] ss:$2 sm:$0xff] %v2290
  %v2313 = vld.sshfl [vmem:[#allocation1 + $0x30] sm:$0xff pattern:$0x75316420]
  %2314 = vst [vmem:[#allocation1] ss:$2 sm:$0xff] %v2291
  %v2315 = vld.sshfl [vmem:[#allocation1] sm:$0xff pattern:$0x75316420]
  %2316 = vst [vmem:[%s2305] ss:$2 sm:$0xff] %v2292
  %v2317 = vld.sshfl [vmem:[#allocation1 + $0x10] sm:$0xff pattern:$0x75316420]
  %2318 = vst [vmem:[%s2308] ss:$2 sm:$0xff] %v2293
  %v2319 = vld.sshfl [vmem:[#allocation1 + $0x20] sm:$0xff pattern:$0x75316420]
  %2320 = vst [vmem:[%s2311] ss:$2 sm:$0xff] %v2294
  %v2321 = vld.sshfl [vmem:[#allocation1 + $0x30] sm:$0xff pattern:$0x75316420]
  %2322 = vrot.lane.b32.xlu0 %v2304, 64
  %v2323 = vpop.permute.xlu0 %2322
  %2324 = vrot.lane.b32.xlu0 %v2307, 64
  %v2325 = vpop.permute.xlu0 %2324
  %2326 = vrot.lane.b32.xlu0 %v2310, 64
  %v2327 = vpop.permute.xlu0 %2326
  %2328 = vrot.lane.b32.xlu0 %v2313, 64
  %v2329 = vpop.permute.xlu0 %2328
  %2330 = vrot.lane.b32.xlu0 %v2315, 64
  %v2331 = vpop.permute.xlu0 %2330
  %2332 = vrot.lane.b32.xlu0 %v2317, 64
  %v2333 = vpop.permute.xlu0 %2332
  %2334 = vrot.lane.b32.xlu0 %v2319, 64
  %v2335 = vpop.permute.xlu0 %2334
  %2336 = vrot.lane.b32.xlu0 %v2321, 64
  %v2337 = vpop.permute.xlu0 %2336
  %v2346 = vsel %vm282, %v2279, %v2323
  %v2347 = vsel %vm282, %v2280, %v2325
  %v2348 = vsel %vm282, %v2281, %v2327
  %v2349 = vsel %vm282, %v2282, %v2329
  %v2350 = vsel %vm282, %v2283, %v2331
  %v2351 = vsel %vm282, %v2284, %v2333
  %v2352 = vsel %vm282, %v2285, %v2335
  %v2353 = vsel %vm282, %v2286, %v2337
  %v2354 = vadd.f32 %v1349, %v2346
  %v2355 = vadd.f32 %v1350, %v2347
  %v2356 = vadd.f32 %v1351, %v2348
  %v2357 = vadd.f32 %v1352, %v2349
  %v2358 = vadd.f32 %v1353, %v2350
  %v2359 = vadd.f32 %v1354, %v2351
  %v2360 = vadd.f32 %v1355, %v2352
  %v2361 = vadd.f32 %v1356, %v2353
  %v2363 = vperm.slane %v101, 0
  %v2365 = vadd.f32 %v2354, %v2363
  %v2366 = vadd.f32 %v2355, %v2363
  %v2367 = vadd.f32 %v2356, %v2363
  %v2368 = vadd.f32 %v2357, %v2363
  %v2369 = vadd.f32 %v2358, %v2363
  %v2370 = vadd.f32 %v2359, %v2363
  %v2371 = vadd.f32 %v2360, %v2363
  %v2372 = vadd.f32 %v2361, %v2363
  %2373 = vst [vmem:[%s7] sm:$0xf] %v2365
  %2374 = vst [vmem:[%s7 + $0x4] sm:$0xf] %v2366
  %2375 = vst [vmem:[%s7 + $0x8] sm:$0xf] %v2367
  %2376 = vst [vmem:[%s7 + $0xc] sm:$0xf] %v2368
  %2377 = vst [vmem:[%s7 + $0x10] sm:$0xf] %v2369
  %2378 = vst [vmem:[%s7 + $0x14] sm:$0xf] %v2370
  %2379 = vst [vmem:[%s7 + $0x18] sm:$0xf] %v2371
  %2380 = vst [vmem:[%s7 + $0x1c] sm:$0xf] %v2372
  %s2381 = scalar_lea.vmem %s0, 16
  %v2382 = vld [vmem:[%s2381] sm:$0x3]
  %v2383 = vld [vmem:[%s2381 + $0x2] sm:$0x3]
  %v2384 = vld [vmem:[%s2381 + $0x4] sm:$0x3]
  %v2385 = vld [vmem:[%s2381 + $0x6] sm:$0x3]
  %v2386 = vld [vmem:[%s2381 + $0x8] sm:$0x3]
  %v2387 = vld [vmem:[%s2381 + $0xa] sm:$0x3]
  %v2388 = vld [vmem:[%s2381 + $0xc] sm:$0x3]
  %v2389 = vld [vmem:[%s2381 + $0xe] sm:$0x3]
  %2391 = vst [vmem:[#allocation1] ss:$4 sm:$0xff] %v2382
  %s2393 = scalar_lea.vmem [#allocation1], 1
  %2394 = vst [vmem:[%s2393] ss:$4 sm:$0xff] %v2383
  %s2396 = scalar_lea.vmem [#allocation1], 2
  %2397 = vst [vmem:[%s2396] ss:$4 sm:$0xff] %v2384
  %s2399 = scalar_lea.vmem [#allocation1], 3
  %2400 = vst [vmem:[%s2399] ss:$4 sm:$0xff] %v2385
  %s2402 = scalar_lea.vmem [#allocation1], 32
  %2403 = vst [vmem:[%s2402] ss:$4 sm:$0xff] %v2386
  %s2405 = scalar_lea.vmem [#allocation1], 33
  %2406 = vst [vmem:[%s2405] ss:$4 sm:$0xff] %v2387
  %s2408 = scalar_lea.vmem [#allocation1], 34
  %2409 = vst [vmem:[%s2408] ss:$4 sm:$0xff] %v2388
  %s2411 = scalar_lea.vmem [#allocation1], 35
  %2412 = vst [vmem:[%s2411] ss:$4 sm:$0xff] %v2389
  %v2413 = vld.sshfl [vmem:[#allocation1] sm:$0xff pattern:$0x73625140]
  %v2414 = vld.sshfl [vmem:[#allocation1 + $0x20] sm:$0xff pattern:$0x73625140]
  %v2415 = vsel %vm147, %v2413, 0
  %v2417 = vsel %vm147, %v2414, 0
  %2419 = vmatpush.bf16.msra.mxu0 0
  %2420 = vmatpush.bf16.msra.mxu0 0
  %2421 = vmatpush.bf16.msra.mxu0 0
  %2422 = vmatpush.bf16.msra.mxu0 0
  %2423 = vmatpush.bf16.msra.mxu0 0
  %2424 = vmatpush.bf16.msra.mxu0 0
  %2425 = vmatpush.bf16.msra.mxu0 %v144
  %2426 = vmatpush.bf16.msra.mxu0 %v143
  %2427 = vmatmul.bf16.gmra.mxu0 %v2415
  %v2428 = vpop.f32.mrf.mxu0
  %v2429 = vadd.f32 0.0, %v2428
  %v2430 = vpop.f32.mrf.mxu0
  %v2431 = vadd.f32 0.0, %v2430
  %2432 = vmatmul.bf16.gmra.mxu0 %v2417
  %v2433 = vpop.f32.mrf.mxu0
  %v2434 = vadd.f32 0.0, %v2433
  %v2435 = vpop.f32.mrf.mxu0
  %v2436 = vadd.f32 0.0, %v2435
  %2437 = vdwg.mxu0
  %v2442 = vrot.slane %v2429, 4
  %v2443 = vrot.slane %v2431, 4
  %v2444 = vrot.slane %v2434, 4
  %v2445 = vrot.slane %v2436, 4
  %2450 = vst [vmem:[#allocation1] ss:$4 sm:$0xff] %v2382
  %s2451 = scalar_lea.vmem [#allocation1], 1
  %2452 = vst [vmem:[%s2451] ss:$4 sm:$0xff] %v2383
  %s2453 = scalar_lea.vmem [#allocation1], 2
  %2454 = vst [vmem:[%s2453] ss:$4 sm:$0xff] %v2384
  %s2455 = scalar_lea.vmem [#allocation1], 3
  %2456 = vst [vmem:[%s2455] ss:$4 sm:$0xff] %v2385
  %s2457 = scalar_lea.vmem [#allocation1], 32
  %2458 = vst [vmem:[%s2457] ss:$4 sm:$0xff] %v2386
  %s2459 = scalar_lea.vmem [#allocation1], 33
  %2460 = vst [vmem:[%s2459] ss:$4 sm:$0xff] %v2387
  %s2461 = scalar_lea.vmem [#allocation1], 34
  %2462 = vst [vmem:[%s2461] ss:$4 sm:$0xff] %v2388
  %s2463 = scalar_lea.vmem [#allocation1], 35
  %2464 = vst [vmem:[%s2463] ss:$4 sm:$0xff] %v2389
  %v2465 = vld.sshfl [vmem:[#allocation1] sm:$0xff pattern:$0x73625140]
  %v2467 = vld.sshfl [vmem:[#allocation1 + $0x20] sm:$0xff pattern:$0x73625140]
  %2469 = vrot.lane.b32.xlu0 %v2465, 96
  %v2470 = vpop.permute.xlu0 %2469
  %2471 = vrot.lane.b32.xlu0 %v2467, 96
  %v2472 = vpop.permute.xlu0 %2471
  %v2474 = vsel %vm147, %v2470, 0
  %v2477 = vsel %vm147, %v2472, 0
  %2479 = vmatpush.bf16.msra.mxu0 0
  %2480 = vmatpush.bf16.msra.mxu0 0
  %2481 = vmatpush.bf16.msra.mxu0 0
  %2482 = vmatpush.bf16.msra.mxu0 0
  %2483 = vmatpush.bf16.msra.mxu0 0
  %2484 = vmatpush.bf16.msra.mxu0 0
  %2485 = vmatpush.bf16.msra.mxu0 %v144
  %2486 = vmatpush.bf16.msra.mxu0 %v143
  %2487 = vmatmul.bf16.gmra.mxu0 %v2474
  %v2488 = vpop.f32.mrf.mxu0
  %v2489 = vadd.f32 0.0, %v2488
  %v2490 = vpop.f32.mrf.mxu0
  %v2491 = vadd.f32 0.0, %v2490
  %2492 = vmatmul.bf16.gmra.mxu0 %v2477
  %v2493 = vpop.f32.mrf.mxu0
  %v2494 = vadd.f32 0.0, %v2493
  %v2495 = vpop.f32.mrf.mxu0
  %v2496 = vadd.f32 0.0, %v2495
  %2497 = vdwg.mxu0
  %v2502 = vrot.slane %v2489, 4
  %v2503 = vrot.slane %v2491, 4
  %v2504 = vrot.slane %v2494, 4
  %v2505 = vrot.slane %v2496, 4
  %2506 = vst [vmem:[#allocation1] ss:$2 sm:$0xff] %v2489
  %v2507 = vld.sshfl [vmem:[#allocation1] sm:$0xff pattern:$0x75316420]
  %s2508 = scalar_lea.vmem [#allocation1], 16
  %2509 = vst [vmem:[%s2508] ss:$2 sm:$0xff] %v2502
  %v2510 = vld.sshfl [vmem:[#allocation1 + $0x10] sm:$0xff pattern:$0x75316420]
  %s2511 = scalar_lea.vmem [#allocation1], 32
  %2512 = vst [vmem:[%s2511] ss:$2 sm:$0xff] %v2491
  %v2513 = vld.sshfl [vmem:[#allocation1 + $0x20] sm:$0xff pattern:$0x75316420]
  %s2514 = scalar_lea.vmem [#allocation1], 48
  %2515 = vst [vmem:[%s2514] ss:$2 sm:$0xff] %v2503
  %v2516 = vld.sshfl [vmem:[#allocation1 + $0x30] sm:$0xff pattern:$0x75316420]
  %2517 = vst [vmem:[#allocation1] ss:$2 sm:$0xff] %v2494
  %v2518 = vld.sshfl [vmem:[#allocation1] sm:$0xff pattern:$0x75316420]
  %2519 = vst [vmem:[%s2508] ss:$2 sm:$0xff] %v2504
  %v2520 = vld.sshfl [vmem:[#allocation1 + $0x10] sm:$0xff pattern:$0x75316420]
  %2521 = vst [vmem:[%s2511] ss:$2 sm:$0xff] %v2496
  %v2522 = vld.sshfl [vmem:[#allocation1 + $0x20] sm:$0xff pattern:$0x75316420]
  %2523 = vst [vmem:[%s2514] ss:$2 sm:$0xff] %v2505
  %v2524 = vld.sshfl [vmem:[#allocation1 + $0x30] sm:$0xff pattern:$0x75316420]
  %2525 = vrot.lane.b32.xlu0 %v2507, 64
  %v2526 = vpop.permute.xlu0 %2525
  %2527 = vrot.lane.b32.xlu0 %v2510, 64
  %v2528 = vpop.permute.xlu0 %2527
  %2529 = vrot.lane.b32.xlu0 %v2513, 64
  %v2530 = vpop.permute.xlu0 %2529
  %2531 = vrot.lane.b32.xlu0 %v2516, 64
  %v2532 = vpop.permute.xlu0 %2531
  %2533 = vrot.lane.b32.xlu0 %v2518, 64
  %v2534 = vpop.permute.xlu0 %2533
  %2535 = vrot.lane.b32.xlu0 %v2520, 64
  %v2536 = vpop.permute.xlu0 %2535
  %2537 = vrot.lane.b32.xlu0 %v2522, 64
  %v2538 = vpop.permute.xlu0 %2537
  %2539 = vrot.lane.b32.xlu0 %v2524, 64
  %v2540 = vpop.permute.xlu0 %2539
  %v2549 = vsel %vm282, %v2429, %v2526
  %v2550 = vsel %vm282, %v2442, %v2528
  %v2551 = vsel %vm282, %v2431, %v2530
  %v2552 = vsel %vm282, %v2443, %v2532
  %v2553 = vsel %vm282, %v2434, %v2534
  %v2554 = vsel %vm282, %v2444, %v2536
  %v2555 = vsel %vm282, %v2436, %v2538
  %v2556 = vsel %vm282, %v2445, %v2540
  %v2557 = vadd.f32 %v2549, %v292
  %v2558 = vadd.f32 %v2550, %v292
  %v2559 = vadd.f32 %v2551, %v292
  %v2560 = vadd.f32 %v2552, %v292
  %v2561 = vadd.f32 %v2553, %v292
  %v2562 = vadd.f32 %v2554, %v292
  %v2563 = vadd.f32 %v2555, %v292
  %v2564 = vadd.f32 %v2556, %v292
  %s2565 = scalar_lea.vmem %s1, 8
  %v2566 = vld [vmem:[%s2565] sm:$0x3]
  %v2567 = vld [vmem:[%s2565 + $0x2] sm:$0x3]
  %v2568 = vld [vmem:[%s2565 + $0x4] sm:$0x3]
  %v2569 = vld [vmem:[%s2565 + $0x6] sm:$0x3]
  %2571 = vst [vmem:[#allocation1] ss:$4 sm:$0xff] %v2566
  %v2572 = vld.sshfl [vmem:[#allocation1] sm:$0xff pattern:$0x73625140]
  %s2575 = scalar_lea.vmem [#allocation1], 32
  %2576 = vst [vmem:[%s2575] ss:$4 sm:$0xff] %v2567
  %v2577 = vld.sshfl [vmem:[#allocation1 + $0x20] sm:$0xff pattern:$0x73625140]
  %2580 = vst [vmem:[#allocation1] ss:$4 sm:$0xff] %v2568
  %v2581 = vld.sshfl [vmem:[#allocation1] sm:$0xff pattern:$0x73625140]
  %2584 = vst [vmem:[%s2575] ss:$4 sm:$0xff] %v2569
  %v2585 = vld.sshfl [vmem:[#allocation1 + $0x20] sm:$0xff pattern:$0x73625140]
  %2587 = vrot.lane.b32.xlu0 %v2572, 64
  %v2588 = vpop.permute.xlu0 %2587
  %2589 = vrot.lane.b32.xlu0 %v2577, 64
  %v2590 = vpop.permute.xlu0 %2589
  %2591 = vrot.lane.b32.xlu0 %v2581, 64
  %v2592 = vpop.permute.xlu0 %2591
  %2593 = vrot.lane.b32.xlu0 %v2585, 64
  %v2594 = vpop.permute.xlu0 %2593
  %v2596 = vsel %vm282, %v2566, %v2588
  %v2599 = vsel %vm282, %v2567, %v2590
  %v2602 = vsel %vm282, %v2568, %v2592
  %v2605 = vsel %vm282, %v2569, %v2594
  %v2607 = vunpack.c.l.bf16 %v2596
  %v2608 = vunpack.c.l.bf16 %v2599
  %v2609 = vunpack.c.l.bf16 %v2602
  %v2610 = vunpack.c.l.bf16 %v2605
  %v2611 = vadd.f32 %v2557, %v2607
  %v2612 = vadd.f32 %v2558, %v2607
  %v2613 = vadd.f32 %v2559, %v2608
  %v2614 = vadd.f32 %v2560, %v2608
  %v2615 = vadd.f32 %v2561, %v2609
  %v2616 = vadd.f32 %v2562, %v2609
  %v2617 = vadd.f32 %v2563, %v2610
  %v2618 = vadd.f32 %v2564, %v2610
  %v2619 = vpack.c.bf16 %v2611, %v2611
  %v2620 = vpack.c.bf16 %v2612, %v2612
  %v2621 = vpack.c.bf16 %v2613, %v2613
  %v2622 = vpack.c.bf16 %v2614, %v2614
  %v2623 = vpack.c.bf16 %v2615, %v2615
  %v2624 = vpack.c.bf16 %v2616, %v2616
  %v2625 = vpack.c.bf16 %v2617, %v2617
  %v2626 = vpack.c.bf16 %v2618, %v2618
  %v2628 = vshrl.u32 %v2619, 16
  %v2630 = vrot.slane %v2628, 7
  %v2631 = vshll.u32 %v2619, 16
  %v2633 = vor.u32 %v2630, %v2631
  %v2635 = vshrl.u32 %v2620, 16
  %v2637 = vrot.slane %v2635, 7
  %v2638 = vshll.u32 %v2620, 16
  %v2640 = vor.u32 %v2637, %v2638
  %v2642 = vshrl.u32 %v2621, 16
  %v2644 = vrot.slane %v2642, 7
  %v2645 = vshll.u32 %v2621, 16
  %v2647 = vor.u32 %v2644, %v2645
  %v2649 = vshrl.u32 %v2622, 16
  %v2651 = vrot.slane %v2649, 7
  %v2652 = vshll.u32 %v2622, 16
  %v2654 = vor.u32 %v2651, %v2652
  %v2656 = vshrl.u32 %v2623, 16
  %v2658 = vrot.slane %v2656, 7
  %v2659 = vshll.u32 %v2623, 16
  %v2661 = vor.u32 %v2658, %v2659
  %v2663 = vshrl.u32 %v2624, 16
  %v2665 = vrot.slane %v2663, 7
  %v2666 = vshll.u32 %v2624, 16
  %v2668 = vor.u32 %v2665, %v2666
  %v2670 = vshrl.u32 %v2625, 16
  %v2672 = vrot.slane %v2670, 7
  %v2673 = vshll.u32 %v2625, 16
  %v2675 = vor.u32 %v2672, %v2673
  %v2677 = vshrl.u32 %v2626, 16
  %v2679 = vrot.slane %v2677, 7
  %v2680 = vshll.u32 %v2626, 16
  %v2682 = vor.u32 %v2679, %v2680
  %v2691 = vld [vmem:[%s427] sm:$0x7]
  %v2692 = vsel %vm430, %v2633, %v2691
  %2693 = vst [vmem:[%s427] sm:$0x7] %v2692
  %v2694 = vld [vmem:[%s427 + $0x4] sm:$0x7]
  %v2695 = vsel %vm430, %v2640, %v2694
  %2696 = vst [vmem:[%s427 + $0x4] sm:$0x7] %v2695
  %v2697 = vld [vmem:[%s427 + $0x8] sm:$0x7]
  %v2698 = vsel %vm430, %v2647, %v2697
  %2699 = vst [vmem:[%s427 + $0x8] sm:$0x7] %v2698
  %v2700 = vld [vmem:[%s427 + $0xc] sm:$0x7]
  %v2701 = vsel %vm430, %v2654, %v2700
  %2702 = vst [vmem:[%s427 + $0xc] sm:$0x7] %v2701
  %v2703 = vld [vmem:[%s427 + $0x10] sm:$0x7]
  %v2704 = vsel %vm430, %v2661, %v2703
  %2705 = vst [vmem:[%s427 + $0x10] sm:$0x7] %v2704
  %v2706 = vld [vmem:[%s427 + $0x14] sm:$0x7]
  %v2707 = vsel %vm430, %v2668, %v2706
  %2708 = vst [vmem:[%s427 + $0x14] sm:$0x7] %v2707
  %v2709 = vld [vmem:[%s427 + $0x18] sm:$0x7]
  %v2710 = vsel %vm430, %v2675, %v2709
  %2711 = vst [vmem:[%s427 + $0x18] sm:$0x7] %v2710
  %v2712 = vld [vmem:[%s427 + $0x1c] sm:$0x7]
  %v2713 = vsel %vm430, %v2682, %v2712
  %2714 = vst [vmem:[%s427 + $0x1c] sm:$0x7] %v2713
  %v2715 = vld [vmem:[#allocation2] sm:$0x7]
  %v2716 = vld [vmem:[#allocation2 + $0x4] sm:$0x7]
  %v2717 = vld [vmem:[#allocation2 + $0x8] sm:$0x7]
  %v2718 = vld [vmem:[#allocation2 + $0xc] sm:$0x7]
  %v2719 = vld [vmem:[#allocation2 + $0x10] sm:$0x7]
  %v2720 = vld [vmem:[#allocation2 + $0x14] sm:$0x7]
  %v2721 = vld [vmem:[#allocation2 + $0x18] sm:$0x7]
  %v2722 = vld [vmem:[#allocation2 + $0x1c] sm:$0x7]
  %v2723 = vld [vmem:[%s4] sm:$0xf]
  %v2724 = vld [vmem:[%s4 + $0x4] sm:$0xf]
  %v2725 = vld [vmem:[%s4 + $0x8] sm:$0xf]
  %v2726 = vld [vmem:[%s4 + $0xc] sm:$0xf]
  %v2727 = vld [vmem:[%s4 + $0x10] sm:$0xf]
  %v2728 = vld [vmem:[%s4 + $0x14] sm:$0xf]
  %v2729 = vld [vmem:[%s4 + $0x18] sm:$0xf]
  %v2730 = vld [vmem:[%s4 + $0x1c] sm:$0xf]
  %v2731 = vld [vmem:[%s4 + $0x20] sm:$0xf]
  %v2732 = vld [vmem:[%s4 + $0x24] sm:$0xf]
  %v2733 = vld [vmem:[%s4 + $0x28] sm:$0xf]
  %v2734 = vld [vmem:[%s4 + $0x2c] sm:$0xf]
  %v2735 = vld [vmem:[%s4 + $0x30] sm:$0xf]
  %v2736 = vld [vmem:[%s4 + $0x34] sm:$0xf]
  %v2737 = vld [vmem:[%s4 + $0x38] sm:$0xf]
  %v2738 = vld [vmem:[%s4 + $0x3c] sm:$0xf]
  %v2739 = vld [vmem:[%s427] sm:$0x7]
  %v2740 = vld [vmem:[%s427 + $0x4] sm:$0x7]
  %v2741 = vld [vmem:[%s427 + $0x8] sm:$0x7]
  %v2742 = vld [vmem:[%s427 + $0xc] sm:$0x7]
  %v2743 = vld [vmem:[%s427 + $0x10] sm:$0x7]
  %v2744 = vld [vmem:[%s427 + $0x14] sm:$0x7]
  %v2745 = vld [vmem:[%s427 + $0x18] sm:$0x7]
  %v2746 = vld [vmem:[%s427 + $0x1c] sm:$0x7]
  %v2747 = vld [vmem:[%s487] sm:$0xf]
  %v2748 = vld [vmem:[%s487 + $0x4] sm:$0xf]
  %v2749 = vld [vmem:[%s487 + $0x8] sm:$0xf]
  %v2750 = vld [vmem:[%s487 + $0xc] sm:$0xf]
  %v2751 = vld [vmem:[%s487 + $0x10] sm:$0xf]
  %v2752 = vld [vmem:[%s487 + $0x14] sm:$0xf]
  %v2753 = vld [vmem:[%s487 + $0x18] sm:$0xf]
  %v2754 = vld [vmem:[%s487 + $0x1c] sm:$0xf]
  %v2755 = vld [vmem:[%s487 + $0x20] sm:$0xf]
  %v2756 = vld [vmem:[%s487 + $0x24] sm:$0xf]
  %v2757 = vld [vmem:[%s487 + $0x28] sm:$0xf]
  %v2758 = vld [vmem:[%s487 + $0x2c] sm:$0xf]
  %v2759 = vld [vmem:[%s487 + $0x30] sm:$0xf]
  %v2760 = vld [vmem:[%s487 + $0x34] sm:$0xf]
  %v2761 = vld [vmem:[%s487 + $0x38] sm:$0xf]
  %v2762 = vld [vmem:[%s487 + $0x3c] sm:$0xf]
  %v2771 = vrot.slane %v2739, 2
  %v2772 = vrot.slane %v2740, 2
  %v2773 = vrot.slane %v2741, 2
  %v2774 = vrot.slane %v2742, 2
  %v2775 = vrot.slane %v2743, 2
  %v2776 = vrot.slane %v2744, 2
  %v2777 = vrot.slane %v2745, 2
  %v2778 = vrot.slane %v2746, 2
  %v2781 = vsel %vm520, %v2739, %v2771
  %v2782 = vsel %vm524, %v2739, %v2771
  %v2784 = vrot.slane %v2782, 2
  %v2787 = vsel %vm520, %v2740, %v2772
  %v2788 = vsel %vm524, %v2740, %v2772
  %v2790 = vrot.slane %v2788, 2
  %v2793 = vsel %vm520, %v2741, %v2773
  %v2794 = vsel %vm524, %v2741, %v2773
  %v2796 = vrot.slane %v2794, 2
  %v2799 = vsel %vm520, %v2742, %v2774
  %v2800 = vsel %vm524, %v2742, %v2774
  %v2802 = vrot.slane %v2800, 2
  %v2805 = vsel %vm520, %v2743, %v2775
  %v2806 = vsel %vm524, %v2743, %v2775
  %v2808 = vrot.slane %v2806, 2
  %v2811 = vsel %vm520, %v2744, %v2776
  %v2812 = vsel %vm524, %v2744, %v2776
  %v2814 = vrot.slane %v2812, 2
  %v2817 = vsel %vm520, %v2745, %v2777
  %v2818 = vsel %vm524, %v2745, %v2777
  %v2820 = vrot.slane %v2818, 2
  %v2823 = vsel %vm520, %v2746, %v2778
  %v2824 = vsel %vm524, %v2746, %v2778
  %v2826 = vrot.slane %v2824, 2
  %v2827 = vshrl.u32 %v2781, 16
  %v2829 = vrot.slane %v2827, 6
  %v2830 = vshll.u32 %v2781, 16
  %v2832 = vrot.slane %v2830, 7
  %v2833 = vor.u32 %v2829, %v2832
  %v2834 = vrot.slane %v2833, 2
  %v2836 = vshll.u32 %v2784, 16
  %v2838 = vrot.slane %v2836, 7
  %v2839 = vsel %vm576, %v2834, %v2838
  %v2840 = vshrl.u32 %v2787, 16
  %v2842 = vrot.slane %v2840, 6
  %v2843 = vshll.u32 %v2787, 16
  %v2845 = vrot.slane %v2843, 7
  %v2846 = vor.u32 %v2842, %v2845
  %v2847 = vrot.slane %v2846, 2
  %v2849 = vshll.u32 %v2790, 16
  %v2851 = vrot.slane %v2849, 7
  %v2852 = vsel %vm576, %v2847, %v2851
  %v2853 = vshrl.u32 %v2793, 16
  %v2855 = vrot.slane %v2853, 6
  %v2856 = vshll.u32 %v2793, 16
  %v2858 = vrot.slane %v2856, 7
  %v2859 = vor.u32 %v2855, %v2858
  %v2860 = vrot.slane %v2859, 2
  %v2862 = vshll.u32 %v2796, 16
  %v2864 = vrot.slane %v2862, 7
  %v2865 = vsel %vm576, %v2860, %v2864
  %v2866 = vshrl.u32 %v2799, 16
  %v2868 = vrot.slane %v2866, 6
  %v2869 = vshll.u32 %v2799, 16
  %v2871 = vrot.slane %v2869, 7
  %v2872 = vor.u32 %v2868, %v2871
  %v2873 = vrot.slane %v2872, 2
  %v2875 = vshll.u32 %v2802, 16
  %v2877 = vrot.slane %v2875, 7
  %v2878 = vsel %vm576, %v2873, %v2877
  %v2879 = vshrl.u32 %v2805, 16
  %v2881 = vrot.slane %v2879, 6
  %v2882 = vshll.u32 %v2805, 16
  %v2884 = vrot.slane %v2882, 7
  %v2885 = vor.u32 %v2881, %v2884
  %v2886 = vrot.slane %v2885, 2
  %v2888 = vshll.u32 %v2808, 16
  %v2890 = vrot.slane %v2888, 7
  %v2891 = vsel %vm576, %v2886, %v2890
  %v2892 = vshrl.u32 %v2811, 16
  %v2894 = vrot.slane %v2892, 6
  %v2895 = vshll.u32 %v2811, 16
  %v2897 = vrot.slane %v2895, 7
  %v2898 = vor.u32 %v2894, %v2897
  %v2899 = vrot.slane %v2898, 2
  %v2901 = vshll.u32 %v2814, 16
  %v2903 = vrot.slane %v2901, 7
  %v2904 = vsel %vm576, %v2899, %v2903
  %v2905 = vshrl.u32 %v2817, 16
  %v2907 = vrot.slane %v2905, 6
  %v2908 = vshll.u32 %v2817, 16
  %v2910 = vrot.slane %v2908, 7
  %v2911 = vor.u32 %v2907, %v2910
  %v2912 = vrot.slane %v2911, 2
  %v2914 = vshll.u32 %v2820, 16
  %v2916 = vrot.slane %v2914, 7
  %v2917 = vsel %vm576, %v2912, %v2916
  %v2918 = vshrl.u32 %v2823, 16
  %v2920 = vrot.slane %v2918, 6
  %v2921 = vshll.u32 %v2823, 16
  %v2923 = vrot.slane %v2921, 7
  %v2924 = vor.u32 %v2920, %v2923
  %v2925 = vrot.slane %v2924, 2
  %v2927 = vshll.u32 %v2826, 16
  %v2929 = vrot.slane %v2927, 7
  %v2930 = vsel %vm576, %v2925, %v2929
  %2932 = vst [vmem:[#allocation1] ss:$4 sm:$0xff] %v2839
  %s2934 = scalar_lea.vmem [#allocation1], 1
  %2935 = vst [vmem:[%s2934] ss:$4 sm:$0xff] %v2852
  %s2937 = scalar_lea.vmem [#allocation1], 2
  %2938 = vst [vmem:[%s2937] ss:$4 sm:$0xff] %v2865
  %s2940 = scalar_lea.vmem [#allocation1], 3
  %2941 = vst [vmem:[%s2940] ss:$4 sm:$0xff] %v2878
  %s2943 = scalar_lea.vmem [#allocation1], 32
  %2944 = vst [vmem:[%s2943] ss:$4 sm:$0xff] %v2891
  %s2946 = scalar_lea.vmem [#allocation1], 33
  %2947 = vst [vmem:[%s2946] ss:$4 sm:$0xff] %v2904
  %s2949 = scalar_lea.vmem [#allocation1], 34
  %2950 = vst [vmem:[%s2949] ss:$4 sm:$0xff] %v2917
  %s2952 = scalar_lea.vmem [#allocation1], 35
  %2953 = vst [vmem:[%s2952] ss:$4 sm:$0xff] %v2930
  %v2954 = vld.sshfl [vmem:[#allocation1] sm:$0xff pattern:$0x73625140]
  %v2955 = vld.sshfl [vmem:[#allocation1 + $0x20] sm:$0xff pattern:$0x73625140]
  %v2974 = vunpack.c.l.b16 %v2747
  %v2975 = vunpack.c.l.b16 %v2748
  %v2976 = vunpack.c.l.b16 %v2749
  %v2977 = vunpack.c.l.b16 %v2750
  %v2978 = vunpack.c.l.b16 %v2751
  %v2979 = vunpack.c.l.b16 %v2752
  %v2980 = vunpack.c.l.b16 %v2753
  %v2981 = vunpack.c.l.b16 %v2754
  %v2982 = vunpack.c.l.b16 %v2755
  %v2983 = vunpack.c.l.b16 %v2756
  %v2984 = vunpack.c.l.b16 %v2757
  %v2985 = vunpack.c.l.b16 %v2758
  %v2986 = vunpack.c.l.b16 %v2759
  %v2987 = vunpack.c.l.b16 %v2760
  %v2988 = vunpack.c.l.b16 %v2761
  %v2989 = vunpack.c.l.b16 %v2762
  %v2990 = vpack.c.b16 %v2975, %v2974
  %v2991 = vpack.c.b16 %v2977, %v2976
  %v2992 = vpack.c.b16 %v2979, %v2978
  %v2993 = vpack.c.b16 %v2981, %v2980
  %v2994 = vpack.c.b16 %v2983, %v2982
  %v2995 = vpack.c.b16 %v2985, %v2984
  %v2996 = vpack.c.b16 %v2987, %v2986
  %v2997 = vpack.c.b16 %v2989, %v2988
  %3006 = vmatpush.bf16.msra.mxu0 %v2997
  %3007 = vmatpush.bf16.msra.mxu0 %v2996
  %3008 = vmatpush.bf16.msra.mxu0 %v2995
  %3009 = vmatpush.bf16.msra.mxu0 %v2994
  %3010 = vmatpush.bf16.msra.mxu0 %v2993
  %3011 = vmatpush.bf16.msra.mxu0 %v2992
  %3012 = vmatpush.bf16.msra.mxu0 %v2991
  %3013 = vmatpush.bf16.msra.mxu0 %v2990
  %3014 = vmatmul.bf16.gmra.mxu0 %v2954
  %v3015 = vpop.f32.mrf.mxu0
  %v3016 = vadd.f32 0.0, %v3015
  %v3017 = vpop.f32.mrf.mxu0
  %v3018 = vadd.f32 0.0, %v3017
  %3019 = vmatmul.bf16.gmra.mxu0 %v2955
  %v3020 = vpop.f32.mrf.mxu0
  %v3021 = vadd.f32 0.0, %v3020
  %v3022 = vpop.f32.mrf.mxu0
  %v3023 = vadd.f32 0.0, %v3022
  %3024 = vdwg.mxu0
  %v3033 = vrot.slane %v2715, 2
  %v3034 = vrot.slane %v2716, 2
  %v3035 = vrot.slane %v2717, 2
  %v3036 = vrot.slane %v2718, 2
  %v3037 = vrot.slane %v2719, 2
  %v3038 = vrot.slane %v2720, 2
  %v3039 = vrot.slane %v2721, 2
  %v3040 = vrot.slane %v2722, 2
  %v3043 = vsel %vm520, %v2715, %v3033
  %v3044 = vsel %vm524, %v2715, %v3033
  %v3046 = vrot.slane %v3044, 2
  %v3049 = vsel %vm520, %v2716, %v3034
  %v3050 = vsel %vm524, %v2716, %v3034
  %v3052 = vrot.slane %v3050, 2
  %v3055 = vsel %vm520, %v2717, %v3035
  %v3056 = vsel %vm524, %v2717, %v3035
  %v3058 = vrot.slane %v3056, 2
  %v3061 = vsel %vm520, %v2718, %v3036
  %v3062 = vsel %vm524, %v2718, %v3036
  %v3064 = vrot.slane %v3062, 2
  %v3067 = vsel %vm520, %v2719, %v3037
  %v3068 = vsel %vm524, %v2719, %v3037
  %v3070 = vrot.slane %v3068, 2
  %v3073 = vsel %vm520, %v2720, %v3038
  %v3074 = vsel %vm524, %v2720, %v3038
  %v3076 = vrot.slane %v3074, 2
  %v3079 = vsel %vm520, %v2721, %v3039
  %v3080 = vsel %vm524, %v2721, %v3039
  %v3082 = vrot.slane %v3080, 2
  %v3085 = vsel %vm520, %v2722, %v3040
  %v3086 = vsel %vm524, %v2722, %v3040
  %v3088 = vrot.slane %v3086, 2
  %v3089 = vshrl.u32 %v3043, 16
  %v3091 = vrot.slane %v3089, 6
  %v3092 = vshll.u32 %v3043, 16
  %v3094 = vrot.slane %v3092, 7
  %v3095 = vor.u32 %v3091, %v3094
  %v3096 = vrot.slane %v3095, 2
  %v3098 = vshll.u32 %v3046, 16
  %v3100 = vrot.slane %v3098, 7
  %v3101 = vsel %vm576, %v3096, %v3100
  %v3102 = vshrl.u32 %v3049, 16
  %v3104 = vrot.slane %v3102, 6
  %v3105 = vshll.u32 %v3049, 16
  %v3107 = vrot.slane %v3105, 7
  %v3108 = vor.u32 %v3104, %v3107
  %v3109 = vrot.slane %v3108, 2
  %v3111 = vshll.u32 %v3052, 16
  %v3113 = vrot.slane %v3111, 7
  %v3114 = vsel %vm576, %v3109, %v3113
  %v3115 = vshrl.u32 %v3055, 16
  %v3117 = vrot.slane %v3115, 6
  %v3118 = vshll.u32 %v3055, 16
  %v3120 = vrot.slane %v3118, 7
  %v3121 = vor.u32 %v3117, %v3120
  %v3122 = vrot.slane %v3121, 2
  %v3124 = vshll.u32 %v3058, 16
  %v3126 = vrot.slane %v3124, 7
  %v3127 = vsel %vm576, %v3122, %v3126
  %v3128 = vshrl.u32 %v3061, 16
  %v3130 = vrot.slane %v3128, 6
  %v3131 = vshll.u32 %v3061, 16
  %v3133 = vrot.slane %v3131, 7
  %v3134 = vor.u32 %v3130, %v3133
  %v3135 = vrot.slane %v3134, 2
  %v3137 = vshll.u32 %v3064, 16
  %v3139 = vrot.slane %v3137, 7
  %v3140 = vsel %vm576, %v3135, %v3139
  %v3141 = vshrl.u32 %v3067, 16
  %v3143 = vrot.slane %v3141, 6
  %v3144 = vshll.u32 %v3067, 16
  %v3146 = vrot.slane %v3144, 7
  %v3147 = vor.u32 %v3143, %v3146
  %v3148 = vrot.slane %v3147, 2
  %v3150 = vshll.u32 %v3070, 16
  %v3152 = vrot.slane %v3150, 7
  %v3153 = vsel %vm576, %v3148, %v3152
  %v3154 = vshrl.u32 %v3073, 16
  %v3156 = vrot.slane %v3154, 6
  %v3157 = vshll.u32 %v3073, 16
  %v3159 = vrot.slane %v3157, 7
  %v3160 = vor.u32 %v3156, %v3159
  %v3161 = vrot.slane %v3160, 2
  %v3163 = vshll.u32 %v3076, 16
  %v3165 = vrot.slane %v3163, 7
  %v3166 = vsel %vm576, %v3161, %v3165
  %v3167 = vshrl.u32 %v3079, 16
  %v3169 = vrot.slane %v3167, 6
  %v3170 = vshll.u32 %v3079, 16
  %v3172 = vrot.slane %v3170, 7
  %v3173 = vor.u32 %v3169, %v3172
  %v3174 = vrot.slane %v3173, 2
  %v3176 = vshll.u32 %v3082, 16
  %v3178 = vrot.slane %v3176, 7
  %v3179 = vsel %vm576, %v3174, %v3178
  %v3180 = vshrl.u32 %v3085, 16
  %v3182 = vrot.slane %v3180, 6
  %v3183 = vshll.u32 %v3085, 16
  %v3185 = vrot.slane %v3183, 7
  %v3186 = vor.u32 %v3182, %v3185
  %v3187 = vrot.slane %v3186, 2
  %v3189 = vshll.u32 %v3088, 16
  %v3191 = vrot.slane %v3189, 7
  %v3192 = vsel %vm576, %v3187, %v3191
  %3194 = vst [vmem:[#allocation1] ss:$4 sm:$0xff] %v3101
  %s3196 = scalar_lea.vmem [#allocation1], 1
  %3197 = vst [vmem:[%s3196] ss:$4 sm:$0xff] %v3114
  %s3199 = scalar_lea.vmem [#allocation1], 2
  %3200 = vst [vmem:[%s3199] ss:$4 sm:$0xff] %v3127
  %s3202 = scalar_lea.vmem [#allocation1], 3
  %3203 = vst [vmem:[%s3202] ss:$4 sm:$0xff] %v3140
  %s3205 = scalar_lea.vmem [#allocation1], 32
  %3206 = vst [vmem:[%s3205] ss:$4 sm:$0xff] %v3153
  %s3208 = scalar_lea.vmem [#allocation1], 33
  %3209 = vst [vmem:[%s3208] ss:$4 sm:$0xff] %v3166
  %s3211 = scalar_lea.vmem [#allocation1], 34
  %3212 = vst [vmem:[%s3211] ss:$4 sm:$0xff] %v3179
  %s3214 = scalar_lea.vmem [#allocation1], 35
  %3215 = vst [vmem:[%s3214] ss:$4 sm:$0xff] %v3192
  %v3216 = vld.sshfl [vmem:[#allocation1] sm:$0xff pattern:$0x73625140]
  %v3217 = vld.sshfl [vmem:[#allocation1 + $0x20] sm:$0xff pattern:$0x73625140]
  %v3236 = vunpack.c.l.b16 %v2723
  %v3237 = vunpack.c.l.b16 %v2724
  %v3238 = vunpack.c.l.b16 %v2725
  %v3239 = vunpack.c.l.b16 %v2726
  %v3240 = vunpack.c.l.b16 %v2727
  %v3241 = vunpack.c.l.b16 %v2728
  %v3242 = vunpack.c.l.b16 %v2729
  %v3243 = vunpack.c.l.b16 %v2730
  %v3244 = vunpack.c.l.b16 %v2731
  %v3245 = vunpack.c.l.b16 %v2732
  %v3246 = vunpack.c.l.b16 %v2733
  %v3247 = vunpack.c.l.b16 %v2734
  %v3248 = vunpack.c.l.b16 %v2735
  %v3249 = vunpack.c.l.b16 %v2736
  %v3250 = vunpack.c.l.b16 %v2737
  %v3251 = vunpack.c.l.b16 %v2738
  %v3252 = vpack.c.b16 %v3237, %v3236
  %v3253 = vpack.c.b16 %v3239, %v3238
  %v3254 = vpack.c.b16 %v3241, %v3240
  %v3255 = vpack.c.b16 %v3243, %v3242
  %v3256 = vpack.c.b16 %v3245, %v3244
  %v3257 = vpack.c.b16 %v3247, %v3246
  %v3258 = vpack.c.b16 %v3249, %v3248
  %v3259 = vpack.c.b16 %v3251, %v3250
  %3268 = vmatpush.bf16.msra.mxu0 %v3259
  %3269 = vmatpush.bf16.msra.mxu0 %v3258
  %3270 = vmatpush.bf16.msra.mxu0 %v3257
  %3271 = vmatpush.bf16.msra.mxu0 %v3256
  %3272 = vmatpush.bf16.msra.mxu0 %v3255
  %3273 = vmatpush.bf16.msra.mxu0 %v3254
  %3274 = vmatpush.bf16.msra.mxu0 %v3253
  %3275 = vmatpush.bf16.msra.mxu0 %v3252
  %3276 = vmatmul.bf16.gmra.mxu0 %v3216
  %v3277 = vpop.f32.mrf.mxu0
  %v3278 = vadd.f32 %v3016, %v3277
  %v3279 = vpop.f32.mrf.mxu0
  %v3280 = vadd.f32 %v3018, %v3279
  %3281 = vmatmul.bf16.gmra.mxu0 %v3217
  %v3282 = vpop.f32.mrf.mxu0
  %v3283 = vadd.f32 %v3021, %v3282
  %v3284 = vpop.f32.mrf.mxu0
  %v3285 = vadd.f32 %v3023, %v3284
  %3286 = vdwg.mxu0
  %v3291 = vrot.slane %v3278, 4
  %v3292 = vrot.slane %v3280, 4
  %v3293 = vrot.slane %v3283, 4
  %v3294 = vrot.slane %v3285, 4
  %v3299 = vld [vmem:[%s1049] sm:$0x7]
  %v3300 = vld [vmem:[%s1049 + $0x4] sm:$0x7]
  %v3301 = vld [vmem:[%s1049 + $0x8] sm:$0x7]
  %v3302 = vld [vmem:[%s1049 + $0xc] sm:$0x7]
  %v3303 = vld [vmem:[%s1049 + $0x10] sm:$0x7]
  %v3304 = vld [vmem:[%s1049 + $0x14] sm:$0x7]
  %v3305 = vld [vmem:[%s1049 + $0x18] sm:$0x7]
  %v3306 = vld [vmem:[%s1049 + $0x1c] sm:$0x7]
  %v3307 = vld [vmem:[%s1058] sm:$0xf]
  %v3308 = vld [vmem:[%s1058 + $0x4] sm:$0xf]
  %v3309 = vld [vmem:[%s1058 + $0x8] sm:$0xf]
  %v3310 = vld [vmem:[%s1058 + $0xc] sm:$0xf]
  %v3311 = vld [vmem:[%s1058 + $0x10] sm:$0xf]
  %v3312 = vld [vmem:[%s1058 + $0x14] sm:$0xf]
  %v3313 = vld [vmem:[%s1058 + $0x18] sm:$0xf]
  %v3314 = vld [vmem:[%s1058 + $0x1c] sm:$0xf]
  %v3315 = vld [vmem:[%s1058 + $0x20] sm:$0xf]
  %v3316 = vld [vmem:[%s1058 + $0x24] sm:$0xf]
  %v3317 = vld [vmem:[%s1058 + $0x28] sm:$0xf]
  %v3318 = vld [vmem:[%s1058 + $0x2c] sm:$0xf]
  %v3319 = vld [vmem:[%s1058 + $0x30] sm:$0xf]
  %v3320 = vld [vmem:[%s1058 + $0x34] sm:$0xf]
  %v3321 = vld [vmem:[%s1058 + $0x38] sm:$0xf]
  %v3322 = vld [vmem:[%s1058 + $0x3c] sm:$0xf]
  %v3331 = vrot.slane %v3299, 2
  %v3332 = vrot.slane %v3300, 2
  %v3333 = vrot.slane %v3301, 2
  %v3334 = vrot.slane %v3302, 2
  %v3335 = vrot.slane %v3303, 2
  %v3336 = vrot.slane %v3304, 2
  %v3337 = vrot.slane %v3305, 2
  %v3338 = vrot.slane %v3306, 2
  %v3341 = vsel %vm520, %v3299, %v3331
  %v3342 = vsel %vm524, %v3299, %v3331
  %v3344 = vrot.slane %v3342, 2
  %v3347 = vsel %vm520, %v3300, %v3332
  %v3348 = vsel %vm524, %v3300, %v3332
  %v3350 = vrot.slane %v3348, 2
  %v3353 = vsel %vm520, %v3301, %v3333
  %v3354 = vsel %vm524, %v3301, %v3333
  %v3356 = vrot.slane %v3354, 2
  %v3359 = vsel %vm520, %v3302, %v3334
  %v3360 = vsel %vm524, %v3302, %v3334
  %v3362 = vrot.slane %v3360, 2
  %v3365 = vsel %vm520, %v3303, %v3335
  %v3366 = vsel %vm524, %v3303, %v3335
  %v3368 = vrot.slane %v3366, 2
  %v3371 = vsel %vm520, %v3304, %v3336
  %v3372 = vsel %vm524, %v3304, %v3336
  %v3374 = vrot.slane %v3372, 2
  %v3377 = vsel %vm520, %v3305, %v3337
  %v3378 = vsel %vm524, %v3305, %v3337
  %v3380 = vrot.slane %v3378, 2
  %v3383 = vsel %vm520, %v3306, %v3338
  %v3384 = vsel %vm524, %v3306, %v3338
  %v3386 = vrot.slane %v3384, 2
  %v3387 = vshrl.u32 %v3341, 16
  %v3389 = vrot.slane %v3387, 6
  %v3390 = vshll.u32 %v3341, 16
  %v3392 = vrot.slane %v3390, 7
  %v3393 = vor.u32 %v3389, %v3392
  %v3394 = vrot.slane %v3393, 2
  %v3396 = vshll.u32 %v3344, 16
  %v3398 = vrot.slane %v3396, 7
  %v3399 = vsel %vm576, %v3394, %v3398
  %v3400 = vshrl.u32 %v3347, 16
  %v3402 = vrot.slane %v3400, 6
  %v3403 = vshll.u32 %v3347, 16
  %v3405 = vrot.slane %v3403, 7
  %v3406 = vor.u32 %v3402, %v3405
  %v3407 = vrot.slane %v3406, 2
  %v3409 = vshll.u32 %v3350, 16
  %v3411 = vrot.slane %v3409, 7
  %v3412 = vsel %vm576, %v3407, %v3411
  %v3413 = vshrl.u32 %v3353, 16
  %v3415 = vrot.slane %v3413, 6
  %v3416 = vshll.u32 %v3353, 16
  %v3418 = vrot.slane %v3416, 7
  %v3419 = vor.u32 %v3415, %v3418
  %v3420 = vrot.slane %v3419, 2
  %v3422 = vshll.u32 %v3356, 16
  %v3424 = vrot.slane %v3422, 7
  %v3425 = vsel %vm576, %v3420, %v3424
  %v3426 = vshrl.u32 %v3359, 16
  %v3428 = vrot.slane %v3426, 6
  %v3429 = vshll.u32 %v3359, 16
  %v3431 = vrot.slane %v3429, 7
  %v3432 = vor.u32 %v3428, %v3431
  %v3433 = vrot.slane %v3432, 2
  %v3435 = vshll.u32 %v3362, 16
  %v3437 = vrot.slane %v3435, 7
  %v3438 = vsel %vm576, %v3433, %v3437
  %v3439 = vshrl.u32 %v3365, 16
  %v3441 = vrot.slane %v3439, 6
  %v3442 = vshll.u32 %v3365, 16
  %v3444 = vrot.slane %v3442, 7
  %v3445 = vor.u32 %v3441, %v3444
  %v3446 = vrot.slane %v3445, 2
  %v3448 = vshll.u32 %v3368, 16
  %v3450 = vrot.slane %v3448, 7
  %v3451 = vsel %vm576, %v3446, %v3450
  %v3452 = vshrl.u32 %v3371, 16
  %v3454 = vrot.slane %v3452, 6
  %v3455 = vshll.u32 %v3371, 16
  %v3457 = vrot.slane %v3455, 7
  %v3458 = vor.u32 %v3454, %v3457
  %v3459 = vrot.slane %v3458, 2
  %v3461 = vshll.u32 %v3374, 16
  %v3463 = vrot.slane %v3461, 7
  %v3464 = vsel %vm576, %v3459, %v3463
  %v3465 = vshrl.u32 %v3377, 16
  %v3467 = vrot.slane %v3465, 6
  %v3468 = vshll.u32 %v3377, 16
  %v3470 = vrot.slane %v3468, 7
  %v3471 = vor.u32 %v3467, %v3470
  %v3472 = vrot.slane %v3471, 2
  %v3474 = vshll.u32 %v3380, 16
  %v3476 = vrot.slane %v3474, 7
  %v3477 = vsel %vm576, %v3472, %v3476
  %v3478 = vshrl.u32 %v3383, 16
  %v3480 = vrot.slane %v3478, 6
  %v3481 = vshll.u32 %v3383, 16
  %v3483 = vrot.slane %v3481, 7
  %v3484 = vor.u32 %v3480, %v3483
  %v3485 = vrot.slane %v3484, 2
  %v3487 = vshll.u32 %v3386, 16
  %v3489 = vrot.slane %v3487, 7
  %v3490 = vsel %vm576, %v3485, %v3489
  %3492 = vst [vmem:[#allocation1] ss:$4 sm:$0xff] %v3399
  %s3494 = scalar_lea.vmem [#allocation1], 1
  %3495 = vst [vmem:[%s3494] ss:$4 sm:$0xff] %v3412
  %s3497 = scalar_lea.vmem [#allocation1], 2
  %3498 = vst [vmem:[%s3497] ss:$4 sm:$0xff] %v3425
  %s3500 = scalar_lea.vmem [#allocation1], 3
  %3501 = vst [vmem:[%s3500] ss:$4 sm:$0xff] %v3438
  %s3503 = scalar_lea.vmem [#allocation1], 32
  %3504 = vst [vmem:[%s3503] ss:$4 sm:$0xff] %v3451
  %s3506 = scalar_lea.vmem [#allocation1], 33
  %3507 = vst [vmem:[%s3506] ss:$4 sm:$0xff] %v3464
  %s3509 = scalar_lea.vmem [#allocation1], 34
  %3510 = vst [vmem:[%s3509] ss:$4 sm:$0xff] %v3477
  %s3512 = scalar_lea.vmem [#allocation1], 35
  %3513 = vst [vmem:[%s3512] ss:$4 sm:$0xff] %v3490
  %v3514 = vld.sshfl [vmem:[#allocation1] sm:$0xff pattern:$0x73625140]
  %v3515 = vld.sshfl [vmem:[#allocation1 + $0x20] sm:$0xff pattern:$0x73625140]
  %v3534 = vunpack.c.l.b16 %v3307
  %v3535 = vunpack.c.l.b16 %v3308
  %v3536 = vunpack.c.l.b16 %v3309
  %v3537 = vunpack.c.l.b16 %v3310
  %v3538 = vunpack.c.l.b16 %v3311
  %v3539 = vunpack.c.l.b16 %v3312
  %v3540 = vunpack.c.l.b16 %v3313
  %v3541 = vunpack.c.l.b16 %v3314
  %v3542 = vunpack.c.l.b16 %v3315
  %v3543 = vunpack.c.l.b16 %v3316
  %v3544 = vunpack.c.l.b16 %v3317
  %v3545 = vunpack.c.l.b16 %v3318
  %v3546 = vunpack.c.l.b16 %v3319
  %v3547 = vunpack.c.l.b16 %v3320
  %v3548 = vunpack.c.l.b16 %v3321
  %v3549 = vunpack.c.l.b16 %v3322
  %v3550 = vpack.c.b16 %v3535, %v3534
  %v3551 = vpack.c.b16 %v3537, %v3536
  %v3552 = vpack.c.b16 %v3539, %v3538
  %v3553 = vpack.c.b16 %v3541, %v3540
  %v3554 = vpack.c.b16 %v3543, %v3542
  %v3555 = vpack.c.b16 %v3545, %v3544
  %v3556 = vpack.c.b16 %v3547, %v3546
  %v3557 = vpack.c.b16 %v3549, %v3548
  %3566 = vmatpush.bf16.msra.mxu0 %v3557
  %3567 = vmatpush.bf16.msra.mxu0 %v3556
  %3568 = vmatpush.bf16.msra.mxu0 %v3555
  %3569 = vmatpush.bf16.msra.mxu0 %v3554
  %3570 = vmatpush.bf16.msra.mxu0 %v3553
  %3571 = vmatpush.bf16.msra.mxu0 %v3552
  %3572 = vmatpush.bf16.msra.mxu0 %v3551
  %3573 = vmatpush.bf16.msra.mxu0 %v3550
  %3574 = vmatmul.bf16.gmra.mxu0 %v3514
  %v3575 = vpop.f32.mrf.mxu0
  %v3576 = vadd.f32 0.0, %v3575
  %v3577 = vpop.f32.mrf.mxu0
  %v3578 = vadd.f32 0.0, %v3577
  %3579 = vmatmul.bf16.gmra.mxu0 %v3515
  %v3580 = vpop.f32.mrf.mxu0
  %v3581 = vadd.f32 0.0, %v3580
  %v3582 = vpop.f32.mrf.mxu0
  %v3583 = vadd.f32 0.0, %v3582
  %3584 = vdwg.mxu0
  %v3589 = vrot.slane %v3576, 4
  %v3590 = vrot.slane %v3578, 4
  %v3591 = vrot.slane %v3581, 4
  %v3592 = vrot.slane %v3583, 4
  %v3597 = vadd.f32 %v3278, %v3576
  %v3598 = vadd.f32 %v3291, %v3589
  %v3599 = vadd.f32 %v3280, %v3578
  %v3600 = vadd.f32 %v3292, %v3590
  %v3601 = vadd.f32 %v3283, %v3581
  %v3602 = vadd.f32 %v3293, %v3591
  %v3603 = vadd.f32 %v3285, %v3583
  %v3604 = vadd.f32 %v3294, %v3592
  %v3605 = vld [vmem:[#allocation2] sm:$0x3]
  %v3606 = vld [vmem:[#allocation2 + $0x4] sm:$0x3]
  %v3607 = vld [vmem:[#allocation2 + $0x8] sm:$0x3]
  %v3608 = vld [vmem:[#allocation2 + $0xc] sm:$0x3]
  %v3609 = vld [vmem:[#allocation2 + $0x10] sm:$0x3]
  %v3610 = vld [vmem:[#allocation2 + $0x14] sm:$0x3]
  %v3611 = vld [vmem:[#allocation2 + $0x18] sm:$0x3]
  %v3612 = vld [vmem:[#allocation2 + $0x1c] sm:$0x3]
  %v3613 = vld [vmem:[%s5] sm:$0xf]
  %v3614 = vld [vmem:[%s5 + $0x4] sm:$0xf]
  %v3615 = vld [vmem:[%s5 + $0x8] sm:$0xf]
  %v3616 = vld [vmem:[%s5 + $0xc] sm:$0xf]
  %v3617 = vld [vmem:[%s5 + $0x10] sm:$0xf]
  %v3618 = vld [vmem:[%s5 + $0x14] sm:$0xf]
  %v3619 = vld [vmem:[%s5 + $0x18] sm:$0xf]
  %v3620 = vld [vmem:[%s5 + $0x1c] sm:$0xf]
  %v3621 = vld [vmem:[#allocation2] sm:$0x6]
  %v3622 = vld [vmem:[#allocation2 + $0x4] sm:$0x6]
  %v3623 = vld [vmem:[#allocation2 + $0x8] sm:$0x6]
  %v3624 = vld [vmem:[#allocation2 + $0xc] sm:$0x6]
  %v3625 = vld [vmem:[#allocation2 + $0x10] sm:$0x6]
  %v3626 = vld [vmem:[#allocation2 + $0x14] sm:$0x6]
  %v3627 = vld [vmem:[#allocation2 + $0x18] sm:$0x6]
  %v3628 = vld [vmem:[#allocation2 + $0x1c] sm:$0x6]
  %v3629 = vld [vmem:[%s1381] sm:$0xf]
  %v3630 = vld [vmem:[%s1381 + $0x4] sm:$0xf]
  %v3631 = vld [vmem:[%s1381 + $0x8] sm:$0xf]
  %v3632 = vld [vmem:[%s1381 + $0xc] sm:$0xf]
  %v3633 = vld [vmem:[%s1381 + $0x10] sm:$0xf]
  %v3634 = vld [vmem:[%s1381 + $0x14] sm:$0xf]
  %v3635 = vld [vmem:[%s1381 + $0x18] sm:$0xf]
  %v3636 = vld [vmem:[%s1381 + $0x1c] sm:$0xf]
  %v3637 = vld [vmem:[%s427] sm:$0x3]
  %v3638 = vld [vmem:[%s427 + $0x4] sm:$0x3]
  %v3639 = vld [vmem:[%s427 + $0x8] sm:$0x3]
  %v3640 = vld [vmem:[%s427 + $0xc] sm:$0x3]
  %v3641 = vld [vmem:[%s427 + $0x10] sm:$0x3]
  %v3642 = vld [vmem:[%s427 + $0x14] sm:$0x3]
  %v3643 = vld [vmem:[%s427 + $0x18] sm:$0x3]
  %v3644 = vld [vmem:[%s427 + $0x1c] sm:$0x3]
  %v3645 = vld [vmem:[%s1398] sm:$0xf]
  %v3646 = vld [vmem:[%s1398 + $0x4] sm:$0xf]
  %v3647 = vld [vmem:[%s1398 + $0x8] sm:$0xf]
  %v3648 = vld [vmem:[%s1398 + $0xc] sm:$0xf]
  %v3649 = vld [vmem:[%s1398 + $0x10] sm:$0xf]
  %v3650 = vld [vmem:[%s1398 + $0x14] sm:$0xf]
  %v3651 = vld [vmem:[%s1398 + $0x18] sm:$0xf]
  %v3652 = vld [vmem:[%s1398 + $0x1c] sm:$0xf]
  %3654 = vst [vmem:[#allocation1] ss:$4 sm:$0xff] %v3637
  %s3656 = scalar_lea.vmem [#allocation1], 1
  %3657 = vst [vmem:[%s3656] ss:$4 sm:$0xff] %v3638
  %s3659 = scalar_lea.vmem [#allocation1], 2
  %3660 = vst [vmem:[%s3659] ss:$4 sm:$0xff] %v3639
  %s3662 = scalar_lea.vmem [#allocation1], 3
  %3663 = vst [vmem:[%s3662] ss:$4 sm:$0xff] %v3640
  %s3665 = scalar_lea.vmem [#allocation1], 32
  %3666 = vst [vmem:[%s3665] ss:$4 sm:$0xff] %v3641
  %s3668 = scalar_lea.vmem [#allocation1], 33
  %3669 = vst [vmem:[%s3668] ss:$4 sm:$0xff] %v3642
  %s3671 = scalar_lea.vmem [#allocation1], 34
  %3672 = vst [vmem:[%s3671] ss:$4 sm:$0xff] %v3643
  %s3674 = scalar_lea.vmem [#allocation1], 35
  %3675 = vst [vmem:[%s3674] ss:$4 sm:$0xff] %v3644
  %v3676 = vld.sshfl [vmem:[#allocation1] sm:$0xff pattern:$0x73625140]
  %v3678 = vld.sshfl [vmem:[#allocation1 + $0x20] sm:$0xff pattern:$0x73625140]
  %3680 = vrot.lane.b32.xlu0 %v3676, 64
  %v3681 = vpop.permute.xlu0 %3680
  %3682 = vrot.lane.b32.xlu0 %v3678, 64
  %v3683 = vpop.permute.xlu0 %3682
  %v3692 = vunpack.c.l.b16 %v3645
  %v3693 = vunpack.c.l.b16 %v3646
  %v3694 = vunpack.c.l.b16 %v3647
  %v3695 = vunpack.c.l.b16 %v3648
  %v3696 = vunpack.c.l.b16 %v3649
  %v3697 = vunpack.c.l.b16 %v3650
  %v3698 = vunpack.c.l.b16 %v3651
  %v3699 = vunpack.c.l.b16 %v3652
  %v3700 = vpack.c.b16 %v3693, %v3692
  %v3701 = vpack.c.b16 %v3695, %v3694
  %v3702 = vpack.c.b16 %v3697, %v3696
  %v3703 = vpack.c.b16 %v3699, %v3698
  %v3709 = vsel %vm282, %v3681, 0
  %v3712 = vsel %vm282, %v3683, 0
  %3714 = vmatpush.bf16.msra.mxu0 0
  %3715 = vmatpush.bf16.msra.mxu0 0
  %3716 = vmatpush.bf16.msra.mxu0 0
  %3717 = vmatpush.bf16.msra.mxu0 0
  %3718 = vmatpush.bf16.msra.mxu0 %v3703
  %3719 = vmatpush.bf16.msra.mxu0 %v3702
  %3720 = vmatpush.bf16.msra.mxu0 %v3701
  %3721 = vmatpush.bf16.msra.mxu0 %v3700
  %3722 = vmatmul.bf16.gmra.mxu0 %v3709
  %v3723 = vpop.f32.mrf.mxu0
  %v3724 = vadd.f32 0.0, %v3723
  %v3725 = vpop.f32.mrf.mxu0
  %v3726 = vadd.f32 0.0, %v3725
  %3727 = vmatmul.bf16.gmra.mxu0 %v3712
  %v3728 = vpop.f32.mrf.mxu0
  %v3729 = vadd.f32 0.0, %v3728
  %v3730 = vpop.f32.mrf.mxu0
  %v3731 = vadd.f32 0.0, %v3730
  %3732 = vdwg.mxu0
  %v3733 = vld [vmem:[%s427] sm:$0x6]
  %v3734 = vld [vmem:[%s427 + $0x4] sm:$0x6]
  %v3735 = vld [vmem:[%s427 + $0x8] sm:$0x6]
  %v3736 = vld [vmem:[%s427 + $0xc] sm:$0x6]
  %v3737 = vld [vmem:[%s427 + $0x10] sm:$0x6]
  %v3738 = vld [vmem:[%s427 + $0x14] sm:$0x6]
  %v3739 = vld [vmem:[%s427 + $0x18] sm:$0x6]
  %v3740 = vld [vmem:[%s427 + $0x1c] sm:$0x6]
  %v3741 = vld [vmem:[%s1495] sm:$0xf]
  %v3742 = vld [vmem:[%s1495 + $0x4] sm:$0xf]
  %v3743 = vld [vmem:[%s1495 + $0x8] sm:$0xf]
  %v3744 = vld [vmem:[%s1495 + $0xc] sm:$0xf]
  %v3745 = vld [vmem:[%s1495 + $0x10] sm:$0xf]
  %v3746 = vld [vmem:[%s1495 + $0x14] sm:$0xf]
  %v3747 = vld [vmem:[%s1495 + $0x18] sm:$0xf]
  %v3748 = vld [vmem:[%s1495 + $0x1c] sm:$0xf]
  %v3757 = vrot.slane %v3733, 2
  %v3758 = vrot.slane %v3734, 2
  %v3759 = vrot.slane %v3735, 2
  %v3760 = vrot.slane %v3736, 2
  %v3761 = vrot.slane %v3737, 2
  %v3762 = vrot.slane %v3738, 2
  %v3763 = vrot.slane %v3739, 2
  %v3764 = vrot.slane %v3740, 2
  %v3767 = vsel %vm520, %v3733, %v3757
  %v3769 = vsel %vm524, %v3733, %v3757
  %v3771 = vrot.slane %v3769, 2
  %v3774 = vsel %vm520, %v3734, %v3758
  %v3776 = vsel %vm524, %v3734, %v3758
  %v3778 = vrot.slane %v3776, 2
  %v3781 = vsel %vm520, %v3735, %v3759
  %v3783 = vsel %vm524, %v3735, %v3759
  %v3785 = vrot.slane %v3783, 2
  %v3788 = vsel %vm520, %v3736, %v3760
  %v3790 = vsel %vm524, %v3736, %v3760
  %v3792 = vrot.slane %v3790, 2
  %v3795 = vsel %vm520, %v3737, %v3761
  %v3797 = vsel %vm524, %v3737, %v3761
  %v3799 = vrot.slane %v3797, 2
  %v3802 = vsel %vm520, %v3738, %v3762
  %v3804 = vsel %vm524, %v3738, %v3762
  %v3806 = vrot.slane %v3804, 2
  %v3809 = vsel %vm520, %v3739, %v3763
  %v3811 = vsel %vm524, %v3739, %v3763
  %v3813 = vrot.slane %v3811, 2
  %v3816 = vsel %vm520, %v3740, %v3764
  %v3818 = vsel %vm524, %v3740, %v3764
  %v3820 = vrot.slane %v3818, 2
  %v3821 = vrot.slane %v3767, 7
  %v3822 = vrot.slane %v3821, 2
  %v3823 = vrot.slane %v3771, 7
  %v3824 = vsel %vm1580, %v3822, %v3823
  %v3825 = vrot.slane %v3774, 7
  %v3826 = vrot.slane %v3825, 2
  %v3827 = vrot.slane %v3778, 7
  %v3828 = vsel %vm1580, %v3826, %v3827
  %v3829 = vrot.slane %v3781, 7
  %v3830 = vrot.slane %v3829, 2
  %v3831 = vrot.slane %v3785, 7
  %v3832 = vsel %vm1580, %v3830, %v3831
  %v3833 = vrot.slane %v3788, 7
  %v3834 = vrot.slane %v3833, 2
  %v3835 = vrot.slane %v3792, 7
  %v3836 = vsel %vm1580, %v3834, %v3835
  %v3837 = vrot.slane %v3795, 7
  %v3838 = vrot.slane %v3837, 2
  %v3839 = vrot.slane %v3799, 7
  %v3840 = vsel %vm1580, %v3838, %v3839
  %v3841 = vrot.slane %v3802, 7
  %v3842 = vrot.slane %v3841, 2
  %v3843 = vrot.slane %v3806, 7
  %v3844 = vsel %vm1580, %v3842, %v3843
  %v3845 = vrot.slane %v3809, 7
  %v3846 = vrot.slane %v3845, 2
  %v3847 = vrot.slane %v3813, 7
  %v3848 = vsel %vm1580, %v3846, %v3847
  %v3849 = vrot.slane %v3816, 7
  %v3850 = vrot.slane %v3849, 2
  %v3851 = vrot.slane %v3820, 7
  %v3852 = vsel %vm1580, %v3850, %v3851
  %3854 = vst [vmem:[#allocation1] ss:$4 sm:$0xff] %v3824
  %s3856 = scalar_lea.vmem [#allocation1], 1
  %3857 = vst [vmem:[%s3856] ss:$4 sm:$0xff] %v3828
  %s3859 = scalar_lea.vmem [#allocation1], 2
  %3860 = vst [vmem:[%s3859] ss:$4 sm:$0xff] %v3832
  %s3862 = scalar_lea.vmem [#allocation1], 3
  %3863 = vst [vmem:[%s3862] ss:$4 sm:$0xff] %v3836
  %s3865 = scalar_lea.vmem [#allocation1], 32
  %3866 = vst [vmem:[%s3865] ss:$4 sm:$0xff] %v3840
  %s3868 = scalar_lea.vmem [#allocation1], 33
  %3869 = vst [vmem:[%s3868] ss:$4 sm:$0xff] %v3844
  %s3871 = scalar_lea.vmem [#allocation1], 34
  %3872 = vst [vmem:[%s3871] ss:$4 sm:$0xff] %v3848
  %s3874 = scalar_lea.vmem [#allocation1], 35
  %3875 = vst [vmem:[%s3874] ss:$4 sm:$0xff] %v3852
  %v3876 = vld.sshfl [vmem:[#allocation1] sm:$0xff pattern:$0x73625140]
  %v3877 = vld.sshfl [vmem:[#allocation1 + $0x20] sm:$0xff pattern:$0x73625140]
  %v3886 = vunpack.c.l.b16 %v3741
  %v3887 = vunpack.c.l.b16 %v3742
  %v3888 = vunpack.c.l.b16 %v3743
  %v3889 = vunpack.c.l.b16 %v3744
  %v3890 = vunpack.c.l.b16 %v3745
  %v3891 = vunpack.c.l.b16 %v3746
  %v3892 = vunpack.c.l.b16 %v3747
  %v3893 = vunpack.c.l.b16 %v3748
  %v3894 = vpack.c.b16 %v3887, %v3886
  %v3895 = vpack.c.b16 %v3889, %v3888
  %v3896 = vpack.c.b16 %v3891, %v3890
  %v3897 = vpack.c.b16 %v3893, %v3892
  %v3902 = vsel %vm282, %v3876, 0
  %v3904 = vsel %vm282, %v3877, 0
  %3906 = vmatpush.bf16.msra.mxu0 0
  %3907 = vmatpush.bf16.msra.mxu0 0
  %3908 = vmatpush.bf16.msra.mxu0 0
  %3909 = vmatpush.bf16.msra.mxu0 0
  %3910 = vmatpush.bf16.msra.mxu0 %v3897
  %3911 = vmatpush.bf16.msra.mxu0 %v3896
  %3912 = vmatpush.bf16.msra.mxu0 %v3895
  %3913 = vmatpush.bf16.msra.mxu0 %v3894
  %3914 = vmatmul.bf16.gmra.mxu0 %v3902
  %v3915 = vpop.f32.mrf.mxu0
  %v3916 = vadd.f32 0.0, %v3915
  %v3917 = vpop.f32.mrf.mxu0
  %v3918 = vadd.f32 0.0, %v3917
  %3919 = vmatmul.bf16.gmra.mxu0 %v3904
  %v3920 = vpop.f32.mrf.mxu0
  %v3921 = vadd.f32 0.0, %v3920
  %v3922 = vpop.f32.mrf.mxu0
  %v3923 = vadd.f32 0.0, %v3922
  %3924 = vdwg.mxu0
  %3926 = vst [vmem:[#allocation1] ss:$4 sm:$0xff] %v3605
  %s3928 = scalar_lea.vmem [#allocation1], 1
  %3929 = vst [vmem:[%s3928] ss:$4 sm:$0xff] %v3606
  %s3931 = scalar_lea.vmem [#allocation1], 2
  %3932 = vst [vmem:[%s3931] ss:$4 sm:$0xff] %v3607
  %s3934 = scalar_lea.vmem [#allocation1], 3
  %3935 = vst [vmem:[%s3934] ss:$4 sm:$0xff] %v3608
  %s3937 = scalar_lea.vmem [#allocation1], 32
  %3938 = vst [vmem:[%s3937] ss:$4 sm:$0xff] %v3609
  %s3940 = scalar_lea.vmem [#allocation1], 33
  %3941 = vst [vmem:[%s3940] ss:$4 sm:$0xff] %v3610
  %s3943 = scalar_lea.vmem [#allocation1], 34
  %3944 = vst [vmem:[%s3943] ss:$4 sm:$0xff] %v3611
  %s3946 = scalar_lea.vmem [#allocation1], 35
  %3947 = vst [vmem:[%s3946] ss:$4 sm:$0xff] %v3612
  %v3948 = vld.sshfl [vmem:[#allocation1] sm:$0xff pattern:$0x73625140]
  %v3950 = vld.sshfl [vmem:[#allocation1 + $0x20] sm:$0xff pattern:$0x73625140]
  %3952 = vrot.lane.b32.xlu0 %v3948, 64
  %v3953 = vpop.permute.xlu0 %3952
  %3954 = vrot.lane.b32.xlu0 %v3950, 64
  %v3955 = vpop.permute.xlu0 %3954
  %v3964 = vunpack.c.l.b16 %v3613
  %v3965 = vunpack.c.l.b16 %v3614
  %v3966 = vunpack.c.l.b16 %v3615
  %v3967 = vunpack.c.l.b16 %v3616
  %v3968 = vunpack.c.l.b16 %v3617
  %v3969 = vunpack.c.l.b16 %v3618
  %v3970 = vunpack.c.l.b16 %v3619
  %v3971 = vunpack.c.l.b16 %v3620
  %v3972 = vpack.c.b16 %v3965, %v3964
  %v3973 = vpack.c.b16 %v3967, %v3966
  %v3974 = vpack.c.b16 %v3969, %v3968
  %v3975 = vpack.c.b16 %v3971, %v3970
  %v3981 = vsel %vm282, %v3953, 0
  %v3984 = vsel %vm282, %v3955, 0
  %3986 = vmatpush.bf16.msra.mxu0 0
  %3987 = vmatpush.bf16.msra.mxu0 0
  %3988 = vmatpush.bf16.msra.mxu0 0
  %3989 = vmatpush.bf16.msra.mxu0 0
  %3990 = vmatpush.bf16.msra.mxu0 %v3975
  %3991 = vmatpush.bf16.msra.mxu0 %v3974
  %3992 = vmatpush.bf16.msra.mxu0 %v3973
  %3993 = vmatpush.bf16.msra.mxu0 %v3972
  %3994 = vmatmul.bf16.gmra.mxu0 %v3981
  %v3995 = vpop.f32.mrf.mxu0
  %v3996 = vadd.f32 %v3724, %v3995
  %v3997 = vpop.f32.mrf.mxu0
  %v3998 = vadd.f32 %v3726, %v3997
  %3999 = vmatmul.bf16.gmra.mxu0 %v3984
  %v4000 = vpop.f32.mrf.mxu0
  %v4001 = vadd.f32 %v3729, %v4000
  %v4002 = vpop.f32.mrf.mxu0
  %v4003 = vadd.f32 %v3731, %v4002
  %4004 = vdwg.mxu0
  %v4009 = vrot.slane %v3996, 4
  %v4010 = vrot.slane %v3998, 4
  %v4011 = vrot.slane %v4001, 4
  %v4012 = vrot.slane %v4003, 4
  %v4025 = vrot.slane %v3621, 2
  %v4026 = vrot.slane %v3622, 2
  %v4027 = vrot.slane %v3623, 2
  %v4028 = vrot.slane %v3624, 2
  %v4029 = vrot.slane %v3625, 2
  %v4030 = vrot.slane %v3626, 2
  %v4031 = vrot.slane %v3627, 2
  %v4032 = vrot.slane %v3628, 2
  %v4035 = vsel %vm520, %v3621, %v4025
  %v4037 = vsel %vm524, %v3621, %v4025
  %v4039 = vrot.slane %v4037, 2
  %v4042 = vsel %vm520, %v3622, %v4026
  %v4044 = vsel %vm524, %v3622, %v4026
  %v4046 = vrot.slane %v4044, 2
  %v4049 = vsel %vm520, %v3623, %v4027
  %v4051 = vsel %vm524, %v3623, %v4027
  %v4053 = vrot.slane %v4051, 2
  %v4056 = vsel %vm520, %v3624, %v4028
  %v4058 = vsel %vm524, %v3624, %v4028
  %v4060 = vrot.slane %v4058, 2
  %v4063 = vsel %vm520, %v3625, %v4029
  %v4065 = vsel %vm524, %v3625, %v4029
  %v4067 = vrot.slane %v4065, 2
  %v4070 = vsel %vm520, %v3626, %v4030
  %v4072 = vsel %vm524, %v3626, %v4030
  %v4074 = vrot.slane %v4072, 2
  %v4077 = vsel %vm520, %v3627, %v4031
  %v4079 = vsel %vm524, %v3627, %v4031
  %v4081 = vrot.slane %v4079, 2
  %v4084 = vsel %vm520, %v3628, %v4032
  %v4086 = vsel %vm524, %v3628, %v4032
  %v4088 = vrot.slane %v4086, 2
  %v4089 = vrot.slane %v4035, 7
  %v4090 = vrot.slane %v4089, 2
  %v4091 = vrot.slane %v4039, 7
  %v4092 = vsel %vm1580, %v4090, %v4091
  %v4093 = vrot.slane %v4042, 7
  %v4094 = vrot.slane %v4093, 2
  %v4095 = vrot.slane %v4046, 7
  %v4096 = vsel %vm1580, %v4094, %v4095
  %v4097 = vrot.slane %v4049, 7
  %v4098 = vrot.slane %v4097, 2
  %v4099 = vrot.slane %v4053, 7
  %v4100 = vsel %vm1580, %v4098, %v4099
  %v4101 = vrot.slane %v4056, 7
  %v4102 = vrot.slane %v4101, 2
  %v4103 = vrot.slane %v4060, 7
  %v4104 = vsel %vm1580, %v4102, %v4103
  %v4105 = vrot.slane %v4063, 7
  %v4106 = vrot.slane %v4105, 2
  %v4107 = vrot.slane %v4067, 7
  %v4108 = vsel %vm1580, %v4106, %v4107
  %v4109 = vrot.slane %v4070, 7
  %v4110 = vrot.slane %v4109, 2
  %v4111 = vrot.slane %v4074, 7
  %v4112 = vsel %vm1580, %v4110, %v4111
  %v4113 = vrot.slane %v4077, 7
  %v4114 = vrot.slane %v4113, 2
  %v4115 = vrot.slane %v4081, 7
  %v4116 = vsel %vm1580, %v4114, %v4115
  %v4117 = vrot.slane %v4084, 7
  %v4118 = vrot.slane %v4117, 2
  %v4119 = vrot.slane %v4088, 7
  %v4120 = vsel %vm1580, %v4118, %v4119
  %4122 = vst [vmem:[#allocation1] ss:$4 sm:$0xff] %v4092
  %s4124 = scalar_lea.vmem [#allocation1], 1
  %4125 = vst [vmem:[%s4124] ss:$4 sm:$0xff] %v4096
  %s4127 = scalar_lea.vmem [#allocation1], 2
  %4128 = vst [vmem:[%s4127] ss:$4 sm:$0xff] %v4100
  %s4130 = scalar_lea.vmem [#allocation1], 3
  %4131 = vst [vmem:[%s4130] ss:$4 sm:$0xff] %v4104
  %s4133 = scalar_lea.vmem [#allocation1], 32
  %4134 = vst [vmem:[%s4133] ss:$4 sm:$0xff] %v4108
  %s4136 = scalar_lea.vmem [#allocation1], 33
  %4137 = vst [vmem:[%s4136] ss:$4 sm:$0xff] %v4112
  %s4139 = scalar_lea.vmem [#allocation1], 34
  %4140 = vst [vmem:[%s4139] ss:$4 sm:$0xff] %v4116
  %s4142 = scalar_lea.vmem [#allocation1], 35
  %4143 = vst [vmem:[%s4142] ss:$4 sm:$0xff] %v4120
  %v4144 = vld.sshfl [vmem:[#allocation1] sm:$0xff pattern:$0x73625140]
  %v4145 = vld.sshfl [vmem:[#allocation1 + $0x20] sm:$0xff pattern:$0x73625140]
  %v4154 = vunpack.c.l.b16 %v3629
  %v4155 = vunpack.c.l.b16 %v3630
  %v4156 = vunpack.c.l.b16 %v3631
  %v4157 = vunpack.c.l.b16 %v3632
  %v4158 = vunpack.c.l.b16 %v3633
  %v4159 = vunpack.c.l.b16 %v3634
  %v4160 = vunpack.c.l.b16 %v3635
  %v4161 = vunpack.c.l.b16 %v3636
  %v4162 = vpack.c.b16 %v4155, %v4154
  %v4163 = vpack.c.b16 %v4157, %v4156
  %v4164 = vpack.c.b16 %v4159, %v4158
  %v4165 = vpack.c.b16 %v4161, %v4160
  %v4170 = vsel %vm282, %v4144, 0
  %v4172 = vsel %vm282, %v4145, 0
  %4174 = vmatpush.bf16.msra.mxu0 0
  %4175 = vmatpush.bf16.msra.mxu0 0
  %4176 = vmatpush.bf16.msra.mxu0 0
  %4177 = vmatpush.bf16.msra.mxu0 0
  %4178 = vmatpush.bf16.msra.mxu0 %v4165
  %4179 = vmatpush.bf16.msra.mxu0 %v4164
  %4180 = vmatpush.bf16.msra.mxu0 %v4163
  %4181 = vmatpush.bf16.msra.mxu0 %v4162
  %4182 = vmatmul.bf16.gmra.mxu0 %v4170
  %v4183 = vpop.f32.mrf.mxu0
  %v4184 = vadd.f32 %v3916, %v4183
  %v4185 = vpop.f32.mrf.mxu0
  %v4186 = vadd.f32 %v3918, %v4185
  %4187 = vmatmul.bf16.gmra.mxu0 %v4172
  %v4188 = vpop.f32.mrf.mxu0
  %v4189 = vadd.f32 %v3921, %v4188
  %v4190 = vpop.f32.mrf.mxu0
  %v4191 = vadd.f32 %v3923, %v4190
  %4192 = vdwg.mxu0
  %v4197 = vrot.slane %v4184, 4
  %v4198 = vrot.slane %v4186, 4
  %v4199 = vrot.slane %v4189, 4
  %v4200 = vrot.slane %v4191, 4
  %v4205 = vld [vmem:[%s1049] sm:$0x3]
  %v4206 = vld [vmem:[%s1049 + $0x4] sm:$0x3]
  %v4207 = vld [vmem:[%s1049 + $0x8] sm:$0x3]
  %v4208 = vld [vmem:[%s1049 + $0xc] sm:$0x3]
  %v4209 = vld [vmem:[%s1049 + $0x10] sm:$0x3]
  %v4210 = vld [vmem:[%s1049 + $0x14] sm:$0x3]
  %v4211 = vld [vmem:[%s1049 + $0x18] sm:$0x3]
  %v4212 = vld [vmem:[%s1049 + $0x1c] sm:$0x3]
  %v4213 = vld [vmem:[%s1973] sm:$0xf]
  %v4214 = vld [vmem:[%s1973 + $0x4] sm:$0xf]
  %v4215 = vld [vmem:[%s1973 + $0x8] sm:$0xf]
  %v4216 = vld [vmem:[%s1973 + $0xc] sm:$0xf]
  %v4217 = vld [vmem:[%s1973 + $0x10] sm:$0xf]
  %v4218 = vld [vmem:[%s1973 + $0x14] sm:$0xf]
  %v4219 = vld [vmem:[%s1973 + $0x18] sm:$0xf]
  %v4220 = vld [vmem:[%s1973 + $0x1c] sm:$0xf]
  %4222 = vst [vmem:[#allocation1] ss:$4 sm:$0xff] %v4205
  %s4224 = scalar_lea.vmem [#allocation1], 1
  %4225 = vst [vmem:[%s4224] ss:$4 sm:$0xff] %v4206
  %s4227 = scalar_lea.vmem [#allocation1], 2
  %4228 = vst [vmem:[%s4227] ss:$4 sm:$0xff] %v4207
  %s4230 = scalar_lea.vmem [#allocation1], 3
  %4231 = vst [vmem:[%s4230] ss:$4 sm:$0xff] %v4208
  %s4233 = scalar_lea.vmem [#allocation1], 32
  %4234 = vst [vmem:[%s4233] ss:$4 sm:$0xff] %v4209
  %s4236 = scalar_lea.vmem [#allocation1], 33
  %4237 = vst [vmem:[%s4236] ss:$4 sm:$0xff] %v4210
  %s4239 = scalar_lea.vmem [#allocation1], 34
  %4240 = vst [vmem:[%s4239] ss:$4 sm:$0xff] %v4211
  %s4242 = scalar_lea.vmem [#allocation1], 35
  %4243 = vst [vmem:[%s4242] ss:$4 sm:$0xff] %v4212
  %v4244 = vld.sshfl [vmem:[#allocation1] sm:$0xff pattern:$0x73625140]
  %v4246 = vld.sshfl [vmem:[#allocation1 + $0x20] sm:$0xff pattern:$0x73625140]
  %4248 = vrot.lane.b32.xlu0 %v4244, 64
  %v4249 = vpop.permute.xlu0 %4248
  %4250 = vrot.lane.b32.xlu0 %v4246, 64
  %v4251 = vpop.permute.xlu0 %4250
  %v4260 = vunpack.c.l.b16 %v4213
  %v4261 = vunpack.c.l.b16 %v4214
  %v4262 = vunpack.c.l.b16 %v4215
  %v4263 = vunpack.c.l.b16 %v4216
  %v4264 = vunpack.c.l.b16 %v4217
  %v4265 = vunpack.c.l.b16 %v4218
  %v4266 = vunpack.c.l.b16 %v4219
  %v4267 = vunpack.c.l.b16 %v4220
  %v4268 = vpack.c.b16 %v4261, %v4260
  %v4269 = vpack.c.b16 %v4263, %v4262
  %v4270 = vpack.c.b16 %v4265, %v4264
  %v4271 = vpack.c.b16 %v4267, %v4266
  %v4277 = vsel %vm282, %v4249, 0
  %v4280 = vsel %vm282, %v4251, 0
  %4282 = vmatpush.bf16.msra.mxu0 0
  %4283 = vmatpush.bf16.msra.mxu0 0
  %4284 = vmatpush.bf16.msra.mxu0 0
  %4285 = vmatpush.bf16.msra.mxu0 0
  %4286 = vmatpush.bf16.msra.mxu0 %v4271
  %4287 = vmatpush.bf16.msra.mxu0 %v4270
  %4288 = vmatpush.bf16.msra.mxu0 %v4269
  %4289 = vmatpush.bf16.msra.mxu0 %v4268
  %4290 = vmatmul.bf16.gmra.mxu0 %v4277
  %v4291 = vpop.f32.mrf.mxu0
  %v4292 = vadd.f32 0.0, %v4291
  %v4293 = vpop.f32.mrf.mxu0
  %v4294 = vadd.f32 0.0, %v4293
  %4295 = vmatmul.bf16.gmra.mxu0 %v4280
  %v4296 = vpop.f32.mrf.mxu0
  %v4297 = vadd.f32 0.0, %v4296
  %v4298 = vpop.f32.mrf.mxu0
  %v4299 = vadd.f32 0.0, %v4298
  %4300 = vdwg.mxu0
  %v4305 = vrot.slane %v4292, 4
  %v4306 = vrot.slane %v4294, 4
  %v4307 = vrot.slane %v4297, 4
  %v4308 = vrot.slane %v4299, 4
  %v4313 = vld [vmem:[%s1049] sm:$0x6]
  %v4314 = vld [vmem:[%s1049 + $0x4] sm:$0x6]
  %v4315 = vld [vmem:[%s1049 + $0x8] sm:$0x6]
  %v4316 = vld [vmem:[%s1049 + $0xc] sm:$0x6]
  %v4317 = vld [vmem:[%s1049 + $0x10] sm:$0x6]
  %v4318 = vld [vmem:[%s1049 + $0x14] sm:$0x6]
  %v4319 = vld [vmem:[%s1049 + $0x18] sm:$0x6]
  %v4320 = vld [vmem:[%s1049 + $0x1c] sm:$0x6]
  %v4321 = vld [vmem:[%s2082] sm:$0xf]
  %v4322 = vld [vmem:[%s2082 + $0x4] sm:$0xf]
  %v4323 = vld [vmem:[%s2082 + $0x8] sm:$0xf]
  %v4324 = vld [vmem:[%s2082 + $0xc] sm:$0xf]
  %v4325 = vld [vmem:[%s2082 + $0x10] sm:$0xf]
  %v4326 = vld [vmem:[%s2082 + $0x14] sm:$0xf]
  %v4327 = vld [vmem:[%s2082 + $0x18] sm:$0xf]
  %v4328 = vld [vmem:[%s2082 + $0x1c] sm:$0xf]
  %v4337 = vrot.slane %v4313, 2
  %v4338 = vrot.slane %v4314, 2
  %v4339 = vrot.slane %v4315, 2
  %v4340 = vrot.slane %v4316, 2
  %v4341 = vrot.slane %v4317, 2
  %v4342 = vrot.slane %v4318, 2
  %v4343 = vrot.slane %v4319, 2
  %v4344 = vrot.slane %v4320, 2
  %v4347 = vsel %vm520, %v4313, %v4337
  %v4349 = vsel %vm524, %v4313, %v4337
  %v4351 = vrot.slane %v4349, 2
  %v4354 = vsel %vm520, %v4314, %v4338
  %v4356 = vsel %vm524, %v4314, %v4338
  %v4358 = vrot.slane %v4356, 2
  %v4361 = vsel %vm520, %v4315, %v4339
  %v4363 = vsel %vm524, %v4315, %v4339
  %v4365 = vrot.slane %v4363, 2
  %v4368 = vsel %vm520, %v4316, %v4340
  %v4370 = vsel %vm524, %v4316, %v4340
  %v4372 = vrot.slane %v4370, 2
  %v4375 = vsel %vm520, %v4317, %v4341
  %v4377 = vsel %vm524, %v4317, %v4341
  %v4379 = vrot.slane %v4377, 2
  %v4382 = vsel %vm520, %v4318, %v4342
  %v4384 = vsel %vm524, %v4318, %v4342
  %v4386 = vrot.slane %v4384, 2
  %v4389 = vsel %vm520, %v4319, %v4343
  %v4391 = vsel %vm524, %v4319, %v4343
  %v4393 = vrot.slane %v4391, 2
  %v4396 = vsel %vm520, %v4320, %v4344
  %v4398 = vsel %vm524, %v4320, %v4344
  %v4400 = vrot.slane %v4398, 2
  %v4401 = vrot.slane %v4347, 7
  %v4402 = vrot.slane %v4401, 2
  %v4403 = vrot.slane %v4351, 7
  %v4404 = vsel %vm1580, %v4402, %v4403
  %v4405 = vrot.slane %v4354, 7
  %v4406 = vrot.slane %v4405, 2
  %v4407 = vrot.slane %v4358, 7
  %v4408 = vsel %vm1580, %v4406, %v4407
  %v4409 = vrot.slane %v4361, 7
  %v4410 = vrot.slane %v4409, 2
  %v4411 = vrot.slane %v4365, 7
  %v4412 = vsel %vm1580, %v4410, %v4411
  %v4413 = vrot.slane %v4368, 7
  %v4414 = vrot.slane %v4413, 2
  %v4415 = vrot.slane %v4372, 7
  %v4416 = vsel %vm1580, %v4414, %v4415
  %v4417 = vrot.slane %v4375, 7
  %v4418 = vrot.slane %v4417, 2
  %v4419 = vrot.slane %v4379, 7
  %v4420 = vsel %vm1580, %v4418, %v4419
  %v4421 = vrot.slane %v4382, 7
  %v4422 = vrot.slane %v4421, 2
  %v4423 = vrot.slane %v4386, 7
  %v4424 = vsel %vm1580, %v4422, %v4423
  %v4425 = vrot.slane %v4389, 7
  %v4426 = vrot.slane %v4425, 2
  %v4427 = vrot.slane %v4393, 7
  %v4428 = vsel %vm1580, %v4426, %v4427
  %v4429 = vrot.slane %v4396, 7
  %v4430 = vrot.slane %v4429, 2
  %v4431 = vrot.slane %v4400, 7
  %v4432 = vsel %vm1580, %v4430, %v4431
  %4434 = vst [vmem:[#allocation1] ss:$4 sm:$0xff] %v4404
  %s4436 = scalar_lea.vmem [#allocation1], 1
  %4437 = vst [vmem:[%s4436] ss:$4 sm:$0xff] %v4408
  %s4439 = scalar_lea.vmem [#allocation1], 2
  %4440 = vst [vmem:[%s4439] ss:$4 sm:$0xff] %v4412
  %s4442 = scalar_lea.vmem [#allocation1], 3
  %4443 = vst [vmem:[%s4442] ss:$4 sm:$0xff] %v4416
  %s4445 = scalar_lea.vmem [#allocation1], 32
  %4446 = vst [vmem:[%s4445] ss:$4 sm:$0xff] %v4420
  %s4448 = scalar_lea.vmem [#allocation1], 33
  %4449 = vst [vmem:[%s4448] ss:$4 sm:$0xff] %v4424
  %s4451 = scalar_lea.vmem [#allocation1], 34
  %4452 = vst [vmem:[%s4451] ss:$4 sm:$0xff] %v4428
  %s4454 = scalar_lea.vmem [#allocation1], 35
  %4455 = vst [vmem:[%s4454] ss:$4 sm:$0xff] %v4432
  %v4456 = vld.sshfl [vmem:[#allocation1] sm:$0xff pattern:$0x73625140]
  %v4457 = vld.sshfl [vmem:[#allocation1 + $0x20] sm:$0xff pattern:$0x73625140]
  %v4466 = vunpack.c.l.b16 %v4321
  %v4467 = vunpack.c.l.b16 %v4322
  %v4468 = vunpack.c.l.b16 %v4323
  %v4469 = vunpack.c.l.b16 %v4324
  %v4470 = vunpack.c.l.b16 %v4325
  %v4471 = vunpack.c.l.b16 %v4326
  %v4472 = vunpack.c.l.b16 %v4327
  %v4473 = vunpack.c.l.b16 %v4328
  %v4474 = vpack.c.b16 %v4467, %v4466
  %v4475 = vpack.c.b16 %v4469, %v4468
  %v4476 = vpack.c.b16 %v4471, %v4470
  %v4477 = vpack.c.b16 %v4473, %v4472
  %v4482 = vsel %vm282, %v4456, 0
  %v4484 = vsel %vm282, %v4457, 0
  %4486 = vmatpush.bf16.msra.mxu0 0
  %4487 = vmatpush.bf16.msra.mxu0 0
  %4488 = vmatpush.bf16.msra.mxu0 0
  %4489 = vmatpush.bf16.msra.mxu0 0
  %4490 = vmatpush.bf16.msra.mxu0 %v4477
  %4491 = vmatpush.bf16.msra.mxu0 %v4476
  %4492 = vmatpush.bf16.msra.mxu0 %v4475
  %4493 = vmatpush.bf16.msra.mxu0 %v4474
  %4494 = vmatmul.bf16.gmra.mxu0 %v4482
  %v4495 = vpop.f32.mrf.mxu0
  %v4496 = vadd.f32 0.0, %v4495
  %v4497 = vpop.f32.mrf.mxu0
  %v4498 = vadd.f32 0.0, %v4497
  %4499 = vmatmul.bf16.gmra.mxu0 %v4484
  %v4500 = vpop.f32.mrf.mxu0
  %v4501 = vadd.f32 0.0, %v4500
  %v4502 = vpop.f32.mrf.mxu0
  %v4503 = vadd.f32 0.0, %v4502
  %4504 = vdwg.mxu0
  %v4509 = vrot.slane %v4496, 4
  %v4510 = vrot.slane %v4498, 4
  %v4511 = vrot.slane %v4501, 4
  %v4512 = vrot.slane %v4503, 4
  %v4517 = vadd.f32 %v3996, %v4292
  %v4518 = vadd.f32 %v4009, %v4305
  %v4519 = vadd.f32 %v3998, %v4294
  %v4520 = vadd.f32 %v4010, %v4306
  %v4521 = vadd.f32 %v4001, %v4297
  %v4522 = vadd.f32 %v4011, %v4307
  %v4523 = vadd.f32 %v4003, %v4299
  %v4524 = vadd.f32 %v4012, %v4308
  %v4525 = vadd.f32 %v4184, %v4496
  %v4526 = vadd.f32 %v4197, %v4509
  %v4527 = vadd.f32 %v4186, %v4498
  %v4528 = vadd.f32 %v4198, %v4510
  %v4529 = vadd.f32 %v4189, %v4501
  %v4530 = vadd.f32 %v4199, %v4511
  %v4531 = vadd.f32 %v4191, %v4503
  %v4532 = vadd.f32 %v4200, %v4512
  %4541 = vst [vmem:[#allocation1] ss:$2 sm:$0xff] %v4525
  %v4542 = vld.sshfl [vmem:[#allocation1] sm:$0xff pattern:$0x75316420]
  %s4543 = scalar_lea.vmem [#allocation1], 16
  %4544 = vst [vmem:[%s4543] ss:$2 sm:$0xff] %v4526
  %v4545 = vld.sshfl [vmem:[#allocation1 + $0x10] sm:$0xff pattern:$0x75316420]
  %s4546 = scalar_lea.vmem [#allocation1], 32
  %4547 = vst [vmem:[%s4546] ss:$2 sm:$0xff] %v4527
  %v4548 = vld.sshfl [vmem:[#allocation1 + $0x20] sm:$0xff pattern:$0x75316420]
  %s4549 = scalar_lea.vmem [#allocation1], 48
  %4550 = vst [vmem:[%s4549] ss:$2 sm:$0xff] %v4528
  %v4551 = vld.sshfl [vmem:[#allocation1 + $0x30] sm:$0xff pattern:$0x75316420]
  %4552 = vst [vmem:[#allocation1] ss:$2 sm:$0xff] %v4529
  %v4553 = vld.sshfl [vmem:[#allocation1] sm:$0xff pattern:$0x75316420]
  %4554 = vst [vmem:[%s4543] ss:$2 sm:$0xff] %v4530
  %v4555 = vld.sshfl [vmem:[#allocation1 + $0x10] sm:$0xff pattern:$0x75316420]
  %4556 = vst [vmem:[%s4546] ss:$2 sm:$0xff] %v4531
  %v4557 = vld.sshfl [vmem:[#allocation1 + $0x20] sm:$0xff pattern:$0x75316420]
  %4558 = vst [vmem:[%s4549] ss:$2 sm:$0xff] %v4532
  %v4559 = vld.sshfl [vmem:[#allocation1 + $0x30] sm:$0xff pattern:$0x75316420]
  %4560 = vrot.lane.b32.xlu0 %v4542, 64
  %v4561 = vpop.permute.xlu0 %4560
  %4562 = vrot.lane.b32.xlu0 %v4545, 64
  %v4563 = vpop.permute.xlu0 %4562
  %4564 = vrot.lane.b32.xlu0 %v4548, 64
  %v4565 = vpop.permute.xlu0 %4564
  %4566 = vrot.lane.b32.xlu0 %v4551, 64
  %v4567 = vpop.permute.xlu0 %4566
  %4568 = vrot.lane.b32.xlu0 %v4553, 64
  %v4569 = vpop.permute.xlu0 %4568
  %4570 = vrot.lane.b32.xlu0 %v4555, 64
  %v4571 = vpop.permute.xlu0 %4570
  %4572 = vrot.lane.b32.xlu0 %v4557, 64
  %v4573 = vpop.permute.xlu0 %4572
  %4574 = vrot.lane.b32.xlu0 %v4559, 64
  %v4575 = vpop.permute.xlu0 %4574
  %v4584 = vsel %vm282, %v4517, %v4561
  %v4585 = vsel %vm282, %v4518, %v4563
  %v4586 = vsel %vm282, %v4519, %v4565
  %v4587 = vsel %vm282, %v4520, %v4567
  %v4588 = vsel %vm282, %v4521, %v4569
  %v4589 = vsel %vm282, %v4522, %v4571
  %v4590 = vsel %vm282, %v4523, %v4573
  %v4591 = vsel %vm282, %v4524, %v4575
  %v4592 = vadd.f32 %v3597, %v4584
  %v4593 = vadd.f32 %v3598, %v4585
  %v4594 = vadd.f32 %v3599, %v4586
  %v4595 = vadd.f32 %v3600, %v4587
  %v4596 = vadd.f32 %v3601, %v4588
  %v4597 = vadd.f32 %v3602, %v4589
  %v4598 = vadd.f32 %v3603, %v4590
  %v4599 = vadd.f32 %v3604, %v4591
  %v4600 = vadd.f32 %v4592, %v2363
  %v4601 = vadd.f32 %v4593, %v2363
  %v4602 = vadd.f32 %v4594, %v2363
  %v4603 = vadd.f32 %v4595, %v2363
  %v4604 = vadd.f32 %v4596, %v2363
  %v4605 = vadd.f32 %v4597, %v2363
  %v4606 = vadd.f32 %v4598, %v2363
  %v4607 = vadd.f32 %v4599, %v2363
  %s4608 = scalar_lea.vmem %s7, 32
  %4609 = vst [vmem:[%s4608] sm:$0xf] %v4600
  %4610 = vst [vmem:[%s4608 + $0x4] sm:$0xf] %v4601
  %4611 = vst [vmem:[%s4608 + $0x8] sm:$0xf] %v4602
  %4612 = vst [vmem:[%s4608 + $0xc] sm:$0xf] %v4603
  %4613 = vst [vmem:[%s4608 + $0x10] sm:$0xf] %v4604
  %4614 = vst [vmem:[%s4608 + $0x14] sm:$0xf] %v4605
  %4615 = vst [vmem:[%s4608 + $0x18] sm:$0xf] %v4606
  %4616 = vst [vmem:[%s4608 + $0x1c] sm:$0xf] %v4607
  // Predicated region
  $region30: #{detector_backbone_with_fpn.5} parent=0 // pred_check
    _
  $region31: #{detector_backbone_with_fpn.5} parent=0 // pred_check_branch
    %4618 = sbr.rel (0) target = $region33
  $region32: #{detector_backbone_with_fpn.5} parent=0 // pred_region
    _
  $region33: #{detector_backbone_with_fpn.5} parent=0 // pred_fallthru
    _
  // Predicated region
  $region34: #{detector_backbone_with_fpn.5} parent=0 // pred_check
    _
  $region35: #{detector_backbone_with_fpn.5} parent=0 // pred_check_branch
    %4620 = sbr.rel (0) target = $region37
  $region36: #{detector_backbone_with_fpn.5} parent=0 // pred_region
    _
  $region37: #{detector_backbone_with_fpn.5} parent=0 // pred_fallthru
    _

</llo_original>
